<compile_context>
chip_gen: v5e
topology: v5e:2x2
jax: 0.10.0
libtpu: 0.0.40
codegen_flags: <defaults>
</compile_context>

<pallas_src>
import functools

import jax
import jax.numpy as jnp
from jax.experimental import pallas as pl
from jax.experimental.pallas import tpu as pltpu


_PAD = 128        # lane offset of the activation inside the padded scratch
_BN_EPS = 1e-5


# ------------------------------ fused kernel -------------------------------- #

def _fused_block_kernel(x_ref, ws1_ref, wa1_ref, g1_ref, b1_ref,
                        ws2_ref, wa2_ref, g2_ref, b2_ref, masks_ref,
                        o_ref, pad_ref, *, width, planes):
    """Fused (shift-conv -> adder -> BN -> ReLU) x2 + identity skip.

    Layouts (all float32):
      x_ref    : (Cin,    NHW)        channels on sublanes, flat n*H*W on lanes
      ws*_ref  : (planes, 9*Cin)      shift-conv weights, im2col column order
      wa*_ref  : (planes, 9*planes)   adder weights, column j = (tap, cin)
      g*/b*    : (planes, 1)          BN gamma / beta
      masks_ref: (9, NHW)             1.0 where the 3x3 tap is in bounds
      o_ref    : (planes, NHW)        lane-dense output
      pad_ref  : (planes, NHW + 2*_PAD) VMEM scratch acting as a zero frame so
                                      the 9 taps are static lane-shifted views
    """
    nhw = x_ref.shape[1]

    # Zero the frame once; the centre is overwritten per stage, margins stay 0.
    pad_ref[...] = jnp.zeros(pad_ref.shape, pad_ref.dtype)

    def load_tap(k):
        # Tap k of the 3x3 window = lane-shifted view of the padded scratch,
        # with out-of-range positions forced to exactly 0 (conv zero padding /
        # adder |0 - w| semantics).
        off = (k // 3 - 1) * width + (k % 3 - 1)
        view = pad_ref[:, _PAD + off:_PAD + off + nhw]
        return view * masks_ref[k:k + 1, :]

    def conv_stage(a, ws_ref, wa_ref, g_ref, b_ref, residual=None):
        # ---- SEConv2d (power-of-two weights): one im2col MXU matmul --------
        pad_ref[:, _PAD:_PAD + nhw] = a
        patches = jnp.concatenate([load_tap(k) for k in range(9)], axis=0)
        t = jnp.dot(ws_ref[...], patches,
                    preferred_element_type=jnp.float32)        # (planes, NHW)

        # ---- Adder2D: out = -sum |x_tap - w|, lane-dense VPU accumulation --
        pad_ref[:, _PAD:_PAD + nhw] = t
        wa = wa_ref[...]                                        # (planes, 9*planes)
        acc = jnp.zeros((planes, nhw), jnp.float32)
        for k in range(9):
            tap = load_tap(k)                                   # (planes, NHW)
            for ci in range(planes):
                j = k * planes + ci
                acc = acc + jnp.abs(tap[ci:ci + 1, :] - wa[:, j:j + 1])
        y = -acc

        # ---- BatchNorm2d (training-mode batch stats, biased var) -----------
        mean = jnp.mean(y, axis=1, keepdims=True)
        var = jnp.mean(jnp.square(y - mean), axis=1, keepdims=True)
        y = (y - mean) * jax.lax.rsqrt(var + _BN_EPS)
        y = y * g_ref[...] + b_ref[...]
        if residual is not None:
            y = y + residual
        return jnp.maximum(y, 0.0)

    y1 = conv_stage(x_ref[...], ws1_ref, wa1_ref, g1_ref, b1_ref)
    y2 = conv_stage(y1, ws2_ref, wa2_ref, g2_ref, b2_ref, residual=x_ref[...])
    o_ref[...] = y2.astype(o_ref.dtype)


# ------------------------------ JAX wrappers -------------------------------- #

def _prep_conv_weight(w_oihw):
    """OIHW -> (Cout, 9*Cin), column order (kh, kw, cin) to match the kernel."""
    co, ci = w_oihw.shape[0], w_oihw.shape[1]
    return (jnp.transpose(w_oihw, (0, 2, 3, 1))
            .reshape(co, 9 * ci).astype(jnp.float32))


def _tap_masks(n, h, w):
    """(9, N*H*W) {0,1} masks: tap k in-bounds at flattened position p."""
    p = jnp.arange(n * h * w, dtype=jnp.int32) % (h * w)
    hh, ww = p // w, p % w
    rows = []
    for k in range(9):
        dh, dw = k // 3 - 1, k % 3 - 1
        ok = ((hh + dh >= 0) & (hh + dh < h) & (ww + dw >= 0) & (ww + dw < w))
        rows.append(ok)
    return jnp.stack(rows, axis=0).astype(jnp.float32)


def quantize_shift_weight(w, threshold=5e-3):
    # SEConv2d forward-equivalent weights: sign * 2^round(log2|w|), small
    # weights pruned to zero.
    # TODO(synk): SEConv2d's trainable sign/shift STE reparameterization
    # (sign_threshold, distribution) is training-time machinery; only the
    # forward weight values are reproduced.
    sign = jnp.where(w >= 0, 1.0, -1.0)
    mag = jnp.clip(jnp.abs(w), 2.0 ** -7, 1.0)
    wq = sign * (2.0 ** jnp.round(jnp.log2(mag)))
    return jnp.where(jnp.abs(w) < threshold, 0.0, wq).astype(jnp.float32)


@jax.jit
def basic_block_forward(x_nchw, params):
    """ShiftAdd BasicBlock forward, stride=1 / identity skip (layer1 config).

    x_nchw: (N, C, H, W) float32, PyTorch layout.
    TODO(synk): the remaining ResNet_vis glue (stem conv1/bn1/relu, stride-2
    blocks with the SEConv+Adder+BN downsample branch, avgpool, fc_1/fc_2) is
    composition around repeated applications of this block kernel and is not
    replicated here.
    """
    n, c, h, w = x_nchw.shape
    planes = params["w1_shift"].shape[0]
    assert planes == c, "identity-skip block requires inplanes == planes"
    nhw = n * h * w

    x = jnp.transpose(x_nchw, (1, 0, 2, 3)).reshape(c, nhw).astype(jnp.float32)
    masks = _tap_masks(n, h, w)

    kernel = functools.partial(_fused_block_kernel, width=w, planes=planes)
    in_specs = [pl.BlockSpec(memory_space=pltpu.MemorySpace.VMEM)
                for _ in range(10)]
    out = pl.pallas_call(
        kernel,
        out_shape=jax.ShapeDtypeStruct((planes, nhw), jnp.float32),
        in_specs=in_specs,
        out_specs=pl.BlockSpec(memory_space=pltpu.MemorySpace.VMEM),
        scratch_shapes=[pltpu.VMEM((planes, nhw + 2 * _PAD), jnp.float32)],
        compiler_params=pltpu.CompilerParams(
            vmem_limit_bytes=32 * 1024 * 1024),
    )(x,
      _prep_conv_weight(params["w1_shift"]),
      _prep_conv_weight(params["w1_add"]),
      params["bn1_g"].reshape(planes, 1).astype(jnp.float32),
      params["bn1_b"].reshape(planes, 1).astype(jnp.float32),
      _prep_conv_weight(params["w2_shift"]),
      _prep_conv_weight(params["w2_add"]),
      params["bn2_g"].reshape(planes, 1).astype(jnp.float32),
      params["bn2_b"].reshape(planes, 1).astype(jnp.float32),
      masks)

    # (planes, N*H*W) -> NCHW (layout plumbing only).
    return jnp.transpose(out.reshape(planes, n, h, w), (1, 0, 2, 3))


# ------------------------- pure-JAX reference check ------------------------- #

def _ref_forward(x, p):
    def shift_conv(x, w):
        return jax.lax.conv_general_dilated(
            x, w, (1, 1), ((1, 1), (1, 1)),
            dimension_numbers=("NCHW", "OIHW", "NCHW"))

    def adder_conv(x, w):
        N, C, H, W = x.shape
        Co = w.shape[0]
        xp = jnp.pad(x, ((0, 0), (0, 0), (1, 1), (1, 1)))
        pats = [xp[:, :, kh:kh + H, kw:kw + W]
                for kh in range(3) for kw in range(3)]
        pat = jnp.stack(pats, axis=2).reshape(N, C * 9, H, W)
        wf = w.reshape(Co, C, 3, 3).reshape(Co, C * 9)
        d = jnp.abs(pat[:, None] - wf[None, :, :, None, None])
        return -jnp.sum(d, axis=2)

    def bn(t, g, b):
        m = jnp.mean(t, axis=(0, 2, 3), keepdims=True)
        v = jnp.mean((t - m) ** 2, axis=(0, 2, 3), keepdims=True)
        return (g[None, :, None, None] * (t - m) * jax.lax.rsqrt(v + 1e-5)
                + b[None, :, None, None])

    out = adder_conv(shift_conv(x, p["w1_shift"]), p["w1_add"])
    out = jnp.maximum(bn(out, p["bn1_g"], p["bn1_b"]), 0.0)
    out = adder_conv(shift_conv(out, p["w2_shift"]), p["w2_add"])
    out = bn(out, p["bn2_g"], p["bn2_b"]) + x
    return jnp.maximum(out, 0.0)


# ----------------------------------- main ----------------------------------- #

if __name__ == "__main__":
    N, inplanes, planes, H, W = 2, 8, 8, 16, 16   # stride=1, identity skip

    key = jax.random.PRNGKey(0)
    ks = jax.random.split(key, 8)
    params = {
        "w1_shift": quantize_shift_weight(
            0.3 * jax.random.normal(ks[0], (planes, inplanes, 3, 3), jnp.float32)),
        "w1_add": 0.3 * jax.random.normal(ks[1], (planes, planes, 3, 3), jnp.float32),
        "bn1_g": 1.0 + 0.1 * jax.random.normal(ks[2], (planes,), jnp.float32),
        "bn1_b": 0.1 * jax.random.normal(ks[3], (planes,), jnp.float32),
        "w2_shift": quantize_shift_weight(
            0.3 * jax.random.normal(ks[4], (planes, planes, 3, 3), jnp.float32)),
        "w2_add": 0.3 * jax.random.normal(ks[5], (planes, planes, 3, 3), jnp.float32),
        "bn2_g": 1.0 + 0.1 * jax.random.normal(ks[6], (planes,), jnp.float32),
        "bn2_b": 0.1 * jax.random.normal(ks[7], (planes,), jnp.float32),
    }

    x = jax.random.normal(jax.random.PRNGKey(1), (N, inplanes, H, W), jnp.float32)

    out = jax.block_until_ready(basic_block_forward(x, params))
    ref = jax.block_until_ready(_ref_forward(x, params))

    assert out.shape == (N, planes, H, W)
    assert bool(jnp.all(jnp.isfinite(out)))
    assert bool(jnp.allclose(out, ref, atol=1e-2, rtol=1e-2)), "mismatch vs reference"

    print("KERNEL_OK")
</pallas_src>

<mosaic_0001>
module attributes {stable_mosaic.version = 11 : i64} {
  func.func @_fused_block_kernel(%arg0: memref<8x512xf32, #tpu.memory_space<vmem>>, %arg1: memref<8x72xf32, #tpu.memory_space<vmem>>, %arg2: memref<8x72xf32, #tpu.memory_space<vmem>>, %arg3: memref<8x1xf32, #tpu.memory_space<vmem>>, %arg4: memref<8x1xf32, #tpu.memory_space<vmem>>, %arg5: memref<8x72xf32, #tpu.memory_space<vmem>>, %arg6: memref<8x72xf32, #tpu.memory_space<vmem>>, %arg7: memref<8x1xf32, #tpu.memory_space<vmem>>, %arg8: memref<8x1xf32, #tpu.memory_space<vmem>>, %arg9: memref<9x512xf32, #tpu.memory_space<vmem>>, %arg10: memref<8x512xf32, #tpu.memory_space<vmem>>, %arg11: memref<8x768xf32, #tpu.memory_space<vmem>>) attributes {dimension_semantics = [], scalar_prefetch = 0 : i64, scratch_operands = 1 : i64, tpu.core_type = #tpu.core_type<tc>} {
    %cst = arith.constant 0.000000e+00 : f32
    %0 = vector.broadcast %cst : f32 to vector<8x768xf32>
    %c0 = arith.constant 0 : index
    %c0_0 = arith.constant 0 : index
    %1 = vector.load %arg11[%c0, %c0_0] : memref<8x768xf32, #tpu.memory_space<vmem>>, vector<8x768xf32>
    tpu.vector_store %arg11[%c0, %c0_0], %0 {strides = array<i32>} : memref<8x768xf32, #tpu.memory_space<vmem>>, vector<8x768xf32>,
    %c0_1 = arith.constant 0 : index
    %c0_2 = arith.constant 0 : index
    %2 = vector.load %arg0[%c0_1, %c0_2] : memref<8x512xf32, #tpu.memory_space<vmem>>, vector<8x512xf32>
    %c0_3 = arith.constant 0 : index
    %c128 = arith.constant 128 : index
    %3 = vector.load %arg11[%c0_3, %c128] : memref<8x768xf32, #tpu.memory_space<vmem>>, vector<8x512xf32>
    tpu.vector_store %arg11[%c0_3, %c128], %2 {strides = array<i32>} : memref<8x768xf32, #tpu.memory_space<vmem>>, vector<8x512xf32>,
    %c0_4 = arith.constant 0 : index
    %c111 = arith.constant 111 : index
    %4 = vector.load %arg11[%c0_4, %c111] : memref<8x768xf32, #tpu.memory_space<vmem>>, vector<8x512xf32>
    %c0_5 = arith.constant 0 : index
    %c0_6 = arith.constant 0 : index
    %5 = vector.load %arg9[%c0_5, %c0_6] : memref<9x512xf32, #tpu.memory_space<vmem>>, vector<1x512xf32>
    %6 = vector.broadcast %5 : vector<1x512xf32> to vector<8x512xf32>
    %7 = arith.mulf %4, %6 : vector<8x512xf32>
    %c0_7 = arith.constant 0 : index
    %c112 = arith.constant 112 : index
    %8 = vector.load %arg11[%c0_7, %c112] : memref<8x768xf32, #tpu.memory_space<vmem>>, vector<8x512xf32>
    %c1 = arith.constant 1 : index
    %c0_8 = arith.constant 0 : index
    %9 = vector.load %arg9[%c1, %c0_8] : memref<9x512xf32, #tpu.memory_space<vmem>>, vector<1x512xf32>
    %10 = vector.broadcast %9 : vector<1x512xf32> to vector<8x512xf32>
    %11 = arith.mulf %8, %10 : vector<8x512xf32>
    %c0_9 = arith.constant 0 : index
    %c113 = arith.constant 113 : index
    %12 = vector.load %arg11[%c0_9, %c113] : memref<8x768xf32, #tpu.memory_space<vmem>>, vector<8x512xf32>
    %c2 = arith.constant 2 : index
    %c0_10 = arith.constant 0 : index
    %13 = vector.load %arg9[%c2, %c0_10] : memref<9x512xf32, #tpu.memory_space<vmem>>, vector<1x512xf32>
    %14 = vector.broadcast %13 : vector<1x512xf32> to vector<8x512xf32>
    %15 = arith.mulf %12, %14 : vector<8x512xf32>
    %c0_11 = arith.constant 0 : index
    %c127 = arith.constant 127 : index
    %16 = vector.load %arg11[%c0_11, %c127] : memref<8x768xf32, #tpu.memory_space<vmem>>, vector<8x512xf32>
    %c3 = arith.constant 3 : index
    %c0_12 = arith.constant 0 : index
    %17 = vector.load %arg9[%c3, %c0_12] : memref<9x512xf32, #tpu.memory_space<vmem>>, vector<1x512xf32>
    %18 = vector.broadcast %17 : vector<1x512xf32> to vector<8x512xf32>
    %19 = arith.mulf %16, %18 : vector<8x512xf32>
    %c0_13 = arith.constant 0 : index
    %c128_14 = arith.constant 128 : index
    %20 = vector.load %arg11[%c0_13, %c128_14] : memref<8x768xf32, #tpu.memory_space<vmem>>, vector<8x512xf32>
    %c4 = arith.constant 4 : index
    %c0_15 = arith.constant 0 : index
    %21 = vector.load %arg9[%c4, %c0_15] : memref<9x512xf32, #tpu.memory_space<vmem>>, vector<1x512xf32>
    %22 = vector.broadcast %21 : vector<1x512xf32> to vector<8x512xf32>
    %23 = arith.mulf %20, %22 : vector<8x512xf32>
    %c0_16 = arith.constant 0 : index
    %c129 = arith.constant 129 : index
    %24 = vector.load %arg11[%c0_16, %c129] : memref<8x768xf32, #tpu.memory_space<vmem>>, vector<8x512xf32>
    %c5 = arith.constant 5 : index
    %c0_17 = arith.constant 0 : index
    %25 = vector.load %arg9[%c5, %c0_17] : memref<9x512xf32, #tpu.memory_space<vmem>>, vector<1x512xf32>
    %26 = vector.broadcast %25 : vector<1x512xf32> to vector<8x512xf32>
    %27 = arith.mulf %24, %26 : vector<8x512xf32>
    %c0_18 = arith.constant 0 : index
    %c143 = arith.constant 143 : index
    %28 = vector.load %arg11[%c0_18, %c143] : memref<8x768xf32, #tpu.memory_space<vmem>>, vector<8x512xf32>
    %c6 = arith.constant 6 : index
    %c0_19 = arith.constant 0 : index
    %29 = vector.load %arg9[%c6, %c0_19] : memref<9x512xf32, #tpu.memory_space<vmem>>, vector<1x512xf32>
    %30 = vector.broadcast %29 : vector<1x512xf32> to vector<8x512xf32>
    %31 = arith.mulf %28, %30 : vector<8x512xf32>
    %c0_20 = arith.constant 0 : index
    %c144 = arith.constant 144 : index
    %32 = vector.load %arg11[%c0_20, %c144] : memref<8x768xf32, #tpu.memory_space<vmem>>, vector<8x512xf32>
    %c7 = arith.constant 7 : index
    %c0_21 = arith.constant 0 : index
    %33 = vector.load %arg9[%c7, %c0_21] : memref<9x512xf32, #tpu.memory_space<vmem>>, vector<1x512xf32>
    %34 = vector.broadcast %33 : vector<1x512xf32> to vector<8x512xf32>
    %35 = arith.mulf %32, %34 : vector<8x512xf32>
    %c0_22 = arith.constant 0 : index
    %c145 = arith.constant 145 : index
    %36 = vector.load %arg11[%c0_22, %c145] : memref<8x768xf32, #tpu.memory_space<vmem>>, vector<8x512xf32>
    %c8 = arith.constant 8 : index
    %c0_23 = arith.constant 0 : index
    %37 = vector.load %arg9[%c8, %c0_23] : memref<9x512xf32, #tpu.memory_space<vmem>>, vector<1x512xf32>
    %38 = vector.broadcast %37 : vector<1x512xf32> to vector<8x512xf32>
    %39 = arith.mulf %36, %38 : vector<8x512xf32>
    %40 = tpu.concatenate %7, %11, %15, %19, %23, %27, %31, %35, %39 in 0 : vector<8x512xf32>, vector<8x512xf32>, vector<8x512xf32>, vector<8x512xf32>, vector<8x512xf32>, vector<8x512xf32>, vector<8x512xf32>, vector<8x512xf32>, vector<8x512xf32> -> vector<72x512xf32>
    %c0_24 = arith.constant 0 : index
    %c0_25 = arith.constant 0 : index
    %41 = vector.load %arg1[%c0_24, %c0_25] : memref<8x72xf32, #tpu.memory_space<vmem>>, vector<8x72xf32>
    %cst_26 = arith.constant dense<0.000000e+00> : vector<8x512xf32>
    %42 = tpu.matmul %41, %40, %cst_26 {dimension_numbers = #tpu.dot_dimension_numbers<[1], [0], [0], [1], [0, 0, 1, 1], [], []>} : vector<8x72xf32>, vector<72x512xf32>, vector<8x512xf32> -> vector<8x512xf32>
    %c0_27 = arith.constant 0 : index
    %c128_28 = arith.constant 128 : index
    %43 = vector.load %arg11[%c0_27, %c128_28] : memref<8x768xf32, #tpu.memory_space<vmem>>, vector<8x512xf32>
    tpu.vector_store %arg11[%c0_27, %c128_28], %42 {strides = array<i32>} : memref<8x768xf32, #tpu.memory_space<vmem>>, vector<8x512xf32>,
    %c0_29 = arith.constant 0 : index
    %c0_30 = arith.constant 0 : index
    %44 = vector.load %arg2[%c0_29, %c0_30] : memref<8x72xf32, #tpu.memory_space<vmem>>, vector<8x72xf32>
    %cst_31 = arith.constant 0.000000e+00 : f32
    %45 = vector.broadcast %cst_31 : f32 to vector<8x512xf32>
    %c0_32 = arith.constant 0 : index
    %c111_33 = arith.constant 111 : index
    %46 = vector.load %arg11[%c0_32, %c111_33] : memref<8x768xf32, #tpu.memory_space<vmem>>, vector<8x512xf32>
    %c0_34 = arith.constant 0 : index
    %c0_35 = arith.constant 0 : index
    %47 = vector.load %arg9[%c0_34, %c0_35] : memref<9x512xf32, #tpu.memory_space<vmem>>, vector<1x512xf32>
    %48 = vector.broadcast %47 : vector<1x512xf32> to vector<8x512xf32>
    %49 = arith.mulf %46, %48 : vector<8x512xf32>
    %50 = vector.extract_strided_slice %49 {offsets = [0, 0], sizes = [1, 512], strides = [1, 1]} : vector<8x512xf32> to vector<1x512xf32>
    %51 = vector.extract_strided_slice %44 {offsets = [0, 0], sizes = [8, 1], strides = [1, 1]} : vector<8x72xf32> to vector<8x1xf32>
    %52 = vector.broadcast %50 : vector<1x512xf32> to vector<8x512xf32>
    %53 = vector.broadcast %51 : vector<8x1xf32> to vector<8x512xf32>
    %54 = arith.subf %52, %53 : vector<8x512xf32>
    %55 = math.absf %54 : vector<8x512xf32>
    %56 = arith.addf %45, %55 : vector<8x512xf32>
    %57 = vector.extract_strided_slice %49 {offsets = [1, 0], sizes = [1, 512], strides = [1, 1]} : vector<8x512xf32> to vector<1x512xf32>
    %58 = vector.extract_strided_slice %44 {offsets = [0, 1], sizes = [8, 1], strides = [1, 1]} : vector<8x72xf32> to vector<8x1xf32>
    %59 = vector.broadcast %57 : vector<1x512xf32> to vector<8x512xf32>
    %60 = vector.broadcast %58 : vector<8x1xf32> to vector<8x512xf32>
    %61 = arith.subf %59, %60 : vector<8x512xf32>
    %62 = math.absf %61 : vector<8x512xf32>
    %63 = arith.addf %56, %62 : vector<8x512xf32>
    %64 = vector.extract_strided_slice %49 {offsets = [2, 0], sizes = [1, 512], strides = [1, 1]} : vector<8x512xf32> to vector<1x512xf32>
    %65 = vector.extract_strided_slice %44 {offsets = [0, 2], sizes = [8, 1], strides = [1, 1]} : vector<8x72xf32> to vector<8x1xf32>
    %66 = vector.broadcast %64 : vector<1x512xf32> to vector<8x512xf32>
    %67 = vector.broadcast %65 : vector<8x1xf32> to vector<8x512xf32>
    %68 = arith.subf %66, %67 : vector<8x512xf32>
    %69 = math.absf %68 : vector<8x512xf32>
    %70 = arith.addf %63, %69 : vector<8x512xf32>
    %71 = vector.extract_strided_slice %49 {offsets = [3, 0], sizes = [1, 512], strides = [1, 1]} : vector<8x512xf32> to vector<1x512xf32>
    %72 = vector.extract_strided_slice %44 {offsets = [0, 3], sizes = [8, 1], strides = [1, 1]} : vector<8x72xf32> to vector<8x1xf32>
    %73 = vector.broadcast %71 : vector<1x512xf32> to vector<8x512xf32>
    %74 = vector.broadcast %72 : vector<8x1xf32> to vector<8x512xf32>
    %75 = arith.subf %73, %74 : vector<8x512xf32>
    %76 = math.absf %75 : vector<8x512xf32>
    %77 = arith.addf %70, %76 : vector<8x512xf32>
    %78 = vector.extract_strided_slice %49 {offsets = [4, 0], sizes = [1, 512], strides = [1, 1]} : vector<8x512xf32> to vector<1x512xf32>
    %79 = vector.extract_strided_slice %44 {offsets = [0, 4], sizes = [8, 1], strides = [1, 1]} : vector<8x72xf32> to vector<8x1xf32>
    %80 = vector.broadcast %78 : vector<1x512xf32> to vector<8x512xf32>
    %81 = vector.broadcast %79 : vector<8x1xf32> to vector<8x512xf32>
    %82 = arith.subf %80, %81 : vector<8x512xf32>
    %83 = math.absf %82 : vector<8x512xf32>
    %84 = arith.addf %77, %83 : vector<8x512xf32>
    %85 = vector.extract_strided_slice %49 {offsets = [5, 0], sizes = [1, 512], strides = [1, 1]} : vector<8x512xf32> to vector<1x512xf32>
    %86 = vector.extract_strided_slice %44 {offsets = [0, 5], sizes = [8, 1], strides = [1, 1]} : vector<8x72xf32> to vector<8x1xf32>
    %87 = vector.broadcast %85 : vector<1x512xf32> to vector<8x512xf32>
    %88 = vector.broadcast %86 : vector<8x1xf32> to vector<8x512xf32>
    %89 = arith.subf %87, %88 : vector<8x512xf32>
    %90 = math.absf %89 : vector<8x512xf32>
    %91 = arith.addf %84, %90 : vector<8x512xf32>
    %92 = vector.extract_strided_slice %49 {offsets = [6, 0], sizes = [1, 512], strides = [1, 1]} : vector<8x512xf32> to vector<1x512xf32>
    %93 = vector.extract_strided_slice %44 {offsets = [0, 6], sizes = [8, 1], strides = [1, 1]} : vector<8x72xf32> to vector<8x1xf32>
    %94 = vector.broadcast %92 : vector<1x512xf32> to vector<8x512xf32>
    %95 = vector.broadcast %93 : vector<8x1xf32> to vector<8x512xf32>
    %96 = arith.subf %94, %95 : vector<8x512xf32>
    %97 = math.absf %96 : vector<8x512xf32>
    %98 = arith.addf %91, %97 : vector<8x512xf32>
    %99 = vector.extract_strided_slice %49 {offsets = [7, 0], sizes = [1, 512], strides = [1, 1]} : vector<8x512xf32> to vector<1x512xf32>
    %100 = vector.extract_strided_slice %44 {offsets = [0, 7], sizes = [8, 1], strides = [1, 1]} : vector<8x72xf32> to vector<8x1xf32>
    %101 = vector.broadcast %99 : vector<1x512xf32> to vector<8x512xf32>
    %102 = vector.broadcast %100 : vector<8x1xf32> to vector<8x512xf32>
    %103 = arith.subf %101, %102 : vector<8x512xf32>
    %104 = math.absf %103 : vector<8x512xf32>
    %105 = arith.addf %98, %104 : vector<8x512xf32>
    %c0_36 = arith.constant 0 : index
    %c112_37 = arith.constant 112 : index
    %106 = vector.load %arg11[%c0_36, %c112_37] : memref<8x768xf32, #tpu.memory_space<vmem>>, vector<8x512xf32>
    %c1_38 = arith.constant 1 : index
    %c0_39 = arith.constant 0 : index
    %107 = vector.load %arg9[%c1_38, %c0_39] : memref<9x512xf32, #tpu.memory_space<vmem>>, vector<1x512xf32>
    %108 = vector.broadcast %107 : vector<1x512xf32> to vector<8x512xf32>
    %109 = arith.mulf %106, %108 : vector<8x512xf32>
    %110 = vector.extract_strided_slice %109 {offsets = [0, 0], sizes = [1, 512], strides = [1, 1]} : vector<8x512xf32> to vector<1x512xf32>
    %111 = vector.extract_strided_slice %44 {offsets = [0, 8], sizes = [8, 1], strides = [1, 1]} : vector<8x72xf32> to vector<8x1xf32>
    %112 = vector.broadcast %110 : vector<1x512xf32> to vector<8x512xf32>
    %113 = vector.broadcast %111 : vector<8x1xf32> to vector<8x512xf32>
    %114 = arith.subf %112, %113 : vector<8x512xf32>
    %115 = math.absf %114 : vector<8x512xf32>
    %116 = arith.addf %105, %115 : vector<8x512xf32>
    %117 = vector.extract_strided_slice %109 {offsets = [1, 0], sizes = [1, 512], strides = [1, 1]} : vector<8x512xf32> to vector<1x512xf32>
    %118 = vector.extract_strided_slice %44 {offsets = [0, 9], sizes = [8, 1], strides = [1, 1]} : vector<8x72xf32> to vector<8x1xf32>
    %119 = vector.broadcast %117 : vector<1x512xf32> to vector<8x512xf32>
    %120 = vector.broadcast %118 : vector<8x1xf32> to vector<8x512xf32>
    %121 = arith.subf %119, %120 : vector<8x512xf32>
    %122 = math.absf %121 : vector<8x512xf32>
    %123 = arith.addf %116, %122 : vector<8x512xf32>
    %124 = vector.extract_strided_slice %109 {offsets = [2, 0], sizes = [1, 512], strides = [1, 1]} : vector<8x512xf32> to vector<1x512xf32>
    %125 = vector.extract_strided_slice %44 {offsets = [0, 10], sizes = [8, 1], strides = [1, 1]} : vector<8x72xf32> to vector<8x1xf32>
    %126 = vector.broadcast %124 : vector<1x512xf32> to vector<8x512xf32>
    %127 = vector.broadcast %125 : vector<8x1xf32> to vector<8x512xf32>
    %128 = arith.subf %126, %127 : vector<8x512xf32>
    %129 = math.absf %128 : vector<8x512xf32>
    %130 = arith.addf %123, %129 : vector<8x512xf32>
    %131 = vector.extract_strided_slice %109 {offsets = [3, 0], sizes = [1, 512], strides = [1, 1]} : vector<8x512xf32> to vector<1x512xf32>
    %132 = vector.extract_strided_slice %44 {offsets = [0, 11], sizes = [8, 1], strides = [1, 1]} : vector<8x72xf32> to vector<8x1xf32>
    %133 = vector.broadcast %131 : vector<1x512xf32> to vector<8x512xf32>
    %134 = vector.broadcast %132 : vector<8x1xf32> to vector<8x512xf32>
    %135 = arith.subf %133, %134 : vector<8x512xf32>
    %136 = math.absf %135 : vector<8x512xf32>
    %137 = arith.addf %130, %136 : vector<8x512xf32>
    %138 = vector.extract_strided_slice %109 {offsets = [4, 0], sizes = [1, 512], strides = [1, 1]} : vector<8x512xf32> to vector<1x512xf32>
    %139 = vector.extract_strided_slice %44 {offsets = [0, 12], sizes = [8, 1], strides = [1, 1]} : vector<8x72xf32> to vector<8x1xf32>
    %140 = vector.broadcast %138 : vector<1x512xf32> to vector<8x512xf32>
    %141 = vector.broadcast %139 : vector<8x1xf32> to vector<8x512xf32>
    %142 = arith.subf %140, %141 : vector<8x512xf32>
    %143 = math.absf %142 : vector<8x512xf32>
    %144 = arith.addf %137, %143 : vector<8x512xf32>
    %145 = vector.extract_strided_slice %109 {offsets = [5, 0], sizes = [1, 512], strides = [1, 1]} : vector<8x512xf32> to vector<1x512xf32>
    %146 = vector.extract_strided_slice %44 {offsets = [0, 13], sizes = [8, 1], strides = [1, 1]} : vector<8x72xf32> to vector<8x1xf32>
    %147 = vector.broadcast %145 : vector<1x512xf32> to vector<8x512xf32>
    %148 = vector.broadcast %146 : vector<8x1xf32> to vector<8x512xf32>
    %149 = arith.subf %147, %148 : vector<8x512xf32>
    %150 = math.absf %149 : vector<8x512xf32>
    %151 = arith.addf %144, %150 : vector<8x512xf32>
    %152 = vector.extract_strided_slice %109 {offsets = [6, 0], sizes = [1, 512], strides = [1, 1]} : vector<8x512xf32> to vector<1x512xf32>
    %153 = vector.extract_strided_slice %44 {offsets = [0, 14], sizes = [8, 1], strides = [1, 1]} : vector<8x72xf32> to vector<8x1xf32>
    %154 = vector.broadcast %152 : vector<1x512xf32> to vector<8x512xf32>
    %155 = vector.broadcast %153 : vector<8x1xf32> to vector<8x512xf32>
    %156 = arith.subf %154, %155 : vector<8x512xf32>
    %157 = math.absf %156 : vector<8x512xf32>
    %158 = arith.addf %151, %157 : vector<8x512xf32>
    %159 = vector.extract_strided_slice %109 {offsets = [7, 0], sizes = [1, 512], strides = [1, 1]} : vector<8x512xf32> to vector<1x512xf32>
    %160 = vector.extract_strided_slice %44 {offsets = [0, 15], sizes = [8, 1], strides = [1, 1]} : vector<8x72xf32> to vector<8x1xf32>
    %161 = vector.broadcast %159 : vector<1x512xf32> to vector<8x512xf32>
    %162 = vector.broadcast %160 : vector<8x1xf32> to vector<8x512xf32>
    %163 = arith.subf %161, %162 : vector<8x512xf32>
    %164 = math.absf %163 : vector<8x512xf32>
    %165 = arith.addf %158, %164 : vector<8x512xf32>
    %c0_40 = arith.constant 0 : index
    %c113_41 = arith.constant 113 : index
    %166 = vector.load %arg11[%c0_40, %c113_41] : memref<8x768xf32, #tpu.memory_space<vmem>>, vector<8x512xf32>
    %c2_42 = arith.constant 2 : index
    %c0_43 = arith.constant 0 : index
    %167 = vector.load %arg9[%c2_42, %c0_43] : memref<9x512xf32, #tpu.memory_space<vmem>>, vector<1x512xf32>
    %168 = vector.broadcast %167 : vector<1x512xf32> to vector<8x512xf32>
    %169 = arith.mulf %166, %168 : vector<8x512xf32>
    %170 = vector.extract_strided_slice %169 {offsets = [0, 0], sizes = [1, 512], strides = [1, 1]} : vector<8x512xf32> to vector<1x512xf32>
    %171 = vector.extract_strided_slice %44 {offsets = [0, 16], sizes = [8, 1], strides = [1, 1]} : vector<8x72xf32> to vector<8x1xf32>
    %172 = vector.broadcast %170 : vector<1x512xf32> to vector<8x512xf32>
    %173 = vector.broadcast %171 : vector<8x1xf32> to vector<8x512xf32>
    %174 = arith.subf %172, %173 : vector<8x512xf32>
    %175 = math.absf %174 : vector<8x512xf32>
    %176 = arith.addf %165, %175 : vector<8x512xf32>
    %177 = vector.extract_strided_slice %169 {offsets = [1, 0], sizes = [1, 512], strides = [1, 1]} : vector<8x512xf32> to vector<1x512xf32>
    %178 = vector.extract_strided_slice %44 {offsets = [0, 17], sizes = [8, 1], strides = [1, 1]} : vector<8x72xf32> to vector<8x1xf32>
    %179 = vector.broadcast %177 : vector<1x512xf32> to vector<8x512xf32>
    %180 = vector.broadcast %178 : vector<8x1xf32> to vector<8x512xf32>
    %181 = arith.subf %179, %180 : vector<8x512xf32>
    %182 = math.absf %181 : vector<8x512xf32>
    %183 = arith.addf %176, %182 : vector<8x512xf32>
    %184 = vector.extract_strided_slice %169 {offsets = [2, 0], sizes = [1, 512], strides = [1, 1]} : vector<8x512xf32> to vector<1x512xf32>
    %185 = vector.extract_strided_slice %44 {offsets = [0, 18], sizes = [8, 1], strides = [1, 1]} : vector<8x72xf32> to vector<8x1xf32>
    %186 = vector.broadcast %184 : vector<1x512xf32> to vector<8x512xf32>
    %187 = vector.broadcast %185 : vector<8x1xf32> to vector<8x512xf32>
    %188 = arith.subf %186, %187 : vector<8x512xf32>
    %189 = math.absf %188 : vector<8x512xf32>
    %190 = arith.addf %183, %189 : vector<8x512xf32>
    %191 = vector.extract_strided_slice %169 {offsets = [3, 0], sizes = [1, 512], strides = [1, 1]} : vector<8x512xf32> to vector<1x512xf32>
    %192 = vector.extract_strided_slice %44 {offsets = [0, 19], sizes = [8, 1], strides = [1, 1]} : vector<8x72xf32> to vector<8x1xf32>
    %193 = vector.broadcast %191 : vector<1x512xf32> to vector<8x512xf32>
    %194 = vector.broadcast %192 : vector<8x1xf32> to vector<8x512xf32>
    %195 = arith.subf %193, %194 : vector<8x512xf32>
    %196 = math.absf %195 : vector<8x512xf32>
    %197 = arith.addf %190, %196 : vector<8x512xf32>
    %198 = vector.extract_strided_slice %169 {offsets = [4, 0], sizes = [1, 512], strides = [1, 1]} : vector<8x512xf32> to vector<1x512xf32>
    %199 = vector.extract_strided_slice %44 {offsets = [0, 20], sizes = [8, 1], strides = [1, 1]} : vector<8x72xf32> to vector<8x1xf32>
    %200 = vector.broadcast %198 : vector<1x512xf32> to vector<8x512xf32>
    %201 = vector.broadcast %199 : vector<8x1xf32> to vector<8x512xf32>
    %202 = arith.subf %200, %201 : vector<8x512xf32>
    %203 = math.absf %202 : vector<8x512xf32>
    %204 = arith.addf %197, %203 : vector<8x512xf32>
    %205 = vector.extract_strided_slice %169 {offsets = [5, 0], sizes = [1, 512], strides = [1, 1]} : vector<8x512xf32> to vector<1x512xf32>
    %206 = vector.extract_strided_slice %44 {offsets = [0, 21], sizes = [8, 1], strides = [1, 1]} : vector<8x72xf32> to vector<8x1xf32>
    %207 = vector.broadcast %205 : vector<1x512xf32> to vector<8x512xf32>
    %208 = vector.broadcast %206 : vector<8x1xf32> to vector<8x512xf32>
    %209 = arith.subf %207, %208 : vector<8x512xf32>
    %210 = math.absf %209 : vector<8x512xf32>
    %211 = arith.addf %204, %210 : vector<8x512xf32>
    %212 = vector.extract_strided_slice %169 {offsets = [6, 0], sizes = [1, 512], strides = [1, 1]} : vector<8x512xf32> to vector<1x512xf32>
    %213 = vector.extract_strided_slice %44 {offsets = [0, 22], sizes = [8, 1], strides = [1, 1]} : vector<8x72xf32> to vector<8x1xf32>
    %214 = vector.broadcast %212 : vector<1x512xf32> to vector<8x512xf32>
    %215 = vector.broadcast %213 : vector<8x1xf32> to vector<8x512xf32>
    %216 = arith.subf %214, %215 : vector<8x512xf32>
    %217 = math.absf %216 : vector<8x512xf32>
    %218 = arith.addf %211, %217 : vector<8x512xf32>
    %219 = vector.extract_strided_slice %169 {offsets = [7, 0], sizes = [1, 512], strides = [1, 1]} : vector<8x512xf32> to vector<1x512xf32>
    %220 = vector.extract_strided_slice %44 {offsets = [0, 23], sizes = [8, 1], strides = [1, 1]} : vector<8x72xf32> to vector<8x1xf32>
    %221 = vector.broadcast %219 : vector<1x512xf32> to vector<8x512xf32>
    %222 = vector.broadcast %220 : vector<8x1xf32> to vector<8x512xf32>
    %223 = arith.subf %221, %222 : vector<8x512xf32>
    %224 = math.absf %223 : vector<8x512xf32>
    %225 = arith.addf %218, %224 : vector<8x512xf32>
    %c0_44 = arith.constant 0 : index
    %c127_45 = arith.constant 127 : index
    %226 = vector.load %arg11[%c0_44, %c127_45] : memref<8x768xf32, #tpu.memory_space<vmem>>, vector<8x512xf32>
    %c3_46 = arith.constant 3 : index
    %c0_47 = arith.constant 0 : index
    %227 = vector.load %arg9[%c3_46, %c0_47] : memref<9x512xf32, #tpu.memory_space<vmem>>, vector<1x512xf32>
    %228 = vector.broadcast %227 : vector<1x512xf32> to vector<8x512xf32>
    %229 = arith.mulf %226, %228 : vector<8x512xf32>
    %230 = vector.extract_strided_slice %229 {offsets = [0, 0], sizes = [1, 512], strides = [1, 1]} : vector<8x512xf32> to vector<1x512xf32>
    %231 = vector.extract_strided_slice %44 {offsets = [0, 24], sizes = [8, 1], strides = [1, 1]} : vector<8x72xf32> to vector<8x1xf32>
    %232 = vector.broadcast %230 : vector<1x512xf32> to vector<8x512xf32>
    %233 = vector.broadcast %231 : vector<8x1xf32> to vector<8x512xf32>
    %234 = arith.subf %232, %233 : vector<8x512xf32>
    %235 = math.absf %234 : vector<8x512xf32>
    %236 = arith.addf %225, %235 : vector<8x512xf32>
    %237 = vector.extract_strided_slice %229 {offsets = [1, 0], sizes = [1, 512], strides = [1, 1]} : vector<8x512xf32> to vector<1x512xf32>
    %238 = vector.extract_strided_slice %44 {offsets = [0, 25], sizes = [8, 1], strides = [1, 1]} : vector<8x72xf32> to vector<8x1xf32>
    %239 = vector.broadcast %237 : vector<1x512xf32> to vector<8x512xf32>
    %240 = vector.broadcast %238 : vector<8x1xf32> to vector<8x512xf32>
    %241 = arith.subf %239, %240 : vector<8x512xf32>
    %242 = math.absf %241 : vector<8x512xf32>
    %243 = arith.addf %236, %242 : vector<8x512xf32>
    %244 = vector.extract_strided_slice %229 {offsets = [2, 0], sizes = [1, 512], strides = [1, 1]} : vector<8x512xf32> to vector<1x512xf32>
    %245 = vector.extract_strided_slice %44 {offsets = [0, 26], sizes = [8, 1], strides = [1, 1]} : vector<8x72xf32> to vector<8x1xf32>
    %246 = vector.broadcast %244 : vector<1x512xf32> to vector<8x512xf32>
    %247 = vector.broadcast %245 : vector<8x1xf32> to vector<8x512xf32>
    %248 = arith.subf %246, %247 : vector<8x512xf32>
    %249 = math.absf %248 : vector<8x512xf32>
    %250 = arith.addf %243, %249 : vector<8x512xf32>
    %251 = vector.extract_strided_slice %229 {offsets = [3, 0], sizes = [1, 512], strides = [1, 1]} : vector<8x512xf32> to vector<1x512xf32>
    %252 = vector.extract_strided_slice %44 {offsets = [0, 27], sizes = [8, 1], strides = [1, 1]} : vector<8x72xf32> to vector<8x1xf32>
    %253 = vector.broadcast %251 : vector<1x512xf32> to vector<8x512xf32>
    %254 = vector.broadcast %252 : vector<8x1xf32> to vector<8x512xf32>
    %255 = arith.subf %253, %254 : vector<8x512xf32>
    %256 = math.absf %255 : vector<8x512xf32>
    %257 = arith.addf %250, %256 : vector<8x512xf32>
    %258 = vector.extract_strided_slice %229 {offsets = [4, 0], sizes = [1, 512], strides = [1, 1]} : vector<8x512xf32> to vector<1x512xf32>
    %259 = vector.extract_strided_slice %44 {offsets = [0, 28], sizes = [8, 1], strides = [1, 1]} : vector<8x72xf32> to vector<8x1xf32>
    %260 = vector.broadcast %258 : vector<1x512xf32> to vector<8x512xf32>
    %261 = vector.broadcast %259 : vector<8x1xf32> to vector<8x512xf32>
    %262 = arith.subf %260, %261 : vector<8x512xf32>
    %263 = math.absf %262 : vector<8x512xf32>
    %264 = arith.addf %257, %263 : vector<8x512xf32>
    %265 = vector.extract_strided_slice %229 {offsets = [5, 0], sizes = [1, 512], strides = [1, 1]} : vector<8x512xf32> to vector<1x512xf32>
    %266 = vector.extract_strided_slice %44 {offsets = [0, 29], sizes = [8, 1], strides = [1, 1]} : vector<8x72xf32> to vector<8x1xf32>
    %267 = vector.broadcast %265 : vector<1x512xf32> to vector<8x512xf32>
    %268 = vector.broadcast %266 : vector<8x1xf32> to vector<8x512xf32>
    %269 = arith.subf %267, %268 : vector<8x512xf32>
    %270 = math.absf %269 : vector<8x512xf32>
    %271 = arith.addf %264, %270 : vector<8x512xf32>
    %272 = vector.extract_strided_slice %229 {offsets = [6, 0], sizes = [1, 512], strides = [1, 1]} : vector<8x512xf32> to vector<1x512xf32>
    %273 = vector.extract_strided_slice %44 {offsets = [0, 30], sizes = [8, 1], strides = [1, 1]} : vector<8x72xf32> to vector<8x1xf32>
    %274 = vector.broadcast %272 : vector<1x512xf32> to vector<8x512xf32>
    %275 = vector.broadcast %273 : vector<8x1xf32> to vector<8x512xf32>
    %276 = arith.subf %274, %275 : vector<8x512xf32>
    %277 = math.absf %276 : vector<8x512xf32>
    %278 = arith.addf %271, %277 : vector<8x512xf32>
    %279 = vector.extract_strided_slice %229 {offsets = [7, 0], sizes = [1, 512], strides = [1, 1]} : vector<8x512xf32> to vector<1x512xf32>
    %280 = vector.extract_strided_slice %44 {offsets = [0, 31], sizes = [8, 1], strides = [1, 1]} : vector<8x72xf32> to vector<8x1xf32>
    %281 = vector.broadcast %279 : vector<1x512xf32> to vector<8x512xf32>
    %282 = vector.broadcast %280 : vector<8x1xf32> to vector<8x512xf32>
    %283 = arith.subf %281, %282 : vector<8x512xf32>
    %284 = math.absf %283 : vector<8x512xf32>
    %285 = arith.addf %278, %284 : vector<8x512xf32>
    %c0_48 = arith.constant 0 : index
    %c128_49 = arith.constant 128 : index
    %286 = vector.load %arg11[%c0_48, %c128_49] : memref<8x768xf32, #tpu.memory_space<vmem>>, vector<8x512xf32>
    %c4_50 = arith.constant 4 : index
    %c0_51 = arith.constant 0 : index
    %287 = vector.load %arg9[%c4_50, %c0_51] : memref<9x512xf32, #tpu.memory_space<vmem>>, vector<1x512xf32>
    %288 = vector.broadcast %287 : vector<1x512xf32> to vector<8x512xf32>
    %289 = arith.mulf %286, %288 : vector<8x512xf32>
    %290 = vector.extract_strided_slice %289 {offsets = [0, 0], sizes = [1, 512], strides = [1, 1]} : vector<8x512xf32> to vector<1x512xf32>
    %291 = vector.extract_strided_slice %44 {offsets = [0, 32], sizes = [8, 1], strides = [1, 1]} : vector<8x72xf32> to vector<8x1xf32>
    %292 = vector.broadcast %290 : vector<1x512xf32> to vector<8x512xf32>
    %293 = vector.broadcast %291 : vector<8x1xf32> to vector<8x512xf32>
    %294 = arith.subf %292, %293 : vector<8x512xf32>
    %295 = math.absf %294 : vector<8x512xf32>
    %296 = arith.addf %285, %295 : vector<8x512xf32>
    %297 = vector.extract_strided_slice %289 {offsets = [1, 0], sizes = [1, 512], strides = [1, 1]} : vector<8x512xf32> to vector<1x512xf32>
    %298 = vector.extract_strided_slice %44 {offsets = [0, 33], sizes = [8, 1], strides = [1, 1]} : vector<8x72xf32> to vector<8x1xf32>
    %299 = vector.broadcast %297 : vector<1x512xf32> to vector<8x512xf32>
    %300 = vector.broadcast %298 : vector<8x1xf32> to vector<8x512xf32>
    %301 = arith.subf %299, %300 : vector<8x512xf32>
    %302 = math.absf %301 : vector<8x512xf32>
    %303 = arith.addf %296, %302 : vector<8x512xf32>
    %304 = vector.extract_strided_slice %289 {offsets = [2, 0], sizes = [1, 512], strides = [1, 1]} : vector<8x512xf32> to vector<1x512xf32>
    %305 = vector.extract_strided_slice %44 {offsets = [0, 34], sizes = [8, 1], strides = [1, 1]} : vector<8x72xf32> to vector<8x1xf32>
    %306 = vector.broadcast %304 : vector<1x512xf32> to vector<8x512xf32>
    %307 = vector.broadcast %305 : vector<8x1xf32> to vector<8x512xf32>
    %308 = arith.subf %306, %307 : vector<8x512xf32>
    %309 = math.absf %308 : vector<8x512xf32>
    %310 = arith.addf %303, %309 : vector<8x512xf32>
    %311 = vector.extract_strided_slice %289 {offsets = [3, 0], sizes = [1, 512], strides = [1, 1]} : vector<8x512xf32> to vector<1x512xf32>
    %312 = vector.extract_strided_slice %44 {offsets = [0, 35], sizes = [8, 1], strides = [1, 1]} : vector<8x72xf32> to vector<8x1xf32>
    %313 = vector.broadcast %311 : vector<1x512xf32> to vector<8x512xf32>
    %314 = vector.broadcast %312 : vector<8x1xf32> to vector<8x512xf32>
    %315 = arith.subf %313, %314 : vector<8x512xf32>
    %316 = math.absf %315 : vector<8x512xf32>
    %317 = arith.addf %310, %316 : vector<8x512xf32>
    %318 = vector.extract_strided_slice %289 {offsets = [4, 0], sizes = [1, 512], strides = [1, 1]} : vector<8x512xf32> to vector<1x512xf32>
    %319 = vector.extract_strided_slice %44 {offsets = [0, 36], sizes = [8, 1], strides = [1, 1]} : vector<8x72xf32> to vector<8x1xf32>
    %320 = vector.broadcast %318 : vector<1x512xf32> to vector<8x512xf32>
    %321 = vector.broadcast %319 : vector<8x1xf32> to vector<8x512xf32>
    %322 = arith.subf %320, %321 : vector<8x512xf32>
    %323 = math.absf %322 : vector<8x512xf32>
    %324 = arith.addf %317, %323 : vector<8x512xf32>
    %325 = vector.extract_strided_slice %289 {offsets = [5, 0], sizes = [1, 512], strides = [1, 1]} : vector<8x512xf32> to vector<1x512xf32>
    %326 = vector.extract_strided_slice %44 {offsets = [0, 37], sizes = [8, 1], strides = [1, 1]} : vector<8x72xf32> to vector<8x1xf32>
    %327 = vector.broadcast %325 : vector<1x512xf32> to vector<8x512xf32>
    %328 = vector.broadcast %326 : vector<8x1xf32> to vector<8x512xf32>
    %329 = arith.subf %327, %328 : vector<8x512xf32>
    %330 = math.absf %329 : vector<8x512xf32>
    %331 = arith.addf %324, %330 : vector<8x512xf32>
    %332 = vector.extract_strided_slice %289 {offsets = [6, 0], sizes = [1, 512], strides = [1, 1]} : vector<8x512xf32> to vector<1x512xf32>
    %333 = vector.extract_strided_slice %44 {offsets = [0, 38], sizes = [8, 1], strides = [1, 1]} : vector<8x72xf32> to vector<8x1xf32>
    %334 = vector.broadcast %332 : vector<1x512xf32> to vector<8x512xf32>
    %335 = vector.broadcast %333 : vector<8x1xf32> to vector<8x512xf32>
    %336 = arith.subf %334, %335 : vector<8x512xf32>
    %337 = math.absf %336 : vector<8x512xf32>
    %338 = arith.addf %331, %337 : vector<8x512xf32>
    %339 = vector.extract_strided_slice %289 {offsets = [7, 0], sizes = [1, 512], strides = [1, 1]} : vector<8x512xf32> to vector<1x512xf32>
    %340 = vector.extract_strided_slice %44 {offsets = [0, 39], sizes = [8, 1], strides = [1, 1]} : vector<8x72xf32> to vector<8x1xf32>
    %341 = vector.broadcast %339 : vector<1x512xf32> to vector<8x512xf32>
    %342 = vector.broadcast %340 : vector<8x1xf32> to vector<8x512xf32>
    %343 = arith.subf %341, %342 : vector<8x512xf32>
    %344 = math.absf %343 : vector<8x512xf32>
    %345 = arith.addf %338, %344 : vector<8x512xf32>
    %c0_52 = arith.constant 0 : index
    %c129_53 = arith.constant 129 : index
    %346 = vector.load %arg11[%c0_52, %c129_53] : memref<8x768xf32, #tpu.memory_space<vmem>>, vector<8x512xf32>
    %c5_54 = arith.constant 5 : index
    %c0_55 = arith.constant 0 : index
    %347 = vector.load %arg9[%c5_54, %c0_55] : memref<9x512xf32, #tpu.memory_space<vmem>>, vector<1x512xf32>
    %348 = vector.broadcast %347 : vector<1x512xf32> to vector<8x512xf32>
    %349 = arith.mulf %346, %348 : vector<8x512xf32>
    %350 = vector.extract_strided_slice %349 {offsets = [0, 0], sizes = [1, 512], strides = [1, 1]} : vector<8x512xf32> to vector<1x512xf32>
    %351 = vector.extract_strided_slice %44 {offsets = [0, 40], sizes = [8, 1], strides = [1, 1]} : vector<8x72xf32> to vector<8x1xf32>
    %352 = vector.broadcast %350 : vector<1x512xf32> to vector<8x512xf32>
    %353 = vector.broadcast %351 : vector<8x1xf32> to vector<8x512xf32>
    %354 = arith.subf %352, %353 : vector<8x512xf32>
    %355 = math.absf %354 : vector<8x512xf32>
    %356 = arith.addf %345, %355 : vector<8x512xf32>
    %357 = vector.extract_strided_slice %349 {offsets = [1, 0], sizes = [1, 512], strides = [1, 1]} : vector<8x512xf32> to vector<1x512xf32>
    %358 = vector.extract_strided_slice %44 {offsets = [0, 41], sizes = [8, 1], strides = [1, 1]} : vector<8x72xf32> to vector<8x1xf32>
    %359 = vector.broadcast %357 : vector<1x512xf32> to vector<8x512xf32>
    %360 = vector.broadcast %358 : vector<8x1xf32> to vector<8x512xf32>
    %361 = arith.subf %359, %360 : vector<8x512xf32>
    %362 = math.absf %361 : vector<8x512xf32>
    %363 = arith.addf %356, %362 : vector<8x512xf32>
    %364 = vector.extract_strided_slice %349 {offsets = [2, 0], sizes = [1, 512], strides = [1, 1]} : vector<8x512xf32> to vector<1x512xf32>
    %365 = vector.extract_strided_slice %44 {offsets = [0, 42], sizes = [8, 1], strides = [1, 1]} : vector<8x72xf32> to vector<8x1xf32>
    %366 = vector.broadcast %364 : vector<1x512xf32> to vector<8x512xf32>
    %367 = vector.broadcast %365 : vector<8x1xf32> to vector<8x512xf32>
    %368 = arith.subf %366, %367 : vector<8x512xf32>
    %369 = math.absf %368 : vector<8x512xf32>
    %370 = arith.addf %363, %369 : vector<8x512xf32>
    %371 = vector.extract_strided_slice %349 {offsets = [3, 0], sizes = [1, 512], strides = [1, 1]} : vector<8x512xf32> to vector<1x512xf32>
    %372 = vector.extract_strided_slice %44 {offsets = [0, 43], sizes = [8, 1], strides = [1, 1]} : vector<8x72xf32> to vector<8x1xf32>
    %373 = vector.broadcast %371 : vector<1x512xf32> to vector<8x512xf32>
    %374 = vector.broadcast %372 : vector<8x1xf32> to vector<8x512xf32>
    %375 = arith.subf %373, %374 : vector<8x512xf32>
    %376 = math.absf %375 : vector<8x512xf32>
    %377 = arith.addf %370, %376 : vector<8x512xf32>
    %378 = vector.extract_strided_slice %349 {offsets = [4, 0], sizes = [1, 512], strides = [1, 1]} : vector<8x512xf32> to vector<1x512xf32>
    %379 = vector.extract_strided_slice %44 {offsets = [0, 44], sizes = [8, 1], strides = [1, 1]} : vector<8x72xf32> to vector<8x1xf32>
    %380 = vector.broadcast %378 : vector<1x512xf32> to vector<8x512xf32>
    %381 = vector.broadcast %379 : vector<8x1xf32> to vector<8x512xf32>
    %382 = arith.subf %380, %381 : vector<8x512xf32>
    %383 = math.absf %382 : vector<8x512xf32>
    %384 = arith.addf %377, %383 : vector<8x512xf32>
    %385 = vector.extract_strided_slice %349 {offsets = [5, 0], sizes = [1, 512], strides = [1, 1]} : vector<8x512xf32> to vector<1x512xf32>
    %386 = vector.extract_strided_slice %44 {offsets = [0, 45], sizes = [8, 1], strides = [1, 1]} : vector<8x72xf32> to vector<8x1xf32>
    %387 = vector.broadcast %385 : vector<1x512xf32> to vector<8x512xf32>
    %388 = vector.broadcast %386 : vector<8x1xf32> to vector<8x512xf32>
    %389 = arith.subf %387, %388 : vector<8x512xf32>
    %390 = math.absf %389 : vector<8x512xf32>
    %391 = arith.addf %384, %390 : vector<8x512xf32>
    %392 = vector.extract_strided_slice %349 {offsets = [6, 0], sizes = [1, 512], strides = [1, 1]} : vector<8x512xf32> to vector<1x512xf32>
    %393 = vector.extract_strided_slice %44 {offsets = [0, 46], sizes = [8, 1], strides = [1, 1]} : vector<8x72xf32> to vector<8x1xf32>
    %394 = vector.broadcast %392 : vector<1x512xf32> to vector<8x512xf32>
    %395 = vector.broadcast %393 : vector<8x1xf32> to vector<8x512xf32>
    %396 = arith.subf %394, %395 : vector<8x512xf32>
    %397 = math.absf %396 : vector<8x512xf32>
    %398 = arith.addf %391, %397 : vector<8x512xf32>
    %399 = vector.extract_strided_slice %349 {offsets = [7, 0], sizes = [1, 512], strides = [1, 1]} : vector<8x512xf32> to vector<1x512xf32>
    %400 = vector.extract_strided_slice %44 {offsets = [0, 47], sizes = [8, 1], strides = [1, 1]} : vector<8x72xf32> to vector<8x1xf32>
    %401 = vector.broadcast %399 : vector<1x512xf32> to vector<8x512xf32>
    %402 = vector.broadcast %400 : vector<8x1xf32> to vector<8x512xf32>
    %403 = arith.subf %401, %402 : vector<8x512xf32>
    %404 = math.absf %403 : vector<8x512xf32>
    %405 = arith.addf %398, %404 : vector<8x512xf32>
    %c0_56 = arith.constant 0 : index
    %c143_57 = arith.constant 143 : index
    %406 = vector.load %arg11[%c0_56, %c143_57] : memref<8x768xf32, #tpu.memory_space<vmem>>, vector<8x512xf32>
    %c6_58 = arith.constant 6 : index
    %c0_59 = arith.constant 0 : index
    %407 = vector.load %arg9[%c6_58, %c0_59] : memref<9x512xf32, #tpu.memory_space<vmem>>, vector<1x512xf32>
    %408 = vector.broadcast %407 : vector<1x512xf32> to vector<8x512xf32>
    %409 = arith.mulf %406, %408 : vector<8x512xf32>
    %410 = vector.extract_strided_slice %409 {offsets = [0, 0], sizes = [1, 512], strides = [1, 1]} : vector<8x512xf32> to vector<1x512xf32>
    %411 = vector.extract_strided_slice %44 {offsets = [0, 48], sizes = [8, 1], strides = [1, 1]} : vector<8x72xf32> to vector<8x1xf32>
    %412 = vector.broadcast %410 : vector<1x512xf32> to vector<8x512xf32>
    %413 = vector.broadcast %411 : vector<8x1xf32> to vector<8x512xf32>
    %414 = arith.subf %412, %413 : vector<8x512xf32>
    %415 = math.absf %414 : vector<8x512xf32>
    %416 = arith.addf %405, %415 : vector<8x512xf32>
    %417 = vector.extract_strided_slice %409 {offsets = [1, 0], sizes = [1, 512], strides = [1, 1]} : vector<8x512xf32> to vector<1x512xf32>
    %418 = vector.extract_strided_slice %44 {offsets = [0, 49], sizes = [8, 1], strides = [1, 1]} : vector<8x72xf32> to vector<8x1xf32>
    %419 = vector.broadcast %417 : vector<1x512xf32> to vector<8x512xf32>
    %420 = vector.broadcast %418 : vector<8x1xf32> to vector<8x512xf32>
    %421 = arith.subf %419, %420 : vector<8x512xf32>
    %422 = math.absf %421 : vector<8x512xf32>
    %423 = arith.addf %416, %422 : vector<8x512xf32>
    %424 = vector.extract_strided_slice %409 {offsets = [2, 0], sizes = [1, 512], strides = [1, 1]} : vector<8x512xf32> to vector<1x512xf32>
    %425 = vector.extract_strided_slice %44 {offsets = [0, 50], sizes = [8, 1], strides = [1, 1]} : vector<8x72xf32> to vector<8x1xf32>
    %426 = vector.broadcast %424 : vector<1x512xf32> to vector<8x512xf32>
    %427 = vector.broadcast %425 : vector<8x1xf32> to vector<8x512xf32>
    %428 = arith.subf %426, %427 : vector<8x512xf32>
    %429 = math.absf %428 : vector<8x512xf32>
    %430 = arith.addf %423, %429 : vector<8x512xf32>
    %431 = vector.extract_strided_slice %409 {offsets = [3, 0], sizes = [1, 512], strides = [1, 1]} : vector<8x512xf32> to vector<1x512xf32>
    %432 = vector.extract_strided_slice %44 {offsets = [0, 51], sizes = [8, 1], strides = [1, 1]} : vector<8x72xf32> to vector<8x1xf32>
    %433 = vector.broadcast %431 : vector<1x512xf32> to vector<8x512xf32>
    %434 = vector.broadcast %432 : vector<8x1xf32> to vector<8x512xf32>
    %435 = arith.subf %433, %434 : vector<8x512xf32>
    %436 = math.absf %435 : vector<8x512xf32>
    %437 = arith.addf %430, %436 : vector<8x512xf32>
    %438 = vector.extract_strided_slice %409 {offsets = [4, 0], sizes = [1, 512], strides = [1, 1]} : vector<8x512xf32> to vector<1x512xf32>
    %439 = vector.extract_strided_slice %44 {offsets = [0, 52], sizes = [8, 1], strides = [1, 1]} : vector<8x72xf32> to vector<8x1xf32>
    %440 = vector.broadcast %438 : vector<1x512xf32> to vector<8x512xf32>
    %441 = vector.broadcast %439 : vector<8x1xf32> to vector<8x512xf32>
    %442 = arith.subf %440, %441 : vector<8x512xf32>
    %443 = math.absf %442 : vector<8x512xf32>
    %444 = arith.addf %437, %443 : vector<8x512xf32>
    %445 = vector.extract_strided_slice %409 {offsets = [5, 0], sizes = [1, 512], strides = [1, 1]} : vector<8x512xf32> to vector<1x512xf32>
    %446 = vector.extract_strided_slice %44 {offsets = [0, 53], sizes = [8, 1], strides = [1, 1]} : vector<8x72xf32> to vector<8x1xf32>
    %447 = vector.broadcast %445 : vector<1x512xf32> to vector<8x512xf32>
    %448 = vector.broadcast %446 : vector<8x1xf32> to vector<8x512xf32>
    %449 = arith.subf %447, %448 : vector<8x512xf32>
    %450 = math.absf %449 : vector<8x512xf32>
    %451 = arith.addf %444, %450 : vector<8x512xf32>
    %452 = vector.extract_strided_slice %409 {offsets = [6, 0], sizes = [1, 512], strides = [1, 1]} : vector<8x512xf32> to vector<1x512xf32>
    %453 = vector.extract_strided_slice %44 {offsets = [0, 54], sizes = [8, 1], strides = [1, 1]} : vector<8x72xf32> to vector<8x1xf32>
    %454 = vector.broadcast %452 : vector<1x512xf32> to vector<8x512xf32>
    %455 = vector.broadcast %453 : vector<8x1xf32> to vector<8x512xf32>
    %456 = arith.subf %454, %455 : vector<8x512xf32>
    %457 = math.absf %456 : vector<8x512xf32>
    %458 = arith.addf %451, %457 : vector<8x512xf32>
    %459 = vector.extract_strided_slice %409 {offsets = [7, 0], sizes = [1, 512], strides = [1, 1]} : vector<8x512xf32> to vector<1x512xf32>
    %460 = vector.extract_strided_slice %44 {offsets = [0, 55], sizes = [8, 1], strides = [1, 1]} : vector<8x72xf32> to vector<8x1xf32>
    %461 = vector.broadcast %459 : vector<1x512xf32> to vector<8x512xf32>
    %462 = vector.broadcast %460 : vector<8x1xf32> to vector<8x512xf32>
    %463 = arith.subf %461, %462 : vector<8x512xf32>
    %464 = math.absf %463 : vector<8x512xf32>
    %465 = arith.addf %458, %464 : vector<8x512xf32>
    %c0_60 = arith.constant 0 : index
    %c144_61 = arith.constant 144 : index
    %466 = vector.load %arg11[%c0_60, %c144_61] : memref<8x768xf32, #tpu.memory_space<vmem>>, vector<8x512xf32>
    %c7_62 = arith.constant 7 : index
    %c0_63 = arith.constant 0 : index
    %467 = vector.load %arg9[%c7_62, %c0_63] : memref<9x512xf32, #tpu.memory_space<vmem>>, vector<1x512xf32>
    %468 = vector.broadcast %467 : vector<1x512xf32> to vector<8x512xf32>
    %469 = arith.mulf %466, %468 : vector<8x512xf32>
    %470 = vector.extract_strided_slice %469 {offsets = [0, 0], sizes = [1, 512], strides = [1, 1]} : vector<8x512xf32> to vector<1x512xf32>
    %471 = vector.extract_strided_slice %44 {offsets = [0, 56], sizes = [8, 1], strides = [1, 1]} : vector<8x72xf32> to vector<8x1xf32>
    %472 = vector.broadcast %470 : vector<1x512xf32> to vector<8x512xf32>
    %473 = vector.broadcast %471 : vector<8x1xf32> to vector<8x512xf32>
    %474 = arith.subf %472, %473 : vector<8x512xf32>
    %475 = math.absf %474 : vector<8x512xf32>
    %476 = arith.addf %465, %475 : vector<8x512xf32>
    %477 = vector.extract_strided_slice %469 {offsets = [1, 0], sizes = [1, 512], strides = [1, 1]} : vector<8x512xf32> to vector<1x512xf32>
    %478 = vector.extract_strided_slice %44 {offsets = [0, 57], sizes = [8, 1], strides = [1, 1]} : vector<8x72xf32> to vector<8x1xf32>
    %479 = vector.broadcast %477 : vector<1x512xf32> to vector<8x512xf32>
    %480 = vector.broadcast %478 : vector<8x1xf32> to vector<8x512xf32>
    %481 = arith.subf %479, %480 : vector<8x512xf32>
    %482 = math.absf %481 : vector<8x512xf32>
    %483 = arith.addf %476, %482 : vector<8x512xf32>
    %484 = vector.extract_strided_slice %469 {offsets = [2, 0], sizes = [1, 512], strides = [1, 1]} : vector<8x512xf32> to vector<1x512xf32>
    %485 = vector.extract_strided_slice %44 {offsets = [0, 58], sizes = [8, 1], strides = [1, 1]} : vector<8x72xf32> to vector<8x1xf32>
    %486 = vector.broadcast %484 : vector<1x512xf32> to vector<8x512xf32>
    %487 = vector.broadcast %485 : vector<8x1xf32> to vector<8x512xf32>
    %488 = arith.subf %486, %487 : vector<8x512xf32>
    %489 = math.absf %488 : vector<8x512xf32>
    %490 = arith.addf %483, %489 : vector<8x512xf32>
    %491 = vector.extract_strided_slice %469 {offsets = [3, 0], sizes = [1, 512], strides = [1, 1]} : vector<8x512xf32> to vector<1x512xf32>
    %492 = vector.extract_strided_slice %44 {offsets = [0, 59], sizes = [8, 1], strides = [1, 1]} : vector<8x72xf32> to vector<8x1xf32>
    %493 = vector.broadcast %491 : vector<1x512xf32> to vector<8x512xf32>
    %494 = vector.broadcast %492 : vector<8x1xf32> to vector<8x512xf32>
    %495 = arith.subf %493, %494 : vector<8x512xf32>
    %496 = math.absf %495 : vector<8x512xf32>
    %497 = arith.addf %490, %496 : vector<8x512xf32>
    %498 = vector.extract_strided_slice %469 {offsets = [4, 0], sizes = [1, 512], strides = [1, 1]} : vector<8x512xf32> to vector<1x512xf32>
    %499 = vector.extract_strided_slice %44 {offsets = [0, 60], sizes = [8, 1], strides = [1, 1]} : vector<8x72xf32> to vector<8x1xf32>
    %500 = vector.broadcast %498 : vector<1x512xf32> to vector<8x512xf32>
    %501 = vector.broadcast %499 : vector<8x1xf32> to vector<8x512xf32>
    %502 = arith.subf %500, %501 : vector<8x512xf32>
    %503 = math.absf %502 : vector<8x512xf32>
    %504 = arith.addf %497, %503 : vector<8x512xf32>
    %505 = vector.extract_strided_slice %469 {offsets = [5, 0], sizes = [1, 512], strides = [1, 1]} : vector<8x512xf32> to vector<1x512xf32>
    %506 = vector.extract_strided_slice %44 {offsets = [0, 61], sizes = [8, 1], strides = [1, 1]} : vector<8x72xf32> to vector<8x1xf32>
    %507 = vector.broadcast %505 : vector<1x512xf32> to vector<8x512xf32>
    %508 = vector.broadcast %506 : vector<8x1xf32> to vector<8x512xf32>
    %509 = arith.subf %507, %508 : vector<8x512xf32>
    %510 = math.absf %509 : vector<8x512xf32>
    %511 = arith.addf %504, %510 : vector<8x512xf32>
    %512 = vector.extract_strided_slice %469 {offsets = [6, 0], sizes = [1, 512], strides = [1, 1]} : vector<8x512xf32> to vector<1x512xf32>
    %513 = vector.extract_strided_slice %44 {offsets = [0, 62], sizes = [8, 1], strides = [1, 1]} : vector<8x72xf32> to vector<8x1xf32>
    %514 = vector.broadcast %512 : vector<1x512xf32> to vector<8x512xf32>
    %515 = vector.broadcast %513 : vector<8x1xf32> to vector<8x512xf32>
    %516 = arith.subf %514, %515 : vector<8x512xf32>
    %517 = math.absf %516 : vector<8x512xf32>
    %518 = arith.addf %511, %517 : vector<8x512xf32>
    %519 = vector.extract_strided_slice %469 {offsets = [7, 0], sizes = [1, 512], strides = [1, 1]} : vector<8x512xf32> to vector<1x512xf32>
    %520 = vector.extract_strided_slice %44 {offsets = [0, 63], sizes = [8, 1], strides = [1, 1]} : vector<8x72xf32> to vector<8x1xf32>
    %521 = vector.broadcast %519 : vector<1x512xf32> to vector<8x512xf32>
    %522 = vector.broadcast %520 : vector<8x1xf32> to vector<8x512xf32>
    %523 = arith.subf %521, %522 : vector<8x512xf32>
    %524 = math.absf %523 : vector<8x512xf32>
    %525 = arith.addf %518, %524 : vector<8x512xf32>
    %c0_64 = arith.constant 0 : index
    %c145_65 = arith.constant 145 : index
    %526 = vector.load %arg11[%c0_64, %c145_65] : memref<8x768xf32, #tpu.memory_space<vmem>>, vector<8x512xf32>
    %c8_66 = arith.constant 8 : index
    %c0_67 = arith.constant 0 : index
    %527 = vector.load %arg9[%c8_66, %c0_67] : memref<9x512xf32, #tpu.memory_space<vmem>>, vector<1x512xf32>
    %528 = vector.broadcast %527 : vector<1x512xf32> to vector<8x512xf32>
    %529 = arith.mulf %526, %528 : vector<8x512xf32>
    %530 = vector.extract_strided_slice %529 {offsets = [0, 0], sizes = [1, 512], strides = [1, 1]} : vector<8x512xf32> to vector<1x512xf32>
    %531 = vector.extract_strided_slice %44 {offsets = [0, 64], sizes = [8, 1], strides = [1, 1]} : vector<8x72xf32> to vector<8x1xf32>
    %532 = vector.broadcast %530 : vector<1x512xf32> to vector<8x512xf32>
    %533 = vector.broadcast %531 : vector<8x1xf32> to vector<8x512xf32>
    %534 = arith.subf %532, %533 : vector<8x512xf32>
    %535 = math.absf %534 : vector<8x512xf32>
    %536 = arith.addf %525, %535 : vector<8x512xf32>
    %537 = vector.extract_strided_slice %529 {offsets = [1, 0], sizes = [1, 512], strides = [1, 1]} : vector<8x512xf32> to vector<1x512xf32>
    %538 = vector.extract_strided_slice %44 {offsets = [0, 65], sizes = [8, 1], strides = [1, 1]} : vector<8x72xf32> to vector<8x1xf32>
    %539 = vector.broadcast %537 : vector<1x512xf32> to vector<8x512xf32>
    %540 = vector.broadcast %538 : vector<8x1xf32> to vector<8x512xf32>
    %541 = arith.subf %539, %540 : vector<8x512xf32>
    %542 = math.absf %541 : vector<8x512xf32>
    %543 = arith.addf %536, %542 : vector<8x512xf32>
    %544 = vector.extract_strided_slice %529 {offsets = [2, 0], sizes = [1, 512], strides = [1, 1]} : vector<8x512xf32> to vector<1x512xf32>
    %545 = vector.extract_strided_slice %44 {offsets = [0, 66], sizes = [8, 1], strides = [1, 1]} : vector<8x72xf32> to vector<8x1xf32>
    %546 = vector.broadcast %544 : vector<1x512xf32> to vector<8x512xf32>
    %547 = vector.broadcast %545 : vector<8x1xf32> to vector<8x512xf32>
    %548 = arith.subf %546, %547 : vector<8x512xf32>
    %549 = math.absf %548 : vector<8x512xf32>
    %550 = arith.addf %543, %549 : vector<8x512xf32>
    %551 = vector.extract_strided_slice %529 {offsets = [3, 0], sizes = [1, 512], strides = [1, 1]} : vector<8x512xf32> to vector<1x512xf32>
    %552 = vector.extract_strided_slice %44 {offsets = [0, 67], sizes = [8, 1], strides = [1, 1]} : vector<8x72xf32> to vector<8x1xf32>
    %553 = vector.broadcast %551 : vector<1x512xf32> to vector<8x512xf32>
    %554 = vector.broadcast %552 : vector<8x1xf32> to vector<8x512xf32>
    %555 = arith.subf %553, %554 : vector<8x512xf32>
    %556 = math.absf %555 : vector<8x512xf32>
    %557 = arith.addf %550, %556 : vector<8x512xf32>
    %558 = vector.extract_strided_slice %529 {offsets = [4, 0], sizes = [1, 512], strides = [1, 1]} : vector<8x512xf32> to vector<1x512xf32>
    %559 = vector.extract_strided_slice %44 {offsets = [0, 68], sizes = [8, 1], strides = [1, 1]} : vector<8x72xf32> to vector<8x1xf32>
    %560 = vector.broadcast %558 : vector<1x512xf32> to vector<8x512xf32>
    %561 = vector.broadcast %559 : vector<8x1xf32> to vector<8x512xf32>
    %562 = arith.subf %560, %561 : vector<8x512xf32>
    %563 = math.absf %562 : vector<8x512xf32>
    %564 = arith.addf %557, %563 : vector<8x512xf32>
    %565 = vector.extract_strided_slice %529 {offsets = [5, 0], sizes = [1, 512], strides = [1, 1]} : vector<8x512xf32> to vector<1x512xf32>
    %566 = vector.extract_strided_slice %44 {offsets = [0, 69], sizes = [8, 1], strides = [1, 1]} : vector<8x72xf32> to vector<8x1xf32>
    %567 = vector.broadcast %565 : vector<1x512xf32> to vector<8x512xf32>
    %568 = vector.broadcast %566 : vector<8x1xf32> to vector<8x512xf32>
    %569 = arith.subf %567, %568 : vector<8x512xf32>
    %570 = math.absf %569 : vector<8x512xf32>
    %571 = arith.addf %564, %570 : vector<8x512xf32>
    %572 = vector.extract_strided_slice %529 {offsets = [6, 0], sizes = [1, 512], strides = [1, 1]} : vector<8x512xf32> to vector<1x512xf32>
    %573 = vector.extract_strided_slice %44 {offsets = [0, 70], sizes = [8, 1], strides = [1, 1]} : vector<8x72xf32> to vector<8x1xf32>
    %574 = vector.broadcast %572 : vector<1x512xf32> to vector<8x512xf32>
    %575 = vector.broadcast %573 : vector<8x1xf32> to vector<8x512xf32>
    %576 = arith.subf %574, %575 : vector<8x512xf32>
    %577 = math.absf %576 : vector<8x512xf32>
    %578 = arith.addf %571, %577 : vector<8x512xf32>
    %579 = vector.extract_strided_slice %529 {offsets = [7, 0], sizes = [1, 512], strides = [1, 1]} : vector<8x512xf32> to vector<1x512xf32>
    %580 = vector.extract_strided_slice %44 {offsets = [0, 71], sizes = [8, 1], strides = [1, 1]} : vector<8x72xf32> to vector<8x1xf32>
    %581 = vector.broadcast %579 : vector<1x512xf32> to vector<8x512xf32>
    %582 = vector.broadcast %580 : vector<8x1xf32> to vector<8x512xf32>
    %583 = arith.subf %581, %582 : vector<8x512xf32>
    %584 = math.absf %583 : vector<8x512xf32>
    %585 = arith.addf %578, %584 : vector<8x512xf32>
    %cst_68 = arith.constant 0.000000e+00 : f32
    %586 = vector.broadcast %cst_68 : f32 to vector<8x512xf32>
    %587 = arith.subf %586, %585 : vector<8x512xf32>
    %cst_69 = arith.constant dense<0.000000e+00> : vector<8xf32>
    %588 = vector.multi_reduction <add>, %587, %cst_69 [1] : vector<8x512xf32> to vector<8xf32>
    %589 = vector.shape_cast %588 : vector<8xf32> to vector<8x1xf32>
    %cst_70 = arith.constant 5.120000e+02 : f32
    %590 = vector.broadcast %cst_70 : f32 to vector<8x1xf32>
    %591 = arith.divf %589, %590 : vector<8x1xf32>
    %592 = vector.broadcast %591 : vector<8x1xf32> to vector<8x512xf32>
    %593 = arith.subf %587, %592 : vector<8x512xf32>
    %594 = arith.mulf %593, %593 : vector<8x512xf32>
    %cst_71 = arith.constant dense<0.000000e+00> : vector<8xf32>
    %595 = vector.multi_reduction <add>, %594, %cst_71 [1] : vector<8x512xf32> to vector<8xf32>
    %596 = vector.shape_cast %595 : vector<8xf32> to vector<8x1xf32>
    %cst_72 = arith.constant 5.120000e+02 : f32
    %597 = vector.broadcast %cst_72 : f32 to vector<8x1xf32>
    %598 = arith.divf %596, %597 : vector<8x1xf32>
    %599 = vector.broadcast %591 : vector<8x1xf32> to vector<8x512xf32>
    %600 = arith.subf %587, %599 : vector<8x512xf32>
    %cst_73 = arith.constant 9.99999974E-6 : f32
    %601 = vector.broadcast %cst_73 : f32 to vector<8x1xf32>
    %602 = arith.addf %598, %601 : vector<8x1xf32>
    %603 = math.rsqrt %602 : vector<8x1xf32>
    %604 = vector.broadcast %603 : vector<8x1xf32> to vector<8x512xf32>
    %605 = arith.mulf %600, %604 : vector<8x512xf32>
    %c0_74 = arith.constant 0 : index
    %c0_75 = arith.constant 0 : index
    %606 = vector.load %arg3[%c0_74, %c0_75] : memref<8x1xf32, #tpu.memory_space<vmem>>, vector<8x1xf32>
    %607 = vector.broadcast %606 : vector<8x1xf32> to vector<8x512xf32>
    %608 = arith.mulf %605, %607 : vector<8x512xf32>
    %c0_76 = arith.constant 0 : index
    %c0_77 = arith.constant 0 : index
    %609 = vector.load %arg4[%c0_76, %c0_77] : memref<8x1xf32, #tpu.memory_space<vmem>>, vector<8x1xf32>
    %610 = vector.broadcast %609 : vector<8x1xf32> to vector<8x512xf32>
    %611 = arith.addf %608, %610 : vector<8x512xf32>
    %cst_78 = arith.constant 0.000000e+00 : f32
    %612 = vector.broadcast %cst_78 : f32 to vector<8x512xf32>
    %613 = arith.maximumf %611, %612 : vector<8x512xf32>
    %c0_79 = arith.constant 0 : index
    %c0_80 = arith.constant 0 : index
    %614 = vector.load %arg0[%c0_79, %c0_80] : memref<8x512xf32, #tpu.memory_space<vmem>>, vector<8x512xf32>
    %c0_81 = arith.constant 0 : index
    %c128_82 = arith.constant 128 : index
    %615 = vector.load %arg11[%c0_81, %c128_82] : memref<8x768xf32, #tpu.memory_space<vmem>>, vector<8x512xf32>
    tpu.vector_store %arg11[%c0_81, %c128_82], %613 {strides = array<i32>} : memref<8x768xf32, #tpu.memory_space<vmem>>, vector<8x512xf32>,
    %c0_83 = arith.constant 0 : index
    %c111_84 = arith.constant 111 : index
    %616 = vector.load %arg11[%c0_83, %c111_84] : memref<8x768xf32, #tpu.memory_space<vmem>>, vector<8x512xf32>
    %c0_85 = arith.constant 0 : index
    %c0_86 = arith.constant 0 : index
    %617 = vector.load %arg9[%c0_85, %c0_86] : memref<9x512xf32, #tpu.memory_space<vmem>>, vector<1x512xf32>
    %618 = vector.broadcast %617 : vector<1x512xf32> to vector<8x512xf32>
    %619 = arith.mulf %616, %618 : vector<8x512xf32>
    %c0_87 = arith.constant 0 : index
    %c112_88 = arith.constant 112 : index
    %620 = vector.load %arg11[%c0_87, %c112_88] : memref<8x768xf32, #tpu.memory_space<vmem>>, vector<8x512xf32>
    %c1_89 = arith.constant 1 : index
    %c0_90 = arith.constant 0 : index
    %621 = vector.load %arg9[%c1_89, %c0_90] : memref<9x512xf32, #tpu.memory_space<vmem>>, vector<1x512xf32>
    %622 = vector.broadcast %621 : vector<1x512xf32> to vector<8x512xf32>
    %623 = arith.mulf %620, %622 : vector<8x512xf32>
    %c0_91 = arith.constant 0 : index
    %c113_92 = arith.constant 113 : index
    %624 = vector.load %arg11[%c0_91, %c113_92] : memref<8x768xf32, #tpu.memory_space<vmem>>, vector<8x512xf32>
    %c2_93 = arith.constant 2 : index
    %c0_94 = arith.constant 0 : index
    %625 = vector.load %arg9[%c2_93, %c0_94] : memref<9x512xf32, #tpu.memory_space<vmem>>, vector<1x512xf32>
    %626 = vector.broadcast %625 : vector<1x512xf32> to vector<8x512xf32>
    %627 = arith.mulf %624, %626 : vector<8x512xf32>
    %c0_95 = arith.constant 0 : index
    %c127_96 = arith.constant 127 : index
    %628 = vector.load %arg11[%c0_95, %c127_96] : memref<8x768xf32, #tpu.memory_space<vmem>>, vector<8x512xf32>
    %c3_97 = arith.constant 3 : index
    %c0_98 = arith.constant 0 : index
    %629 = vector.load %arg9[%c3_97, %c0_98] : memref<9x512xf32, #tpu.memory_space<vmem>>, vector<1x512xf32>
    %630 = vector.broadcast %629 : vector<1x512xf32> to vector<8x512xf32>
    %631 = arith.mulf %628, %630 : vector<8x512xf32>
    %c0_99 = arith.constant 0 : index
    %c128_100 = arith.constant 128 : index
    %632 = vector.load %arg11[%c0_99, %c128_100] : memref<8x768xf32, #tpu.memory_space<vmem>>, vector<8x512xf32>
    %c4_101 = arith.constant 4 : index
    %c0_102 = arith.constant 0 : index
    %633 = vector.load %arg9[%c4_101, %c0_102] : memref<9x512xf32, #tpu.memory_space<vmem>>, vector<1x512xf32>
    %634 = vector.broadcast %633 : vector<1x512xf32> to vector<8x512xf32>
    %635 = arith.mulf %632, %634 : vector<8x512xf32>
    %c0_103 = arith.constant 0 : index
    %c129_104 = arith.constant 129 : index
    %636 = vector.load %arg11[%c0_103, %c129_104] : memref<8x768xf32, #tpu.memory_space<vmem>>, vector<8x512xf32>
    %c5_105 = arith.constant 5 : index
    %c0_106 = arith.constant 0 : index
    %637 = vector.load %arg9[%c5_105, %c0_106] : memref<9x512xf32, #tpu.memory_space<vmem>>, vector<1x512xf32>
    %638 = vector.broadcast %637 : vector<1x512xf32> to vector<8x512xf32>
    %639 = arith.mulf %636, %638 : vector<8x512xf32>
    %c0_107 = arith.constant 0 : index
    %c143_108 = arith.constant 143 : index
    %640 = vector.load %arg11[%c0_107, %c143_108] : memref<8x768xf32, #tpu.memory_space<vmem>>, vector<8x512xf32>
    %c6_109 = arith.constant 6 : index
    %c0_110 = arith.constant 0 : index
    %641 = vector.load %arg9[%c6_109, %c0_110] : memref<9x512xf32, #tpu.memory_space<vmem>>, vector<1x512xf32>
    %642 = vector.broadcast %641 : vector<1x512xf32> to vector<8x512xf32>
    %643 = arith.mulf %640, %642 : vector<8x512xf32>
    %c0_111 = arith.constant 0 : index
    %c144_112 = arith.constant 144 : index
    %644 = vector.load %arg11[%c0_111, %c144_112] : memref<8x768xf32, #tpu.memory_space<vmem>>, vector<8x512xf32>
    %c7_113 = arith.constant 7 : index
    %c0_114 = arith.constant 0 : index
    %645 = vector.load %arg9[%c7_113, %c0_114] : memref<9x512xf32, #tpu.memory_space<vmem>>, vector<1x512xf32>
    %646 = vector.broadcast %645 : vector<1x512xf32> to vector<8x512xf32>
    %647 = arith.mulf %644, %646 : vector<8x512xf32>
    %c0_115 = arith.constant 0 : index
    %c145_116 = arith.constant 145 : index
    %648 = vector.load %arg11[%c0_115, %c145_116] : memref<8x768xf32, #tpu.memory_space<vmem>>, vector<8x512xf32>
    %c8_117 = arith.constant 8 : index
    %c0_118 = arith.constant 0 : index
    %649 = vector.load %arg9[%c8_117, %c0_118] : memref<9x512xf32, #tpu.memory_space<vmem>>, vector<1x512xf32>
    %650 = vector.broadcast %649 : vector<1x512xf32> to vector<8x512xf32>
    %651 = arith.mulf %648, %650 : vector<8x512xf32>
    %652 = tpu.concatenate %619, %623, %627, %631, %635, %639, %643, %647, %651 in 0 : vector<8x512xf32>, vector<8x512xf32>, vector<8x512xf32>, vector<8x512xf32>, vector<8x512xf32>, vector<8x512xf32>, vector<8x512xf32>, vector<8x512xf32>, vector<8x512xf32> -> vector<72x512xf32>
    %c0_119 = arith.constant 0 : index
    %c0_120 = arith.constant 0 : index
    %653 = vector.load %arg5[%c0_119, %c0_120] : memref<8x72xf32, #tpu.memory_space<vmem>>, vector<8x72xf32>
    %cst_121 = arith.constant dense<0.000000e+00> : vector<8x512xf32>
    %654 = tpu.matmul %653, %652, %cst_121 {dimension_numbers = #tpu.dot_dimension_numbers<[1], [0], [0], [1], [0, 0, 1, 1], [], []>} : vector<8x72xf32>, vector<72x512xf32>, vector<8x512xf32> -> vector<8x512xf32>
    %c0_122 = arith.constant 0 : index
    %c128_123 = arith.constant 128 : index
    %655 = vector.load %arg11[%c0_122, %c128_123] : memref<8x768xf32, #tpu.memory_space<vmem>>, vector<8x512xf32>
    tpu.vector_store %arg11[%c0_122, %c128_123], %654 {strides = array<i32>} : memref<8x768xf32, #tpu.memory_space<vmem>>, vector<8x512xf32>,
    %c0_124 = arith.constant 0 : index
    %c0_125 = arith.constant 0 : index
    %656 = vector.load %arg6[%c0_124, %c0_125] : memref<8x72xf32, #tpu.memory_space<vmem>>, vector<8x72xf32>
    %cst_126 = arith.constant 0.000000e+00 : f32
    %657 = vector.broadcast %cst_126 : f32 to vector<8x512xf32>
    %c0_127 = arith.constant 0 : index
    %c111_128 = arith.constant 111 : index
    %658 = vector.load %arg11[%c0_127, %c111_128] : memref<8x768xf32, #tpu.memory_space<vmem>>, vector<8x512xf32>
    %c0_129 = arith.constant 0 : index
    %c0_130 = arith.constant 0 : index
    %659 = vector.load %arg9[%c0_129, %c0_130] : memref<9x512xf32, #tpu.memory_space<vmem>>, vector<1x512xf32>
    %660 = vector.broadcast %659 : vector<1x512xf32> to vector<8x512xf32>
    %661 = arith.mulf %658, %660 : vector<8x512xf32>
    %662 = vector.extract_strided_slice %661 {offsets = [0, 0], sizes = [1, 512], strides = [1, 1]} : vector<8x512xf32> to vector<1x512xf32>
    %663 = vector.extract_strided_slice %656 {offsets = [0, 0], sizes = [8, 1], strides = [1, 1]} : vector<8x72xf32> to vector<8x1xf32>
    %664 = vector.broadcast %662 : vector<1x512xf32> to vector<8x512xf32>
    %665 = vector.broadcast %663 : vector<8x1xf32> to vector<8x512xf32>
    %666 = arith.subf %664, %665 : vector<8x512xf32>
    %667 = math.absf %666 : vector<8x512xf32>
    %668 = arith.addf %657, %667 : vector<8x512xf32>
    %669 = vector.extract_strided_slice %661 {offsets = [1, 0], sizes = [1, 512], strides = [1, 1]} : vector<8x512xf32> to vector<1x512xf32>
    %670 = vector.extract_strided_slice %656 {offsets = [0, 1], sizes = [8, 1], strides = [1, 1]} : vector<8x72xf32> to vector<8x1xf32>
    %671 = vector.broadcast %669 : vector<1x512xf32> to vector<8x512xf32>
    %672 = vector.broadcast %670 : vector<8x1xf32> to vector<8x512xf32>
    %673 = arith.subf %671, %672 : vector<8x512xf32>
    %674 = math.absf %673 : vector<8x512xf32>
    %675 = arith.addf %668, %674 : vector<8x512xf32>
    %676 = vector.extract_strided_slice %661 {offsets = [2, 0], sizes = [1, 512], strides = [1, 1]} : vector<8x512xf32> to vector<1x512xf32>
    %677 = vector.extract_strided_slice %656 {offsets = [0, 2], sizes = [8, 1], strides = [1, 1]} : vector<8x72xf32> to vector<8x1xf32>
    %678 = vector.broadcast %676 : vector<1x512xf32> to vector<8x512xf32>
    %679 = vector.broadcast %677 : vector<8x1xf32> to vector<8x512xf32>
    %680 = arith.subf %678, %679 : vector<8x512xf32>
    %681 = math.absf %680 : vector<8x512xf32>
    %682 = arith.addf %675, %681 : vector<8x512xf32>
    %683 = vector.extract_strided_slice %661 {offsets = [3, 0], sizes = [1, 512], strides = [1, 1]} : vector<8x512xf32> to vector<1x512xf32>
    %684 = vector.extract_strided_slice %656 {offsets = [0, 3], sizes = [8, 1], strides = [1, 1]} : vector<8x72xf32> to vector<8x1xf32>
    %685 = vector.broadcast %683 : vector<1x512xf32> to vector<8x512xf32>
    %686 = vector.broadcast %684 : vector<8x1xf32> to vector<8x512xf32>
    %687 = arith.subf %685, %686 : vector<8x512xf32>
    %688 = math.absf %687 : vector<8x512xf32>
    %689 = arith.addf %682, %688 : vector<8x512xf32>
    %690 = vector.extract_strided_slice %661 {offsets = [4, 0], sizes = [1, 512], strides = [1, 1]} : vector<8x512xf32> to vector<1x512xf32>
    %691 = vector.extract_strided_slice %656 {offsets = [0, 4], sizes = [8, 1], strides = [1, 1]} : vector<8x72xf32> to vector<8x1xf32>
    %692 = vector.broadcast %690 : vector<1x512xf32> to vector<8x512xf32>
    %693 = vector.broadcast %691 : vector<8x1xf32> to vector<8x512xf32>
    %694 = arith.subf %692, %693 : vector<8x512xf32>
    %695 = math.absf %694 : vector<8x512xf32>
    %696 = arith.addf %689, %695 : vector<8x512xf32>
    %697 = vector.extract_strided_slice %661 {offsets = [5, 0], sizes = [1, 512], strides = [1, 1]} : vector<8x512xf32> to vector<1x512xf32>
    %698 = vector.extract_strided_slice %656 {offsets = [0, 5], sizes = [8, 1], strides = [1, 1]} : vector<8x72xf32> to vector<8x1xf32>
    %699 = vector.broadcast %697 : vector<1x512xf32> to vector<8x512xf32>
    %700 = vector.broadcast %698 : vector<8x1xf32> to vector<8x512xf32>
    %701 = arith.subf %699, %700 : vector<8x512xf32>
    %702 = math.absf %701 : vector<8x512xf32>
    %703 = arith.addf %696, %702 : vector<8x512xf32>
    %704 = vector.extract_strided_slice %661 {offsets = [6, 0], sizes = [1, 512], strides = [1, 1]} : vector<8x512xf32> to vector<1x512xf32>
    %705 = vector.extract_strided_slice %656 {offsets = [0, 6], sizes = [8, 1], strides = [1, 1]} : vector<8x72xf32> to vector<8x1xf32>
    %706 = vector.broadcast %704 : vector<1x512xf32> to vector<8x512xf32>
    %707 = vector.broadcast %705 : vector<8x1xf32> to vector<8x512xf32>
    %708 = arith.subf %706, %707 : vector<8x512xf32>
    %709 = math.absf %708 : vector<8x512xf32>
    %710 = arith.addf %703, %709 : vector<8x512xf32>
    %711 = vector.extract_strided_slice %661 {offsets = [7, 0], sizes = [1, 512], strides = [1, 1]} : vector<8x512xf32> to vector<1x512xf32>
    %712 = vector.extract_strided_slice %656 {offsets = [0, 7], sizes = [8, 1], strides = [1, 1]} : vector<8x72xf32> to vector<8x1xf32>
    %713 = vector.broadcast %711 : vector<1x512xf32> to vector<8x512xf32>
    %714 = vector.broadcast %712 : vector<8x1xf32> to vector<8x512xf32>
    %715 = arith.subf %713, %714 : vector<8x512xf32>
    %716 = math.absf %715 : vector<8x512xf32>
    %717 = arith.addf %710, %716 : vector<8x512xf32>
    %c0_131 = arith.constant 0 : index
    %c112_132 = arith.constant 112 : index
    %718 = vector.load %arg11[%c0_131, %c112_132] : memref<8x768xf32, #tpu.memory_space<vmem>>, vector<8x512xf32>
    %c1_133 = arith.constant 1 : index
    %c0_134 = arith.constant 0 : index
    %719 = vector.load %arg9[%c1_133, %c0_134] : memref<9x512xf32, #tpu.memory_space<vmem>>, vector<1x512xf32>
    %720 = vector.broadcast %719 : vector<1x512xf32> to vector<8x512xf32>
    %721 = arith.mulf %718, %720 : vector<8x512xf32>
    %722 = vector.extract_strided_slice %721 {offsets = [0, 0], sizes = [1, 512], strides = [1, 1]} : vector<8x512xf32> to vector<1x512xf32>
    %723 = vector.extract_strided_slice %656 {offsets = [0, 8], sizes = [8, 1], strides = [1, 1]} : vector<8x72xf32> to vector<8x1xf32>
    %724 = vector.broadcast %722 : vector<1x512xf32> to vector<8x512xf32>
    %725 = vector.broadcast %723 : vector<8x1xf32> to vector<8x512xf32>
    %726 = arith.subf %724, %725 : vector<8x512xf32>
    %727 = math.absf %726 : vector<8x512xf32>
    %728 = arith.addf %717, %727 : vector<8x512xf32>
    %729 = vector.extract_strided_slice %721 {offsets = [1, 0], sizes = [1, 512], strides = [1, 1]} : vector<8x512xf32> to vector<1x512xf32>
    %730 = vector.extract_strided_slice %656 {offsets = [0, 9], sizes = [8, 1], strides = [1, 1]} : vector<8x72xf32> to vector<8x1xf32>
    %731 = vector.broadcast %729 : vector<1x512xf32> to vector<8x512xf32>
    %732 = vector.broadcast %730 : vector<8x1xf32> to vector<8x512xf32>
    %733 = arith.subf %731, %732 : vector<8x512xf32>
    %734 = math.absf %733 : vector<8x512xf32>
    %735 = arith.addf %728, %734 : vector<8x512xf32>
    %736 = vector.extract_strided_slice %721 {offsets = [2, 0], sizes = [1, 512], strides = [1, 1]} : vector<8x512xf32> to vector<1x512xf32>
    %737 = vector.extract_strided_slice %656 {offsets = [0, 10], sizes = [8, 1], strides = [1, 1]} : vector<8x72xf32> to vector<8x1xf32>
    %738 = vector.broadcast %736 : vector<1x512xf32> to vector<8x512xf32>
    %739 = vector.broadcast %737 : vector<8x1xf32> to vector<8x512xf32>
    %740 = arith.subf %738, %739 : vector<8x512xf32>
    %741 = math.absf %740 : vector<8x512xf32>
    %742 = arith.addf %735, %741 : vector<8x512xf32>
    %743 = vector.extract_strided_slice %721 {offsets = [3, 0], sizes = [1, 512], strides = [1, 1]} : vector<8x512xf32> to vector<1x512xf32>
    %744 = vector.extract_strided_slice %656 {offsets = [0, 11], sizes = [8, 1], strides = [1, 1]} : vector<8x72xf32> to vector<8x1xf32>
    %745 = vector.broadcast %743 : vector<1x512xf32> to vector<8x512xf32>
    %746 = vector.broadcast %744 : vector<8x1xf32> to vector<8x512xf32>
    %747 = arith.subf %745, %746 : vector<8x512xf32>
    %748 = math.absf %747 : vector<8x512xf32>
    %749 = arith.addf %742, %748 : vector<8x512xf32>
    %750 = vector.extract_strided_slice %721 {offsets = [4, 0], sizes = [1, 512], strides = [1, 1]} : vector<8x512xf32> to vector<1x512xf32>
    %751 = vector.extract_strided_slice %656 {offsets = [0, 12], sizes = [8, 1], strides = [1, 1]} : vector<8x72xf32> to vector<8x1xf32>
    %752 = vector.broadcast %750 : vector<1x512xf32> to vector<8x512xf32>
    %753 = vector.broadcast %751 : vector<8x1xf32> to vector<8x512xf32>
    %754 = arith.subf %752, %753 : vector<8x512xf32>
    %755 = math.absf %754 : vector<8x512xf32>
    %756 = arith.addf %749, %755 : vector<8x512xf32>
    %757 = vector.extract_strided_slice %721 {offsets = [5, 0], sizes = [1, 512], strides = [1, 1]} : vector<8x512xf32> to vector<1x512xf32>
    %758 = vector.extract_strided_slice %656 {offsets = [0, 13], sizes = [8, 1], strides = [1, 1]} : vector<8x72xf32> to vector<8x1xf32>
    %759 = vector.broadcast %757 : vector<1x512xf32> to vector<8x512xf32>
    %760 = vector.broadcast %758 : vector<8x1xf32> to vector<8x512xf32>
    %761 = arith.subf %759, %760 : vector<8x512xf32>
    %762 = math.absf %761 : vector<8x512xf32>
    %763 = arith.addf %756, %762 : vector<8x512xf32>
    %764 = vector.extract_strided_slice %721 {offsets = [6, 0], sizes = [1, 512], strides = [1, 1]} : vector<8x512xf32> to vector<1x512xf32>
    %765 = vector.extract_strided_slice %656 {offsets = [0, 14], sizes = [8, 1], strides = [1, 1]} : vector<8x72xf32> to vector<8x1xf32>
    %766 = vector.broadcast %764 : vector<1x512xf32> to vector<8x512xf32>
    %767 = vector.broadcast %765 : vector<8x1xf32> to vector<8x512xf32>
    %768 = arith.subf %766, %767 : vector<8x512xf32>
    %769 = math.absf %768 : vector<8x512xf32>
    %770 = arith.addf %763, %769 : vector<8x512xf32>
    %771 = vector.extract_strided_slice %721 {offsets = [7, 0], sizes = [1, 512], strides = [1, 1]} : vector<8x512xf32> to vector<1x512xf32>
    %772 = vector.extract_strided_slice %656 {offsets = [0, 15], sizes = [8, 1], strides = [1, 1]} : vector<8x72xf32> to vector<8x1xf32>
    %773 = vector.broadcast %771 : vector<1x512xf32> to vector<8x512xf32>
    %774 = vector.broadcast %772 : vector<8x1xf32> to vector<8x512xf32>
    %775 = arith.subf %773, %774 : vector<8x512xf32>
    %776 = math.absf %775 : vector<8x512xf32>
    %777 = arith.addf %770, %776 : vector<8x512xf32>
    %c0_135 = arith.constant 0 : index
    %c113_136 = arith.constant 113 : index
    %778 = vector.load %arg11[%c0_135, %c113_136] : memref<8x768xf32, #tpu.memory_space<vmem>>, vector<8x512xf32>
    %c2_137 = arith.constant 2 : index
    %c0_138 = arith.constant 0 : index
    %779 = vector.load %arg9[%c2_137, %c0_138] : memref<9x512xf32, #tpu.memory_space<vmem>>, vector<1x512xf32>
    %780 = vector.broadcast %779 : vector<1x512xf32> to vector<8x512xf32>
    %781 = arith.mulf %778, %780 : vector<8x512xf32>
    %782 = vector.extract_strided_slice %781 {offsets = [0, 0], sizes = [1, 512], strides = [1, 1]} : vector<8x512xf32> to vector<1x512xf32>
    %783 = vector.extract_strided_slice %656 {offsets = [0, 16], sizes = [8, 1], strides = [1, 1]} : vector<8x72xf32> to vector<8x1xf32>
    %784 = vector.broadcast %782 : vector<1x512xf32> to vector<8x512xf32>
    %785 = vector.broadcast %783 : vector<8x1xf32> to vector<8x512xf32>
    %786 = arith.subf %784, %785 : vector<8x512xf32>
    %787 = math.absf %786 : vector<8x512xf32>
    %788 = arith.addf %777, %787 : vector<8x512xf32>
    %789 = vector.extract_strided_slice %781 {offsets = [1, 0], sizes = [1, 512], strides = [1, 1]} : vector<8x512xf32> to vector<1x512xf32>
    %790 = vector.extract_strided_slice %656 {offsets = [0, 17], sizes = [8, 1], strides = [1, 1]} : vector<8x72xf32> to vector<8x1xf32>
    %791 = vector.broadcast %789 : vector<1x512xf32> to vector<8x512xf32>
    %792 = vector.broadcast %790 : vector<8x1xf32> to vector<8x512xf32>
    %793 = arith.subf %791, %792 : vector<8x512xf32>
    %794 = math.absf %793 : vector<8x512xf32>
    %795 = arith.addf %788, %794 : vector<8x512xf32>
    %796 = vector.extract_strided_slice %781 {offsets = [2, 0], sizes = [1, 512], strides = [1, 1]} : vector<8x512xf32> to vector<1x512xf32>
    %797 = vector.extract_strided_slice %656 {offsets = [0, 18], sizes = [8, 1], strides = [1, 1]} : vector<8x72xf32> to vector<8x1xf32>
    %798 = vector.broadcast %796 : vector<1x512xf32> to vector<8x512xf32>
    %799 = vector.broadcast %797 : vector<8x1xf32> to vector<8x512xf32>
    %800 = arith.subf %798, %799 : vector<8x512xf32>
    %801 = math.absf %800 : vector<8x512xf32>
    %802 = arith.addf %795, %801 : vector<8x512xf32>
    %803 = vector.extract_strided_slice %781 {offsets = [3, 0], sizes = [1, 512], strides = [1, 1]} : vector<8x512xf32> to vector<1x512xf32>
    %804 = vector.extract_strided_slice %656 {offsets = [0, 19], sizes = [8, 1], strides = [1, 1]} : vector<8x72xf32> to vector<8x1xf32>
    %805 = vector.broadcast %803 : vector<1x512xf32> to vector<8x512xf32>
    %806 = vector.broadcast %804 : vector<8x1xf32> to vector<8x512xf32>
    %807 = arith.subf %805, %806 : vector<8x512xf32>
    %808 = math.absf %807 : vector<8x512xf32>
    %809 = arith.addf %802, %808 : vector<8x512xf32>
    %810 = vector.extract_strided_slice %781 {offsets = [4, 0], sizes = [1, 512], strides = [1, 1]} : vector<8x512xf32> to vector<1x512xf32>
    %811 = vector.extract_strided_slice %656 {offsets = [0, 20], sizes = [8, 1], strides = [1, 1]} : vector<8x72xf32> to vector<8x1xf32>
    %812 = vector.broadcast %810 : vector<1x512xf32> to vector<8x512xf32>
    %813 = vector.broadcast %811 : vector<8x1xf32> to vector<8x512xf32>
    %814 = arith.subf %812, %813 : vector<8x512xf32>
    %815 = math.absf %814 : vector<8x512xf32>
    %816 = arith.addf %809, %815 : vector<8x512xf32>
    %817 = vector.extract_strided_slice %781 {offsets = [5, 0], sizes = [1, 512], strides = [1, 1]} : vector<8x512xf32> to vector<1x512xf32>
    %818 = vector.extract_strided_slice %656 {offsets = [0, 21], sizes = [8, 1], strides = [1, 1]} : vector<8x72xf32> to vector<8x1xf32>
    %819 = vector.broadcast %817 : vector<1x512xf32> to vector<8x512xf32>
    %820 = vector.broadcast %818 : vector<8x1xf32> to vector<8x512xf32>
    %821 = arith.subf %819, %820 : vector<8x512xf32>
    %822 = math.absf %821 : vector<8x512xf32>
    %823 = arith.addf %816, %822 : vector<8x512xf32>
    %824 = vector.extract_strided_slice %781 {offsets = [6, 0], sizes = [1, 512], strides = [1, 1]} : vector<8x512xf32> to vector<1x512xf32>
    %825 = vector.extract_strided_slice %656 {offsets = [0, 22], sizes = [8, 1], strides = [1, 1]} : vector<8x72xf32> to vector<8x1xf32>
    %826 = vector.broadcast %824 : vector<1x512xf32> to vector<8x512xf32>
    %827 = vector.broadcast %825 : vector<8x1xf32> to vector<8x512xf32>
    %828 = arith.subf %826, %827 : vector<8x512xf32>
    %829 = math.absf %828 : vector<8x512xf32>
    %830 = arith.addf %823, %829 : vector<8x512xf32>
    %831 = vector.extract_strided_slice %781 {offsets = [7, 0], sizes = [1, 512], strides = [1, 1]} : vector<8x512xf32> to vector<1x512xf32>
    %832 = vector.extract_strided_slice %656 {offsets = [0, 23], sizes = [8, 1], strides = [1, 1]} : vector<8x72xf32> to vector<8x1xf32>
    %833 = vector.broadcast %831 : vector<1x512xf32> to vector<8x512xf32>
    %834 = vector.broadcast %832 : vector<8x1xf32> to vector<8x512xf32>
    %835 = arith.subf %833, %834 : vector<8x512xf32>
    %836 = math.absf %835 : vector<8x512xf32>
    %837 = arith.addf %830, %836 : vector<8x512xf32>
    %c0_139 = arith.constant 0 : index
    %c127_140 = arith.constant 127 : index
    %838 = vector.load %arg11[%c0_139, %c127_140] : memref<8x768xf32, #tpu.memory_space<vmem>>, vector<8x512xf32>
    %c3_141 = arith.constant 3 : index
    %c0_142 = arith.constant 0 : index
    %839 = vector.load %arg9[%c3_141, %c0_142] : memref<9x512xf32, #tpu.memory_space<vmem>>, vector<1x512xf32>
    %840 = vector.broadcast %839 : vector<1x512xf32> to vector<8x512xf32>
    %841 = arith.mulf %838, %840 : vector<8x512xf32>
    %842 = vector.extract_strided_slice %841 {offsets = [0, 0], sizes = [1, 512], strides = [1, 1]} : vector<8x512xf32> to vector<1x512xf32>
    %843 = vector.extract_strided_slice %656 {offsets = [0, 24], sizes = [8, 1], strides = [1, 1]} : vector<8x72xf32> to vector<8x1xf32>
    %844 = vector.broadcast %842 : vector<1x512xf32> to vector<8x512xf32>
    %845 = vector.broadcast %843 : vector<8x1xf32> to vector<8x512xf32>
    %846 = arith.subf %844, %845 : vector<8x512xf32>
    %847 = math.absf %846 : vector<8x512xf32>
    %848 = arith.addf %837, %847 : vector<8x512xf32>
    %849 = vector.extract_strided_slice %841 {offsets = [1, 0], sizes = [1, 512], strides = [1, 1]} : vector<8x512xf32> to vector<1x512xf32>
    %850 = vector.extract_strided_slice %656 {offsets = [0, 25], sizes = [8, 1], strides = [1, 1]} : vector<8x72xf32> to vector<8x1xf32>
    %851 = vector.broadcast %849 : vector<1x512xf32> to vector<8x512xf32>
    %852 = vector.broadcast %850 : vector<8x1xf32> to vector<8x512xf32>
    %853 = arith.subf %851, %852 : vector<8x512xf32>
    %854 = math.absf %853 : vector<8x512xf32>
    %855 = arith.addf %848, %854 : vector<8x512xf32>
    %856 = vector.extract_strided_slice %841 {offsets = [2, 0], sizes = [1, 512], strides = [1, 1]} : vector<8x512xf32> to vector<1x512xf32>
    %857 = vector.extract_strided_slice %656 {offsets = [0, 26], sizes = [8, 1], strides = [1, 1]} : vector<8x72xf32> to vector<8x1xf32>
    %858 = vector.broadcast %856 : vector<1x512xf32> to vector<8x512xf32>
    %859 = vector.broadcast %857 : vector<8x1xf32> to vector<8x512xf32>
    %860 = arith.subf %858, %859 : vector<8x512xf32>
    %861 = math.absf %860 : vector<8x512xf32>
    %862 = arith.addf %855, %861 : vector<8x512xf32>
    %863 = vector.extract_strided_slice %841 {offsets = [3, 0], sizes = [1, 512], strides = [1, 1]} : vector<8x512xf32> to vector<1x512xf32>
    %864 = vector.extract_strided_slice %656 {offsets = [0, 27], sizes = [8, 1], strides = [1, 1]} : vector<8x72xf32> to vector<8x1xf32>
    %865 = vector.broadcast %863 : vector<1x512xf32> to vector<8x512xf32>
    %866 = vector.broadcast %864 : vector<8x1xf32> to vector<8x512xf32>
    %867 = arith.subf %865, %866 : vector<8x512xf32>
    %868 = math.absf %867 : vector<8x512xf32>
    %869 = arith.addf %862, %868 : vector<8x512xf32>
    %870 = vector.extract_strided_slice %841 {offsets = [4, 0], sizes = [1, 512], strides = [1, 1]} : vector<8x512xf32> to vector<1x512xf32>
    %871 = vector.extract_strided_slice %656 {offsets = [0, 28], sizes = [8, 1], strides = [1, 1]} : vector<8x72xf32> to vector<8x1xf32>
    %872 = vector.broadcast %870 : vector<1x512xf32> to vector<8x512xf32>
    %873 = vector.broadcast %871 : vector<8x1xf32> to vector<8x512xf32>
    %874 = arith.subf %872, %873 : vector<8x512xf32>
    %875 = math.absf %874 : vector<8x512xf32>
    %876 = arith.addf %869, %875 : vector<8x512xf32>
    %877 = vector.extract_strided_slice %841 {offsets = [5, 0], sizes = [1, 512], strides = [1, 1]} : vector<8x512xf32> to vector<1x512xf32>
    %878 = vector.extract_strided_slice %656 {offsets = [0, 29], sizes = [8, 1], strides = [1, 1]} : vector<8x72xf32> to vector<8x1xf32>
    %879 = vector.broadcast %877 : vector<1x512xf32> to vector<8x512xf32>
    %880 = vector.broadcast %878 : vector<8x1xf32> to vector<8x512xf32>
    %881 = arith.subf %879, %880 : vector<8x512xf32>
    %882 = math.absf %881 : vector<8x512xf32>
    %883 = arith.addf %876, %882 : vector<8x512xf32>
    %884 = vector.extract_strided_slice %841 {offsets = [6, 0], sizes = [1, 512], strides = [1, 1]} : vector<8x512xf32> to vector<1x512xf32>
    %885 = vector.extract_strided_slice %656 {offsets = [0, 30], sizes = [8, 1], strides = [1, 1]} : vector<8x72xf32> to vector<8x1xf32>
    %886 = vector.broadcast %884 : vector<1x512xf32> to vector<8x512xf32>
    %887 = vector.broadcast %885 : vector<8x1xf32> to vector<8x512xf32>
    %888 = arith.subf %886, %887 : vector<8x512xf32>
    %889 = math.absf %888 : vector<8x512xf32>
    %890 = arith.addf %883, %889 : vector<8x512xf32>
    %891 = vector.extract_strided_slice %841 {offsets = [7, 0], sizes = [1, 512], strides = [1, 1]} : vector<8x512xf32> to vector<1x512xf32>
    %892 = vector.extract_strided_slice %656 {offsets = [0, 31], sizes = [8, 1], strides = [1, 1]} : vector<8x72xf32> to vector<8x1xf32>
    %893 = vector.broadcast %891 : vector<1x512xf32> to vector<8x512xf32>
    %894 = vector.broadcast %892 : vector<8x1xf32> to vector<8x512xf32>
    %895 = arith.subf %893, %894 : vector<8x512xf32>
    %896 = math.absf %895 : vector<8x512xf32>
    %897 = arith.addf %890, %896 : vector<8x512xf32>
    %c0_143 = arith.constant 0 : index
    %c128_144 = arith.constant 128 : index
    %898 = vector.load %arg11[%c0_143, %c128_144] : memref<8x768xf32, #tpu.memory_space<vmem>>, vector<8x512xf32>
    %c4_145 = arith.constant 4 : index
    %c0_146 = arith.constant 0 : index
    %899 = vector.load %arg9[%c4_145, %c0_146] : memref<9x512xf32, #tpu.memory_space<vmem>>, vector<1x512xf32>
    %900 = vector.broadcast %899 : vector<1x512xf32> to vector<8x512xf32>
    %901 = arith.mulf %898, %900 : vector<8x512xf32>
    %902 = vector.extract_strided_slice %901 {offsets = [0, 0], sizes = [1, 512], strides = [1, 1]} : vector<8x512xf32> to vector<1x512xf32>
    %903 = vector.extract_strided_slice %656 {offsets = [0, 32], sizes = [8, 1], strides = [1, 1]} : vector<8x72xf32> to vector<8x1xf32>
    %904 = vector.broadcast %902 : vector<1x512xf32> to vector<8x512xf32>
    %905 = vector.broadcast %903 : vector<8x1xf32> to vector<8x512xf32>
    %906 = arith.subf %904, %905 : vector<8x512xf32>
    %907 = math.absf %906 : vector<8x512xf32>
    %908 = arith.addf %897, %907 : vector<8x512xf32>
    %909 = vector.extract_strided_slice %901 {offsets = [1, 0], sizes = [1, 512], strides = [1, 1]} : vector<8x512xf32> to vector<1x512xf32>
    %910 = vector.extract_strided_slice %656 {offsets = [0, 33], sizes = [8, 1], strides = [1, 1]} : vector<8x72xf32> to vector<8x1xf32>
    %911 = vector.broadcast %909 : vector<1x512xf32> to vector<8x512xf32>
    %912 = vector.broadcast %910 : vector<8x1xf32> to vector<8x512xf32>
    %913 = arith.subf %911, %912 : vector<8x512xf32>
    %914 = math.absf %913 : vector<8x512xf32>
    %915 = arith.addf %908, %914 : vector<8x512xf32>
    %916 = vector.extract_strided_slice %901 {offsets = [2, 0], sizes = [1, 512], strides = [1, 1]} : vector<8x512xf32> to vector<1x512xf32>
    %917 = vector.extract_strided_slice %656 {offsets = [0, 34], sizes = [8, 1], strides = [1, 1]} : vector<8x72xf32> to vector<8x1xf32>
    %918 = vector.broadcast %916 : vector<1x512xf32> to vector<8x512xf32>
    %919 = vector.broadcast %917 : vector<8x1xf32> to vector<8x512xf32>
    %920 = arith.subf %918, %919 : vector<8x512xf32>
    %921 = math.absf %920 : vector<8x512xf32>
    %922 = arith.addf %915, %921 : vector<8x512xf32>
    %923 = vector.extract_strided_slice %901 {offsets = [3, 0], sizes = [1, 512], strides = [1, 1]} : vector<8x512xf32> to vector<1x512xf32>
    %924 = vector.extract_strided_slice %656 {offsets = [0, 35], sizes = [8, 1], strides = [1, 1]} : vector<8x72xf32> to vector<8x1xf32>
    %925 = vector.broadcast %923 : vector<1x512xf32> to vector<8x512xf32>
    %926 = vector.broadcast %924 : vector<8x1xf32> to vector<8x512xf32>
    %927 = arith.subf %925, %926 : vector<8x512xf32>
    %928 = math.absf %927 : vector<8x512xf32>
    %929 = arith.addf %922, %928 : vector<8x512xf32>
    %930 = vector.extract_strided_slice %901 {offsets = [4, 0], sizes = [1, 512], strides = [1, 1]} : vector<8x512xf32> to vector<1x512xf32>
    %931 = vector.extract_strided_slice %656 {offsets = [0, 36], sizes = [8, 1], strides = [1, 1]} : vector<8x72xf32> to vector<8x1xf32>
    %932 = vector.broadcast %930 : vector<1x512xf32> to vector<8x512xf32>
    %933 = vector.broadcast %931 : vector<8x1xf32> to vector<8x512xf32>
    %934 = arith.subf %932, %933 : vector<8x512xf32>
    %935 = math.absf %934 : vector<8x512xf32>
    %936 = arith.addf %929, %935 : vector<8x512xf32>
    %937 = vector.extract_strided_slice %901 {offsets = [5, 0], sizes = [1, 512], strides = [1, 1]} : vector<8x512xf32> to vector<1x512xf32>
    %938 = vector.extract_strided_slice %656 {offsets = [0, 37], sizes = [8, 1], strides = [1, 1]} : vector<8x72xf32> to vector<8x1xf32>
    %939 = vector.broadcast %937 : vector<1x512xf32> to vector<8x512xf32>
    %940 = vector.broadcast %938 : vector<8x1xf32> to vector<8x512xf32>
    %941 = arith.subf %939, %940 : vector<8x512xf32>
    %942 = math.absf %941 : vector<8x512xf32>
    %943 = arith.addf %936, %942 : vector<8x512xf32>
    %944 = vector.extract_strided_slice %901 {offsets = [6, 0], sizes = [1, 512], strides = [1, 1]} : vector<8x512xf32> to vector<1x512xf32>
    %945 = vector.extract_strided_slice %656 {offsets = [0, 38], sizes = [8, 1], strides = [1, 1]} : vector<8x72xf32> to vector<8x1xf32>
    %946 = vector.broadcast %944 : vector<1x512xf32> to vector<8x512xf32>
    %947 = vector.broadcast %945 : vector<8x1xf32> to vector<8x512xf32>
    %948 = arith.subf %946, %947 : vector<8x512xf32>
    %949 = math.absf %948 : vector<8x512xf32>
    %950 = arith.addf %943, %949 : vector<8x512xf32>
    %951 = vector.extract_strided_slice %901 {offsets = [7, 0], sizes = [1, 512], strides = [1, 1]} : vector<8x512xf32> to vector<1x512xf32>
    %952 = vector.extract_strided_slice %656 {offsets = [0, 39], sizes = [8, 1], strides = [1, 1]} : vector<8x72xf32> to vector<8x1xf32>
    %953 = vector.broadcast %951 : vector<1x512xf32> to vector<8x512xf32>
    %954 = vector.broadcast %952 : vector<8x1xf32> to vector<8x512xf32>
    %955 = arith.subf %953, %954 : vector<8x512xf32>
    %956 = math.absf %955 : vector<8x512xf32>
    %957 = arith.addf %950, %956 : vector<8x512xf32>
    %c0_147 = arith.constant 0 : index
    %c129_148 = arith.constant 129 : index
    %958 = vector.load %arg11[%c0_147, %c129_148] : memref<8x768xf32, #tpu.memory_space<vmem>>, vector<8x512xf32>
    %c5_149 = arith.constant 5 : index
    %c0_150 = arith.constant 0 : index
    %959 = vector.load %arg9[%c5_149, %c0_150] : memref<9x512xf32, #tpu.memory_space<vmem>>, vector<1x512xf32>
    %960 = vector.broadcast %959 : vector<1x512xf32> to vector<8x512xf32>
    %961 = arith.mulf %958, %960 : vector<8x512xf32>
    %962 = vector.extract_strided_slice %961 {offsets = [0, 0], sizes = [1, 512], strides = [1, 1]} : vector<8x512xf32> to vector<1x512xf32>
    %963 = vector.extract_strided_slice %656 {offsets = [0, 40], sizes = [8, 1], strides = [1, 1]} : vector<8x72xf32> to vector<8x1xf32>
    %964 = vector.broadcast %962 : vector<1x512xf32> to vector<8x512xf32>
    %965 = vector.broadcast %963 : vector<8x1xf32> to vector<8x512xf32>
    %966 = arith.subf %964, %965 : vector<8x512xf32>
    %967 = math.absf %966 : vector<8x512xf32>
    %968 = arith.addf %957, %967 : vector<8x512xf32>
    %969 = vector.extract_strided_slice %961 {offsets = [1, 0], sizes = [1, 512], strides = [1, 1]} : vector<8x512xf32> to vector<1x512xf32>
    %970 = vector.extract_strided_slice %656 {offsets = [0, 41], sizes = [8, 1], strides = [1, 1]} : vector<8x72xf32> to vector<8x1xf32>
    %971 = vector.broadcast %969 : vector<1x512xf32> to vector<8x512xf32>
    %972 = vector.broadcast %970 : vector<8x1xf32> to vector<8x512xf32>
    %973 = arith.subf %971, %972 : vector<8x512xf32>
    %974 = math.absf %973 : vector<8x512xf32>
    %975 = arith.addf %968, %974 : vector<8x512xf32>
    %976 = vector.extract_strided_slice %961 {offsets = [2, 0], sizes = [1, 512], strides = [1, 1]} : vector<8x512xf32> to vector<1x512xf32>
    %977 = vector.extract_strided_slice %656 {offsets = [0, 42], sizes = [8, 1], strides = [1, 1]} : vector<8x72xf32> to vector<8x1xf32>
    %978 = vector.broadcast %976 : vector<1x512xf32> to vector<8x512xf32>
    %979 = vector.broadcast %977 : vector<8x1xf32> to vector<8x512xf32>
    %980 = arith.subf %978, %979 : vector<8x512xf32>
    %981 = math.absf %980 : vector<8x512xf32>
    %982 = arith.addf %975, %981 : vector<8x512xf32>
    %983 = vector.extract_strided_slice %961 {offsets = [3, 0], sizes = [1, 512], strides = [1, 1]} : vector<8x512xf32> to vector<1x512xf32>
    %984 = vector.extract_strided_slice %656 {offsets = [0, 43], sizes = [8, 1], strides = [1, 1]} : vector<8x72xf32> to vector<8x1xf32>
    %985 = vector.broadcast %983 : vector<1x512xf32> to vector<8x512xf32>
    %986 = vector.broadcast %984 : vector<8x1xf32> to vector<8x512xf32>
    %987 = arith.subf %985, %986 : vector<8x512xf32>
    %988 = math.absf %987 : vector<8x512xf32>
    %989 = arith.addf %982, %988 : vector<8x512xf32>
    %990 = vector.extract_strided_slice %961 {offsets = [4, 0], sizes = [1, 512], strides = [1, 1]} : vector<8x512xf32> to vector<1x512xf32>
    %991 = vector.extract_strided_slice %656 {offsets = [0, 44], sizes = [8, 1], strides = [1, 1]} : vector<8x72xf32> to vector<8x1xf32>
    %992 = vector.broadcast %990 : vector<1x512xf32> to vector<8x512xf32>
    %993 = vector.broadcast %991 : vector<8x1xf32> to vector<8x512xf32>
    %994 = arith.subf %992, %993 : vector<8x512xf32>
    %995 = math.absf %994 : vector<8x512xf32>
    %996 = arith.addf %989, %995 : vector<8x512xf32>
    %997 = vector.extract_strided_slice %961 {offsets = [5, 0], sizes = [1, 512], strides = [1, 1]} : vector<8x512xf32> to vector<1x512xf32>
    %998 = vector.extract_strided_slice %656 {offsets = [0, 45], sizes = [8, 1], strides = [1, 1]} : vector<8x72xf32> to vector<8x1xf32>
    %999 = vector.broadcast %997 : vector<1x512xf32> to vector<8x512xf32>
    %1000 = vector.broadcast %998 : vector<8x1xf32> to vector<8x512xf32>
    %1001 = arith.subf %999, %1000 : vector<8x512xf32>
    %1002 = math.absf %1001 : vector<8x512xf32>
    %1003 = arith.addf %996, %1002 : vector<8x512xf32>
    %1004 = vector.extract_strided_slice %961 {offsets = [6, 0], sizes = [1, 512], strides = [1, 1]} : vector<8x512xf32> to vector<1x512xf32>
    %1005 = vector.extract_strided_slice %656 {offsets = [0, 46], sizes = [8, 1], strides = [1, 1]} : vector<8x72xf32> to vector<8x1xf32>
    %1006 = vector.broadcast %1004 : vector<1x512xf32> to vector<8x512xf32>
    %1007 = vector.broadcast %1005 : vector<8x1xf32> to vector<8x512xf32>
    %1008 = arith.subf %1006, %1007 : vector<8x512xf32>
    %1009 = math.absf %1008 : vector<8x512xf32>
    %1010 = arith.addf %1003, %1009 : vector<8x512xf32>
    %1011 = vector.extract_strided_slice %961 {offsets = [7, 0], sizes = [1, 512], strides = [1, 1]} : vector<8x512xf32> to vector<1x512xf32>
    %1012 = vector.extract_strided_slice %656 {offsets = [0, 47], sizes = [8, 1], strides = [1, 1]} : vector<8x72xf32> to vector<8x1xf32>
    %1013 = vector.broadcast %1011 : vector<1x512xf32> to vector<8x512xf32>
    %1014 = vector.broadcast %1012 : vector<8x1xf32> to vector<8x512xf32>
    %1015 = arith.subf %1013, %1014 : vector<8x512xf32>
    %1016 = math.absf %1015 : vector<8x512xf32>
    %1017 = arith.addf %1010, %1016 : vector<8x512xf32>
    %c0_151 = arith.constant 0 : index
    %c143_152 = arith.constant 143 : index
    %1018 = vector.load %arg11[%c0_151, %c143_152] : memref<8x768xf32, #tpu.memory_space<vmem>>, vector<8x512xf32>
    %c6_153 = arith.constant 6 : index
    %c0_154 = arith.constant 0 : index
    %1019 = vector.load %arg9[%c6_153, %c0_154] : memref<9x512xf32, #tpu.memory_space<vmem>>, vector<1x512xf32>
    %1020 = vector.broadcast %1019 : vector<1x512xf32> to vector<8x512xf32>
    %1021 = arith.mulf %1018, %1020 : vector<8x512xf32>
    %1022 = vector.extract_strided_slice %1021 {offsets = [0, 0], sizes = [1, 512], strides = [1, 1]} : vector<8x512xf32> to vector<1x512xf32>
    %1023 = vector.extract_strided_slice %656 {offsets = [0, 48], sizes = [8, 1], strides = [1, 1]} : vector<8x72xf32> to vector<8x1xf32>
    %1024 = vector.broadcast %1022 : vector<1x512xf32> to vector<8x512xf32>
    %1025 = vector.broadcast %1023 : vector<8x1xf32> to vector<8x512xf32>
    %1026 = arith.subf %1024, %1025 : vector<8x512xf32>
    %1027 = math.absf %1026 : vector<8x512xf32>
    %1028 = arith.addf %1017, %1027 : vector<8x512xf32>
    %1029 = vector.extract_strided_slice %1021 {offsets = [1, 0], sizes = [1, 512], strides = [1, 1]} : vector<8x512xf32> to vector<1x512xf32>
    %1030 = vector.extract_strided_slice %656 {offsets = [0, 49], sizes = [8, 1], strides = [1, 1]} : vector<8x72xf32> to vector<8x1xf32>
    %1031 = vector.broadcast %1029 : vector<1x512xf32> to vector<8x512xf32>
    %1032 = vector.broadcast %1030 : vector<8x1xf32> to vector<8x512xf32>
    %1033 = arith.subf %1031, %1032 : vector<8x512xf32>
    %1034 = math.absf %1033 : vector<8x512xf32>
    %1035 = arith.addf %1028, %1034 : vector<8x512xf32>
    %1036 = vector.extract_strided_slice %1021 {offsets = [2, 0], sizes = [1, 512], strides = [1, 1]} : vector<8x512xf32> to vector<1x512xf32>
    %1037 = vector.extract_strided_slice %656 {offsets = [0, 50], sizes = [8, 1], strides = [1, 1]} : vector<8x72xf32> to vector<8x1xf32>
    %1038 = vector.broadcast %1036 : vector<1x512xf32> to vector<8x512xf32>
    %1039 = vector.broadcast %1037 : vector<8x1xf32> to vector<8x512xf32>
    %1040 = arith.subf %1038, %1039 : vector<8x512xf32>
    %1041 = math.absf %1040 : vector<8x512xf32>
    %1042 = arith.addf %1035, %1041 : vector<8x512xf32>
    %1043 = vector.extract_strided_slice %1021 {offsets = [3, 0], sizes = [1, 512], strides = [1, 1]} : vector<8x512xf32> to vector<1x512xf32>
    %1044 = vector.extract_strided_slice %656 {offsets = [0, 51], sizes = [8, 1], strides = [1, 1]} : vector<8x72xf32> to vector<8x1xf32>
    %1045 = vector.broadcast %1043 : vector<1x512xf32> to vector<8x512xf32>
    %1046 = vector.broadcast %1044 : vector<8x1xf32> to vector<8x512xf32>
    %1047 = arith.subf %1045, %1046 : vector<8x512xf32>
    %1048 = math.absf %1047 : vector<8x512xf32>
    %1049 = arith.addf %1042, %1048 : vector<8x512xf32>
    %1050 = vector.extract_strided_slice %1021 {offsets = [4, 0], sizes = [1, 512], strides = [1, 1]} : vector<8x512xf32> to vector<1x512xf32>
    %1051 = vector.extract_strided_slice %656 {offsets = [0, 52], sizes = [8, 1], strides = [1, 1]} : vector<8x72xf32> to vector<8x1xf32>
    %1052 = vector.broadcast %1050 : vector<1x512xf32> to vector<8x512xf32>
    %1053 = vector.broadcast %1051 : vector<8x1xf32> to vector<8x512xf32>
    %1054 = arith.subf %1052, %1053 : vector<8x512xf32>
    %1055 = math.absf %1054 : vector<8x512xf32>
    %1056 = arith.addf %1049, %1055 : vector<8x512xf32>
    %1057 = vector.extract_strided_slice %1021 {offsets = [5, 0], sizes = [1, 512], strides = [1, 1]} : vector<8x512xf32> to vector<1x512xf32>
    %1058 = vector.extract_strided_slice %656 {offsets = [0, 53], sizes = [8, 1], strides = [1, 1]} : vector<8x72xf32> to vector<8x1xf32>
    %1059 = vector.broadcast %1057 : vector<1x512xf32> to vector<8x512xf32>
    %1060 = vector.broadcast %1058 : vector<8x1xf32> to vector<8x512xf32>
    %1061 = arith.subf %1059, %1060 : vector<8x512xf32>
    %1062 = math.absf %1061 : vector<8x512xf32>
    %1063 = arith.addf %1056, %1062 : vector<8x512xf32>
    %1064 = vector.extract_strided_slice %1021 {offsets = [6, 0], sizes = [1, 512], strides = [1, 1]} : vector<8x512xf32> to vector<1x512xf32>
    %1065 = vector.extract_strided_slice %656 {offsets = [0, 54], sizes = [8, 1], strides = [1, 1]} : vector<8x72xf32> to vector<8x1xf32>
    %1066 = vector.broadcast %1064 : vector<1x512xf32> to vector<8x512xf32>
    %1067 = vector.broadcast %1065 : vector<8x1xf32> to vector<8x512xf32>
    %1068 = arith.subf %1066, %1067 : vector<8x512xf32>
    %1069 = math.absf %1068 : vector<8x512xf32>
    %1070 = arith.addf %1063, %1069 : vector<8x512xf32>
    %1071 = vector.extract_strided_slice %1021 {offsets = [7, 0], sizes = [1, 512], strides = [1, 1]} : vector<8x512xf32> to vector<1x512xf32>
    %1072 = vector.extract_strided_slice %656 {offsets = [0, 55], sizes = [8, 1], strides = [1, 1]} : vector<8x72xf32> to vector<8x1xf32>
    %1073 = vector.broadcast %1071 : vector<1x512xf32> to vector<8x512xf32>
    %1074 = vector.broadcast %1072 : vector<8x1xf32> to vector<8x512xf32>
    %1075 = arith.subf %1073, %1074 : vector<8x512xf32>
    %1076 = math.absf %1075 : vector<8x512xf32>
    %1077 = arith.addf %1070, %1076 : vector<8x512xf32>
    %c0_155 = arith.constant 0 : index
    %c144_156 = arith.constant 144 : index
    %1078 = vector.load %arg11[%c0_155, %c144_156] : memref<8x768xf32, #tpu.memory_space<vmem>>, vector<8x512xf32>
    %c7_157 = arith.constant 7 : index
    %c0_158 = arith.constant 0 : index
    %1079 = vector.load %arg9[%c7_157, %c0_158] : memref<9x512xf32, #tpu.memory_space<vmem>>, vector<1x512xf32>
    %1080 = vector.broadcast %1079 : vector<1x512xf32> to vector<8x512xf32>
    %1081 = arith.mulf %1078, %1080 : vector<8x512xf32>
    %1082 = vector.extract_strided_slice %1081 {offsets = [0, 0], sizes = [1, 512], strides = [1, 1]} : vector<8x512xf32> to vector<1x512xf32>
    %1083 = vector.extract_strided_slice %656 {offsets = [0, 56], sizes = [8, 1], strides = [1, 1]} : vector<8x72xf32> to vector<8x1xf32>
    %1084 = vector.broadcast %1082 : vector<1x512xf32> to vector<8x512xf32>
    %1085 = vector.broadcast %1083 : vector<8x1xf32> to vector<8x512xf32>
    %1086 = arith.subf %1084, %1085 : vector<8x512xf32>
    %1087 = math.absf %1086 : vector<8x512xf32>
    %1088 = arith.addf %1077, %1087 : vector<8x512xf32>
    %1089 = vector.extract_strided_slice %1081 {offsets = [1, 0], sizes = [1, 512], strides = [1, 1]} : vector<8x512xf32> to vector<1x512xf32>
    %1090 = vector.extract_strided_slice %656 {offsets = [0, 57], sizes = [8, 1], strides = [1, 1]} : vector<8x72xf32> to vector<8x1xf32>
    %1091 = vector.broadcast %1089 : vector<1x512xf32> to vector<8x512xf32>
    %1092 = vector.broadcast %1090 : vector<8x1xf32> to vector<8x512xf32>
    %1093 = arith.subf %1091, %1092 : vector<8x512xf32>
    %1094 = math.absf %1093 : vector<8x512xf32>
    %1095 = arith.addf %1088, %1094 : vector<8x512xf32>
    %1096 = vector.extract_strided_slice %1081 {offsets = [2, 0], sizes = [1, 512], strides = [1, 1]} : vector<8x512xf32> to vector<1x512xf32>
    %1097 = vector.extract_strided_slice %656 {offsets = [0, 58], sizes = [8, 1], strides = [1, 1]} : vector<8x72xf32> to vector<8x1xf32>
    %1098 = vector.broadcast %1096 : vector<1x512xf32> to vector<8x512xf32>
    %1099 = vector.broadcast %1097 : vector<8x1xf32> to vector<8x512xf32>
    %1100 = arith.subf %1098, %1099 : vector<8x512xf32>
    %1101 = math.absf %1100 : vector<8x512xf32>
    %1102 = arith.addf %1095, %1101 : vector<8x512xf32>
    %1103 = vector.extract_strided_slice %1081 {offsets = [3, 0], sizes = [1, 512], strides = [1, 1]} : vector<8x512xf32> to vector<1x512xf32>
    %1104 = vector.extract_strided_slice %656 {offsets = [0, 59], sizes = [8, 1], strides = [1, 1]} : vector<8x72xf32> to vector<8x1xf32>
    %1105 = vector.broadcast %1103 : vector<1x512xf32> to vector<8x512xf32>
    %1106 = vector.broadcast %1104 : vector<8x1xf32> to vector<8x512xf32>
    %1107 = arith.subf %1105, %1106 : vector<8x512xf32>
    %1108 = math.absf %1107 : vector<8x512xf32>
    %1109 = arith.addf %1102, %1108 : vector<8x512xf32>
    %1110 = vector.extract_strided_slice %1081 {offsets = [4, 0], sizes = [1, 512], strides = [1, 1]} : vector<8x512xf32> to vector<1x512xf32>
    %1111 = vector.extract_strided_slice %656 {offsets = [0, 60], sizes = [8, 1], strides = [1, 1]} : vector<8x72xf32> to vector<8x1xf32>
    %1112 = vector.broadcast %1110 : vector<1x512xf32> to vector<8x512xf32>
    %1113 = vector.broadcast %1111 : vector<8x1xf32> to vector<8x512xf32>
    %1114 = arith.subf %1112, %1113 : vector<8x512xf32>
    %1115 = math.absf %1114 : vector<8x512xf32>
    %1116 = arith.addf %1109, %1115 : vector<8x512xf32>
    %1117 = vector.extract_strided_slice %1081 {offsets = [5, 0], sizes = [1, 512], strides = [1, 1]} : vector<8x512xf32> to vector<1x512xf32>
    %1118 = vector.extract_strided_slice %656 {offsets = [0, 61], sizes = [8, 1], strides = [1, 1]} : vector<8x72xf32> to vector<8x1xf32>
    %1119 = vector.broadcast %1117 : vector<1x512xf32> to vector<8x512xf32>
    %1120 = vector.broadcast %1118 : vector<8x1xf32> to vector<8x512xf32>
    %1121 = arith.subf %1119, %1120 : vector<8x512xf32>
    %1122 = math.absf %1121 : vector<8x512xf32>
    %1123 = arith.addf %1116, %1122 : vector<8x512xf32>
    %1124 = vector.extract_strided_slice %1081 {offsets = [6, 0], sizes = [1, 512], strides = [1, 1]} : vector<8x512xf32> to vector<1x512xf32>
    %1125 = vector.extract_strided_slice %656 {offsets = [0, 62], sizes = [8, 1], strides = [1, 1]} : vector<8x72xf32> to vector<8x1xf32>
    %1126 = vector.broadcast %1124 : vector<1x512xf32> to vector<8x512xf32>
    %1127 = vector.broadcast %1125 : vector<8x1xf32> to vector<8x512xf32>
    %1128 = arith.subf %1126, %1127 : vector<8x512xf32>
    %1129 = math.absf %1128 : vector<8x512xf32>
    %1130 = arith.addf %1123, %1129 : vector<8x512xf32>
    %1131 = vector.extract_strided_slice %1081 {offsets = [7, 0], sizes = [1, 512], strides = [1, 1]} : vector<8x512xf32> to vector<1x512xf32>
    %1132 = vector.extract_strided_slice %656 {offsets = [0, 63], sizes = [8, 1], strides = [1, 1]} : vector<8x72xf32> to vector<8x1xf32>
    %1133 = vector.broadcast %1131 : vector<1x512xf32> to vector<8x512xf32>
    %1134 = vector.broadcast %1132 : vector<8x1xf32> to vector<8x512xf32>
    %1135 = arith.subf %1133, %1134 : vector<8x512xf32>
    %1136 = math.absf %1135 : vector<8x512xf32>
    %1137 = arith.addf %1130, %1136 : vector<8x512xf32>
    %c0_159 = arith.constant 0 : index
    %c145_160 = arith.constant 145 : index
    %1138 = vector.load %arg11[%c0_159, %c145_160] : memref<8x768xf32, #tpu.memory_space<vmem>>, vector<8x512xf32>
    %c8_161 = arith.constant 8 : index
    %c0_162 = arith.constant 0 : index
    %1139 = vector.load %arg9[%c8_161, %c0_162] : memref<9x512xf32, #tpu.memory_space<vmem>>, vector<1x512xf32>
    %1140 = vector.broadcast %1139 : vector<1x512xf32> to vector<8x512xf32>
    %1141 = arith.mulf %1138, %1140 : vector<8x512xf32>
    %1142 = vector.extract_strided_slice %1141 {offsets = [0, 0], sizes = [1, 512], strides = [1, 1]} : vector<8x512xf32> to vector<1x512xf32>
    %1143 = vector.extract_strided_slice %656 {offsets = [0, 64], sizes = [8, 1], strides = [1, 1]} : vector<8x72xf32> to vector<8x1xf32>
    %1144 = vector.broadcast %1142 : vector<1x512xf32> to vector<8x512xf32>
    %1145 = vector.broadcast %1143 : vector<8x1xf32> to vector<8x512xf32>
    %1146 = arith.subf %1144, %1145 : vector<8x512xf32>
    %1147 = math.absf %1146 : vector<8x512xf32>
    %1148 = arith.addf %1137, %1147 : vector<8x512xf32>
    %1149 = vector.extract_strided_slice %1141 {offsets = [1, 0], sizes = [1, 512], strides = [1, 1]} : vector<8x512xf32> to vector<1x512xf32>
    %1150 = vector.extract_strided_slice %656 {offsets = [0, 65], sizes = [8, 1], strides = [1, 1]} : vector<8x72xf32> to vector<8x1xf32>
    %1151 = vector.broadcast %1149 : vector<1x512xf32> to vector<8x512xf32>
    %1152 = vector.broadcast %1150 : vector<8x1xf32> to vector<8x512xf32>
    %1153 = arith.subf %1151, %1152 : vector<8x512xf32>
    %1154 = math.absf %1153 : vector<8x512xf32>
    %1155 = arith.addf %1148, %1154 : vector<8x512xf32>
    %1156 = vector.extract_strided_slice %1141 {offsets = [2, 0], sizes = [1, 512], strides = [1, 1]} : vector<8x512xf32> to vector<1x512xf32>
    %1157 = vector.extract_strided_slice %656 {offsets = [0, 66], sizes = [8, 1], strides = [1, 1]} : vector<8x72xf32> to vector<8x1xf32>
    %1158 = vector.broadcast %1156 : vector<1x512xf32> to vector<8x512xf32>
    %1159 = vector.broadcast %1157 : vector<8x1xf32> to vector<8x512xf32>
    %1160 = arith.subf %1158, %1159 : vector<8x512xf32>
    %1161 = math.absf %1160 : vector<8x512xf32>
    %1162 = arith.addf %1155, %1161 : vector<8x512xf32>
    %1163 = vector.extract_strided_slice %1141 {offsets = [3, 0], sizes = [1, 512], strides = [1, 1]} : vector<8x512xf32> to vector<1x512xf32>
    %1164 = vector.extract_strided_slice %656 {offsets = [0, 67], sizes = [8, 1], strides = [1, 1]} : vector<8x72xf32> to vector<8x1xf32>
    %1165 = vector.broadcast %1163 : vector<1x512xf32> to vector<8x512xf32>
    %1166 = vector.broadcast %1164 : vector<8x1xf32> to vector<8x512xf32>
    %1167 = arith.subf %1165, %1166 : vector<8x512xf32>
    %1168 = math.absf %1167 : vector<8x512xf32>
    %1169 = arith.addf %1162, %1168 : vector<8x512xf32>
    %1170 = vector.extract_strided_slice %1141 {offsets = [4, 0], sizes = [1, 512], strides = [1, 1]} : vector<8x512xf32> to vector<1x512xf32>
    %1171 = vector.extract_strided_slice %656 {offsets = [0, 68], sizes = [8, 1], strides = [1, 1]} : vector<8x72xf32> to vector<8x1xf32>
    %1172 = vector.broadcast %1170 : vector<1x512xf32> to vector<8x512xf32>
    %1173 = vector.broadcast %1171 : vector<8x1xf32> to vector<8x512xf32>
    %1174 = arith.subf %1172, %1173 : vector<8x512xf32>
    %1175 = math.absf %1174 : vector<8x512xf32>
    %1176 = arith.addf %1169, %1175 : vector<8x512xf32>
    %1177 = vector.extract_strided_slice %1141 {offsets = [5, 0], sizes = [1, 512], strides = [1, 1]} : vector<8x512xf32> to vector<1x512xf32>
    %1178 = vector.extract_strided_slice %656 {offsets = [0, 69], sizes = [8, 1], strides = [1, 1]} : vector<8x72xf32> to vector<8x1xf32>
    %1179 = vector.broadcast %1177 : vector<1x512xf32> to vector<8x512xf32>
    %1180 = vector.broadcast %1178 : vector<8x1xf32> to vector<8x512xf32>
    %1181 = arith.subf %1179, %1180 : vector<8x512xf32>
    %1182 = math.absf %1181 : vector<8x512xf32>
    %1183 = arith.addf %1176, %1182 : vector<8x512xf32>
    %1184 = vector.extract_strided_slice %1141 {offsets = [6, 0], sizes = [1, 512], strides = [1, 1]} : vector<8x512xf32> to vector<1x512xf32>
    %1185 = vector.extract_strided_slice %656 {offsets = [0, 70], sizes = [8, 1], strides = [1, 1]} : vector<8x72xf32> to vector<8x1xf32>
    %1186 = vector.broadcast %1184 : vector<1x512xf32> to vector<8x512xf32>
    %1187 = vector.broadcast %1185 : vector<8x1xf32> to vector<8x512xf32>
    %1188 = arith.subf %1186, %1187 : vector<8x512xf32>
    %1189 = math.absf %1188 : vector<8x512xf32>
    %1190 = arith.addf %1183, %1189 : vector<8x512xf32>
    %1191 = vector.extract_strided_slice %1141 {offsets = [7, 0], sizes = [1, 512], strides = [1, 1]} : vector<8x512xf32> to vector<1x512xf32>
    %1192 = vector.extract_strided_slice %656 {offsets = [0, 71], sizes = [8, 1], strides = [1, 1]} : vector<8x72xf32> to vector<8x1xf32>
    %1193 = vector.broadcast %1191 : vector<1x512xf32> to vector<8x512xf32>
    %1194 = vector.broadcast %1192 : vector<8x1xf32> to vector<8x512xf32>
    %1195 = arith.subf %1193, %1194 : vector<8x512xf32>
    %1196 = math.absf %1195 : vector<8x512xf32>
    %1197 = arith.addf %1190, %1196 : vector<8x512xf32>
    %cst_163 = arith.constant 0.000000e+00 : f32
    %1198 = vector.broadcast %cst_163 : f32 to vector<8x512xf32>
    %1199 = arith.subf %1198, %1197 : vector<8x512xf32>
    %cst_164 = arith.constant dense<0.000000e+00> : vector<8xf32>
    %1200 = vector.multi_reduction <add>, %1199, %cst_164 [1] : vector<8x512xf32> to vector<8xf32>
    %1201 = vector.shape_cast %1200 : vector<8xf32> to vector<8x1xf32>
    %cst_165 = arith.constant 5.120000e+02 : f32
    %1202 = vector.broadcast %cst_165 : f32 to vector<8x1xf32>
    %1203 = arith.divf %1201, %1202 : vector<8x1xf32>
    %1204 = vector.broadcast %1203 : vector<8x1xf32> to vector<8x512xf32>
    %1205 = arith.subf %1199, %1204 : vector<8x512xf32>
    %1206 = arith.mulf %1205, %1205 : vector<8x512xf32>
    %cst_166 = arith.constant dense<0.000000e+00> : vector<8xf32>
    %1207 = vector.multi_reduction <add>, %1206, %cst_166 [1] : vector<8x512xf32> to vector<8xf32>
    %1208 = vector.shape_cast %1207 : vector<8xf32> to vector<8x1xf32>
    %cst_167 = arith.constant 5.120000e+02 : f32
    %1209 = vector.broadcast %cst_167 : f32 to vector<8x1xf32>
    %1210 = arith.divf %1208, %1209 : vector<8x1xf32>
    %1211 = vector.broadcast %1203 : vector<8x1xf32> to vector<8x512xf32>
    %1212 = arith.subf %1199, %1211 : vector<8x512xf32>
    %cst_168 = arith.constant 9.99999974E-6 : f32
    %1213 = vector.broadcast %cst_168 : f32 to vector<8x1xf32>
    %1214 = arith.addf %1210, %1213 : vector<8x1xf32>
    %1215 = math.rsqrt %1214 : vector<8x1xf32>
    %1216 = vector.broadcast %1215 : vector<8x1xf32> to vector<8x512xf32>
    %1217 = arith.mulf %1212, %1216 : vector<8x512xf32>
    %c0_169 = arith.constant 0 : index
    %c0_170 = arith.constant 0 : index
    %1218 = vector.load %arg7[%c0_169, %c0_170] : memref<8x1xf32, #tpu.memory_space<vmem>>, vector<8x1xf32>
    %1219 = vector.broadcast %1218 : vector<8x1xf32> to vector<8x512xf32>
    %1220 = arith.mulf %1217, %1219 : vector<8x512xf32>
    %c0_171 = arith.constant 0 : index
    %c0_172 = arith.constant 0 : index
    %1221 = vector.load %arg8[%c0_171, %c0_172] : memref<8x1xf32, #tpu.memory_space<vmem>>, vector<8x1xf32>
    %1222 = vector.broadcast %1221 : vector<8x1xf32> to vector<8x512xf32>
    %1223 = arith.addf %1220, %1222 : vector<8x512xf32>
    %1224 = arith.addf %1223, %614 : vector<8x512xf32>
    %cst_173 = arith.constant 0.000000e+00 : f32
    %1225 = vector.broadcast %cst_173 : f32 to vector<8x512xf32>
    %1226 = arith.maximumf %1224, %1225 : vector<8x512xf32>
    %c0_174 = arith.constant 0 : index
    %c0_175 = arith.constant 0 : index
    %1227 = vector.load %arg10[%c0_174, %c0_175] : memref<8x512xf32, #tpu.memory_space<vmem>>, vector<8x512xf32>
    tpu.vector_store %arg10[%c0_174, %c0_175], %1226 {strides = array<i32>} : memref<8x512xf32, #tpu.memory_space<vmem>>, vector<8x512xf32>,
    return
  }
}

</mosaic_0001>

<llo_original>
// kernel: basic_block_forward.1
$region0: #{basic_block_forward.1}
  #allocation0 [shape = 'u32[]', space=smem, size = 0x4, offset = 0x4, fixed_abs, tag = 'smem constant byte address 0x4 - core index']
  #allocation1 [shape = 'u32[72,128]{1,0:T(1,128)}', space=vmem, size = 0x9000, scoped, tag = 'internal scratch']
  #allocation2 [shape = 'f32[8,768]{1,0:T(8,128)}', space=vmem, size = 0x6000, scoped, tag = 'scratch operand']
  %s0 = inlined_call_operand.vmem [shape: f32[8,512], index: 0, kind: input, shape index: {}]
  %s1 = inlined_call_operand.vmem [shape: f32[8,72], index: 1, kind: input, shape index: {}]
  %s2 = inlined_call_operand.vmem [shape: f32[8,72], index: 2, kind: input, shape index: {}]
  %s3 = inlined_call_operand.vmem [shape: f32[8,1], index: 3, kind: input, shape index: {}]
  %s4 = inlined_call_operand.vmem [shape: f32[8,1], index: 4, kind: input, shape index: {}]
  %s5 = inlined_call_operand.vmem [shape: f32[8,72], index: 5, kind: input, shape index: {}]
  %s6 = inlined_call_operand.vmem [shape: f32[8,72], index: 6, kind: input, shape index: {}]
  %s7 = inlined_call_operand.vmem [shape: f32[8,1], index: 7, kind: input, shape index: {}]
  %s8 = inlined_call_operand.vmem [shape: f32[8,1], index: 8, kind: input, shape index: {}]
  %s9 = inlined_call_operand.vmem [shape: f32[9,512], index: 9, kind: input, shape index: {}]
  %s10 = inlined_call_operand.vmem [shape: f32[8,512], index: 10, kind: output, shape index: {}]
  %s11 = sld [smem:[#allocation0]]
  $region50: #{basic_block_forward.1} parent=0
    _
  %s13 = ssub.s32 1, %s11
  %s14 = scalar_select 0, %s13, %s11
  // Predicated region
  $region2: #{basic_block_forward.1} parent=0 // pred_check
    _
  $region3: #{basic_block_forward.1} parent=0 // pred_check_branch
    %16 = sbr.rel (0) target = $region5
  $region4: #{basic_block_forward.1} parent=0 // pred_region
    _
  $region5: #{basic_block_forward.1} parent=0 // pred_fallthru
    _
  // Predicated region
  $region6: #{basic_block_forward.1} parent=0 // pred_check
    _
  $region7: #{basic_block_forward.1} parent=0 // pred_check_branch
    %18 = sbr.rel (0) target = $region9
  $region8: #{basic_block_forward.1} parent=0 // pred_region
    _
  $region9: #{basic_block_forward.1} parent=0 // pred_fallthru
    _
  // Predicated region
  $region10: #{basic_block_forward.1} parent=0 // pred_check
    _
  $region11: #{basic_block_forward.1} parent=0 // pred_check_branch
    %20 = sbr.rel (0) target = $region13
  $region12: #{basic_block_forward.1} parent=0 // pred_region
    _
  $region13: #{basic_block_forward.1} parent=0 // pred_fallthru
    _
  // Predicated region
  $region14: #{basic_block_forward.1} parent=0 // pred_check
    _
  $region15: #{basic_block_forward.1} parent=0 // pred_check_branch
    %22 = sbr.rel (0) target = $region17
  $region16: #{basic_block_forward.1} parent=0 // pred_region
    _
  $region17: #{basic_block_forward.1} parent=0 // pred_fallthru
    _
  // Predicated region
  $region18: #{basic_block_forward.1} parent=0 // pred_check
    _
  $region19: #{basic_block_forward.1} parent=0 // pred_check_branch
    %24 = sbr.rel (0) target = $region21
  $region20: #{basic_block_forward.1} parent=0 // pred_region
    _
  $region21: #{basic_block_forward.1} parent=0 // pred_fallthru
    _
  // Predicated region
  $region22: #{basic_block_forward.1} parent=0 // pred_check
    _
  $region23: #{basic_block_forward.1} parent=0 // pred_check_branch
    %26 = sbr.rel (0) target = $region25
  $region24: #{basic_block_forward.1} parent=0 // pred_region
    _
  $region25: #{basic_block_forward.1} parent=0 // pred_fallthru
    _
  // Predicated region
  $region26: #{basic_block_forward.1} parent=0 // pred_check
    _
  $region27: #{basic_block_forward.1} parent=0 // pred_check_branch
    %28 = sbr.rel (0) target = $region29
  $region28: #{basic_block_forward.1} parent=0 // pred_region
    _
  $region29: #{basic_block_forward.1} parent=0 // pred_fallthru
    _
  // Predicated region
  $region30: #{basic_block_forward.1} parent=0 // pred_check
    _
  $region31: #{basic_block_forward.1} parent=0 // pred_check_branch
    %30 = sbr.rel (0) target = $region33
  $region32: #{basic_block_forward.1} parent=0 // pred_region
    _
  $region33: #{basic_block_forward.1} parent=0 // pred_fallthru
    _
  // Predicated region
  $region34: #{basic_block_forward.1} parent=0 // pred_check
    _
  $region35: #{basic_block_forward.1} parent=0 // pred_check_branch
    %32 = sbr.rel (0) target = $region37
  $region36: #{basic_block_forward.1} parent=0 // pred_region
    _
  $region37: #{basic_block_forward.1} parent=0 // pred_fallthru
    _
  // Predicated region
  $region38: #{basic_block_forward.1} parent=0 // pred_check
    _
  $region39: #{basic_block_forward.1} parent=0 // pred_check_branch
    %34 = sbr.rel (0) target = $region41
  $region40: #{basic_block_forward.1} parent=0 // pred_region
    _
  $region41: #{basic_block_forward.1} parent=0 // pred_fallthru
    _
  %35 = vst [vmem:[#allocation2] sm:$0xff] 0.0
  %36 = vst [vmem:[#allocation2 + $0x8] sm:$0xff] 0.0
  %37 = vst [vmem:[#allocation2 + $0x10] sm:$0xff] 0.0
  %38 = vst [vmem:[#allocation2 + $0x18] sm:$0xff] 0.0
  %39 = vst [vmem:[#allocation2 + $0x20] sm:$0xff] 0.0
  %40 = vst [vmem:[#allocation2 + $0x28] sm:$0xff] 0.0
  %v41 = vld [vmem:[%s0] sm:$0xff]
  %v42 = vld [vmem:[%s0 + $0x8] sm:$0xff]
  %v43 = vld [vmem:[%s0 + $0x10] sm:$0xff]
  %v44 = vld [vmem:[%s0 + $0x18] sm:$0xff]
  %45 = vst [vmem:[#allocation2 + $0x8] sm:$0xff] %v41
  %46 = vst [vmem:[#allocation2 + $0x10] sm:$0xff] %v42
  %47 = vst [vmem:[#allocation2 + $0x18] sm:$0xff] %v43
  %48 = vst [vmem:[#allocation2 + $0x20] sm:$0xff] %v44
  %v49 = vld [vmem:[#allocation2] sm:$0xff]
  %v50 = vld [vmem:[#allocation2 + $0x8] sm:$0xff]
  %v51 = vld [vmem:[#allocation2 + $0x10] sm:$0xff]
  %v52 = vld [vmem:[#allocation2 + $0x18] sm:$0xff]
  %v53 = vld [vmem:[#allocation2 + $0x20] sm:$0xff]
  %v54 = vld [vmem:[%s9] ss:$8 sm:$0xf]
  %v56 = vperm.slane %v54, 0
  %v57 = vperm.slane %v54, 1
  %v58 = vperm.slane %v54, 2
  %v59 = vperm.slane %v54, 3
  %60 = vrot.lane.b32.xlu0 %v56, 111
  %v61 = vpop.permute.xlu0 %60
  %62 = vrot.lane.b32.xlu0 %v57, 111
  %v63 = vpop.permute.xlu0 %62
  %64 = vrot.lane.b32.xlu0 %v58, 111
  %v65 = vpop.permute.xlu0 %64
  %66 = vrot.lane.b32.xlu0 %v59, 111
  %v67 = vpop.permute.xlu0 %66
  %vm68 = vcmask 908288
  %v69 = vsel %vm68, %v61, %v63
  %v70 = vsel %vm68, %v63, %v65
  %v71 = vsel %vm68, %v65, %v67
  %v77 = vmul.f32 %v49, %v61
  %v78 = vmul.f32 %v50, %v69
  %v79 = vmul.f32 %v51, %v70
  %v80 = vmul.f32 %v52, %v71
  %v81 = vmul.f32 %v53, %v67
  %s82 = scalar_lea.vmem %s9, 1
  %v83 = vld [vmem:[%s82] ss:$8 sm:$0xf]
  %v85 = vperm.slane %v83, 0
  %v86 = vperm.slane %v83, 1
  %v87 = vperm.slane %v83, 2
  %v88 = vperm.slane %v83, 3
  %89 = vrot.lane.b32.xlu0 %v85, 112
  %v90 = vpop.permute.xlu0 %89
  %91 = vrot.lane.b32.xlu0 %v86, 112
  %v92 = vpop.permute.xlu0 %91
  %93 = vrot.lane.b32.xlu0 %v87, 112
  %v94 = vpop.permute.xlu0 %93
  %95 = vrot.lane.b32.xlu0 %v88, 112
  %v96 = vpop.permute.xlu0 %95
  %vm97 = vcmask 916480
  %v98 = vsel %vm97, %v90, %v92
  %v99 = vsel %vm97, %v92, %v94
  %v100 = vsel %vm97, %v94, %v96
  %v106 = vmul.f32 %v49, %v90
  %v107 = vmul.f32 %v50, %v98
  %v108 = vmul.f32 %v51, %v99
  %v109 = vmul.f32 %v52, %v100
  %v110 = vmul.f32 %v53, %v96
  %s111 = scalar_lea.vmem %s9, 2
  %v112 = vld [vmem:[%s111] ss:$8 sm:$0xf]
  %v114 = vperm.slane %v112, 0
  %v115 = vperm.slane %v112, 1
  %v116 = vperm.slane %v112, 2
  %v117 = vperm.slane %v112, 3
  %118 = vrot.lane.b32.xlu0 %v114, 113
  %v119 = vpop.permute.xlu0 %118
  %120 = vrot.lane.b32.xlu0 %v115, 113
  %v121 = vpop.permute.xlu0 %120
  %122 = vrot.lane.b32.xlu0 %v116, 113
  %v123 = vpop.permute.xlu0 %122
  %124 = vrot.lane.b32.xlu0 %v117, 113
  %v125 = vpop.permute.xlu0 %124
  %vm126 = vcmask 924672
  %v127 = vsel %vm126, %v119, %v121
  %v128 = vsel %vm126, %v121, %v123
  %v129 = vsel %vm126, %v123, %v125
  %v135 = vmul.f32 %v49, %v119
  %v136 = vmul.f32 %v50, %v127
  %v137 = vmul.f32 %v51, %v128
  %v138 = vmul.f32 %v52, %v129
  %v139 = vmul.f32 %v53, %v125
  %s140 = scalar_lea.vmem %s9, 3
  %v141 = vld [vmem:[%s140] ss:$8 sm:$0xf]
  %v143 = vperm.slane %v141, 0
  %v144 = vperm.slane %v141, 1
  %v145 = vperm.slane %v141, 2
  %v146 = vperm.slane %v141, 3
  %147 = vrot.lane.b32.xlu0 %v143, 127
  %v148 = vpop.permute.xlu0 %147
  %149 = vrot.lane.b32.xlu0 %v144, 127
  %v150 = vpop.permute.xlu0 %149
  %151 = vrot.lane.b32.xlu0 %v145, 127
  %v152 = vpop.permute.xlu0 %151
  %153 = vrot.lane.b32.xlu0 %v146, 127
  %v154 = vpop.permute.xlu0 %153
  %vm155 = vcmask 1039360
  %v156 = vsel %vm155, %v148, %v150
  %v157 = vsel %vm155, %v150, %v152
  %v158 = vsel %vm155, %v152, %v154
  %v164 = vmul.f32 %v49, %v148
  %v165 = vmul.f32 %v50, %v156
  %v166 = vmul.f32 %v51, %v157
  %v167 = vmul.f32 %v52, %v158
  %v168 = vmul.f32 %v53, %v154
  %s169 = scalar_lea.vmem %s9, 4
  %v170 = vld [vmem:[%s169] ss:$8 sm:$0xf]
  %v172 = vperm.slane %v170, 0
  %v173 = vperm.slane %v170, 1
  %v174 = vperm.slane %v170, 2
  %v175 = vperm.slane %v170, 3
  %v180 = vmul.f32 %v50, %v172
  %v181 = vmul.f32 %v51, %v173
  %v182 = vmul.f32 %v52, %v174
  %v183 = vmul.f32 %v53, %v175
  %v184 = vld [vmem:[#allocation2 + $0x8] sm:$0xff]
  %v185 = vld [vmem:[#allocation2 + $0x10] sm:$0xff]
  %v186 = vld [vmem:[#allocation2 + $0x18] sm:$0xff]
  %v187 = vld [vmem:[#allocation2 + $0x20] sm:$0xff]
  %v188 = vld [vmem:[#allocation2 + $0x28] sm:$0xff]
  %s189 = scalar_lea.vmem %s9, 5
  %v190 = vld [vmem:[%s189] ss:$8 sm:$0xf]
  %v192 = vperm.slane %v190, 0
  %v193 = vperm.slane %v190, 1
  %v194 = vperm.slane %v190, 2
  %v195 = vperm.slane %v190, 3
  %196 = vrot.lane.b32.xlu0 %v192, 1
  %v197 = vpop.permute.xlu0 %196
  %198 = vrot.lane.b32.xlu0 %v193, 1
  %v199 = vpop.permute.xlu0 %198
  %200 = vrot.lane.b32.xlu0 %v194, 1
  %v201 = vpop.permute.xlu0 %200
  %202 = vrot.lane.b32.xlu0 %v195, 1
  %v203 = vpop.permute.xlu0 %202
  %vm204 = vcmask 7168
  %v205 = vsel %vm204, %v197, %v199
  %v206 = vsel %vm204, %v199, %v201
  %v207 = vsel %vm204, %v201, %v203
  %v213 = vmul.f32 %v184, %v197
  %v214 = vmul.f32 %v185, %v205
  %v215 = vmul.f32 %v186, %v206
  %v216 = vmul.f32 %v187, %v207
  %v217 = vmul.f32 %v188, %v203
  %s218 = scalar_lea.vmem %s9, 6
  %v219 = vld [vmem:[%s218] ss:$8 sm:$0xf]
  %v221 = vperm.slane %v219, 0
  %v222 = vperm.slane %v219, 1
  %v223 = vperm.slane %v219, 2
  %v224 = vperm.slane %v219, 3
  %225 = vrot.lane.b32.xlu0 %v221, 15
  %v226 = vpop.permute.xlu0 %225
  %227 = vrot.lane.b32.xlu0 %v222, 15
  %v228 = vpop.permute.xlu0 %227
  %229 = vrot.lane.b32.xlu0 %v223, 15
  %v230 = vpop.permute.xlu0 %229
  %231 = vrot.lane.b32.xlu0 %v224, 15
  %v232 = vpop.permute.xlu0 %231
  %vm233 = vcmask 121856
  %v234 = vsel %vm233, %v226, %v228
  %v235 = vsel %vm233, %v228, %v230
  %v236 = vsel %vm233, %v230, %v232
  %v242 = vmul.f32 %v184, %v226
  %v243 = vmul.f32 %v185, %v234
  %v244 = vmul.f32 %v186, %v235
  %v245 = vmul.f32 %v187, %v236
  %v246 = vmul.f32 %v188, %v232
  %s247 = scalar_lea.vmem %s9, 7
  %v248 = vld [vmem:[%s247] ss:$8 sm:$0xf]
  %v250 = vperm.slane %v248, 0
  %v251 = vperm.slane %v248, 1
  %v252 = vperm.slane %v248, 2
  %v253 = vperm.slane %v248, 3
  %254 = vrot.lane.b32.xlu0 %v250, 16
  %v255 = vpop.permute.xlu0 %254
  %256 = vrot.lane.b32.xlu0 %v251, 16
  %v257 = vpop.permute.xlu0 %256
  %258 = vrot.lane.b32.xlu0 %v252, 16
  %v259 = vpop.permute.xlu0 %258
  %260 = vrot.lane.b32.xlu0 %v253, 16
  %v261 = vpop.permute.xlu0 %260
  %vm262 = vcmask 130048
  %v263 = vsel %vm262, %v255, %v257
  %v264 = vsel %vm262, %v257, %v259
  %v265 = vsel %vm262, %v259, %v261
  %v271 = vmul.f32 %v184, %v255
  %v272 = vmul.f32 %v185, %v263
  %v273 = vmul.f32 %v186, %v264
  %v274 = vmul.f32 %v187, %v265
  %v275 = vmul.f32 %v188, %v261
  %s276 = scalar_lea.vmem %s9, 32
  %v277 = vld [vmem:[%s276] ss:$8 sm:$0xf]
  %v279 = vperm.slane %v277, 0
  %v280 = vperm.slane %v277, 1
  %v281 = vperm.slane %v277, 2
  %v282 = vperm.slane %v277, 3
  %283 = vrot.lane.b32.xlu0 %v279, 17
  %v284 = vpop.permute.xlu0 %283
  %285 = vrot.lane.b32.xlu0 %v280, 17
  %v286 = vpop.permute.xlu0 %285
  %287 = vrot.lane.b32.xlu0 %v281, 17
  %v288 = vpop.permute.xlu0 %287
  %289 = vrot.lane.b32.xlu0 %v282, 17
  %v290 = vpop.permute.xlu0 %289
  %vm291 = vcmask 138240
  %v292 = vsel %vm291, %v284, %v286
  %v293 = vsel %vm291, %v286, %v288
  %v294 = vsel %vm291, %v288, %v290
  %v300 = vmul.f32 %v184, %v284
  %v301 = vmul.f32 %v185, %v292
  %v302 = vmul.f32 %v186, %v293
  %v303 = vmul.f32 %v187, %v294
  %v304 = vmul.f32 %v188, %v290
  %310 = vrot.lane.b32.xlu0 %v106, 127
  %v311 = vpop.permute.xlu0 %310
  %312 = vrot.lane.b32.xlu0 %v107, 127
  %v313 = vpop.permute.xlu0 %312
  %314 = vrot.lane.b32.xlu0 %v108, 127
  %v315 = vpop.permute.xlu0 %314
  %316 = vrot.lane.b32.xlu0 %v109, 127
  %v317 = vpop.permute.xlu0 %316
  %318 = vrot.lane.b32.xlu0 %v110, 127
  %v319 = vpop.permute.xlu0 %318
  %v320 = vsel %vm155, %v311, %v313
  %v321 = vsel %vm155, %v313, %v315
  %v322 = vsel %vm155, %v315, %v317
  %v323 = vsel %vm155, %v317, %v319
  %329 = vrot.lane.b32.xlu0 %v135, 126
  %v330 = vpop.permute.xlu0 %329
  %331 = vrot.lane.b32.xlu0 %v136, 126
  %v332 = vpop.permute.xlu0 %331
  %333 = vrot.lane.b32.xlu0 %v137, 126
  %v334 = vpop.permute.xlu0 %333
  %335 = vrot.lane.b32.xlu0 %v138, 126
  %v336 = vpop.permute.xlu0 %335
  %337 = vrot.lane.b32.xlu0 %v139, 126
  %v338 = vpop.permute.xlu0 %337
  %vm339 = vcmask 1031168
  %v340 = vsel %vm339, %v330, %v332
  %v341 = vsel %vm339, %v332, %v334
  %v342 = vsel %vm339, %v334, %v336
  %v343 = vsel %vm339, %v336, %v338
  %349 = vrot.lane.b32.xlu0 %v164, 112
  %v350 = vpop.permute.xlu0 %349
  %351 = vrot.lane.b32.xlu0 %v165, 112
  %v352 = vpop.permute.xlu0 %351
  %353 = vrot.lane.b32.xlu0 %v166, 112
  %v354 = vpop.permute.xlu0 %353
  %355 = vrot.lane.b32.xlu0 %v167, 112
  %v356 = vpop.permute.xlu0 %355
  %357 = vrot.lane.b32.xlu0 %v168, 112
  %v358 = vpop.permute.xlu0 %357
  %v359 = vsel %vm97, %v350, %v352
  %v360 = vsel %vm97, %v352, %v354
  %v361 = vsel %vm97, %v354, %v356
  %v362 = vsel %vm97, %v356, %v358
  %367 = vrot.lane.b32.xlu0 %v180, 111
  %v368 = vpop.permute.xlu0 %367
  %369 = vrot.lane.b32.xlu0 %v181, 111
  %v370 = vpop.permute.xlu0 %369
  %371 = vrot.lane.b32.xlu0 %v182, 111
  %v372 = vpop.permute.xlu0 %371
  %373 = vrot.lane.b32.xlu0 %v183, 111
  %v374 = vpop.permute.xlu0 %373
  %v375 = vsel %vm68, %v368, %v370
  %v376 = vsel %vm68, %v370, %v372
  %v377 = vsel %vm68, %v372, %v374
  %383 = vrot.lane.b32.xlu0 %v213, 110
  %v384 = vpop.permute.xlu0 %383
  %385 = vrot.lane.b32.xlu0 %v214, 110
  %v386 = vpop.permute.xlu0 %385
  %387 = vrot.lane.b32.xlu0 %v215, 110
  %v388 = vpop.permute.xlu0 %387
  %389 = vrot.lane.b32.xlu0 %v216, 110
  %v390 = vpop.permute.xlu0 %389
  %391 = vrot.lane.b32.xlu0 %v217, 110
  %v392 = vpop.permute.xlu0 %391
  %vm393 = vcmask 900096
  %v394 = vsel %vm393, %v384, %v386
  %v395 = vsel %vm393, %v386, %v388
  %v396 = vsel %vm393, %v388, %v390
  %v397 = vsel %vm393, %v390, %v392
  %403 = vrot.lane.b32.xlu0 %v242, 96
  %v404 = vpop.permute.xlu0 %403
  %405 = vrot.lane.b32.xlu0 %v243, 96
  %v406 = vpop.permute.xlu0 %405
  %407 = vrot.lane.b32.xlu0 %v244, 96
  %v408 = vpop.permute.xlu0 %407
  %409 = vrot.lane.b32.xlu0 %v245, 96
  %v410 = vpop.permute.xlu0 %409
  %411 = vrot.lane.b32.xlu0 %v246, 96
  %v412 = vpop.permute.xlu0 %411
  %vm413 = vcmask 785408
  %v414 = vsel %vm413, %v404, %v406
  %v415 = vsel %vm413, %v406, %v408
  %v416 = vsel %vm413, %v408, %v410
  %v417 = vsel %vm413, %v410, %v412
  %423 = vrot.lane.b32.xlu0 %v271, 95
  %v424 = vpop.permute.xlu0 %423
  %425 = vrot.lane.b32.xlu0 %v272, 95
  %v426 = vpop.permute.xlu0 %425
  %427 = vrot.lane.b32.xlu0 %v273, 95
  %v428 = vpop.permute.xlu0 %427
  %429 = vrot.lane.b32.xlu0 %v274, 95
  %v430 = vpop.permute.xlu0 %429
  %431 = vrot.lane.b32.xlu0 %v275, 95
  %v432 = vpop.permute.xlu0 %431
  %vm433 = vcmask 777216
  %v434 = vsel %vm433, %v424, %v426
  %v435 = vsel %vm433, %v426, %v428
  %v436 = vsel %vm433, %v428, %v430
  %v437 = vsel %vm433, %v430, %v432
  %443 = vrot.lane.b32.xlu0 %v300, 94
  %v444 = vpop.permute.xlu0 %443
  %445 = vrot.lane.b32.xlu0 %v301, 94
  %v446 = vpop.permute.xlu0 %445
  %447 = vrot.lane.b32.xlu0 %v302, 94
  %v448 = vpop.permute.xlu0 %447
  %449 = vrot.lane.b32.xlu0 %v303, 94
  %v450 = vpop.permute.xlu0 %449
  %451 = vrot.lane.b32.xlu0 %v304, 94
  %v452 = vpop.permute.xlu0 %451
  %vm453 = vcmask 769024
  %v454 = vsel %vm453, %v444, %v446
  %v455 = vsel %vm453, %v446, %v448
  %v456 = vsel %vm453, %v448, %v450
  %v457 = vsel %vm453, %v450, %v452
  %v458 = vld [vmem:[%s1] sm:$0xff]
  %464 = vrot.lane.b32.xlu0 %v77, 17
  %v465 = vpop.permute.xlu0 %464
  %466 = vrot.lane.b32.xlu0 %v78, 17
  %v467 = vpop.permute.xlu0 %466
  %468 = vrot.lane.b32.xlu0 %v79, 17
  %v469 = vpop.permute.xlu0 %468
  %470 = vrot.lane.b32.xlu0 %v80, 17
  %v471 = vpop.permute.xlu0 %470
  %472 = vrot.lane.b32.xlu0 %v81, 17
  %v473 = vpop.permute.xlu0 %472
  %474 = vrot.lane.b32.xlu0 %v320, 17
  %v475 = vpop.permute.xlu0 %474
  %476 = vrot.lane.b32.xlu0 %v321, 17
  %v477 = vpop.permute.xlu0 %476
  %478 = vrot.lane.b32.xlu0 %v322, 17
  %v479 = vpop.permute.xlu0 %478
  %480 = vrot.lane.b32.xlu0 %v323, 17
  %v481 = vpop.permute.xlu0 %480
  %482 = vrot.lane.b32.xlu0 %v319, 17
  %v483 = vpop.permute.xlu0 %482
  %484 = vrot.lane.b32.xlu0 %v340, 17
  %v485 = vpop.permute.xlu0 %484
  %486 = vrot.lane.b32.xlu0 %v341, 17
  %v487 = vpop.permute.xlu0 %486
  %488 = vrot.lane.b32.xlu0 %v342, 17
  %v489 = vpop.permute.xlu0 %488
  %490 = vrot.lane.b32.xlu0 %v343, 17
  %v491 = vpop.permute.xlu0 %490
  %492 = vrot.lane.b32.xlu0 %v338, 17
  %v493 = vpop.permute.xlu0 %492
  %494 = vrot.lane.b32.xlu0 %v359, 17
  %v495 = vpop.permute.xlu0 %494
  %496 = vrot.lane.b32.xlu0 %v360, 17
  %v497 = vpop.permute.xlu0 %496
  %498 = vrot.lane.b32.xlu0 %v361, 17
  %v499 = vpop.permute.xlu0 %498
  %500 = vrot.lane.b32.xlu0 %v362, 17
  %v501 = vpop.permute.xlu0 %500
  %502 = vrot.lane.b32.xlu0 %v358, 17
  %v503 = vpop.permute.xlu0 %502
  %504 = vrot.lane.b32.xlu0 %v368, 17
  %v505 = vpop.permute.xlu0 %504
  %506 = vrot.lane.b32.xlu0 %v375, 17
  %v507 = vpop.permute.xlu0 %506
  %508 = vrot.lane.b32.xlu0 %v376, 17
  %v509 = vpop.permute.xlu0 %508
  %510 = vrot.lane.b32.xlu0 %v377, 17
  %v511 = vpop.permute.xlu0 %510
  %512 = vrot.lane.b32.xlu0 %v374, 17
  %v513 = vpop.permute.xlu0 %512
  %514 = vrot.lane.b32.xlu0 %v384, 17
  %v515 = vpop.permute.xlu0 %514
  %516 = vrot.lane.b32.xlu0 %v394, 17
  %v517 = vpop.permute.xlu0 %516
  %518 = vrot.lane.b32.xlu0 %v395, 17
  %v519 = vpop.permute.xlu0 %518
  %520 = vrot.lane.b32.xlu0 %v396, 17
  %v521 = vpop.permute.xlu0 %520
  %522 = vrot.lane.b32.xlu0 %v397, 17
  %v523 = vpop.permute.xlu0 %522
  %524 = vrot.lane.b32.xlu0 %v404, 17
  %v525 = vpop.permute.xlu0 %524
  %526 = vrot.lane.b32.xlu0 %v414, 17
  %v527 = vpop.permute.xlu0 %526
  %528 = vrot.lane.b32.xlu0 %v415, 17
  %v529 = vpop.permute.xlu0 %528
  %530 = vrot.lane.b32.xlu0 %v416, 17
  %v531 = vpop.permute.xlu0 %530
  %532 = vrot.lane.b32.xlu0 %v417, 17
  %v533 = vpop.permute.xlu0 %532
  %534 = vrot.lane.b32.xlu0 %v424, 17
  %v535 = vpop.permute.xlu0 %534
  %536 = vrot.lane.b32.xlu0 %v434, 17
  %v537 = vpop.permute.xlu0 %536
  %538 = vrot.lane.b32.xlu0 %v435, 17
  %v539 = vpop.permute.xlu0 %538
  %540 = vrot.lane.b32.xlu0 %v436, 17
  %v541 = vpop.permute.xlu0 %540
  %542 = vrot.lane.b32.xlu0 %v437, 17
  %v543 = vpop.permute.xlu0 %542
  %544 = vrot.lane.b32.xlu0 %v444, 17
  %v545 = vpop.permute.xlu0 %544
  %546 = vrot.lane.b32.xlu0 %v454, 17
  %v547 = vpop.permute.xlu0 %546
  %548 = vrot.lane.b32.xlu0 %v455, 17
  %v549 = vpop.permute.xlu0 %548
  %550 = vrot.lane.b32.xlu0 %v456, 17
  %v551 = vpop.permute.xlu0 %550
  %552 = vrot.lane.b32.xlu0 %v457, 17
  %v553 = vpop.permute.xlu0 %552
  %v554 = vsel %vm291, %v465, %v467
  %v555 = vsel %vm291, %v467, %v469
  %v556 = vsel %vm291, %v469, %v471
  %v557 = vsel %vm291, %v471, %v473
  %v558 = vsel %vm291, %v475, %v477
  %v559 = vsel %vm291, %v477, %v479
  %v560 = vsel %vm291, %v479, %v481
  %v561 = vsel %vm291, %v481, %v483
  %v562 = vsel %vm291, %v485, %v487
  %v563 = vsel %vm291, %v487, %v489
  %v564 = vsel %vm291, %v489, %v491
  %v565 = vsel %vm291, %v491, %v493
  %v566 = vsel %vm291, %v495, %v497
  %v567 = vsel %vm291, %v497, %v499
  %v568 = vsel %vm291, %v499, %v501
  %v569 = vsel %vm291, %v501, %v503
  %v570 = vsel %vm291, %v505, %v507
  %v571 = vsel %vm291, %v507, %v509
  %v572 = vsel %vm291, %v509, %v511
  %v573 = vsel %vm291, %v511, %v513
  %v574 = vsel %vm291, %v515, %v517
  %v575 = vsel %vm291, %v517, %v519
  %v576 = vsel %vm291, %v519, %v521
  %v577 = vsel %vm291, %v521, %v523
  %v578 = vsel %vm291, %v525, %v527
  %v579 = vsel %vm291, %v527, %v529
  %v580 = vsel %vm291, %v529, %v531
  %v581 = vsel %vm291, %v531, %v533
  %v582 = vsel %vm291, %v535, %v537
  %v583 = vsel %vm291, %v537, %v539
  %v584 = vsel %vm291, %v539, %v541
  %v585 = vsel %vm291, %v541, %v543
  %v586 = vsel %vm291, %v545, %v547
  %v587 = vsel %vm291, %v547, %v549
  %v588 = vsel %vm291, %v549, %v551
  %v589 = vsel %vm291, %v551, %v553
  %vm626 = vcmask 588800
  %v628 = vsel %vm626, %v458, 0
  %630 = vmatpush.msra.mxu0 0.0
  %631 = vmatpush.msra.mxu0 0.0
  %632 = vmatpush.msra.mxu0 0.0
  %633 = vmatpush.msra.mxu0 0.0
  %634 = vmatpush.msra.mxu0 0.0
  %635 = vmatpush.msra.mxu0 0.0
  %636 = vmatpush.msra.mxu0 0.0
  %637 = vmatpush.msra.mxu0 %v586
  %638 = vmatpush.msra.mxu0 %v582
  %639 = vmatpush.msra.mxu0 %v578
  %640 = vmatpush.msra.mxu0 %v574
  %641 = vmatpush.msra.mxu0 %v570
  %642 = vmatpush.msra.mxu0 %v566
  %643 = vmatpush.msra.mxu0 %v562
  %644 = vmatpush.msra.mxu0 %v558
  %645 = vmatpush.msra.mxu0 %v554
  %646 = vmatmul.f32.gmra.mxu0 %v628
  %v647 = vpop.f32.mrf.mxu0
  %v648 = vadd.f32 0.0, %v647
  %649 = vdwg.mxu0
  %650 = vmatpush.msra.mxu0 0.0
  %651 = vmatpush.msra.mxu0 0.0
  %652 = vmatpush.msra.mxu0 0.0
  %653 = vmatpush.msra.mxu0 0.0
  %654 = vmatpush.msra.mxu0 0.0
  %655 = vmatpush.msra.mxu0 0.0
  %656 = vmatpush.msra.mxu0 0.0
  %657 = vmatpush.msra.mxu0 %v587
  %658 = vmatpush.msra.mxu0 %v583
  %659 = vmatpush.msra.mxu0 %v579
  %660 = vmatpush.msra.mxu0 %v575
  %661 = vmatpush.msra.mxu0 %v571
  %662 = vmatpush.msra.mxu0 %v567
  %663 = vmatpush.msra.mxu0 %v563
  %664 = vmatpush.msra.mxu0 %v559
  %665 = vmatpush.msra.mxu0 %v555
  %666 = vmatmul.f32.gmra.mxu0 %v628
  %v667 = vpop.f32.mrf.mxu0
  %v668 = vadd.f32 0.0, %v667
  %669 = vdwg.mxu0
  %670 = vmatpush.msra.mxu0 0.0
  %671 = vmatpush.msra.mxu0 0.0
  %672 = vmatpush.msra.mxu0 0.0
  %673 = vmatpush.msra.mxu0 0.0
  %674 = vmatpush.msra.mxu0 0.0
  %675 = vmatpush.msra.mxu0 0.0
  %676 = vmatpush.msra.mxu0 0.0
  %677 = vmatpush.msra.mxu0 %v588
  %678 = vmatpush.msra.mxu0 %v584
  %679 = vmatpush.msra.mxu0 %v580
  %680 = vmatpush.msra.mxu0 %v576
  %681 = vmatpush.msra.mxu0 %v572
  %682 = vmatpush.msra.mxu0 %v568
  %683 = vmatpush.msra.mxu0 %v564
  %684 = vmatpush.msra.mxu0 %v560
  %685 = vmatpush.msra.mxu0 %v556
  %686 = vmatmul.f32.gmra.mxu0 %v628
  %v687 = vpop.f32.mrf.mxu0
  %v688 = vadd.f32 0.0, %v687
  %689 = vdwg.mxu0
  %690 = vmatpush.msra.mxu0 0.0
  %691 = vmatpush.msra.mxu0 0.0
  %692 = vmatpush.msra.mxu0 0.0
  %693 = vmatpush.msra.mxu0 0.0
  %694 = vmatpush.msra.mxu0 0.0
  %695 = vmatpush.msra.mxu0 0.0
  %696 = vmatpush.msra.mxu0 0.0
  %697 = vmatpush.msra.mxu0 %v589
  %698 = vmatpush.msra.mxu0 %v585
  %699 = vmatpush.msra.mxu0 %v581
  %700 = vmatpush.msra.mxu0 %v577
  %701 = vmatpush.msra.mxu0 %v573
  %702 = vmatpush.msra.mxu0 %v569
  %703 = vmatpush.msra.mxu0 %v565
  %704 = vmatpush.msra.mxu0 %v561
  %705 = vmatpush.msra.mxu0 %v557
  %706 = vmatmul.f32.gmra.mxu0 %v628
  %v707 = vpop.f32.mrf.mxu0
  %v708 = vadd.f32 0.0, %v707
  %709 = vdwg.mxu0
  %710 = vst [vmem:[#allocation2 + $0x8] sm:$0xff] %v648
  %711 = vst [vmem:[#allocation2 + $0x10] sm:$0xff] %v668
  %712 = vst [vmem:[#allocation2 + $0x18] sm:$0xff] %v688
  %713 = vst [vmem:[#allocation2 + $0x20] sm:$0xff] %v708
  %v714 = vld [vmem:[%s2] sm:$0xff]
  %v715 = vld [vmem:[#allocation2] sm:$0xff]
  %v716 = vld [vmem:[#allocation2 + $0x8] sm:$0xff]
  %v717 = vld [vmem:[#allocation2 + $0x10] sm:$0xff]
  %v718 = vld [vmem:[#allocation2 + $0x18] sm:$0xff]
  %v719 = vld [vmem:[#allocation2 + $0x20] sm:$0xff]
  %v720 = vld [vmem:[%s9] ss:$8 sm:$0xf]
  %v722 = vperm.slane %v720, 0
  %v723 = vperm.slane %v720, 1
  %v724 = vperm.slane %v720, 2
  %v725 = vperm.slane %v720, 3
  %726 = vrot.lane.b32.xlu0 %v722, 111
  %v727 = vpop.permute.xlu0 %726
  %728 = vrot.lane.b32.xlu0 %v723, 111
  %v729 = vpop.permute.xlu0 %728
  %730 = vrot.lane.b32.xlu0 %v724, 111
  %v731 = vpop.permute.xlu0 %730
  %732 = vrot.lane.b32.xlu0 %v725, 111
  %v733 = vpop.permute.xlu0 %732
  %v734 = vsel %vm68, %v727, %v729
  %v735 = vsel %vm68, %v729, %v731
  %v736 = vsel %vm68, %v731, %v733
  %v742 = vmul.f32 %v715, %v727
  %v743 = vmul.f32 %v716, %v734
  %v744 = vmul.f32 %v717, %v735
  %v745 = vmul.f32 %v718, %v736
  %v746 = vmul.f32 %v719, %v733
  %v747 = vperm.slane %v742, 0
  %v748 = vperm.slane %v743, 0
  %v749 = vperm.slane %v744, 0
  %v750 = vperm.slane %v745, 0
  %v751 = vperm.slane %v746, 0
  %753 = vset.pattern.permute.xlu0 0
  %754 = vperm.xlu0 %753, %v714
  %v755 = vpop.permute.xlu0 %754
  %v757 = vsub.f32 %v747, %v755
  %v758 = vsub.f32 %v748, %v755
  %v759 = vsub.f32 %v749, %v755
  %v760 = vsub.f32 %v750, %v755
  %v761 = vsub.f32 %v751, %v755
  %v762 = vand.u32 2147483647, %v757
  %v763 = vand.u32 2147483647, %v758
  %v764 = vand.u32 2147483647, %v759
  %v765 = vand.u32 2147483647, %v760
  %v766 = vand.u32 2147483647, %v761
  %v767 = vadd.f32 %v762, 0.0
  %v768 = vadd.f32 %v763, 0.0
  %v769 = vadd.f32 %v764, 0.0
  %v770 = vadd.f32 %v765, 0.0
  %v771 = vadd.f32 %v766, 0.0
  %v772 = vperm.slane %v742, 1
  %v773 = vperm.slane %v743, 1
  %v774 = vperm.slane %v744, 1
  %v775 = vperm.slane %v745, 1
  %v776 = vperm.slane %v746, 1
  %777 = vset.pattern.permute.xlu0 1
  %778 = vperm.xlu0 %777, %v714
  %v779 = vpop.permute.xlu0 %778
  %v781 = vsub.f32 %v772, %v779
  %v782 = vsub.f32 %v773, %v779
  %v783 = vsub.f32 %v774, %v779
  %v784 = vsub.f32 %v775, %v779
  %v785 = vsub.f32 %v776, %v779
  %v786 = vand.u32 2147483647, %v781
  %v787 = vand.u32 2147483647, %v782
  %v788 = vand.u32 2147483647, %v783
  %v789 = vand.u32 2147483647, %v784
  %v790 = vand.u32 2147483647, %v785
  %v791 = vadd.f32 %v767, %v786
  %v792 = vadd.f32 %v768, %v787
  %v793 = vadd.f32 %v769, %v788
  %v794 = vadd.f32 %v770, %v789
  %v795 = vadd.f32 %v771, %v790
  %v796 = vperm.slane %v742, 2
  %v797 = vperm.slane %v743, 2
  %v798 = vperm.slane %v744, 2
  %v799 = vperm.slane %v745, 2
  %v800 = vperm.slane %v746, 2
  %801 = vset.pattern.permute.xlu0 2
  %802 = vperm.xlu0 %801, %v714
  %v803 = vpop.permute.xlu0 %802
  %v805 = vsub.f32 %v796, %v803
  %v806 = vsub.f32 %v797, %v803
  %v807 = vsub.f32 %v798, %v803
  %v808 = vsub.f32 %v799, %v803
  %v809 = vsub.f32 %v800, %v803
  %v810 = vand.u32 2147483647, %v805
  %v811 = vand.u32 2147483647, %v806
  %v812 = vand.u32 2147483647, %v807
  %v813 = vand.u32 2147483647, %v808
  %v814 = vand.u32 2147483647, %v809
  %v815 = vadd.f32 %v791, %v810
  %v816 = vadd.f32 %v792, %v811
  %v817 = vadd.f32 %v793, %v812
  %v818 = vadd.f32 %v794, %v813
  %v819 = vadd.f32 %v795, %v814
  %v820 = vperm.slane %v742, 3
  %v821 = vperm.slane %v743, 3
  %v822 = vperm.slane %v744, 3
  %v823 = vperm.slane %v745, 3
  %v824 = vperm.slane %v746, 3
  %825 = vset.pattern.permute.xlu0 3
  %826 = vperm.xlu0 %825, %v714
  %v827 = vpop.permute.xlu0 %826
  %v829 = vsub.f32 %v820, %v827
  %v830 = vsub.f32 %v821, %v827
  %v831 = vsub.f32 %v822, %v827
  %v832 = vsub.f32 %v823, %v827
  %v833 = vsub.f32 %v824, %v827
  %v834 = vand.u32 2147483647, %v829
  %v835 = vand.u32 2147483647, %v830
  %v836 = vand.u32 2147483647, %v831
  %v837 = vand.u32 2147483647, %v832
  %v838 = vand.u32 2147483647, %v833
  %v839 = vadd.f32 %v815, %v834
  %v840 = vadd.f32 %v816, %v835
  %v841 = vadd.f32 %v817, %v836
  %v842 = vadd.f32 %v818, %v837
  %v843 = vadd.f32 %v819, %v838
  %v844 = vperm.slane %v742, 4
  %v845 = vperm.slane %v743, 4
  %v846 = vperm.slane %v744, 4
  %v847 = vperm.slane %v745, 4
  %v848 = vperm.slane %v746, 4
  %849 = vset.pattern.permute.xlu0 4
  %850 = vperm.xlu0 %849, %v714
  %v851 = vpop.permute.xlu0 %850
  %v853 = vsub.f32 %v844, %v851
  %v854 = vsub.f32 %v845, %v851
  %v855 = vsub.f32 %v846, %v851
  %v856 = vsub.f32 %v847, %v851
  %v857 = vsub.f32 %v848, %v851
  %v858 = vand.u32 2147483647, %v853
  %v859 = vand.u32 2147483647, %v854
  %v860 = vand.u32 2147483647, %v855
  %v861 = vand.u32 2147483647, %v856
  %v862 = vand.u32 2147483647, %v857
  %v863 = vadd.f32 %v839, %v858
  %v864 = vadd.f32 %v840, %v859
  %v865 = vadd.f32 %v841, %v860
  %v866 = vadd.f32 %v842, %v861
  %v867 = vadd.f32 %v843, %v862
  %v868 = vperm.slane %v742, 5
  %v869 = vperm.slane %v743, 5
  %v870 = vperm.slane %v744, 5
  %v871 = vperm.slane %v745, 5
  %v872 = vperm.slane %v746, 5
  %873 = vset.pattern.permute.xlu0 5
  %874 = vperm.xlu0 %873, %v714
  %v875 = vpop.permute.xlu0 %874
  %v877 = vsub.f32 %v868, %v875
  %v878 = vsub.f32 %v869, %v875
  %v879 = vsub.f32 %v870, %v875
  %v880 = vsub.f32 %v871, %v875
  %v881 = vsub.f32 %v872, %v875
  %v882 = vand.u32 2147483647, %v877
  %v883 = vand.u32 2147483647, %v878
  %v884 = vand.u32 2147483647, %v879
  %v885 = vand.u32 2147483647, %v880
  %v886 = vand.u32 2147483647, %v881
  %v887 = vadd.f32 %v863, %v882
  %v888 = vadd.f32 %v864, %v883
  %v889 = vadd.f32 %v865, %v884
  %v890 = vadd.f32 %v866, %v885
  %v891 = vadd.f32 %v867, %v886
  %v892 = vperm.slane %v742, 6
  %v893 = vperm.slane %v743, 6
  %v894 = vperm.slane %v744, 6
  %v895 = vperm.slane %v745, 6
  %v896 = vperm.slane %v746, 6
  %897 = vset.pattern.permute.xlu0 6
  %898 = vperm.xlu0 %897, %v714
  %v899 = vpop.permute.xlu0 %898
  %v901 = vsub.f32 %v892, %v899
  %v902 = vsub.f32 %v893, %v899
  %v903 = vsub.f32 %v894, %v899
  %v904 = vsub.f32 %v895, %v899
  %v905 = vsub.f32 %v896, %v899
  %v906 = vand.u32 2147483647, %v901
  %v907 = vand.u32 2147483647, %v902
  %v908 = vand.u32 2147483647, %v903
  %v909 = vand.u32 2147483647, %v904
  %v910 = vand.u32 2147483647, %v905
  %v911 = vadd.f32 %v887, %v906
  %v912 = vadd.f32 %v888, %v907
  %v913 = vadd.f32 %v889, %v908
  %v914 = vadd.f32 %v890, %v909
  %v915 = vadd.f32 %v891, %v910
  %v916 = vperm.slane %v742, 7
  %v917 = vperm.slane %v743, 7
  %v918 = vperm.slane %v744, 7
  %v919 = vperm.slane %v745, 7
  %v920 = vperm.slane %v746, 7
  %921 = vset.pattern.permute.xlu0 7
  %922 = vperm.xlu0 %921, %v714
  %v923 = vpop.permute.xlu0 %922
  %v925 = vsub.f32 %v916, %v923
  %v926 = vsub.f32 %v917, %v923
  %v927 = vsub.f32 %v918, %v923
  %v928 = vsub.f32 %v919, %v923
  %v929 = vsub.f32 %v920, %v923
  %v930 = vand.u32 2147483647, %v925
  %v931 = vand.u32 2147483647, %v926
  %v932 = vand.u32 2147483647, %v927
  %v933 = vand.u32 2147483647, %v928
  %v934 = vand.u32 2147483647, %v929
  %v935 = vadd.f32 %v911, %v930
  %v936 = vadd.f32 %v912, %v931
  %v937 = vadd.f32 %v913, %v932
  %v938 = vadd.f32 %v914, %v933
  %v939 = vadd.f32 %v915, %v934
  %v940 = vld [vmem:[%s82] ss:$8 sm:$0xf]
  %v942 = vperm.slane %v940, 0
  %v943 = vperm.slane %v940, 1
  %v944 = vperm.slane %v940, 2
  %v945 = vperm.slane %v940, 3
  %946 = vrot.lane.b32.xlu0 %v942, 112
  %v947 = vpop.permute.xlu0 %946
  %948 = vrot.lane.b32.xlu0 %v943, 112
  %v949 = vpop.permute.xlu0 %948
  %950 = vrot.lane.b32.xlu0 %v944, 112
  %v951 = vpop.permute.xlu0 %950
  %952 = vrot.lane.b32.xlu0 %v945, 112
  %v953 = vpop.permute.xlu0 %952
  %v954 = vsel %vm97, %v947, %v949
  %v955 = vsel %vm97, %v949, %v951
  %v956 = vsel %vm97, %v951, %v953
  %v962 = vmul.f32 %v715, %v947
  %v963 = vmul.f32 %v716, %v954
  %v964 = vmul.f32 %v717, %v955
  %v965 = vmul.f32 %v718, %v956
  %v966 = vmul.f32 %v719, %v953
  %v967 = vperm.slane %v962, 0
  %v968 = vperm.slane %v963, 0
  %v969 = vperm.slane %v964, 0
  %v970 = vperm.slane %v965, 0
  %v971 = vperm.slane %v966, 0
  %972 = vset.pattern.permute.xlu0 8
  %973 = vperm.xlu0 %972, %v714
  %v974 = vpop.permute.xlu0 %973
  %v976 = vsub.f32 %v967, %v974
  %v977 = vsub.f32 %v968, %v974
  %v978 = vsub.f32 %v969, %v974
  %v979 = vsub.f32 %v970, %v974
  %v980 = vsub.f32 %v971, %v974
  %v981 = vand.u32 2147483647, %v976
  %v982 = vand.u32 2147483647, %v977
  %v983 = vand.u32 2147483647, %v978
  %v984 = vand.u32 2147483647, %v979
  %v985 = vand.u32 2147483647, %v980
  %991 = vrot.lane.b32.xlu0 %v981, 127
  %v992 = vpop.permute.xlu0 %991
  %993 = vrot.lane.b32.xlu0 %v982, 127
  %v994 = vpop.permute.xlu0 %993
  %995 = vrot.lane.b32.xlu0 %v983, 127
  %v996 = vpop.permute.xlu0 %995
  %997 = vrot.lane.b32.xlu0 %v984, 127
  %v998 = vpop.permute.xlu0 %997
  %999 = vrot.lane.b32.xlu0 %v985, 127
  %v1000 = vpop.permute.xlu0 %999
  %v1001 = vsel %vm155, %v992, %v994
  %v1002 = vsel %vm155, %v994, %v996
  %v1003 = vsel %vm155, %v996, %v998
  %v1004 = vsel %vm155, %v998, %v1000
  %v1010 = vadd.f32 %v935, %v1001
  %v1011 = vadd.f32 %v936, %v1002
  %v1012 = vadd.f32 %v937, %v1003
  %v1013 = vadd.f32 %v938, %v1004
  %v1014 = vadd.f32 %v939, %v1000
  %v1015 = vperm.slane %v962, 1
  %v1016 = vperm.slane %v963, 1
  %v1017 = vperm.slane %v964, 1
  %v1018 = vperm.slane %v965, 1
  %v1019 = vperm.slane %v966, 1
  %1020 = vset.pattern.permute.xlu0 9
  %1021 = vperm.xlu0 %1020, %v714
  %v1022 = vpop.permute.xlu0 %1021
  %v1024 = vsub.f32 %v1015, %v1022
  %v1025 = vsub.f32 %v1016, %v1022
  %v1026 = vsub.f32 %v1017, %v1022
  %v1027 = vsub.f32 %v1018, %v1022
  %v1028 = vsub.f32 %v1019, %v1022
  %v1029 = vand.u32 2147483647, %v1024
  %v1030 = vand.u32 2147483647, %v1025
  %v1031 = vand.u32 2147483647, %v1026
  %v1032 = vand.u32 2147483647, %v1027
  %v1033 = vand.u32 2147483647, %v1028
  %1039 = vrot.lane.b32.xlu0 %v1029, 127
  %v1040 = vpop.permute.xlu0 %1039
  %1041 = vrot.lane.b32.xlu0 %v1030, 127
  %v1042 = vpop.permute.xlu0 %1041
  %1043 = vrot.lane.b32.xlu0 %v1031, 127
  %v1044 = vpop.permute.xlu0 %1043
  %1045 = vrot.lane.b32.xlu0 %v1032, 127
  %v1046 = vpop.permute.xlu0 %1045
  %1047 = vrot.lane.b32.xlu0 %v1033, 127
  %v1048 = vpop.permute.xlu0 %1047
  %v1049 = vsel %vm155, %v1040, %v1042
  %v1050 = vsel %vm155, %v1042, %v1044
  %v1051 = vsel %vm155, %v1044, %v1046
  %v1052 = vsel %vm155, %v1046, %v1048
  %v1058 = vadd.f32 %v1010, %v1049
  %v1059 = vadd.f32 %v1011, %v1050
  %v1060 = vadd.f32 %v1012, %v1051
  %v1061 = vadd.f32 %v1013, %v1052
  %v1062 = vadd.f32 %v1014, %v1048
  %v1063 = vperm.slane %v962, 2
  %v1064 = vperm.slane %v963, 2
  %v1065 = vperm.slane %v964, 2
  %v1066 = vperm.slane %v965, 2
  %v1067 = vperm.slane %v966, 2
  %1068 = vset.pattern.permute.xlu0 10
  %1069 = vperm.xlu0 %1068, %v714
  %v1070 = vpop.permute.xlu0 %1069
  %v1072 = vsub.f32 %v1063, %v1070
  %v1073 = vsub.f32 %v1064, %v1070
  %v1074 = vsub.f32 %v1065, %v1070
  %v1075 = vsub.f32 %v1066, %v1070
  %v1076 = vsub.f32 %v1067, %v1070
  %v1077 = vand.u32 2147483647, %v1072
  %v1078 = vand.u32 2147483647, %v1073
  %v1079 = vand.u32 2147483647, %v1074
  %v1080 = vand.u32 2147483647, %v1075
  %v1081 = vand.u32 2147483647, %v1076
  %1087 = vrot.lane.b32.xlu0 %v1077, 127
  %v1088 = vpop.permute.xlu0 %1087
  %1089 = vrot.lane.b32.xlu0 %v1078, 127
  %v1090 = vpop.permute.xlu0 %1089
  %1091 = vrot.lane.b32.xlu0 %v1079, 127
  %v1092 = vpop.permute.xlu0 %1091
  %1093 = vrot.lane.b32.xlu0 %v1080, 127
  %v1094 = vpop.permute.xlu0 %1093
  %1095 = vrot.lane.b32.xlu0 %v1081, 127
  %v1096 = vpop.permute.xlu0 %1095
  %v1097 = vsel %vm155, %v1088, %v1090
  %v1098 = vsel %vm155, %v1090, %v1092
  %v1099 = vsel %vm155, %v1092, %v1094
  %v1100 = vsel %vm155, %v1094, %v1096
  %v1106 = vadd.f32 %v1058, %v1097
  %v1107 = vadd.f32 %v1059, %v1098
  %v1108 = vadd.f32 %v1060, %v1099
  %v1109 = vadd.f32 %v1061, %v1100
  %v1110 = vadd.f32 %v1062, %v1096
  %v1111 = vperm.slane %v962, 3
  %v1112 = vperm.slane %v963, 3
  %v1113 = vperm.slane %v964, 3
  %v1114 = vperm.slane %v965, 3
  %v1115 = vperm.slane %v966, 3
  %1116 = vset.pattern.permute.xlu0 11
  %1117 = vperm.xlu0 %1116, %v714
  %v1118 = vpop.permute.xlu0 %1117
  %v1120 = vsub.f32 %v1111, %v1118
  %v1121 = vsub.f32 %v1112, %v1118
  %v1122 = vsub.f32 %v1113, %v1118
  %v1123 = vsub.f32 %v1114, %v1118
  %v1124 = vsub.f32 %v1115, %v1118
  %v1125 = vand.u32 2147483647, %v1120
  %v1126 = vand.u32 2147483647, %v1121
  %v1127 = vand.u32 2147483647, %v1122
  %v1128 = vand.u32 2147483647, %v1123
  %v1129 = vand.u32 2147483647, %v1124
  %1135 = vrot.lane.b32.xlu0 %v1125, 127
  %v1136 = vpop.permute.xlu0 %1135
  %1137 = vrot.lane.b32.xlu0 %v1126, 127
  %v1138 = vpop.permute.xlu0 %1137
  %1139 = vrot.lane.b32.xlu0 %v1127, 127
  %v1140 = vpop.permute.xlu0 %1139
  %1141 = vrot.lane.b32.xlu0 %v1128, 127
  %v1142 = vpop.permute.xlu0 %1141
  %1143 = vrot.lane.b32.xlu0 %v1129, 127
  %v1144 = vpop.permute.xlu0 %1143
  %v1145 = vsel %vm155, %v1136, %v1138
  %v1146 = vsel %vm155, %v1138, %v1140
  %v1147 = vsel %vm155, %v1140, %v1142
  %v1148 = vsel %vm155, %v1142, %v1144
  %v1154 = vadd.f32 %v1106, %v1145
  %v1155 = vadd.f32 %v1107, %v1146
  %v1156 = vadd.f32 %v1108, %v1147
  %v1157 = vadd.f32 %v1109, %v1148
  %v1158 = vadd.f32 %v1110, %v1144
  %v1159 = vperm.slane %v962, 4
  %v1160 = vperm.slane %v963, 4
  %v1161 = vperm.slane %v964, 4
  %v1162 = vperm.slane %v965, 4
  %v1163 = vperm.slane %v966, 4
  %1164 = vset.pattern.permute.xlu0 12
  %1165 = vperm.xlu0 %1164, %v714
  %v1166 = vpop.permute.xlu0 %1165
  %v1168 = vsub.f32 %v1159, %v1166
  %v1169 = vsub.f32 %v1160, %v1166
  %v1170 = vsub.f32 %v1161, %v1166
  %v1171 = vsub.f32 %v1162, %v1166
  %v1172 = vsub.f32 %v1163, %v1166
  %v1173 = vand.u32 2147483647, %v1168
  %v1174 = vand.u32 2147483647, %v1169
  %v1175 = vand.u32 2147483647, %v1170
  %v1176 = vand.u32 2147483647, %v1171
  %v1177 = vand.u32 2147483647, %v1172
  %1183 = vrot.lane.b32.xlu0 %v1173, 127
  %v1184 = vpop.permute.xlu0 %1183
  %1185 = vrot.lane.b32.xlu0 %v1174, 127
  %v1186 = vpop.permute.xlu0 %1185
  %1187 = vrot.lane.b32.xlu0 %v1175, 127
  %v1188 = vpop.permute.xlu0 %1187
  %1189 = vrot.lane.b32.xlu0 %v1176, 127
  %v1190 = vpop.permute.xlu0 %1189
  %1191 = vrot.lane.b32.xlu0 %v1177, 127
  %v1192 = vpop.permute.xlu0 %1191
  %v1193 = vsel %vm155, %v1184, %v1186
  %v1194 = vsel %vm155, %v1186, %v1188
  %v1195 = vsel %vm155, %v1188, %v1190
  %v1196 = vsel %vm155, %v1190, %v1192
  %v1202 = vadd.f32 %v1154, %v1193
  %v1203 = vadd.f32 %v1155, %v1194
  %v1204 = vadd.f32 %v1156, %v1195
  %v1205 = vadd.f32 %v1157, %v1196
  %v1206 = vadd.f32 %v1158, %v1192
  %v1207 = vperm.slane %v962, 5
  %v1208 = vperm.slane %v963, 5
  %v1209 = vperm.slane %v964, 5
  %v1210 = vperm.slane %v965, 5
  %v1211 = vperm.slane %v966, 5
  %1212 = vset.pattern.permute.xlu0 13
  %1213 = vperm.xlu0 %1212, %v714
  %v1214 = vpop.permute.xlu0 %1213
  %v1216 = vsub.f32 %v1207, %v1214
  %v1217 = vsub.f32 %v1208, %v1214
  %v1218 = vsub.f32 %v1209, %v1214
  %v1219 = vsub.f32 %v1210, %v1214
  %v1220 = vsub.f32 %v1211, %v1214
  %v1221 = vand.u32 2147483647, %v1216
  %v1222 = vand.u32 2147483647, %v1217
  %v1223 = vand.u32 2147483647, %v1218
  %v1224 = vand.u32 2147483647, %v1219
  %v1225 = vand.u32 2147483647, %v1220
  %1231 = vrot.lane.b32.xlu0 %v1221, 127
  %v1232 = vpop.permute.xlu0 %1231
  %1233 = vrot.lane.b32.xlu0 %v1222, 127
  %v1234 = vpop.permute.xlu0 %1233
  %1235 = vrot.lane.b32.xlu0 %v1223, 127
  %v1236 = vpop.permute.xlu0 %1235
  %1237 = vrot.lane.b32.xlu0 %v1224, 127
  %v1238 = vpop.permute.xlu0 %1237
  %1239 = vrot.lane.b32.xlu0 %v1225, 127
  %v1240 = vpop.permute.xlu0 %1239
  %v1241 = vsel %vm155, %v1232, %v1234
  %v1242 = vsel %vm155, %v1234, %v1236
  %v1243 = vsel %vm155, %v1236, %v1238
  %v1244 = vsel %vm155, %v1238, %v1240
  %v1250 = vadd.f32 %v1202, %v1241
  %v1251 = vadd.f32 %v1203, %v1242
  %v1252 = vadd.f32 %v1204, %v1243
  %v1253 = vadd.f32 %v1205, %v1244
  %v1254 = vadd.f32 %v1206, %v1240
  %v1255 = vperm.slane %v962, 6
  %v1256 = vperm.slane %v963, 6
  %v1257 = vperm.slane %v964, 6
  %v1258 = vperm.slane %v965, 6
  %v1259 = vperm.slane %v966, 6
  %1260 = vset.pattern.permute.xlu0 14
  %1261 = vperm.xlu0 %1260, %v714
  %v1262 = vpop.permute.xlu0 %1261
  %v1264 = vsub.f32 %v1255, %v1262
  %v1265 = vsub.f32 %v1256, %v1262
  %v1266 = vsub.f32 %v1257, %v1262
  %v1267 = vsub.f32 %v1258, %v1262
  %v1268 = vsub.f32 %v1259, %v1262
  %v1269 = vand.u32 2147483647, %v1264
  %v1270 = vand.u32 2147483647, %v1265
  %v1271 = vand.u32 2147483647, %v1266
  %v1272 = vand.u32 2147483647, %v1267
  %v1273 = vand.u32 2147483647, %v1268
  %1279 = vrot.lane.b32.xlu0 %v1269, 127
  %v1280 = vpop.permute.xlu0 %1279
  %1281 = vrot.lane.b32.xlu0 %v1270, 127
  %v1282 = vpop.permute.xlu0 %1281
  %1283 = vrot.lane.b32.xlu0 %v1271, 127
  %v1284 = vpop.permute.xlu0 %1283
  %1285 = vrot.lane.b32.xlu0 %v1272, 127
  %v1286 = vpop.permute.xlu0 %1285
  %1287 = vrot.lane.b32.xlu0 %v1273, 127
  %v1288 = vpop.permute.xlu0 %1287
  %v1289 = vsel %vm155, %v1280, %v1282
  %v1290 = vsel %vm155, %v1282, %v1284
  %v1291 = vsel %vm155, %v1284, %v1286
  %v1292 = vsel %vm155, %v1286, %v1288
  %v1298 = vadd.f32 %v1250, %v1289
  %v1299 = vadd.f32 %v1251, %v1290
  %v1300 = vadd.f32 %v1252, %v1291
  %v1301 = vadd.f32 %v1253, %v1292
  %v1302 = vadd.f32 %v1254, %v1288
  %v1303 = vperm.slane %v962, 7
  %v1304 = vperm.slane %v963, 7
  %v1305 = vperm.slane %v964, 7
  %v1306 = vperm.slane %v965, 7
  %v1307 = vperm.slane %v966, 7
  %1308 = vset.pattern.permute.xlu0 15
  %1309 = vperm.xlu0 %1308, %v714
  %v1310 = vpop.permute.xlu0 %1309
  %v1312 = vsub.f32 %v1303, %v1310
  %v1313 = vsub.f32 %v1304, %v1310
  %v1314 = vsub.f32 %v1305, %v1310
  %v1315 = vsub.f32 %v1306, %v1310
  %v1316 = vsub.f32 %v1307, %v1310
  %v1317 = vand.u32 2147483647, %v1312
  %v1318 = vand.u32 2147483647, %v1313
  %v1319 = vand.u32 2147483647, %v1314
  %v1320 = vand.u32 2147483647, %v1315
  %v1321 = vand.u32 2147483647, %v1316
  %1327 = vrot.lane.b32.xlu0 %v1317, 127
  %v1328 = vpop.permute.xlu0 %1327
  %1329 = vrot.lane.b32.xlu0 %v1318, 127
  %v1330 = vpop.permute.xlu0 %1329
  %1331 = vrot.lane.b32.xlu0 %v1319, 127
  %v1332 = vpop.permute.xlu0 %1331
  %1333 = vrot.lane.b32.xlu0 %v1320, 127
  %v1334 = vpop.permute.xlu0 %1333
  %1335 = vrot.lane.b32.xlu0 %v1321, 127
  %v1336 = vpop.permute.xlu0 %1335
  %v1337 = vsel %vm155, %v1328, %v1330
  %v1338 = vsel %vm155, %v1330, %v1332
  %v1339 = vsel %vm155, %v1332, %v1334
  %v1340 = vsel %vm155, %v1334, %v1336
  %v1346 = vadd.f32 %v1298, %v1337
  %v1347 = vadd.f32 %v1299, %v1338
  %v1348 = vadd.f32 %v1300, %v1339
  %v1349 = vadd.f32 %v1301, %v1340
  %v1350 = vadd.f32 %v1302, %v1336
  %v1351 = vld [vmem:[%s111] ss:$8 sm:$0xf]
  %v1353 = vperm.slane %v1351, 0
  %v1354 = vperm.slane %v1351, 1
  %v1355 = vperm.slane %v1351, 2
  %v1356 = vperm.slane %v1351, 3
  %1357 = vrot.lane.b32.xlu0 %v1353, 113
  %v1358 = vpop.permute.xlu0 %1357
  %1359 = vrot.lane.b32.xlu0 %v1354, 113
  %v1360 = vpop.permute.xlu0 %1359
  %1361 = vrot.lane.b32.xlu0 %v1355, 113
  %v1362 = vpop.permute.xlu0 %1361
  %1363 = vrot.lane.b32.xlu0 %v1356, 113
  %v1364 = vpop.permute.xlu0 %1363
  %v1365 = vsel %vm126, %v1358, %v1360
  %v1366 = vsel %vm126, %v1360, %v1362
  %v1367 = vsel %vm126, %v1362, %v1364
  %v1373 = vmul.f32 %v715, %v1358
  %v1374 = vmul.f32 %v716, %v1365
  %v1375 = vmul.f32 %v717, %v1366
  %v1376 = vmul.f32 %v718, %v1367
  %v1377 = vmul.f32 %v719, %v1364
  %v1378 = vperm.slane %v1373, 0
  %v1379 = vperm.slane %v1374, 0
  %v1380 = vperm.slane %v1375, 0
  %v1381 = vperm.slane %v1376, 0
  %v1382 = vperm.slane %v1377, 0
  %1383 = vset.pattern.permute.xlu0 16
  %1384 = vperm.xlu0 %1383, %v714
  %v1385 = vpop.permute.xlu0 %1384
  %v1387 = vsub.f32 %v1378, %v1385
  %v1388 = vsub.f32 %v1379, %v1385
  %v1389 = vsub.f32 %v1380, %v1385
  %v1390 = vsub.f32 %v1381, %v1385
  %v1391 = vsub.f32 %v1382, %v1385
  %v1392 = vand.u32 2147483647, %v1387
  %v1393 = vand.u32 2147483647, %v1388
  %v1394 = vand.u32 2147483647, %v1389
  %v1395 = vand.u32 2147483647, %v1390
  %v1396 = vand.u32 2147483647, %v1391
  %1402 = vrot.lane.b32.xlu0 %v1392, 126
  %v1403 = vpop.permute.xlu0 %1402
  %1404 = vrot.lane.b32.xlu0 %v1393, 126
  %v1405 = vpop.permute.xlu0 %1404
  %1406 = vrot.lane.b32.xlu0 %v1394, 126
  %v1407 = vpop.permute.xlu0 %1406
  %1408 = vrot.lane.b32.xlu0 %v1395, 126
  %v1409 = vpop.permute.xlu0 %1408
  %1410 = vrot.lane.b32.xlu0 %v1396, 126
  %v1411 = vpop.permute.xlu0 %1410
  %v1412 = vsel %vm339, %v1403, %v1405
  %v1413 = vsel %vm339, %v1405, %v1407
  %v1414 = vsel %vm339, %v1407, %v1409
  %v1415 = vsel %vm339, %v1409, %v1411
  %v1421 = vadd.f32 %v1346, %v1412
  %v1422 = vadd.f32 %v1347, %v1413
  %v1423 = vadd.f32 %v1348, %v1414
  %v1424 = vadd.f32 %v1349, %v1415
  %v1425 = vadd.f32 %v1350, %v1411
  %v1426 = vperm.slane %v1373, 1
  %v1427 = vperm.slane %v1374, 1
  %v1428 = vperm.slane %v1375, 1
  %v1429 = vperm.slane %v1376, 1
  %v1430 = vperm.slane %v1377, 1
  %1431 = vset.pattern.permute.xlu0 17
  %1432 = vperm.xlu0 %1431, %v714
  %v1433 = vpop.permute.xlu0 %1432
  %v1435 = vsub.f32 %v1426, %v1433
  %v1436 = vsub.f32 %v1427, %v1433
  %v1437 = vsub.f32 %v1428, %v1433
  %v1438 = vsub.f32 %v1429, %v1433
  %v1439 = vsub.f32 %v1430, %v1433
  %v1440 = vand.u32 2147483647, %v1435
  %v1441 = vand.u32 2147483647, %v1436
  %v1442 = vand.u32 2147483647, %v1437
  %v1443 = vand.u32 2147483647, %v1438
  %v1444 = vand.u32 2147483647, %v1439
  %1450 = vrot.lane.b32.xlu0 %v1440, 126
  %v1451 = vpop.permute.xlu0 %1450
  %1452 = vrot.lane.b32.xlu0 %v1441, 126
  %v1453 = vpop.permute.xlu0 %1452
  %1454 = vrot.lane.b32.xlu0 %v1442, 126
  %v1455 = vpop.permute.xlu0 %1454
  %1456 = vrot.lane.b32.xlu0 %v1443, 126
  %v1457 = vpop.permute.xlu0 %1456
  %1458 = vrot.lane.b32.xlu0 %v1444, 126
  %v1459 = vpop.permute.xlu0 %1458
  %v1460 = vsel %vm339, %v1451, %v1453
  %v1461 = vsel %vm339, %v1453, %v1455
  %v1462 = vsel %vm339, %v1455, %v1457
  %v1463 = vsel %vm339, %v1457, %v1459
  %v1469 = vadd.f32 %v1421, %v1460
  %v1470 = vadd.f32 %v1422, %v1461
  %v1471 = vadd.f32 %v1423, %v1462
  %v1472 = vadd.f32 %v1424, %v1463
  %v1473 = vadd.f32 %v1425, %v1459
  %v1474 = vperm.slane %v1373, 2
  %v1475 = vperm.slane %v1374, 2
  %v1476 = vperm.slane %v1375, 2
  %v1477 = vperm.slane %v1376, 2
  %v1478 = vperm.slane %v1377, 2
  %1479 = vset.pattern.permute.xlu0 18
  %1480 = vperm.xlu0 %1479, %v714
  %v1481 = vpop.permute.xlu0 %1480
  %v1483 = vsub.f32 %v1474, %v1481
  %v1484 = vsub.f32 %v1475, %v1481
  %v1485 = vsub.f32 %v1476, %v1481
  %v1486 = vsub.f32 %v1477, %v1481
  %v1487 = vsub.f32 %v1478, %v1481
  %v1488 = vand.u32 2147483647, %v1483
  %v1489 = vand.u32 2147483647, %v1484
  %v1490 = vand.u32 2147483647, %v1485
  %v1491 = vand.u32 2147483647, %v1486
  %v1492 = vand.u32 2147483647, %v1487
  %1498 = vrot.lane.b32.xlu0 %v1488, 126
  %v1499 = vpop.permute.xlu0 %1498
  %1500 = vrot.lane.b32.xlu0 %v1489, 126
  %v1501 = vpop.permute.xlu0 %1500
  %1502 = vrot.lane.b32.xlu0 %v1490, 126
  %v1503 = vpop.permute.xlu0 %1502
  %1504 = vrot.lane.b32.xlu0 %v1491, 126
  %v1505 = vpop.permute.xlu0 %1504
  %1506 = vrot.lane.b32.xlu0 %v1492, 126
  %v1507 = vpop.permute.xlu0 %1506
  %v1508 = vsel %vm339, %v1499, %v1501
  %v1509 = vsel %vm339, %v1501, %v1503
  %v1510 = vsel %vm339, %v1503, %v1505
  %v1511 = vsel %vm339, %v1505, %v1507
  %v1517 = vadd.f32 %v1469, %v1508
  %v1518 = vadd.f32 %v1470, %v1509
  %v1519 = vadd.f32 %v1471, %v1510
  %v1520 = vadd.f32 %v1472, %v1511
  %v1521 = vadd.f32 %v1473, %v1507
  %v1522 = vperm.slane %v1373, 3
  %v1523 = vperm.slane %v1374, 3
  %v1524 = vperm.slane %v1375, 3
  %v1525 = vperm.slane %v1376, 3
  %v1526 = vperm.slane %v1377, 3
  %1527 = vset.pattern.permute.xlu0 19
  %1528 = vperm.xlu0 %1527, %v714
  %v1529 = vpop.permute.xlu0 %1528
  %v1531 = vsub.f32 %v1522, %v1529
  %v1532 = vsub.f32 %v1523, %v1529
  %v1533 = vsub.f32 %v1524, %v1529
  %v1534 = vsub.f32 %v1525, %v1529
  %v1535 = vsub.f32 %v1526, %v1529
  %v1536 = vand.u32 2147483647, %v1531
  %v1537 = vand.u32 2147483647, %v1532
  %v1538 = vand.u32 2147483647, %v1533
  %v1539 = vand.u32 2147483647, %v1534
  %v1540 = vand.u32 2147483647, %v1535
  %1546 = vrot.lane.b32.xlu0 %v1536, 126
  %v1547 = vpop.permute.xlu0 %1546
  %1548 = vrot.lane.b32.xlu0 %v1537, 126
  %v1549 = vpop.permute.xlu0 %1548
  %1550 = vrot.lane.b32.xlu0 %v1538, 126
  %v1551 = vpop.permute.xlu0 %1550
  %1552 = vrot.lane.b32.xlu0 %v1539, 126
  %v1553 = vpop.permute.xlu0 %1552
  %1554 = vrot.lane.b32.xlu0 %v1540, 126
  %v1555 = vpop.permute.xlu0 %1554
  %v1556 = vsel %vm339, %v1547, %v1549
  %v1557 = vsel %vm339, %v1549, %v1551
  %v1558 = vsel %vm339, %v1551, %v1553
  %v1559 = vsel %vm339, %v1553, %v1555
  %v1565 = vadd.f32 %v1517, %v1556
  %v1566 = vadd.f32 %v1518, %v1557
  %v1567 = vadd.f32 %v1519, %v1558
  %v1568 = vadd.f32 %v1520, %v1559
  %v1569 = vadd.f32 %v1521, %v1555
  %v1570 = vperm.slane %v1373, 4
  %v1571 = vperm.slane %v1374, 4
  %v1572 = vperm.slane %v1375, 4
  %v1573 = vperm.slane %v1376, 4
  %v1574 = vperm.slane %v1377, 4
  %1575 = vset.pattern.permute.xlu0 20
  %1576 = vperm.xlu0 %1575, %v714
  %v1577 = vpop.permute.xlu0 %1576
  %v1579 = vsub.f32 %v1570, %v1577
  %v1580 = vsub.f32 %v1571, %v1577
  %v1581 = vsub.f32 %v1572, %v1577
  %v1582 = vsub.f32 %v1573, %v1577
  %v1583 = vsub.f32 %v1574, %v1577
  %v1584 = vand.u32 2147483647, %v1579
  %v1585 = vand.u32 2147483647, %v1580
  %v1586 = vand.u32 2147483647, %v1581
  %v1587 = vand.u32 2147483647, %v1582
  %v1588 = vand.u32 2147483647, %v1583
  %1594 = vrot.lane.b32.xlu0 %v1584, 126
  %v1595 = vpop.permute.xlu0 %1594
  %1596 = vrot.lane.b32.xlu0 %v1585, 126
  %v1597 = vpop.permute.xlu0 %1596
  %1598 = vrot.lane.b32.xlu0 %v1586, 126
  %v1599 = vpop.permute.xlu0 %1598
  %1600 = vrot.lane.b32.xlu0 %v1587, 126
  %v1601 = vpop.permute.xlu0 %1600
  %1602 = vrot.lane.b32.xlu0 %v1588, 126
  %v1603 = vpop.permute.xlu0 %1602
  %v1604 = vsel %vm339, %v1595, %v1597
  %v1605 = vsel %vm339, %v1597, %v1599
  %v1606 = vsel %vm339, %v1599, %v1601
  %v1607 = vsel %vm339, %v1601, %v1603
  %v1613 = vadd.f32 %v1565, %v1604
  %v1614 = vadd.f32 %v1566, %v1605
  %v1615 = vadd.f32 %v1567, %v1606
  %v1616 = vadd.f32 %v1568, %v1607
  %v1617 = vadd.f32 %v1569, %v1603
  %v1618 = vperm.slane %v1373, 5
  %v1619 = vperm.slane %v1374, 5
  %v1620 = vperm.slane %v1375, 5
  %v1621 = vperm.slane %v1376, 5
  %v1622 = vperm.slane %v1377, 5
  %1623 = vset.pattern.permute.xlu0 21
  %1624 = vperm.xlu0 %1623, %v714
  %v1625 = vpop.permute.xlu0 %1624
  %v1627 = vsub.f32 %v1618, %v1625
  %v1628 = vsub.f32 %v1619, %v1625
  %v1629 = vsub.f32 %v1620, %v1625
  %v1630 = vsub.f32 %v1621, %v1625
  %v1631 = vsub.f32 %v1622, %v1625
  %v1632 = vand.u32 2147483647, %v1627
  %v1633 = vand.u32 2147483647, %v1628
  %v1634 = vand.u32 2147483647, %v1629
  %v1635 = vand.u32 2147483647, %v1630
  %v1636 = vand.u32 2147483647, %v1631
  %1642 = vrot.lane.b32.xlu0 %v1632, 126
  %v1643 = vpop.permute.xlu0 %1642
  %1644 = vrot.lane.b32.xlu0 %v1633, 126
  %v1645 = vpop.permute.xlu0 %1644
  %1646 = vrot.lane.b32.xlu0 %v1634, 126
  %v1647 = vpop.permute.xlu0 %1646
  %1648 = vrot.lane.b32.xlu0 %v1635, 126
  %v1649 = vpop.permute.xlu0 %1648
  %1650 = vrot.lane.b32.xlu0 %v1636, 126
  %v1651 = vpop.permute.xlu0 %1650
  %v1652 = vsel %vm339, %v1643, %v1645
  %v1653 = vsel %vm339, %v1645, %v1647
  %v1654 = vsel %vm339, %v1647, %v1649
  %v1655 = vsel %vm339, %v1649, %v1651
  %v1661 = vadd.f32 %v1613, %v1652
  %v1662 = vadd.f32 %v1614, %v1653
  %v1663 = vadd.f32 %v1615, %v1654
  %v1664 = vadd.f32 %v1616, %v1655
  %v1665 = vadd.f32 %v1617, %v1651
  %v1666 = vperm.slane %v1373, 6
  %v1667 = vperm.slane %v1374, 6
  %v1668 = vperm.slane %v1375, 6
  %v1669 = vperm.slane %v1376, 6
  %v1670 = vperm.slane %v1377, 6
  %1671 = vset.pattern.permute.xlu0 22
  %1672 = vperm.xlu0 %1671, %v714
  %v1673 = vpop.permute.xlu0 %1672
  %v1675 = vsub.f32 %v1666, %v1673
  %v1676 = vsub.f32 %v1667, %v1673
  %v1677 = vsub.f32 %v1668, %v1673
  %v1678 = vsub.f32 %v1669, %v1673
  %v1679 = vsub.f32 %v1670, %v1673
  %v1680 = vand.u32 2147483647, %v1675
  %v1681 = vand.u32 2147483647, %v1676
  %v1682 = vand.u32 2147483647, %v1677
  %v1683 = vand.u32 2147483647, %v1678
  %v1684 = vand.u32 2147483647, %v1679
  %1690 = vrot.lane.b32.xlu0 %v1680, 126
  %v1691 = vpop.permute.xlu0 %1690
  %1692 = vrot.lane.b32.xlu0 %v1681, 126
  %v1693 = vpop.permute.xlu0 %1692
  %1694 = vrot.lane.b32.xlu0 %v1682, 126
  %v1695 = vpop.permute.xlu0 %1694
  %1696 = vrot.lane.b32.xlu0 %v1683, 126
  %v1697 = vpop.permute.xlu0 %1696
  %1698 = vrot.lane.b32.xlu0 %v1684, 126
  %v1699 = vpop.permute.xlu0 %1698
  %v1700 = vsel %vm339, %v1691, %v1693
  %v1701 = vsel %vm339, %v1693, %v1695
  %v1702 = vsel %vm339, %v1695, %v1697
  %v1703 = vsel %vm339, %v1697, %v1699
  %v1709 = vadd.f32 %v1661, %v1700
  %v1710 = vadd.f32 %v1662, %v1701
  %v1711 = vadd.f32 %v1663, %v1702
  %v1712 = vadd.f32 %v1664, %v1703
  %v1713 = vadd.f32 %v1665, %v1699
  %v1714 = vperm.slane %v1373, 7
  %v1715 = vperm.slane %v1374, 7
  %v1716 = vperm.slane %v1375, 7
  %v1717 = vperm.slane %v1376, 7
  %v1718 = vperm.slane %v1377, 7
  %1719 = vset.pattern.permute.xlu0 23
  %1720 = vperm.xlu0 %1719, %v714
  %v1721 = vpop.permute.xlu0 %1720
  %v1723 = vsub.f32 %v1714, %v1721
  %v1724 = vsub.f32 %v1715, %v1721
  %v1725 = vsub.f32 %v1716, %v1721
  %v1726 = vsub.f32 %v1717, %v1721
  %v1727 = vsub.f32 %v1718, %v1721
  %v1728 = vand.u32 2147483647, %v1723
  %v1729 = vand.u32 2147483647, %v1724
  %v1730 = vand.u32 2147483647, %v1725
  %v1731 = vand.u32 2147483647, %v1726
  %v1732 = vand.u32 2147483647, %v1727
  %1738 = vrot.lane.b32.xlu0 %v1728, 126
  %v1739 = vpop.permute.xlu0 %1738
  %1740 = vrot.lane.b32.xlu0 %v1729, 126
  %v1741 = vpop.permute.xlu0 %1740
  %1742 = vrot.lane.b32.xlu0 %v1730, 126
  %v1743 = vpop.permute.xlu0 %1742
  %1744 = vrot.lane.b32.xlu0 %v1731, 126
  %v1745 = vpop.permute.xlu0 %1744
  %1746 = vrot.lane.b32.xlu0 %v1732, 126
  %v1747 = vpop.permute.xlu0 %1746
  %v1748 = vsel %vm339, %v1739, %v1741
  %v1749 = vsel %vm339, %v1741, %v1743
  %v1750 = vsel %vm339, %v1743, %v1745
  %v1751 = vsel %vm339, %v1745, %v1747
  %v1757 = vadd.f32 %v1709, %v1748
  %v1758 = vadd.f32 %v1710, %v1749
  %v1759 = vadd.f32 %v1711, %v1750
  %v1760 = vadd.f32 %v1712, %v1751
  %v1761 = vadd.f32 %v1713, %v1747
  %v1762 = vld [vmem:[%s140] ss:$8 sm:$0xf]
  %v1764 = vperm.slane %v1762, 0
  %v1765 = vperm.slane %v1762, 1
  %v1766 = vperm.slane %v1762, 2
  %v1767 = vperm.slane %v1762, 3
  %1768 = vrot.lane.b32.xlu0 %v1764, 127
  %v1769 = vpop.permute.xlu0 %1768
  %1770 = vrot.lane.b32.xlu0 %v1765, 127
  %v1771 = vpop.permute.xlu0 %1770
  %1772 = vrot.lane.b32.xlu0 %v1766, 127
  %v1773 = vpop.permute.xlu0 %1772
  %1774 = vrot.lane.b32.xlu0 %v1767, 127
  %v1775 = vpop.permute.xlu0 %1774
  %v1776 = vsel %vm155, %v1769, %v1771
  %v1777 = vsel %vm155, %v1771, %v1773
  %v1778 = vsel %vm155, %v1773, %v1775
  %v1784 = vmul.f32 %v715, %v1769
  %v1785 = vmul.f32 %v716, %v1776
  %v1786 = vmul.f32 %v717, %v1777
  %v1787 = vmul.f32 %v718, %v1778
  %v1788 = vmul.f32 %v719, %v1775
  %v1789 = vperm.slane %v1784, 0
  %v1790 = vperm.slane %v1785, 0
  %v1791 = vperm.slane %v1786, 0
  %v1792 = vperm.slane %v1787, 0
  %v1793 = vperm.slane %v1788, 0
  %1794 = vset.pattern.permute.xlu0 24
  %1795 = vperm.xlu0 %1794, %v714
  %v1796 = vpop.permute.xlu0 %1795
  %v1798 = vsub.f32 %v1789, %v1796
  %v1799 = vsub.f32 %v1790, %v1796
  %v1800 = vsub.f32 %v1791, %v1796
  %v1801 = vsub.f32 %v1792, %v1796
  %v1802 = vsub.f32 %v1793, %v1796
  %v1803 = vand.u32 2147483647, %v1798
  %v1804 = vand.u32 2147483647, %v1799
  %v1805 = vand.u32 2147483647, %v1800
  %v1806 = vand.u32 2147483647, %v1801
  %v1807 = vand.u32 2147483647, %v1802
  %1813 = vrot.lane.b32.xlu0 %v1803, 112
  %v1814 = vpop.permute.xlu0 %1813
  %1815 = vrot.lane.b32.xlu0 %v1804, 112
  %v1816 = vpop.permute.xlu0 %1815
  %1817 = vrot.lane.b32.xlu0 %v1805, 112
  %v1818 = vpop.permute.xlu0 %1817
  %1819 = vrot.lane.b32.xlu0 %v1806, 112
  %v1820 = vpop.permute.xlu0 %1819
  %1821 = vrot.lane.b32.xlu0 %v1807, 112
  %v1822 = vpop.permute.xlu0 %1821
  %v1823 = vsel %vm97, %v1814, %v1816
  %v1824 = vsel %vm97, %v1816, %v1818
  %v1825 = vsel %vm97, %v1818, %v1820
  %v1826 = vsel %vm97, %v1820, %v1822
  %v1832 = vadd.f32 %v1757, %v1823
  %v1833 = vadd.f32 %v1758, %v1824
  %v1834 = vadd.f32 %v1759, %v1825
  %v1835 = vadd.f32 %v1760, %v1826
  %v1836 = vadd.f32 %v1761, %v1822
  %v1837 = vperm.slane %v1784, 1
  %v1838 = vperm.slane %v1785, 1
  %v1839 = vperm.slane %v1786, 1
  %v1840 = vperm.slane %v1787, 1
  %v1841 = vperm.slane %v1788, 1
  %1842 = vset.pattern.permute.xlu0 25
  %1843 = vperm.xlu0 %1842, %v714
  %v1844 = vpop.permute.xlu0 %1843
  %v1846 = vsub.f32 %v1837, %v1844
  %v1847 = vsub.f32 %v1838, %v1844
  %v1848 = vsub.f32 %v1839, %v1844
  %v1849 = vsub.f32 %v1840, %v1844
  %v1850 = vsub.f32 %v1841, %v1844
  %v1851 = vand.u32 2147483647, %v1846
  %v1852 = vand.u32 2147483647, %v1847
  %v1853 = vand.u32 2147483647, %v1848
  %v1854 = vand.u32 2147483647, %v1849
  %v1855 = vand.u32 2147483647, %v1850
  %1861 = vrot.lane.b32.xlu0 %v1851, 112
  %v1862 = vpop.permute.xlu0 %1861
  %1863 = vrot.lane.b32.xlu0 %v1852, 112
  %v1864 = vpop.permute.xlu0 %1863
  %1865 = vrot.lane.b32.xlu0 %v1853, 112
  %v1866 = vpop.permute.xlu0 %1865
  %1867 = vrot.lane.b32.xlu0 %v1854, 112
  %v1868 = vpop.permute.xlu0 %1867
  %1869 = vrot.lane.b32.xlu0 %v1855, 112
  %v1870 = vpop.permute.xlu0 %1869
  %v1871 = vsel %vm97, %v1862, %v1864
  %v1872 = vsel %vm97, %v1864, %v1866
  %v1873 = vsel %vm97, %v1866, %v1868
  %v1874 = vsel %vm97, %v1868, %v1870
  %v1880 = vadd.f32 %v1832, %v1871
  %v1881 = vadd.f32 %v1833, %v1872
  %v1882 = vadd.f32 %v1834, %v1873
  %v1883 = vadd.f32 %v1835, %v1874
  %v1884 = vadd.f32 %v1836, %v1870
  %v1885 = vperm.slane %v1784, 2
  %v1886 = vperm.slane %v1785, 2
  %v1887 = vperm.slane %v1786, 2
  %v1888 = vperm.slane %v1787, 2
  %v1889 = vperm.slane %v1788, 2
  %1890 = vset.pattern.permute.xlu0 26
  %1891 = vperm.xlu0 %1890, %v714
  %v1892 = vpop.permute.xlu0 %1891
  %v1894 = vsub.f32 %v1885, %v1892
  %v1895 = vsub.f32 %v1886, %v1892
  %v1896 = vsub.f32 %v1887, %v1892
  %v1897 = vsub.f32 %v1888, %v1892
  %v1898 = vsub.f32 %v1889, %v1892
  %v1899 = vand.u32 2147483647, %v1894
  %v1900 = vand.u32 2147483647, %v1895
  %v1901 = vand.u32 2147483647, %v1896
  %v1902 = vand.u32 2147483647, %v1897
  %v1903 = vand.u32 2147483647, %v1898
  %1909 = vrot.lane.b32.xlu0 %v1899, 112
  %v1910 = vpop.permute.xlu0 %1909
  %1911 = vrot.lane.b32.xlu0 %v1900, 112
  %v1912 = vpop.permute.xlu0 %1911
  %1913 = vrot.lane.b32.xlu0 %v1901, 112
  %v1914 = vpop.permute.xlu0 %1913
  %1915 = vrot.lane.b32.xlu0 %v1902, 112
  %v1916 = vpop.permute.xlu0 %1915
  %1917 = vrot.lane.b32.xlu0 %v1903, 112
  %v1918 = vpop.permute.xlu0 %1917
  %v1919 = vsel %vm97, %v1910, %v1912
  %v1920 = vsel %vm97, %v1912, %v1914
  %v1921 = vsel %vm97, %v1914, %v1916
  %v1922 = vsel %vm97, %v1916, %v1918
  %v1928 = vadd.f32 %v1880, %v1919
  %v1929 = vadd.f32 %v1881, %v1920
  %v1930 = vadd.f32 %v1882, %v1921
  %v1931 = vadd.f32 %v1883, %v1922
  %v1932 = vadd.f32 %v1884, %v1918
  %v1933 = vperm.slane %v1784, 3
  %v1934 = vperm.slane %v1785, 3
  %v1935 = vperm.slane %v1786, 3
  %v1936 = vperm.slane %v1787, 3
  %v1937 = vperm.slane %v1788, 3
  %1938 = vset.pattern.permute.xlu0 27
  %1939 = vperm.xlu0 %1938, %v714
  %v1940 = vpop.permute.xlu0 %1939
  %v1942 = vsub.f32 %v1933, %v1940
  %v1943 = vsub.f32 %v1934, %v1940
  %v1944 = vsub.f32 %v1935, %v1940
  %v1945 = vsub.f32 %v1936, %v1940
  %v1946 = vsub.f32 %v1937, %v1940
  %v1947 = vand.u32 2147483647, %v1942
  %v1948 = vand.u32 2147483647, %v1943
  %v1949 = vand.u32 2147483647, %v1944
  %v1950 = vand.u32 2147483647, %v1945
  %v1951 = vand.u32 2147483647, %v1946
  %1957 = vrot.lane.b32.xlu0 %v1947, 112
  %v1958 = vpop.permute.xlu0 %1957
  %1959 = vrot.lane.b32.xlu0 %v1948, 112
  %v1960 = vpop.permute.xlu0 %1959
  %1961 = vrot.lane.b32.xlu0 %v1949, 112
  %v1962 = vpop.permute.xlu0 %1961
  %1963 = vrot.lane.b32.xlu0 %v1950, 112
  %v1964 = vpop.permute.xlu0 %1963
  %1965 = vrot.lane.b32.xlu0 %v1951, 112
  %v1966 = vpop.permute.xlu0 %1965
  %v1967 = vsel %vm97, %v1958, %v1960
  %v1968 = vsel %vm97, %v1960, %v1962
  %v1969 = vsel %vm97, %v1962, %v1964
  %v1970 = vsel %vm97, %v1964, %v1966
  %v1976 = vadd.f32 %v1928, %v1967
  %v1977 = vadd.f32 %v1929, %v1968
  %v1978 = vadd.f32 %v1930, %v1969
  %v1979 = vadd.f32 %v1931, %v1970
  %v1980 = vadd.f32 %v1932, %v1966
  %v1981 = vperm.slane %v1784, 4
  %v1982 = vperm.slane %v1785, 4
  %v1983 = vperm.slane %v1786, 4
  %v1984 = vperm.slane %v1787, 4
  %v1985 = vperm.slane %v1788, 4
  %1986 = vset.pattern.permute.xlu0 28
  %1987 = vperm.xlu0 %1986, %v714
  %v1988 = vpop.permute.xlu0 %1987
  %v1990 = vsub.f32 %v1981, %v1988
  %v1991 = vsub.f32 %v1982, %v1988
  %v1992 = vsub.f32 %v1983, %v1988
  %v1993 = vsub.f32 %v1984, %v1988
  %v1994 = vsub.f32 %v1985, %v1988
  %v1995 = vand.u32 2147483647, %v1990
  %v1996 = vand.u32 2147483647, %v1991
  %v1997 = vand.u32 2147483647, %v1992
  %v1998 = vand.u32 2147483647, %v1993
  %v1999 = vand.u32 2147483647, %v1994
  %2005 = vrot.lane.b32.xlu0 %v1995, 112
  %v2006 = vpop.permute.xlu0 %2005
  %2007 = vrot.lane.b32.xlu0 %v1996, 112
  %v2008 = vpop.permute.xlu0 %2007
  %2009 = vrot.lane.b32.xlu0 %v1997, 112
  %v2010 = vpop.permute.xlu0 %2009
  %2011 = vrot.lane.b32.xlu0 %v1998, 112
  %v2012 = vpop.permute.xlu0 %2011
  %2013 = vrot.lane.b32.xlu0 %v1999, 112
  %v2014 = vpop.permute.xlu0 %2013
  %v2015 = vsel %vm97, %v2006, %v2008
  %v2016 = vsel %vm97, %v2008, %v2010
  %v2017 = vsel %vm97, %v2010, %v2012
  %v2018 = vsel %vm97, %v2012, %v2014
  %v2024 = vadd.f32 %v1976, %v2015
  %v2025 = vadd.f32 %v1977, %v2016
  %v2026 = vadd.f32 %v1978, %v2017
  %v2027 = vadd.f32 %v1979, %v2018
  %v2028 = vadd.f32 %v1980, %v2014
  %v2029 = vperm.slane %v1784, 5
  %v2030 = vperm.slane %v1785, 5
  %v2031 = vperm.slane %v1786, 5
  %v2032 = vperm.slane %v1787, 5
  %v2033 = vperm.slane %v1788, 5
  %2034 = vset.pattern.permute.xlu0 29
  %2035 = vperm.xlu0 %2034, %v714
  %v2036 = vpop.permute.xlu0 %2035
  %v2038 = vsub.f32 %v2029, %v2036
  %v2039 = vsub.f32 %v2030, %v2036
  %v2040 = vsub.f32 %v2031, %v2036
  %v2041 = vsub.f32 %v2032, %v2036
  %v2042 = vsub.f32 %v2033, %v2036
  %v2043 = vand.u32 2147483647, %v2038
  %v2044 = vand.u32 2147483647, %v2039
  %v2045 = vand.u32 2147483647, %v2040
  %v2046 = vand.u32 2147483647, %v2041
  %v2047 = vand.u32 2147483647, %v2042
  %2053 = vrot.lane.b32.xlu0 %v2043, 112
  %v2054 = vpop.permute.xlu0 %2053
  %2055 = vrot.lane.b32.xlu0 %v2044, 112
  %v2056 = vpop.permute.xlu0 %2055
  %2057 = vrot.lane.b32.xlu0 %v2045, 112
  %v2058 = vpop.permute.xlu0 %2057
  %2059 = vrot.lane.b32.xlu0 %v2046, 112
  %v2060 = vpop.permute.xlu0 %2059
  %2061 = vrot.lane.b32.xlu0 %v2047, 112
  %v2062 = vpop.permute.xlu0 %2061
  %v2063 = vsel %vm97, %v2054, %v2056
  %v2064 = vsel %vm97, %v2056, %v2058
  %v2065 = vsel %vm97, %v2058, %v2060
  %v2066 = vsel %vm97, %v2060, %v2062
  %v2072 = vadd.f32 %v2024, %v2063
  %v2073 = vadd.f32 %v2025, %v2064
  %v2074 = vadd.f32 %v2026, %v2065
  %v2075 = vadd.f32 %v2027, %v2066
  %v2076 = vadd.f32 %v2028, %v2062
  %v2077 = vperm.slane %v1784, 6
  %v2078 = vperm.slane %v1785, 6
  %v2079 = vperm.slane %v1786, 6
  %v2080 = vperm.slane %v1787, 6
  %v2081 = vperm.slane %v1788, 6
  %2082 = vset.pattern.permute.xlu0 30
  %2083 = vperm.xlu0 %2082, %v714
  %v2084 = vpop.permute.xlu0 %2083
  %v2086 = vsub.f32 %v2077, %v2084
  %v2087 = vsub.f32 %v2078, %v2084
  %v2088 = vsub.f32 %v2079, %v2084
  %v2089 = vsub.f32 %v2080, %v2084
  %v2090 = vsub.f32 %v2081, %v2084
  %v2091 = vand.u32 2147483647, %v2086
  %v2092 = vand.u32 2147483647, %v2087
  %v2093 = vand.u32 2147483647, %v2088
  %v2094 = vand.u32 2147483647, %v2089
  %v2095 = vand.u32 2147483647, %v2090
  %2101 = vrot.lane.b32.xlu0 %v2091, 112
  %v2102 = vpop.permute.xlu0 %2101
  %2103 = vrot.lane.b32.xlu0 %v2092, 112
  %v2104 = vpop.permute.xlu0 %2103
  %2105 = vrot.lane.b32.xlu0 %v2093, 112
  %v2106 = vpop.permute.xlu0 %2105
  %2107 = vrot.lane.b32.xlu0 %v2094, 112
  %v2108 = vpop.permute.xlu0 %2107
  %2109 = vrot.lane.b32.xlu0 %v2095, 112
  %v2110 = vpop.permute.xlu0 %2109
  %v2111 = vsel %vm97, %v2102, %v2104
  %v2112 = vsel %vm97, %v2104, %v2106
  %v2113 = vsel %vm97, %v2106, %v2108
  %v2114 = vsel %vm97, %v2108, %v2110
  %v2120 = vadd.f32 %v2072, %v2111
  %v2121 = vadd.f32 %v2073, %v2112
  %v2122 = vadd.f32 %v2074, %v2113
  %v2123 = vadd.f32 %v2075, %v2114
  %v2124 = vadd.f32 %v2076, %v2110
  %v2125 = vperm.slane %v1784, 7
  %v2126 = vperm.slane %v1785, 7
  %v2127 = vperm.slane %v1786, 7
  %v2128 = vperm.slane %v1787, 7
  %v2129 = vperm.slane %v1788, 7
  %2130 = vset.pattern.permute.xlu0 31
  %2131 = vperm.xlu0 %2130, %v714
  %v2132 = vpop.permute.xlu0 %2131
  %v2134 = vsub.f32 %v2125, %v2132
  %v2135 = vsub.f32 %v2126, %v2132
  %v2136 = vsub.f32 %v2127, %v2132
  %v2137 = vsub.f32 %v2128, %v2132
  %v2138 = vsub.f32 %v2129, %v2132
  %v2139 = vand.u32 2147483647, %v2134
  %v2140 = vand.u32 2147483647, %v2135
  %v2141 = vand.u32 2147483647, %v2136
  %v2142 = vand.u32 2147483647, %v2137
  %v2143 = vand.u32 2147483647, %v2138
  %2149 = vrot.lane.b32.xlu0 %v2139, 112
  %v2150 = vpop.permute.xlu0 %2149
  %2151 = vrot.lane.b32.xlu0 %v2140, 112
  %v2152 = vpop.permute.xlu0 %2151
  %2153 = vrot.lane.b32.xlu0 %v2141, 112
  %v2154 = vpop.permute.xlu0 %2153
  %2155 = vrot.lane.b32.xlu0 %v2142, 112
  %v2156 = vpop.permute.xlu0 %2155
  %2157 = vrot.lane.b32.xlu0 %v2143, 112
  %v2158 = vpop.permute.xlu0 %2157
  %v2159 = vsel %vm97, %v2150, %v2152
  %v2160 = vsel %vm97, %v2152, %v2154
  %v2161 = vsel %vm97, %v2154, %v2156
  %v2162 = vsel %vm97, %v2156, %v2158
  %v2168 = vadd.f32 %v2120, %v2159
  %v2169 = vadd.f32 %v2121, %v2160
  %v2170 = vadd.f32 %v2122, %v2161
  %v2171 = vadd.f32 %v2123, %v2162
  %v2172 = vadd.f32 %v2124, %v2158
  %v2173 = vld [vmem:[%s169] ss:$8 sm:$0xf]
  %v2175 = vperm.slane %v2173, 0
  %v2176 = vperm.slane %v2173, 1
  %v2177 = vperm.slane %v2173, 2
  %v2178 = vperm.slane %v2173, 3
  %v2183 = vmul.f32 %v716, %v2175
  %v2184 = vmul.f32 %v717, %v2176
  %v2185 = vmul.f32 %v718, %v2177
  %v2186 = vmul.f32 %v719, %v2178
  %v2187 = vperm.slane %v2183, 0
  %v2188 = vperm.slane %v2184, 0
  %v2189 = vperm.slane %v2185, 0
  %v2190 = vperm.slane %v2186, 0
  %2191 = vset.pattern.permute.xlu0 32
  %2192 = vperm.xlu0 %2191, %v714
  %v2193 = vpop.permute.xlu0 %2192
  %v2195 = vsub.f32 %v2187, %v2193
  %v2196 = vsub.f32 %v2188, %v2193
  %v2197 = vsub.f32 %v2189, %v2193
  %v2198 = vsub.f32 %v2190, %v2193
  %v2199 = vand.u32 2147483647, %v2195
  %v2200 = vand.u32 2147483647, %v2196
  %v2201 = vand.u32 2147483647, %v2197
  %v2202 = vand.u32 2147483647, %v2198
  %2207 = vrot.lane.b32.xlu0 %v2199, 111
  %v2208 = vpop.permute.xlu0 %2207
  %2209 = vrot.lane.b32.xlu0 %v2200, 111
  %v2210 = vpop.permute.xlu0 %2209
  %2211 = vrot.lane.b32.xlu0 %v2201, 111
  %v2212 = vpop.permute.xlu0 %2211
  %2213 = vrot.lane.b32.xlu0 %v2202, 111
  %v2214 = vpop.permute.xlu0 %2213
  %v2215 = vsel %vm68, %v2208, %v2210
  %v2216 = vsel %vm68, %v2210, %v2212
  %v2217 = vsel %vm68, %v2212, %v2214
  %v2223 = vadd.f32 %v2168, %v2208
  %v2224 = vadd.f32 %v2169, %v2215
  %v2225 = vadd.f32 %v2170, %v2216
  %v2226 = vadd.f32 %v2171, %v2217
  %v2227 = vadd.f32 %v2172, %v2214
  %v2228 = vperm.slane %v2183, 1
  %v2229 = vperm.slane %v2184, 1
  %v2230 = vperm.slane %v2185, 1
  %v2231 = vperm.slane %v2186, 1
  %2232 = vset.pattern.permute.xlu0 33
  %2233 = vperm.xlu0 %2232, %v714
  %v2234 = vpop.permute.xlu0 %2233
  %v2236 = vsub.f32 %v2228, %v2234
  %v2237 = vsub.f32 %v2229, %v2234
  %v2238 = vsub.f32 %v2230, %v2234
  %v2239 = vsub.f32 %v2231, %v2234
  %v2240 = vand.u32 2147483647, %v2236
  %v2241 = vand.u32 2147483647, %v2237
  %v2242 = vand.u32 2147483647, %v2238
  %v2243 = vand.u32 2147483647, %v2239
  %2248 = vrot.lane.b32.xlu0 %v2240, 111
  %v2249 = vpop.permute.xlu0 %2248
  %2250 = vrot.lane.b32.xlu0 %v2241, 111
  %v2251 = vpop.permute.xlu0 %2250
  %2252 = vrot.lane.b32.xlu0 %v2242, 111
  %v2253 = vpop.permute.xlu0 %2252
  %2254 = vrot.lane.b32.xlu0 %v2243, 111
  %v2255 = vpop.permute.xlu0 %2254
  %v2256 = vsel %vm68, %v2249, %v2251
  %v2257 = vsel %vm68, %v2251, %v2253
  %v2258 = vsel %vm68, %v2253, %v2255
  %v2264 = vadd.f32 %v2223, %v2249
  %v2265 = vadd.f32 %v2224, %v2256
  %v2266 = vadd.f32 %v2225, %v2257
  %v2267 = vadd.f32 %v2226, %v2258
  %v2268 = vadd.f32 %v2227, %v2255
  %v2269 = vperm.slane %v2183, 2
  %v2270 = vperm.slane %v2184, 2
  %v2271 = vperm.slane %v2185, 2
  %v2272 = vperm.slane %v2186, 2
  %2273 = vset.pattern.permute.xlu0 34
  %2274 = vperm.xlu0 %2273, %v714
  %v2275 = vpop.permute.xlu0 %2274
  %v2277 = vsub.f32 %v2269, %v2275
  %v2278 = vsub.f32 %v2270, %v2275
  %v2279 = vsub.f32 %v2271, %v2275
  %v2280 = vsub.f32 %v2272, %v2275
  %v2281 = vand.u32 2147483647, %v2277
  %v2282 = vand.u32 2147483647, %v2278
  %v2283 = vand.u32 2147483647, %v2279
  %v2284 = vand.u32 2147483647, %v2280
  %2289 = vrot.lane.b32.xlu0 %v2281, 111
  %v2290 = vpop.permute.xlu0 %2289
  %2291 = vrot.lane.b32.xlu0 %v2282, 111
  %v2292 = vpop.permute.xlu0 %2291
  %2293 = vrot.lane.b32.xlu0 %v2283, 111
  %v2294 = vpop.permute.xlu0 %2293
  %2295 = vrot.lane.b32.xlu0 %v2284, 111
  %v2296 = vpop.permute.xlu0 %2295
  %v2297 = vsel %vm68, %v2290, %v2292
  %v2298 = vsel %vm68, %v2292, %v2294
  %v2299 = vsel %vm68, %v2294, %v2296
  %v2305 = vadd.f32 %v2264, %v2290
  %v2306 = vadd.f32 %v2265, %v2297
  %v2307 = vadd.f32 %v2266, %v2298
  %v2308 = vadd.f32 %v2267, %v2299
  %v2309 = vadd.f32 %v2268, %v2296
  %v2310 = vperm.slane %v2183, 3
  %v2311 = vperm.slane %v2184, 3
  %v2312 = vperm.slane %v2185, 3
  %v2313 = vperm.slane %v2186, 3
  %2314 = vset.pattern.permute.xlu0 35
  %2315 = vperm.xlu0 %2314, %v714
  %v2316 = vpop.permute.xlu0 %2315
  %v2318 = vsub.f32 %v2310, %v2316
  %v2319 = vsub.f32 %v2311, %v2316
  %v2320 = vsub.f32 %v2312, %v2316
  %v2321 = vsub.f32 %v2313, %v2316
  %v2322 = vand.u32 2147483647, %v2318
  %v2323 = vand.u32 2147483647, %v2319
  %v2324 = vand.u32 2147483647, %v2320
  %v2325 = vand.u32 2147483647, %v2321
  %2330 = vrot.lane.b32.xlu0 %v2322, 111
  %v2331 = vpop.permute.xlu0 %2330
  %2332 = vrot.lane.b32.xlu0 %v2323, 111
  %v2333 = vpop.permute.xlu0 %2332
  %2334 = vrot.lane.b32.xlu0 %v2324, 111
  %v2335 = vpop.permute.xlu0 %2334
  %2336 = vrot.lane.b32.xlu0 %v2325, 111
  %v2337 = vpop.permute.xlu0 %2336
  %v2338 = vsel %vm68, %v2331, %v2333
  %v2339 = vsel %vm68, %v2333, %v2335
  %v2340 = vsel %vm68, %v2335, %v2337
  %v2346 = vadd.f32 %v2305, %v2331
  %v2347 = vadd.f32 %v2306, %v2338
  %v2348 = vadd.f32 %v2307, %v2339
  %v2349 = vadd.f32 %v2308, %v2340
  %v2350 = vadd.f32 %v2309, %v2337
  %v2351 = vperm.slane %v2183, 4
  %v2352 = vperm.slane %v2184, 4
  %v2353 = vperm.slane %v2185, 4
  %v2354 = vperm.slane %v2186, 4
  %2355 = vset.pattern.permute.xlu0 36
  %2356 = vperm.xlu0 %2355, %v714
  %v2357 = vpop.permute.xlu0 %2356
  %v2359 = vsub.f32 %v2351, %v2357
  %v2360 = vsub.f32 %v2352, %v2357
  %v2361 = vsub.f32 %v2353, %v2357
  %v2362 = vsub.f32 %v2354, %v2357
  %v2363 = vand.u32 2147483647, %v2359
  %v2364 = vand.u32 2147483647, %v2360
  %v2365 = vand.u32 2147483647, %v2361
  %v2366 = vand.u32 2147483647, %v2362
  %2371 = vrot.lane.b32.xlu0 %v2363, 111
  %v2372 = vpop.permute.xlu0 %2371
  %2373 = vrot.lane.b32.xlu0 %v2364, 111
  %v2374 = vpop.permute.xlu0 %2373
  %2375 = vrot.lane.b32.xlu0 %v2365, 111
  %v2376 = vpop.permute.xlu0 %2375
  %2377 = vrot.lane.b32.xlu0 %v2366, 111
  %v2378 = vpop.permute.xlu0 %2377
  %v2379 = vsel %vm68, %v2372, %v2374
  %v2380 = vsel %vm68, %v2374, %v2376
  %v2381 = vsel %vm68, %v2376, %v2378
  %v2387 = vadd.f32 %v2346, %v2372
  %v2388 = vadd.f32 %v2347, %v2379
  %v2389 = vadd.f32 %v2348, %v2380
  %v2390 = vadd.f32 %v2349, %v2381
  %v2391 = vadd.f32 %v2350, %v2378
  %v2392 = vperm.slane %v2183, 5
  %v2393 = vperm.slane %v2184, 5
  %v2394 = vperm.slane %v2185, 5
  %v2395 = vperm.slane %v2186, 5
  %2396 = vset.pattern.permute.xlu0 37
  %2397 = vperm.xlu0 %2396, %v714
  %v2398 = vpop.permute.xlu0 %2397
  %v2400 = vsub.f32 %v2392, %v2398
  %v2401 = vsub.f32 %v2393, %v2398
  %v2402 = vsub.f32 %v2394, %v2398
  %v2403 = vsub.f32 %v2395, %v2398
  %v2404 = vand.u32 2147483647, %v2400
  %v2405 = vand.u32 2147483647, %v2401
  %v2406 = vand.u32 2147483647, %v2402
  %v2407 = vand.u32 2147483647, %v2403
  %2412 = vrot.lane.b32.xlu0 %v2404, 111
  %v2413 = vpop.permute.xlu0 %2412
  %2414 = vrot.lane.b32.xlu0 %v2405, 111
  %v2415 = vpop.permute.xlu0 %2414
  %2416 = vrot.lane.b32.xlu0 %v2406, 111
  %v2417 = vpop.permute.xlu0 %2416
  %2418 = vrot.lane.b32.xlu0 %v2407, 111
  %v2419 = vpop.permute.xlu0 %2418
  %v2420 = vsel %vm68, %v2413, %v2415
  %v2421 = vsel %vm68, %v2415, %v2417
  %v2422 = vsel %vm68, %v2417, %v2419
  %v2428 = vadd.f32 %v2387, %v2413
  %v2429 = vadd.f32 %v2388, %v2420
  %v2430 = vadd.f32 %v2389, %v2421
  %v2431 = vadd.f32 %v2390, %v2422
  %v2432 = vadd.f32 %v2391, %v2419
  %v2433 = vperm.slane %v2183, 6
  %v2434 = vperm.slane %v2184, 6
  %v2435 = vperm.slane %v2185, 6
  %v2436 = vperm.slane %v2186, 6
  %2437 = vset.pattern.permute.xlu0 38
  %2438 = vperm.xlu0 %2437, %v714
  %v2439 = vpop.permute.xlu0 %2438
  %v2441 = vsub.f32 %v2433, %v2439
  %v2442 = vsub.f32 %v2434, %v2439
  %v2443 = vsub.f32 %v2435, %v2439
  %v2444 = vsub.f32 %v2436, %v2439
  %v2445 = vand.u32 2147483647, %v2441
  %v2446 = vand.u32 2147483647, %v2442
  %v2447 = vand.u32 2147483647, %v2443
  %v2448 = vand.u32 2147483647, %v2444
  %2453 = vrot.lane.b32.xlu0 %v2445, 111
  %v2454 = vpop.permute.xlu0 %2453
  %2455 = vrot.lane.b32.xlu0 %v2446, 111
  %v2456 = vpop.permute.xlu0 %2455
  %2457 = vrot.lane.b32.xlu0 %v2447, 111
  %v2458 = vpop.permute.xlu0 %2457
  %2459 = vrot.lane.b32.xlu0 %v2448, 111
  %v2460 = vpop.permute.xlu0 %2459
  %v2461 = vsel %vm68, %v2454, %v2456
  %v2462 = vsel %vm68, %v2456, %v2458
  %v2463 = vsel %vm68, %v2458, %v2460
  %v2469 = vadd.f32 %v2428, %v2454
  %v2470 = vadd.f32 %v2429, %v2461
  %v2471 = vadd.f32 %v2430, %v2462
  %v2472 = vadd.f32 %v2431, %v2463
  %v2473 = vadd.f32 %v2432, %v2460
  %v2474 = vperm.slane %v2183, 7
  %v2475 = vperm.slane %v2184, 7
  %v2476 = vperm.slane %v2185, 7
  %v2477 = vperm.slane %v2186, 7
  %2478 = vset.pattern.permute.xlu0 39
  %2479 = vperm.xlu0 %2478, %v714
  %v2480 = vpop.permute.xlu0 %2479
  %v2482 = vsub.f32 %v2474, %v2480
  %v2483 = vsub.f32 %v2475, %v2480
  %v2484 = vsub.f32 %v2476, %v2480
  %v2485 = vsub.f32 %v2477, %v2480
  %v2486 = vand.u32 2147483647, %v2482
  %v2487 = vand.u32 2147483647, %v2483
  %v2488 = vand.u32 2147483647, %v2484
  %v2489 = vand.u32 2147483647, %v2485
  %2494 = vrot.lane.b32.xlu0 %v2486, 111
  %v2495 = vpop.permute.xlu0 %2494
  %2496 = vrot.lane.b32.xlu0 %v2487, 111
  %v2497 = vpop.permute.xlu0 %2496
  %2498 = vrot.lane.b32.xlu0 %v2488, 111
  %v2499 = vpop.permute.xlu0 %2498
  %2500 = vrot.lane.b32.xlu0 %v2489, 111
  %v2501 = vpop.permute.xlu0 %2500
  %v2502 = vsel %vm68, %v2495, %v2497
  %v2503 = vsel %vm68, %v2497, %v2499
  %v2504 = vsel %vm68, %v2499, %v2501
  %v2510 = vadd.f32 %v2469, %v2495
  %v2511 = vadd.f32 %v2470, %v2502
  %v2512 = vadd.f32 %v2471, %v2503
  %v2513 = vadd.f32 %v2472, %v2504
  %v2514 = vadd.f32 %v2473, %v2501
  %v2515 = vld [vmem:[#allocation2 + $0x8] sm:$0xff]
  %v2516 = vld [vmem:[#allocation2 + $0x10] sm:$0xff]
  %v2517 = vld [vmem:[#allocation2 + $0x18] sm:$0xff]
  %v2518 = vld [vmem:[#allocation2 + $0x20] sm:$0xff]
  %v2519 = vld [vmem:[#allocation2 + $0x28] sm:$0xff]
  %v2520 = vld [vmem:[%s189] ss:$8 sm:$0xf]
  %v2522 = vperm.slane %v2520, 0
  %v2523 = vperm.slane %v2520, 1
  %v2524 = vperm.slane %v2520, 2
  %v2525 = vperm.slane %v2520, 3
  %2526 = vrot.lane.b32.xlu0 %v2522, 1
  %v2527 = vpop.permute.xlu0 %2526
  %2528 = vrot.lane.b32.xlu0 %v2523, 1
  %v2529 = vpop.permute.xlu0 %2528
  %2530 = vrot.lane.b32.xlu0 %v2524, 1
  %v2531 = vpop.permute.xlu0 %2530
  %2532 = vrot.lane.b32.xlu0 %v2525, 1
  %v2533 = vpop.permute.xlu0 %2532
  %v2534 = vsel %vm204, %v2527, %v2529
  %v2535 = vsel %vm204, %v2529, %v2531
  %v2536 = vsel %vm204, %v2531, %v2533
  %v2542 = vmul.f32 %v2515, %v2527
  %v2543 = vmul.f32 %v2516, %v2534
  %v2544 = vmul.f32 %v2517, %v2535
  %v2545 = vmul.f32 %v2518, %v2536
  %v2546 = vmul.f32 %v2519, %v2533
  %v2547 = vperm.slane %v2542, 0
  %v2548 = vperm.slane %v2543, 0
  %v2549 = vperm.slane %v2544, 0
  %v2550 = vperm.slane %v2545, 0
  %v2551 = vperm.slane %v2546, 0
  %2552 = vset.pattern.permute.xlu0 40
  %2553 = vperm.xlu0 %2552, %v714
  %v2554 = vpop.permute.xlu0 %2553
  %v2556 = vsub.f32 %v2547, %v2554
  %v2557 = vsub.f32 %v2548, %v2554
  %v2558 = vsub.f32 %v2549, %v2554
  %v2559 = vsub.f32 %v2550, %v2554
  %v2560 = vsub.f32 %v2551, %v2554
  %v2561 = vand.u32 2147483647, %v2556
  %v2562 = vand.u32 2147483647, %v2557
  %v2563 = vand.u32 2147483647, %v2558
  %v2564 = vand.u32 2147483647, %v2559
  %v2565 = vand.u32 2147483647, %v2560
  %2571 = vrot.lane.b32.xlu0 %v2561, 110
  %v2572 = vpop.permute.xlu0 %2571
  %2573 = vrot.lane.b32.xlu0 %v2562, 110
  %v2574 = vpop.permute.xlu0 %2573
  %2575 = vrot.lane.b32.xlu0 %v2563, 110
  %v2576 = vpop.permute.xlu0 %2575
  %2577 = vrot.lane.b32.xlu0 %v2564, 110
  %v2578 = vpop.permute.xlu0 %2577
  %2579 = vrot.lane.b32.xlu0 %v2565, 110
  %v2580 = vpop.permute.xlu0 %2579
  %v2581 = vsel %vm393, %v2572, %v2574
  %v2582 = vsel %vm393, %v2574, %v2576
  %v2583 = vsel %vm393, %v2576, %v2578
  %v2584 = vsel %vm393, %v2578, %v2580
  %v2590 = vadd.f32 %v2510, %v2572
  %v2591 = vadd.f32 %v2511, %v2581
  %v2592 = vadd.f32 %v2512, %v2582
  %v2593 = vadd.f32 %v2513, %v2583
  %v2594 = vadd.f32 %v2514, %v2584
  %v2595 = vperm.slane %v2542, 1
  %v2596 = vperm.slane %v2543, 1
  %v2597 = vperm.slane %v2544, 1
  %v2598 = vperm.slane %v2545, 1
  %v2599 = vperm.slane %v2546, 1
  %2600 = vset.pattern.permute.xlu0 41
  %2601 = vperm.xlu0 %2600, %v714
  %v2602 = vpop.permute.xlu0 %2601
  %v2604 = vsub.f32 %v2595, %v2602
  %v2605 = vsub.f32 %v2596, %v2602
  %v2606 = vsub.f32 %v2597, %v2602
  %v2607 = vsub.f32 %v2598, %v2602
  %v2608 = vsub.f32 %v2599, %v2602
  %v2609 = vand.u32 2147483647, %v2604
  %v2610 = vand.u32 2147483647, %v2605
  %v2611 = vand.u32 2147483647, %v2606
  %v2612 = vand.u32 2147483647, %v2607
  %v2613 = vand.u32 2147483647, %v2608
  %2619 = vrot.lane.b32.xlu0 %v2609, 110
  %v2620 = vpop.permute.xlu0 %2619
  %2621 = vrot.lane.b32.xlu0 %v2610, 110
  %v2622 = vpop.permute.xlu0 %2621
  %2623 = vrot.lane.b32.xlu0 %v2611, 110
  %v2624 = vpop.permute.xlu0 %2623
  %2625 = vrot.lane.b32.xlu0 %v2612, 110
  %v2626 = vpop.permute.xlu0 %2625
  %2627 = vrot.lane.b32.xlu0 %v2613, 110
  %v2628 = vpop.permute.xlu0 %2627
  %v2629 = vsel %vm393, %v2620, %v2622
  %v2630 = vsel %vm393, %v2622, %v2624
  %v2631 = vsel %vm393, %v2624, %v2626
  %v2632 = vsel %vm393, %v2626, %v2628
  %v2638 = vadd.f32 %v2590, %v2620
  %v2639 = vadd.f32 %v2591, %v2629
  %v2640 = vadd.f32 %v2592, %v2630
  %v2641 = vadd.f32 %v2593, %v2631
  %v2642 = vadd.f32 %v2594, %v2632
  %v2643 = vperm.slane %v2542, 2
  %v2644 = vperm.slane %v2543, 2
  %v2645 = vperm.slane %v2544, 2
  %v2646 = vperm.slane %v2545, 2
  %v2647 = vperm.slane %v2546, 2
  %2648 = vset.pattern.permute.xlu0 42
  %2649 = vperm.xlu0 %2648, %v714
  %v2650 = vpop.permute.xlu0 %2649
  %v2652 = vsub.f32 %v2643, %v2650
  %v2653 = vsub.f32 %v2644, %v2650
  %v2654 = vsub.f32 %v2645, %v2650
  %v2655 = vsub.f32 %v2646, %v2650
  %v2656 = vsub.f32 %v2647, %v2650
  %v2657 = vand.u32 2147483647, %v2652
  %v2658 = vand.u32 2147483647, %v2653
  %v2659 = vand.u32 2147483647, %v2654
  %v2660 = vand.u32 2147483647, %v2655
  %v2661 = vand.u32 2147483647, %v2656
  %2667 = vrot.lane.b32.xlu0 %v2657, 110
  %v2668 = vpop.permute.xlu0 %2667
  %2669 = vrot.lane.b32.xlu0 %v2658, 110
  %v2670 = vpop.permute.xlu0 %2669
  %2671 = vrot.lane.b32.xlu0 %v2659, 110
  %v2672 = vpop.permute.xlu0 %2671
  %2673 = vrot.lane.b32.xlu0 %v2660, 110
  %v2674 = vpop.permute.xlu0 %2673
  %2675 = vrot.lane.b32.xlu0 %v2661, 110
  %v2676 = vpop.permute.xlu0 %2675
  %v2677 = vsel %vm393, %v2668, %v2670
  %v2678 = vsel %vm393, %v2670, %v2672
  %v2679 = vsel %vm393, %v2672, %v2674
  %v2680 = vsel %vm393, %v2674, %v2676
  %v2686 = vadd.f32 %v2638, %v2668
  %v2687 = vadd.f32 %v2639, %v2677
  %v2688 = vadd.f32 %v2640, %v2678
  %v2689 = vadd.f32 %v2641, %v2679
  %v2690 = vadd.f32 %v2642, %v2680
  %v2691 = vperm.slane %v2542, 3
  %v2692 = vperm.slane %v2543, 3
  %v2693 = vperm.slane %v2544, 3
  %v2694 = vperm.slane %v2545, 3
  %v2695 = vperm.slane %v2546, 3
  %2696 = vset.pattern.permute.xlu0 43
  %2697 = vperm.xlu0 %2696, %v714
  %v2698 = vpop.permute.xlu0 %2697
  %v2700 = vsub.f32 %v2691, %v2698
  %v2701 = vsub.f32 %v2692, %v2698
  %v2702 = vsub.f32 %v2693, %v2698
  %v2703 = vsub.f32 %v2694, %v2698
  %v2704 = vsub.f32 %v2695, %v2698
  %v2705 = vand.u32 2147483647, %v2700
  %v2706 = vand.u32 2147483647, %v2701
  %v2707 = vand.u32 2147483647, %v2702
  %v2708 = vand.u32 2147483647, %v2703
  %v2709 = vand.u32 2147483647, %v2704
  %2715 = vrot.lane.b32.xlu0 %v2705, 110
  %v2716 = vpop.permute.xlu0 %2715
  %2717 = vrot.lane.b32.xlu0 %v2706, 110
  %v2718 = vpop.permute.xlu0 %2717
  %2719 = vrot.lane.b32.xlu0 %v2707, 110
  %v2720 = vpop.permute.xlu0 %2719
  %2721 = vrot.lane.b32.xlu0 %v2708, 110
  %v2722 = vpop.permute.xlu0 %2721
  %2723 = vrot.lane.b32.xlu0 %v2709, 110
  %v2724 = vpop.permute.xlu0 %2723
  %v2725 = vsel %vm393, %v2716, %v2718
  %v2726 = vsel %vm393, %v2718, %v2720
  %v2727 = vsel %vm393, %v2720, %v2722
  %v2728 = vsel %vm393, %v2722, %v2724
  %v2734 = vadd.f32 %v2686, %v2716
  %v2735 = vadd.f32 %v2687, %v2725
  %v2736 = vadd.f32 %v2688, %v2726
  %v2737 = vadd.f32 %v2689, %v2727
  %v2738 = vadd.f32 %v2690, %v2728
  %v2739 = vperm.slane %v2542, 4
  %v2740 = vperm.slane %v2543, 4
  %v2741 = vperm.slane %v2544, 4
  %v2742 = vperm.slane %v2545, 4
  %v2743 = vperm.slane %v2546, 4
  %2744 = vset.pattern.permute.xlu0 44
  %2745 = vperm.xlu0 %2744, %v714
  %v2746 = vpop.permute.xlu0 %2745
  %v2748 = vsub.f32 %v2739, %v2746
  %v2749 = vsub.f32 %v2740, %v2746
  %v2750 = vsub.f32 %v2741, %v2746
  %v2751 = vsub.f32 %v2742, %v2746
  %v2752 = vsub.f32 %v2743, %v2746
  %v2753 = vand.u32 2147483647, %v2748
  %v2754 = vand.u32 2147483647, %v2749
  %v2755 = vand.u32 2147483647, %v2750
  %v2756 = vand.u32 2147483647, %v2751
  %v2757 = vand.u32 2147483647, %v2752
  %2763 = vrot.lane.b32.xlu0 %v2753, 110
  %v2764 = vpop.permute.xlu0 %2763
  %2765 = vrot.lane.b32.xlu0 %v2754, 110
  %v2766 = vpop.permute.xlu0 %2765
  %2767 = vrot.lane.b32.xlu0 %v2755, 110
  %v2768 = vpop.permute.xlu0 %2767
  %2769 = vrot.lane.b32.xlu0 %v2756, 110
  %v2770 = vpop.permute.xlu0 %2769
  %2771 = vrot.lane.b32.xlu0 %v2757, 110
  %v2772 = vpop.permute.xlu0 %2771
  %v2773 = vsel %vm393, %v2764, %v2766
  %v2774 = vsel %vm393, %v2766, %v2768
  %v2775 = vsel %vm393, %v2768, %v2770
  %v2776 = vsel %vm393, %v2770, %v2772
  %v2782 = vadd.f32 %v2734, %v2764
  %v2783 = vadd.f32 %v2735, %v2773
  %v2784 = vadd.f32 %v2736, %v2774
  %v2785 = vadd.f32 %v2737, %v2775
  %v2786 = vadd.f32 %v2738, %v2776
  %v2787 = vperm.slane %v2542, 5
  %v2788 = vperm.slane %v2543, 5
  %v2789 = vperm.slane %v2544, 5
  %v2790 = vperm.slane %v2545, 5
  %v2791 = vperm.slane %v2546, 5
  %2792 = vset.pattern.permute.xlu0 45
  %2793 = vperm.xlu0 %2792, %v714
  %v2794 = vpop.permute.xlu0 %2793
  %v2796 = vsub.f32 %v2787, %v2794
  %v2797 = vsub.f32 %v2788, %v2794
  %v2798 = vsub.f32 %v2789, %v2794
  %v2799 = vsub.f32 %v2790, %v2794
  %v2800 = vsub.f32 %v2791, %v2794
  %v2801 = vand.u32 2147483647, %v2796
  %v2802 = vand.u32 2147483647, %v2797
  %v2803 = vand.u32 2147483647, %v2798
  %v2804 = vand.u32 2147483647, %v2799
  %v2805 = vand.u32 2147483647, %v2800
  %2811 = vrot.lane.b32.xlu0 %v2801, 110
  %v2812 = vpop.permute.xlu0 %2811
  %2813 = vrot.lane.b32.xlu0 %v2802, 110
  %v2814 = vpop.permute.xlu0 %2813
  %2815 = vrot.lane.b32.xlu0 %v2803, 110
  %v2816 = vpop.permute.xlu0 %2815
  %2817 = vrot.lane.b32.xlu0 %v2804, 110
  %v2818 = vpop.permute.xlu0 %2817
  %2819 = vrot.lane.b32.xlu0 %v2805, 110
  %v2820 = vpop.permute.xlu0 %2819
  %v2821 = vsel %vm393, %v2812, %v2814
  %v2822 = vsel %vm393, %v2814, %v2816
  %v2823 = vsel %vm393, %v2816, %v2818
  %v2824 = vsel %vm393, %v2818, %v2820
  %v2830 = vadd.f32 %v2782, %v2812
  %v2831 = vadd.f32 %v2783, %v2821
  %v2832 = vadd.f32 %v2784, %v2822
  %v2833 = vadd.f32 %v2785, %v2823
  %v2834 = vadd.f32 %v2786, %v2824
  %v2835 = vperm.slane %v2542, 6
  %v2836 = vperm.slane %v2543, 6
  %v2837 = vperm.slane %v2544, 6
  %v2838 = vperm.slane %v2545, 6
  %v2839 = vperm.slane %v2546, 6
  %2840 = vset.pattern.permute.xlu0 46
  %2841 = vperm.xlu0 %2840, %v714
  %v2842 = vpop.permute.xlu0 %2841
  %v2844 = vsub.f32 %v2835, %v2842
  %v2845 = vsub.f32 %v2836, %v2842
  %v2846 = vsub.f32 %v2837, %v2842
  %v2847 = vsub.f32 %v2838, %v2842
  %v2848 = vsub.f32 %v2839, %v2842
  %v2849 = vand.u32 2147483647, %v2844
  %v2850 = vand.u32 2147483647, %v2845
  %v2851 = vand.u32 2147483647, %v2846
  %v2852 = vand.u32 2147483647, %v2847
  %v2853 = vand.u32 2147483647, %v2848
  %2859 = vrot.lane.b32.xlu0 %v2849, 110
  %v2860 = vpop.permute.xlu0 %2859
  %2861 = vrot.lane.b32.xlu0 %v2850, 110
  %v2862 = vpop.permute.xlu0 %2861
  %2863 = vrot.lane.b32.xlu0 %v2851, 110
  %v2864 = vpop.permute.xlu0 %2863
  %2865 = vrot.lane.b32.xlu0 %v2852, 110
  %v2866 = vpop.permute.xlu0 %2865
  %2867 = vrot.lane.b32.xlu0 %v2853, 110
  %v2868 = vpop.permute.xlu0 %2867
  %v2869 = vsel %vm393, %v2860, %v2862
  %v2870 = vsel %vm393, %v2862, %v2864
  %v2871 = vsel %vm393, %v2864, %v2866
  %v2872 = vsel %vm393, %v2866, %v2868
  %v2878 = vadd.f32 %v2830, %v2860
  %v2879 = vadd.f32 %v2831, %v2869
  %v2880 = vadd.f32 %v2832, %v2870
  %v2881 = vadd.f32 %v2833, %v2871
  %v2882 = vadd.f32 %v2834, %v2872
  %v2883 = vperm.slane %v2542, 7
  %v2884 = vperm.slane %v2543, 7
  %v2885 = vperm.slane %v2544, 7
  %v2886 = vperm.slane %v2545, 7
  %v2887 = vperm.slane %v2546, 7
  %2888 = vset.pattern.permute.xlu0 47
  %2889 = vperm.xlu0 %2888, %v714
  %v2890 = vpop.permute.xlu0 %2889
  %v2892 = vsub.f32 %v2883, %v2890
  %v2893 = vsub.f32 %v2884, %v2890
  %v2894 = vsub.f32 %v2885, %v2890
  %v2895 = vsub.f32 %v2886, %v2890
  %v2896 = vsub.f32 %v2887, %v2890
  %v2897 = vand.u32 2147483647, %v2892
  %v2898 = vand.u32 2147483647, %v2893
  %v2899 = vand.u32 2147483647, %v2894
  %v2900 = vand.u32 2147483647, %v2895
  %v2901 = vand.u32 2147483647, %v2896
  %2907 = vrot.lane.b32.xlu0 %v2897, 110
  %v2908 = vpop.permute.xlu0 %2907
  %2909 = vrot.lane.b32.xlu0 %v2898, 110
  %v2910 = vpop.permute.xlu0 %2909
  %2911 = vrot.lane.b32.xlu0 %v2899, 110
  %v2912 = vpop.permute.xlu0 %2911
  %2913 = vrot.lane.b32.xlu0 %v2900, 110
  %v2914 = vpop.permute.xlu0 %2913
  %2915 = vrot.lane.b32.xlu0 %v2901, 110
  %v2916 = vpop.permute.xlu0 %2915
  %v2917 = vsel %vm393, %v2908, %v2910
  %v2918 = vsel %vm393, %v2910, %v2912
  %v2919 = vsel %vm393, %v2912, %v2914
  %v2920 = vsel %vm393, %v2914, %v2916
  %v2926 = vadd.f32 %v2878, %v2908
  %v2927 = vadd.f32 %v2879, %v2917
  %v2928 = vadd.f32 %v2880, %v2918
  %v2929 = vadd.f32 %v2881, %v2919
  %v2930 = vadd.f32 %v2882, %v2920
  %v2931 = vld [vmem:[%s218] ss:$8 sm:$0xf]
  %v2933 = vperm.slane %v2931, 0
  %v2934 = vperm.slane %v2931, 1
  %v2935 = vperm.slane %v2931, 2
  %v2936 = vperm.slane %v2931, 3
  %2937 = vrot.lane.b32.xlu0 %v2933, 15
  %v2938 = vpop.permute.xlu0 %2937
  %2939 = vrot.lane.b32.xlu0 %v2934, 15
  %v2940 = vpop.permute.xlu0 %2939
  %2941 = vrot.lane.b32.xlu0 %v2935, 15
  %v2942 = vpop.permute.xlu0 %2941
  %2943 = vrot.lane.b32.xlu0 %v2936, 15
  %v2944 = vpop.permute.xlu0 %2943
  %v2945 = vsel %vm233, %v2938, %v2940
  %v2946 = vsel %vm233, %v2940, %v2942
  %v2947 = vsel %vm233, %v2942, %v2944
  %v2953 = vmul.f32 %v2515, %v2938
  %v2954 = vmul.f32 %v2516, %v2945
  %v2955 = vmul.f32 %v2517, %v2946
  %v2956 = vmul.f32 %v2518, %v2947
  %v2957 = vmul.f32 %v2519, %v2944
  %v2958 = vperm.slane %v2953, 0
  %v2959 = vperm.slane %v2954, 0
  %v2960 = vperm.slane %v2955, 0
  %v2961 = vperm.slane %v2956, 0
  %v2962 = vperm.slane %v2957, 0
  %2963 = vset.pattern.permute.xlu0 48
  %2964 = vperm.xlu0 %2963, %v714
  %v2965 = vpop.permute.xlu0 %2964
  %v2967 = vsub.f32 %v2958, %v2965
  %v2968 = vsub.f32 %v2959, %v2965
  %v2969 = vsub.f32 %v2960, %v2965
  %v2970 = vsub.f32 %v2961, %v2965
  %v2971 = vsub.f32 %v2962, %v2965
  %v2972 = vand.u32 2147483647, %v2967
  %v2973 = vand.u32 2147483647, %v2968
  %v2974 = vand.u32 2147483647, %v2969
  %v2975 = vand.u32 2147483647, %v2970
  %v2976 = vand.u32 2147483647, %v2971
  %2982 = vrot.lane.b32.xlu0 %v2972, 96
  %v2983 = vpop.permute.xlu0 %2982
  %2984 = vrot.lane.b32.xlu0 %v2973, 96
  %v2985 = vpop.permute.xlu0 %2984
  %2986 = vrot.lane.b32.xlu0 %v2974, 96
  %v2987 = vpop.permute.xlu0 %2986
  %2988 = vrot.lane.b32.xlu0 %v2975, 96
  %v2989 = vpop.permute.xlu0 %2988
  %2990 = vrot.lane.b32.xlu0 %v2976, 96
  %v2991 = vpop.permute.xlu0 %2990
  %v2992 = vsel %vm413, %v2983, %v2985
  %v2993 = vsel %vm413, %v2985, %v2987
  %v2994 = vsel %vm413, %v2987, %v2989
  %v2995 = vsel %vm413, %v2989, %v2991
  %v3001 = vadd.f32 %v2926, %v2983
  %v3002 = vadd.f32 %v2927, %v2992
  %v3003 = vadd.f32 %v2928, %v2993
  %v3004 = vadd.f32 %v2929, %v2994
  %v3005 = vadd.f32 %v2930, %v2995
  %v3006 = vperm.slane %v2953, 1
  %v3007 = vperm.slane %v2954, 1
  %v3008 = vperm.slane %v2955, 1
  %v3009 = vperm.slane %v2956, 1
  %v3010 = vperm.slane %v2957, 1
  %3011 = vset.pattern.permute.xlu0 49
  %3012 = vperm.xlu0 %3011, %v714
  %v3013 = vpop.permute.xlu0 %3012
  %v3015 = vsub.f32 %v3006, %v3013
  %v3016 = vsub.f32 %v3007, %v3013
  %v3017 = vsub.f32 %v3008, %v3013
  %v3018 = vsub.f32 %v3009, %v3013
  %v3019 = vsub.f32 %v3010, %v3013
  %v3020 = vand.u32 2147483647, %v3015
  %v3021 = vand.u32 2147483647, %v3016
  %v3022 = vand.u32 2147483647, %v3017
  %v3023 = vand.u32 2147483647, %v3018
  %v3024 = vand.u32 2147483647, %v3019
  %3030 = vrot.lane.b32.xlu0 %v3020, 96
  %v3031 = vpop.permute.xlu0 %3030
  %3032 = vrot.lane.b32.xlu0 %v3021, 96
  %v3033 = vpop.permute.xlu0 %3032
  %3034 = vrot.lane.b32.xlu0 %v3022, 96
  %v3035 = vpop.permute.xlu0 %3034
  %3036 = vrot.lane.b32.xlu0 %v3023, 96
  %v3037 = vpop.permute.xlu0 %3036
  %3038 = vrot.lane.b32.xlu0 %v3024, 96
  %v3039 = vpop.permute.xlu0 %3038
  %v3040 = vsel %vm413, %v3031, %v3033
  %v3041 = vsel %vm413, %v3033, %v3035
  %v3042 = vsel %vm413, %v3035, %v3037
  %v3043 = vsel %vm413, %v3037, %v3039
  %v3049 = vadd.f32 %v3001, %v3031
  %v3050 = vadd.f32 %v3002, %v3040
  %v3051 = vadd.f32 %v3003, %v3041
  %v3052 = vadd.f32 %v3004, %v3042
  %v3053 = vadd.f32 %v3005, %v3043
  %v3054 = vperm.slane %v2953, 2
  %v3055 = vperm.slane %v2954, 2
  %v3056 = vperm.slane %v2955, 2
  %v3057 = vperm.slane %v2956, 2
  %v3058 = vperm.slane %v2957, 2
  %3059 = vset.pattern.permute.xlu0 50
  %3060 = vperm.xlu0 %3059, %v714
  %v3061 = vpop.permute.xlu0 %3060
  %v3063 = vsub.f32 %v3054, %v3061
  %v3064 = vsub.f32 %v3055, %v3061
  %v3065 = vsub.f32 %v3056, %v3061
  %v3066 = vsub.f32 %v3057, %v3061
  %v3067 = vsub.f32 %v3058, %v3061
  %v3068 = vand.u32 2147483647, %v3063
  %v3069 = vand.u32 2147483647, %v3064
  %v3070 = vand.u32 2147483647, %v3065
  %v3071 = vand.u32 2147483647, %v3066
  %v3072 = vand.u32 2147483647, %v3067
  %3078 = vrot.lane.b32.xlu0 %v3068, 96
  %v3079 = vpop.permute.xlu0 %3078
  %3080 = vrot.lane.b32.xlu0 %v3069, 96
  %v3081 = vpop.permute.xlu0 %3080
  %3082 = vrot.lane.b32.xlu0 %v3070, 96
  %v3083 = vpop.permute.xlu0 %3082
  %3084 = vrot.lane.b32.xlu0 %v3071, 96
  %v3085 = vpop.permute.xlu0 %3084
  %3086 = vrot.lane.b32.xlu0 %v3072, 96
  %v3087 = vpop.permute.xlu0 %3086
  %v3088 = vsel %vm413, %v3079, %v3081
  %v3089 = vsel %vm413, %v3081, %v3083
  %v3090 = vsel %vm413, %v3083, %v3085
  %v3091 = vsel %vm413, %v3085, %v3087
  %v3097 = vadd.f32 %v3049, %v3079
  %v3098 = vadd.f32 %v3050, %v3088
  %v3099 = vadd.f32 %v3051, %v3089
  %v3100 = vadd.f32 %v3052, %v3090
  %v3101 = vadd.f32 %v3053, %v3091
  %v3102 = vperm.slane %v2953, 3
  %v3103 = vperm.slane %v2954, 3
  %v3104 = vperm.slane %v2955, 3
  %v3105 = vperm.slane %v2956, 3
  %v3106 = vperm.slane %v2957, 3
  %3107 = vset.pattern.permute.xlu0 51
  %3108 = vperm.xlu0 %3107, %v714
  %v3109 = vpop.permute.xlu0 %3108
  %v3111 = vsub.f32 %v3102, %v3109
  %v3112 = vsub.f32 %v3103, %v3109
  %v3113 = vsub.f32 %v3104, %v3109
  %v3114 = vsub.f32 %v3105, %v3109
  %v3115 = vsub.f32 %v3106, %v3109
  %v3116 = vand.u32 2147483647, %v3111
  %v3117 = vand.u32 2147483647, %v3112
  %v3118 = vand.u32 2147483647, %v3113
  %v3119 = vand.u32 2147483647, %v3114
  %v3120 = vand.u32 2147483647, %v3115
  %3126 = vrot.lane.b32.xlu0 %v3116, 96
  %v3127 = vpop.permute.xlu0 %3126
  %3128 = vrot.lane.b32.xlu0 %v3117, 96
  %v3129 = vpop.permute.xlu0 %3128
  %3130 = vrot.lane.b32.xlu0 %v3118, 96
  %v3131 = vpop.permute.xlu0 %3130
  %3132 = vrot.lane.b32.xlu0 %v3119, 96
  %v3133 = vpop.permute.xlu0 %3132
  %3134 = vrot.lane.b32.xlu0 %v3120, 96
  %v3135 = vpop.permute.xlu0 %3134
  %v3136 = vsel %vm413, %v3127, %v3129
  %v3137 = vsel %vm413, %v3129, %v3131
  %v3138 = vsel %vm413, %v3131, %v3133
  %v3139 = vsel %vm413, %v3133, %v3135
  %v3145 = vadd.f32 %v3097, %v3127
  %v3146 = vadd.f32 %v3098, %v3136
  %v3147 = vadd.f32 %v3099, %v3137
  %v3148 = vadd.f32 %v3100, %v3138
  %v3149 = vadd.f32 %v3101, %v3139
  %v3150 = vperm.slane %v2953, 4
  %v3151 = vperm.slane %v2954, 4
  %v3152 = vperm.slane %v2955, 4
  %v3153 = vperm.slane %v2956, 4
  %v3154 = vperm.slane %v2957, 4
  %3155 = vset.pattern.permute.xlu0 52
  %3156 = vperm.xlu0 %3155, %v714
  %v3157 = vpop.permute.xlu0 %3156
  %v3159 = vsub.f32 %v3150, %v3157
  %v3160 = vsub.f32 %v3151, %v3157
  %v3161 = vsub.f32 %v3152, %v3157
  %v3162 = vsub.f32 %v3153, %v3157
  %v3163 = vsub.f32 %v3154, %v3157
  %v3164 = vand.u32 2147483647, %v3159
  %v3165 = vand.u32 2147483647, %v3160
  %v3166 = vand.u32 2147483647, %v3161
  %v3167 = vand.u32 2147483647, %v3162
  %v3168 = vand.u32 2147483647, %v3163
  %3174 = vrot.lane.b32.xlu0 %v3164, 96
  %v3175 = vpop.permute.xlu0 %3174
  %3176 = vrot.lane.b32.xlu0 %v3165, 96
  %v3177 = vpop.permute.xlu0 %3176
  %3178 = vrot.lane.b32.xlu0 %v3166, 96
  %v3179 = vpop.permute.xlu0 %3178
  %3180 = vrot.lane.b32.xlu0 %v3167, 96
  %v3181 = vpop.permute.xlu0 %3180
  %3182 = vrot.lane.b32.xlu0 %v3168, 96
  %v3183 = vpop.permute.xlu0 %3182
  %v3184 = vsel %vm413, %v3175, %v3177
  %v3185 = vsel %vm413, %v3177, %v3179
  %v3186 = vsel %vm413, %v3179, %v3181
  %v3187 = vsel %vm413, %v3181, %v3183
  %v3193 = vadd.f32 %v3145, %v3175
  %v3194 = vadd.f32 %v3146, %v3184
  %v3195 = vadd.f32 %v3147, %v3185
  %v3196 = vadd.f32 %v3148, %v3186
  %v3197 = vadd.f32 %v3149, %v3187
  %v3198 = vperm.slane %v2953, 5
  %v3199 = vperm.slane %v2954, 5
  %v3200 = vperm.slane %v2955, 5
  %v3201 = vperm.slane %v2956, 5
  %v3202 = vperm.slane %v2957, 5
  %3203 = vset.pattern.permute.xlu0 53
  %3204 = vperm.xlu0 %3203, %v714
  %v3205 = vpop.permute.xlu0 %3204
  %v3207 = vsub.f32 %v3198, %v3205
  %v3208 = vsub.f32 %v3199, %v3205
  %v3209 = vsub.f32 %v3200, %v3205
  %v3210 = vsub.f32 %v3201, %v3205
  %v3211 = vsub.f32 %v3202, %v3205
  %v3212 = vand.u32 2147483647, %v3207
  %v3213 = vand.u32 2147483647, %v3208
  %v3214 = vand.u32 2147483647, %v3209
  %v3215 = vand.u32 2147483647, %v3210
  %v3216 = vand.u32 2147483647, %v3211
  %3222 = vrot.lane.b32.xlu0 %v3212, 96
  %v3223 = vpop.permute.xlu0 %3222
  %3224 = vrot.lane.b32.xlu0 %v3213, 96
  %v3225 = vpop.permute.xlu0 %3224
  %3226 = vrot.lane.b32.xlu0 %v3214, 96
  %v3227 = vpop.permute.xlu0 %3226
  %3228 = vrot.lane.b32.xlu0 %v3215, 96
  %v3229 = vpop.permute.xlu0 %3228
  %3230 = vrot.lane.b32.xlu0 %v3216, 96
  %v3231 = vpop.permute.xlu0 %3230
  %v3232 = vsel %vm413, %v3223, %v3225
  %v3233 = vsel %vm413, %v3225, %v3227
  %v3234 = vsel %vm413, %v3227, %v3229
  %v3235 = vsel %vm413, %v3229, %v3231
  %v3241 = vadd.f32 %v3193, %v3223
  %v3242 = vadd.f32 %v3194, %v3232
  %v3243 = vadd.f32 %v3195, %v3233
  %v3244 = vadd.f32 %v3196, %v3234
  %v3245 = vadd.f32 %v3197, %v3235
  %v3246 = vperm.slane %v2953, 6
  %v3247 = vperm.slane %v2954, 6
  %v3248 = vperm.slane %v2955, 6
  %v3249 = vperm.slane %v2956, 6
  %v3250 = vperm.slane %v2957, 6
  %3251 = vset.pattern.permute.xlu0 54
  %3252 = vperm.xlu0 %3251, %v714
  %v3253 = vpop.permute.xlu0 %3252
  %v3255 = vsub.f32 %v3246, %v3253
  %v3256 = vsub.f32 %v3247, %v3253
  %v3257 = vsub.f32 %v3248, %v3253
  %v3258 = vsub.f32 %v3249, %v3253
  %v3259 = vsub.f32 %v3250, %v3253
  %v3260 = vand.u32 2147483647, %v3255
  %v3261 = vand.u32 2147483647, %v3256
  %v3262 = vand.u32 2147483647, %v3257
  %v3263 = vand.u32 2147483647, %v3258
  %v3264 = vand.u32 2147483647, %v3259
  %3270 = vrot.lane.b32.xlu0 %v3260, 96
  %v3271 = vpop.permute.xlu0 %3270
  %3272 = vrot.lane.b32.xlu0 %v3261, 96
  %v3273 = vpop.permute.xlu0 %3272
  %3274 = vrot.lane.b32.xlu0 %v3262, 96
  %v3275 = vpop.permute.xlu0 %3274
  %3276 = vrot.lane.b32.xlu0 %v3263, 96
  %v3277 = vpop.permute.xlu0 %3276
  %3278 = vrot.lane.b32.xlu0 %v3264, 96
  %v3279 = vpop.permute.xlu0 %3278
  %v3280 = vsel %vm413, %v3271, %v3273
  %v3281 = vsel %vm413, %v3273, %v3275
  %v3282 = vsel %vm413, %v3275, %v3277
  %v3283 = vsel %vm413, %v3277, %v3279
  %v3289 = vadd.f32 %v3241, %v3271
  %v3290 = vadd.f32 %v3242, %v3280
  %v3291 = vadd.f32 %v3243, %v3281
  %v3292 = vadd.f32 %v3244, %v3282
  %v3293 = vadd.f32 %v3245, %v3283
  %v3294 = vperm.slane %v2953, 7
  %v3295 = vperm.slane %v2954, 7
  %v3296 = vperm.slane %v2955, 7
  %v3297 = vperm.slane %v2956, 7
  %v3298 = vperm.slane %v2957, 7
  %3299 = vset.pattern.permute.xlu0 55
  %3300 = vperm.xlu0 %3299, %v714
  %v3301 = vpop.permute.xlu0 %3300
  %v3303 = vsub.f32 %v3294, %v3301
  %v3304 = vsub.f32 %v3295, %v3301
  %v3305 = vsub.f32 %v3296, %v3301
  %v3306 = vsub.f32 %v3297, %v3301
  %v3307 = vsub.f32 %v3298, %v3301
  %v3308 = vand.u32 2147483647, %v3303
  %v3309 = vand.u32 2147483647, %v3304
  %v3310 = vand.u32 2147483647, %v3305
  %v3311 = vand.u32 2147483647, %v3306
  %v3312 = vand.u32 2147483647, %v3307
  %3318 = vrot.lane.b32.xlu0 %v3308, 96
  %v3319 = vpop.permute.xlu0 %3318
  %3320 = vrot.lane.b32.xlu0 %v3309, 96
  %v3321 = vpop.permute.xlu0 %3320
  %3322 = vrot.lane.b32.xlu0 %v3310, 96
  %v3323 = vpop.permute.xlu0 %3322
  %3324 = vrot.lane.b32.xlu0 %v3311, 96
  %v3325 = vpop.permute.xlu0 %3324
  %3326 = vrot.lane.b32.xlu0 %v3312, 96
  %v3327 = vpop.permute.xlu0 %3326
  %v3328 = vsel %vm413, %v3319, %v3321
  %v3329 = vsel %vm413, %v3321, %v3323
  %v3330 = vsel %vm413, %v3323, %v3325
  %v3331 = vsel %vm413, %v3325, %v3327
  %v3337 = vadd.f32 %v3289, %v3319
  %v3338 = vadd.f32 %v3290, %v3328
  %v3339 = vadd.f32 %v3291, %v3329
  %v3340 = vadd.f32 %v3292, %v3330
  %v3341 = vadd.f32 %v3293, %v3331
  %v3342 = vld [vmem:[%s247] ss:$8 sm:$0xf]
  %v3344 = vperm.slane %v3342, 0
  %v3345 = vperm.slane %v3342, 1
  %v3346 = vperm.slane %v3342, 2
  %v3347 = vperm.slane %v3342, 3
  %3348 = vrot.lane.b32.xlu0 %v3344, 16
  %v3349 = vpop.permute.xlu0 %3348
  %3350 = vrot.lane.b32.xlu0 %v3345, 16
  %v3351 = vpop.permute.xlu0 %3350
  %3352 = vrot.lane.b32.xlu0 %v3346, 16
  %v3353 = vpop.permute.xlu0 %3352
  %3354 = vrot.lane.b32.xlu0 %v3347, 16
  %v3355 = vpop.permute.xlu0 %3354
  %v3356 = vsel %vm262, %v3349, %v3351
  %v3357 = vsel %vm262, %v3351, %v3353
  %v3358 = vsel %vm262, %v3353, %v3355
  %v3364 = vmul.f32 %v2515, %v3349
  %v3365 = vmul.f32 %v2516, %v3356
  %v3366 = vmul.f32 %v2517, %v3357
  %v3367 = vmul.f32 %v2518, %v3358
  %v3368 = vmul.f32 %v2519, %v3355
  %v3369 = vperm.slane %v3364, 0
  %v3370 = vperm.slane %v3365, 0
  %v3371 = vperm.slane %v3366, 0
  %v3372 = vperm.slane %v3367, 0
  %v3373 = vperm.slane %v3368, 0
  %3374 = vset.pattern.permute.xlu0 56
  %3375 = vperm.xlu0 %3374, %v714
  %v3376 = vpop.permute.xlu0 %3375
  %v3378 = vsub.f32 %v3369, %v3376
  %v3379 = vsub.f32 %v3370, %v3376
  %v3380 = vsub.f32 %v3371, %v3376
  %v3381 = vsub.f32 %v3372, %v3376
  %v3382 = vsub.f32 %v3373, %v3376
  %v3383 = vand.u32 2147483647, %v3378
  %v3384 = vand.u32 2147483647, %v3379
  %v3385 = vand.u32 2147483647, %v3380
  %v3386 = vand.u32 2147483647, %v3381
  %v3387 = vand.u32 2147483647, %v3382
  %3393 = vrot.lane.b32.xlu0 %v3383, 95
  %v3394 = vpop.permute.xlu0 %3393
  %3395 = vrot.lane.b32.xlu0 %v3384, 95
  %v3396 = vpop.permute.xlu0 %3395
  %3397 = vrot.lane.b32.xlu0 %v3385, 95
  %v3398 = vpop.permute.xlu0 %3397
  %3399 = vrot.lane.b32.xlu0 %v3386, 95
  %v3400 = vpop.permute.xlu0 %3399
  %3401 = vrot.lane.b32.xlu0 %v3387, 95
  %v3402 = vpop.permute.xlu0 %3401
  %v3403 = vsel %vm433, %v3394, %v3396
  %v3404 = vsel %vm433, %v3396, %v3398
  %v3405 = vsel %vm433, %v3398, %v3400
  %v3406 = vsel %vm433, %v3400, %v3402
  %v3412 = vadd.f32 %v3337, %v3394
  %v3413 = vadd.f32 %v3338, %v3403
  %v3414 = vadd.f32 %v3339, %v3404
  %v3415 = vadd.f32 %v3340, %v3405
  %v3416 = vadd.f32 %v3341, %v3406
  %v3417 = vperm.slane %v3364, 1
  %v3418 = vperm.slane %v3365, 1
  %v3419 = vperm.slane %v3366, 1
  %v3420 = vperm.slane %v3367, 1
  %v3421 = vperm.slane %v3368, 1
  %3422 = vset.pattern.permute.xlu0 57
  %3423 = vperm.xlu0 %3422, %v714
  %v3424 = vpop.permute.xlu0 %3423
  %v3426 = vsub.f32 %v3417, %v3424
  %v3427 = vsub.f32 %v3418, %v3424
  %v3428 = vsub.f32 %v3419, %v3424
  %v3429 = vsub.f32 %v3420, %v3424
  %v3430 = vsub.f32 %v3421, %v3424
  %v3431 = vand.u32 2147483647, %v3426
  %v3432 = vand.u32 2147483647, %v3427
  %v3433 = vand.u32 2147483647, %v3428
  %v3434 = vand.u32 2147483647, %v3429
  %v3435 = vand.u32 2147483647, %v3430
  %3441 = vrot.lane.b32.xlu0 %v3431, 95
  %v3442 = vpop.permute.xlu0 %3441
  %3443 = vrot.lane.b32.xlu0 %v3432, 95
  %v3444 = vpop.permute.xlu0 %3443
  %3445 = vrot.lane.b32.xlu0 %v3433, 95
  %v3446 = vpop.permute.xlu0 %3445
  %3447 = vrot.lane.b32.xlu0 %v3434, 95
  %v3448 = vpop.permute.xlu0 %3447
  %3449 = vrot.lane.b32.xlu0 %v3435, 95
  %v3450 = vpop.permute.xlu0 %3449
  %v3451 = vsel %vm433, %v3442, %v3444
  %v3452 = vsel %vm433, %v3444, %v3446
  %v3453 = vsel %vm433, %v3446, %v3448
  %v3454 = vsel %vm433, %v3448, %v3450
  %v3460 = vadd.f32 %v3412, %v3442
  %v3461 = vadd.f32 %v3413, %v3451
  %v3462 = vadd.f32 %v3414, %v3452
  %v3463 = vadd.f32 %v3415, %v3453
  %v3464 = vadd.f32 %v3416, %v3454
  %v3465 = vperm.slane %v3364, 2
  %v3466 = vperm.slane %v3365, 2
  %v3467 = vperm.slane %v3366, 2
  %v3468 = vperm.slane %v3367, 2
  %v3469 = vperm.slane %v3368, 2
  %3470 = vset.pattern.permute.xlu0 58
  %3471 = vperm.xlu0 %3470, %v714
  %v3472 = vpop.permute.xlu0 %3471
  %v3474 = vsub.f32 %v3465, %v3472
  %v3475 = vsub.f32 %v3466, %v3472
  %v3476 = vsub.f32 %v3467, %v3472
  %v3477 = vsub.f32 %v3468, %v3472
  %v3478 = vsub.f32 %v3469, %v3472
  %v3479 = vand.u32 2147483647, %v3474
  %v3480 = vand.u32 2147483647, %v3475
  %v3481 = vand.u32 2147483647, %v3476
  %v3482 = vand.u32 2147483647, %v3477
  %v3483 = vand.u32 2147483647, %v3478
  %3489 = vrot.lane.b32.xlu0 %v3479, 95
  %v3490 = vpop.permute.xlu0 %3489
  %3491 = vrot.lane.b32.xlu0 %v3480, 95
  %v3492 = vpop.permute.xlu0 %3491
  %3493 = vrot.lane.b32.xlu0 %v3481, 95
  %v3494 = vpop.permute.xlu0 %3493
  %3495 = vrot.lane.b32.xlu0 %v3482, 95
  %v3496 = vpop.permute.xlu0 %3495
  %3497 = vrot.lane.b32.xlu0 %v3483, 95
  %v3498 = vpop.permute.xlu0 %3497
  %v3499 = vsel %vm433, %v3490, %v3492
  %v3500 = vsel %vm433, %v3492, %v3494
  %v3501 = vsel %vm433, %v3494, %v3496
  %v3502 = vsel %vm433, %v3496, %v3498
  %v3508 = vadd.f32 %v3460, %v3490
  %v3509 = vadd.f32 %v3461, %v3499
  %v3510 = vadd.f32 %v3462, %v3500
  %v3511 = vadd.f32 %v3463, %v3501
  %v3512 = vadd.f32 %v3464, %v3502
  %v3513 = vperm.slane %v3364, 3
  %v3514 = vperm.slane %v3365, 3
  %v3515 = vperm.slane %v3366, 3
  %v3516 = vperm.slane %v3367, 3
  %v3517 = vperm.slane %v3368, 3
  %3518 = vset.pattern.permute.xlu0 59
  %3519 = vperm.xlu0 %3518, %v714
  %v3520 = vpop.permute.xlu0 %3519
  %v3522 = vsub.f32 %v3513, %v3520
  %v3523 = vsub.f32 %v3514, %v3520
  %v3524 = vsub.f32 %v3515, %v3520
  %v3525 = vsub.f32 %v3516, %v3520
  %v3526 = vsub.f32 %v3517, %v3520
  %v3527 = vand.u32 2147483647, %v3522
  %v3528 = vand.u32 2147483647, %v3523
  %v3529 = vand.u32 2147483647, %v3524
  %v3530 = vand.u32 2147483647, %v3525
  %v3531 = vand.u32 2147483647, %v3526
  %3537 = vrot.lane.b32.xlu0 %v3527, 95
  %v3538 = vpop.permute.xlu0 %3537
  %3539 = vrot.lane.b32.xlu0 %v3528, 95
  %v3540 = vpop.permute.xlu0 %3539
  %3541 = vrot.lane.b32.xlu0 %v3529, 95
  %v3542 = vpop.permute.xlu0 %3541
  %3543 = vrot.lane.b32.xlu0 %v3530, 95
  %v3544 = vpop.permute.xlu0 %3543
  %3545 = vrot.lane.b32.xlu0 %v3531, 95
  %v3546 = vpop.permute.xlu0 %3545
  %v3547 = vsel %vm433, %v3538, %v3540
  %v3548 = vsel %vm433, %v3540, %v3542
  %v3549 = vsel %vm433, %v3542, %v3544
  %v3550 = vsel %vm433, %v3544, %v3546
  %v3556 = vadd.f32 %v3508, %v3538
  %v3557 = vadd.f32 %v3509, %v3547
  %v3558 = vadd.f32 %v3510, %v3548
  %v3559 = vadd.f32 %v3511, %v3549
  %v3560 = vadd.f32 %v3512, %v3550
  %v3561 = vperm.slane %v3364, 4
  %v3562 = vperm.slane %v3365, 4
  %v3563 = vperm.slane %v3366, 4
  %v3564 = vperm.slane %v3367, 4
  %v3565 = vperm.slane %v3368, 4
  %3566 = vset.pattern.permute.xlu0 60
  %3567 = vperm.xlu0 %3566, %v714
  %v3568 = vpop.permute.xlu0 %3567
  %v3570 = vsub.f32 %v3561, %v3568
  %v3571 = vsub.f32 %v3562, %v3568
  %v3572 = vsub.f32 %v3563, %v3568
  %v3573 = vsub.f32 %v3564, %v3568
  %v3574 = vsub.f32 %v3565, %v3568
  %v3575 = vand.u32 2147483647, %v3570
  %v3576 = vand.u32 2147483647, %v3571
  %v3577 = vand.u32 2147483647, %v3572
  %v3578 = vand.u32 2147483647, %v3573
  %v3579 = vand.u32 2147483647, %v3574
  %3585 = vrot.lane.b32.xlu0 %v3575, 95
  %v3586 = vpop.permute.xlu0 %3585
  %3587 = vrot.lane.b32.xlu0 %v3576, 95
  %v3588 = vpop.permute.xlu0 %3587
  %3589 = vrot.lane.b32.xlu0 %v3577, 95
  %v3590 = vpop.permute.xlu0 %3589
  %3591 = vrot.lane.b32.xlu0 %v3578, 95
  %v3592 = vpop.permute.xlu0 %3591
  %3593 = vrot.lane.b32.xlu0 %v3579, 95
  %v3594 = vpop.permute.xlu0 %3593
  %v3595 = vsel %vm433, %v3586, %v3588
  %v3596 = vsel %vm433, %v3588, %v3590
  %v3597 = vsel %vm433, %v3590, %v3592
  %v3598 = vsel %vm433, %v3592, %v3594
  %v3604 = vadd.f32 %v3556, %v3586
  %v3605 = vadd.f32 %v3557, %v3595
  %v3606 = vadd.f32 %v3558, %v3596
  %v3607 = vadd.f32 %v3559, %v3597
  %v3608 = vadd.f32 %v3560, %v3598
  %v3609 = vperm.slane %v3364, 5
  %v3610 = vperm.slane %v3365, 5
  %v3611 = vperm.slane %v3366, 5
  %v3612 = vperm.slane %v3367, 5
  %v3613 = vperm.slane %v3368, 5
  %3614 = vset.pattern.permute.xlu0 61
  %3615 = vperm.xlu0 %3614, %v714
  %v3616 = vpop.permute.xlu0 %3615
  %v3618 = vsub.f32 %v3609, %v3616
  %v3619 = vsub.f32 %v3610, %v3616
  %v3620 = vsub.f32 %v3611, %v3616
  %v3621 = vsub.f32 %v3612, %v3616
  %v3622 = vsub.f32 %v3613, %v3616
  %v3623 = vand.u32 2147483647, %v3618
  %v3624 = vand.u32 2147483647, %v3619
  %v3625 = vand.u32 2147483647, %v3620
  %v3626 = vand.u32 2147483647, %v3621
  %v3627 = vand.u32 2147483647, %v3622
  %3633 = vrot.lane.b32.xlu0 %v3623, 95
  %v3634 = vpop.permute.xlu0 %3633
  %3635 = vrot.lane.b32.xlu0 %v3624, 95
  %v3636 = vpop.permute.xlu0 %3635
  %3637 = vrot.lane.b32.xlu0 %v3625, 95
  %v3638 = vpop.permute.xlu0 %3637
  %3639 = vrot.lane.b32.xlu0 %v3626, 95
  %v3640 = vpop.permute.xlu0 %3639
  %3641 = vrot.lane.b32.xlu0 %v3627, 95
  %v3642 = vpop.permute.xlu0 %3641
  %v3643 = vsel %vm433, %v3634, %v3636
  %v3644 = vsel %vm433, %v3636, %v3638
  %v3645 = vsel %vm433, %v3638, %v3640
  %v3646 = vsel %vm433, %v3640, %v3642
  %v3652 = vadd.f32 %v3604, %v3634
  %v3653 = vadd.f32 %v3605, %v3643
  %v3654 = vadd.f32 %v3606, %v3644
  %v3655 = vadd.f32 %v3607, %v3645
  %v3656 = vadd.f32 %v3608, %v3646
  %v3657 = vperm.slane %v3364, 6
  %v3658 = vperm.slane %v3365, 6
  %v3659 = vperm.slane %v3366, 6
  %v3660 = vperm.slane %v3367, 6
  %v3661 = vperm.slane %v3368, 6
  %3662 = vset.pattern.permute.xlu0 62
  %3663 = vperm.xlu0 %3662, %v714
  %v3664 = vpop.permute.xlu0 %3663
  %v3666 = vsub.f32 %v3657, %v3664
  %v3667 = vsub.f32 %v3658, %v3664
  %v3668 = vsub.f32 %v3659, %v3664
  %v3669 = vsub.f32 %v3660, %v3664
  %v3670 = vsub.f32 %v3661, %v3664
  %v3671 = vand.u32 2147483647, %v3666
  %v3672 = vand.u32 2147483647, %v3667
  %v3673 = vand.u32 2147483647, %v3668
  %v3674 = vand.u32 2147483647, %v3669
  %v3675 = vand.u32 2147483647, %v3670
  %3681 = vrot.lane.b32.xlu0 %v3671, 95
  %v3682 = vpop.permute.xlu0 %3681
  %3683 = vrot.lane.b32.xlu0 %v3672, 95
  %v3684 = vpop.permute.xlu0 %3683
  %3685 = vrot.lane.b32.xlu0 %v3673, 95
  %v3686 = vpop.permute.xlu0 %3685
  %3687 = vrot.lane.b32.xlu0 %v3674, 95
  %v3688 = vpop.permute.xlu0 %3687
  %3689 = vrot.lane.b32.xlu0 %v3675, 95
  %v3690 = vpop.permute.xlu0 %3689
  %v3691 = vsel %vm433, %v3682, %v3684
  %v3692 = vsel %vm433, %v3684, %v3686
  %v3693 = vsel %vm433, %v3686, %v3688
  %v3694 = vsel %vm433, %v3688, %v3690
  %v3700 = vadd.f32 %v3652, %v3682
  %v3701 = vadd.f32 %v3653, %v3691
  %v3702 = vadd.f32 %v3654, %v3692
  %v3703 = vadd.f32 %v3655, %v3693
  %v3704 = vadd.f32 %v3656, %v3694
  %v3705 = vperm.slane %v3364, 7
  %v3706 = vperm.slane %v3365, 7
  %v3707 = vperm.slane %v3366, 7
  %v3708 = vperm.slane %v3367, 7
  %v3709 = vperm.slane %v3368, 7
  %3710 = vset.pattern.permute.xlu0 63
  %3711 = vperm.xlu0 %3710, %v714
  %v3712 = vpop.permute.xlu0 %3711
  %v3714 = vsub.f32 %v3705, %v3712
  %v3715 = vsub.f32 %v3706, %v3712
  %v3716 = vsub.f32 %v3707, %v3712
  %v3717 = vsub.f32 %v3708, %v3712
  %v3718 = vsub.f32 %v3709, %v3712
  %v3719 = vand.u32 2147483647, %v3714
  %v3720 = vand.u32 2147483647, %v3715
  %v3721 = vand.u32 2147483647, %v3716
  %v3722 = vand.u32 2147483647, %v3717
  %v3723 = vand.u32 2147483647, %v3718
  %3729 = vrot.lane.b32.xlu0 %v3719, 95
  %v3730 = vpop.permute.xlu0 %3729
  %3731 = vrot.lane.b32.xlu0 %v3720, 95
  %v3732 = vpop.permute.xlu0 %3731
  %3733 = vrot.lane.b32.xlu0 %v3721, 95
  %v3734 = vpop.permute.xlu0 %3733
  %3735 = vrot.lane.b32.xlu0 %v3722, 95
  %v3736 = vpop.permute.xlu0 %3735
  %3737 = vrot.lane.b32.xlu0 %v3723, 95
  %v3738 = vpop.permute.xlu0 %3737
  %v3739 = vsel %vm433, %v3730, %v3732
  %v3740 = vsel %vm433, %v3732, %v3734
  %v3741 = vsel %vm433, %v3734, %v3736
  %v3742 = vsel %vm433, %v3736, %v3738
  %v3748 = vadd.f32 %v3700, %v3730
  %v3749 = vadd.f32 %v3701, %v3739
  %v3750 = vadd.f32 %v3702, %v3740
  %v3751 = vadd.f32 %v3703, %v3741
  %v3752 = vadd.f32 %v3704, %v3742
  %v3753 = vld [vmem:[%s276] ss:$8 sm:$0xf]
  %v3755 = vperm.slane %v3753, 0
  %v3756 = vperm.slane %v3753, 1
  %v3757 = vperm.slane %v3753, 2
  %v3758 = vperm.slane %v3753, 3
  %3759 = vrot.lane.b32.xlu0 %v3755, 17
  %v3760 = vpop.permute.xlu0 %3759
  %3761 = vrot.lane.b32.xlu0 %v3756, 17
  %v3762 = vpop.permute.xlu0 %3761
  %3763 = vrot.lane.b32.xlu0 %v3757, 17
  %v3764 = vpop.permute.xlu0 %3763
  %3765 = vrot.lane.b32.xlu0 %v3758, 17
  %v3766 = vpop.permute.xlu0 %3765
  %v3767 = vsel %vm291, %v3760, %v3762
  %v3768 = vsel %vm291, %v3762, %v3764
  %v3769 = vsel %vm291, %v3764, %v3766
  %v3775 = vmul.f32 %v2515, %v3760
  %v3776 = vmul.f32 %v2516, %v3767
  %v3777 = vmul.f32 %v2517, %v3768
  %v3778 = vmul.f32 %v2518, %v3769
  %v3779 = vmul.f32 %v2519, %v3766
  %v3780 = vperm.slane %v3775, 0
  %v3781 = vperm.slane %v3776, 0
  %v3782 = vperm.slane %v3777, 0
  %v3783 = vperm.slane %v3778, 0
  %v3784 = vperm.slane %v3779, 0
  %3785 = vset.pattern.permute.xlu0 64
  %3786 = vperm.xlu0 %3785, %v714
  %v3787 = vpop.permute.xlu0 %3786
  %v3789 = vsub.f32 %v3780, %v3787
  %v3790 = vsub.f32 %v3781, %v3787
  %v3791 = vsub.f32 %v3782, %v3787
  %v3792 = vsub.f32 %v3783, %v3787
  %v3793 = vsub.f32 %v3784, %v3787
  %v3794 = vand.u32 2147483647, %v3789
  %v3795 = vand.u32 2147483647, %v3790
  %v3796 = vand.u32 2147483647, %v3791
  %v3797 = vand.u32 2147483647, %v3792
  %v3798 = vand.u32 2147483647, %v3793
  %3804 = vrot.lane.b32.xlu0 %v3794, 94
  %v3805 = vpop.permute.xlu0 %3804
  %3806 = vrot.lane.b32.xlu0 %v3795, 94
  %v3807 = vpop.permute.xlu0 %3806
  %3808 = vrot.lane.b32.xlu0 %v3796, 94
  %v3809 = vpop.permute.xlu0 %3808
  %3810 = vrot.lane.b32.xlu0 %v3797, 94
  %v3811 = vpop.permute.xlu0 %3810
  %3812 = vrot.lane.b32.xlu0 %v3798, 94
  %v3813 = vpop.permute.xlu0 %3812
  %v3814 = vsel %vm453, %v3805, %v3807
  %v3815 = vsel %vm453, %v3807, %v3809
  %v3816 = vsel %vm453, %v3809, %v3811
  %v3817 = vsel %vm453, %v3811, %v3813
  %v3823 = vadd.f32 %v3748, %v3805
  %v3824 = vadd.f32 %v3749, %v3814
  %v3825 = vadd.f32 %v3750, %v3815
  %v3826 = vadd.f32 %v3751, %v3816
  %v3827 = vadd.f32 %v3752, %v3817
  %v3828 = vperm.slane %v3775, 1
  %v3829 = vperm.slane %v3776, 1
  %v3830 = vperm.slane %v3777, 1
  %v3831 = vperm.slane %v3778, 1
  %v3832 = vperm.slane %v3779, 1
  %3833 = vset.pattern.permute.xlu0 65
  %3834 = vperm.xlu0 %3833, %v714
  %v3835 = vpop.permute.xlu0 %3834
  %v3837 = vsub.f32 %v3828, %v3835
  %v3838 = vsub.f32 %v3829, %v3835
  %v3839 = vsub.f32 %v3830, %v3835
  %v3840 = vsub.f32 %v3831, %v3835
  %v3841 = vsub.f32 %v3832, %v3835
  %v3842 = vand.u32 2147483647, %v3837
  %v3843 = vand.u32 2147483647, %v3838
  %v3844 = vand.u32 2147483647, %v3839
  %v3845 = vand.u32 2147483647, %v3840
  %v3846 = vand.u32 2147483647, %v3841
  %3852 = vrot.lane.b32.xlu0 %v3842, 94
  %v3853 = vpop.permute.xlu0 %3852
  %3854 = vrot.lane.b32.xlu0 %v3843, 94
  %v3855 = vpop.permute.xlu0 %3854
  %3856 = vrot.lane.b32.xlu0 %v3844, 94
  %v3857 = vpop.permute.xlu0 %3856
  %3858 = vrot.lane.b32.xlu0 %v3845, 94
  %v3859 = vpop.permute.xlu0 %3858
  %3860 = vrot.lane.b32.xlu0 %v3846, 94
  %v3861 = vpop.permute.xlu0 %3860
  %v3862 = vsel %vm453, %v3853, %v3855
  %v3863 = vsel %vm453, %v3855, %v3857
  %v3864 = vsel %vm453, %v3857, %v3859
  %v3865 = vsel %vm453, %v3859, %v3861
  %v3871 = vadd.f32 %v3823, %v3853
  %v3872 = vadd.f32 %v3824, %v3862
  %v3873 = vadd.f32 %v3825, %v3863
  %v3874 = vadd.f32 %v3826, %v3864
  %v3875 = vadd.f32 %v3827, %v3865
  %v3876 = vperm.slane %v3775, 2
  %v3877 = vperm.slane %v3776, 2
  %v3878 = vperm.slane %v3777, 2
  %v3879 = vperm.slane %v3778, 2
  %v3880 = vperm.slane %v3779, 2
  %3881 = vset.pattern.permute.xlu0 66
  %3882 = vperm.xlu0 %3881, %v714
  %v3883 = vpop.permute.xlu0 %3882
  %v3885 = vsub.f32 %v3876, %v3883
  %v3886 = vsub.f32 %v3877, %v3883
  %v3887 = vsub.f32 %v3878, %v3883
  %v3888 = vsub.f32 %v3879, %v3883
  %v3889 = vsub.f32 %v3880, %v3883
  %v3890 = vand.u32 2147483647, %v3885
  %v3891 = vand.u32 2147483647, %v3886
  %v3892 = vand.u32 2147483647, %v3887
  %v3893 = vand.u32 2147483647, %v3888
  %v3894 = vand.u32 2147483647, %v3889
  %3900 = vrot.lane.b32.xlu0 %v3890, 94
  %v3901 = vpop.permute.xlu0 %3900
  %3902 = vrot.lane.b32.xlu0 %v3891, 94
  %v3903 = vpop.permute.xlu0 %3902
  %3904 = vrot.lane.b32.xlu0 %v3892, 94
  %v3905 = vpop.permute.xlu0 %3904
  %3906 = vrot.lane.b32.xlu0 %v3893, 94
  %v3907 = vpop.permute.xlu0 %3906
  %3908 = vrot.lane.b32.xlu0 %v3894, 94
  %v3909 = vpop.permute.xlu0 %3908
  %v3910 = vsel %vm453, %v3901, %v3903
  %v3911 = vsel %vm453, %v3903, %v3905
  %v3912 = vsel %vm453, %v3905, %v3907
  %v3913 = vsel %vm453, %v3907, %v3909
  %v3919 = vadd.f32 %v3871, %v3901
  %v3920 = vadd.f32 %v3872, %v3910
  %v3921 = vadd.f32 %v3873, %v3911
  %v3922 = vadd.f32 %v3874, %v3912
  %v3923 = vadd.f32 %v3875, %v3913
  %v3924 = vperm.slane %v3775, 3
  %v3925 = vperm.slane %v3776, 3
  %v3926 = vperm.slane %v3777, 3
  %v3927 = vperm.slane %v3778, 3
  %v3928 = vperm.slane %v3779, 3
  %3929 = vset.pattern.permute.xlu0 67
  %3930 = vperm.xlu0 %3929, %v714
  %v3931 = vpop.permute.xlu0 %3930
  %v3933 = vsub.f32 %v3924, %v3931
  %v3934 = vsub.f32 %v3925, %v3931
  %v3935 = vsub.f32 %v3926, %v3931
  %v3936 = vsub.f32 %v3927, %v3931
  %v3937 = vsub.f32 %v3928, %v3931
  %v3938 = vand.u32 2147483647, %v3933
  %v3939 = vand.u32 2147483647, %v3934
  %v3940 = vand.u32 2147483647, %v3935
  %v3941 = vand.u32 2147483647, %v3936
  %v3942 = vand.u32 2147483647, %v3937
  %3948 = vrot.lane.b32.xlu0 %v3938, 94
  %v3949 = vpop.permute.xlu0 %3948
  %3950 = vrot.lane.b32.xlu0 %v3939, 94
  %v3951 = vpop.permute.xlu0 %3950
  %3952 = vrot.lane.b32.xlu0 %v3940, 94
  %v3953 = vpop.permute.xlu0 %3952
  %3954 = vrot.lane.b32.xlu0 %v3941, 94
  %v3955 = vpop.permute.xlu0 %3954
  %3956 = vrot.lane.b32.xlu0 %v3942, 94
  %v3957 = vpop.permute.xlu0 %3956
  %v3958 = vsel %vm453, %v3949, %v3951
  %v3959 = vsel %vm453, %v3951, %v3953
  %v3960 = vsel %vm453, %v3953, %v3955
  %v3961 = vsel %vm453, %v3955, %v3957
  %v3967 = vadd.f32 %v3919, %v3949
  %v3968 = vadd.f32 %v3920, %v3958
  %v3969 = vadd.f32 %v3921, %v3959
  %v3970 = vadd.f32 %v3922, %v3960
  %v3971 = vadd.f32 %v3923, %v3961
  %v3972 = vperm.slane %v3775, 4
  %v3973 = vperm.slane %v3776, 4
  %v3974 = vperm.slane %v3777, 4
  %v3975 = vperm.slane %v3778, 4
  %v3976 = vperm.slane %v3779, 4
  %3977 = vset.pattern.permute.xlu0 68
  %3978 = vperm.xlu0 %3977, %v714
  %v3979 = vpop.permute.xlu0 %3978
  %v3981 = vsub.f32 %v3972, %v3979
  %v3982 = vsub.f32 %v3973, %v3979
  %v3983 = vsub.f32 %v3974, %v3979
  %v3984 = vsub.f32 %v3975, %v3979
  %v3985 = vsub.f32 %v3976, %v3979
  %v3986 = vand.u32 2147483647, %v3981
  %v3987 = vand.u32 2147483647, %v3982
  %v3988 = vand.u32 2147483647, %v3983
  %v3989 = vand.u32 2147483647, %v3984
  %v3990 = vand.u32 2147483647, %v3985
  %3996 = vrot.lane.b32.xlu0 %v3986, 94
  %v3997 = vpop.permute.xlu0 %3996
  %3998 = vrot.lane.b32.xlu0 %v3987, 94
  %v3999 = vpop.permute.xlu0 %3998
  %4000 = vrot.lane.b32.xlu0 %v3988, 94
  %v4001 = vpop.permute.xlu0 %4000
  %4002 = vrot.lane.b32.xlu0 %v3989, 94
  %v4003 = vpop.permute.xlu0 %4002
  %4004 = vrot.lane.b32.xlu0 %v3990, 94
  %v4005 = vpop.permute.xlu0 %4004
  %v4006 = vsel %vm453, %v3997, %v3999
  %v4007 = vsel %vm453, %v3999, %v4001
  %v4008 = vsel %vm453, %v4001, %v4003
  %v4009 = vsel %vm453, %v4003, %v4005
  %v4015 = vadd.f32 %v3967, %v3997
  %v4016 = vadd.f32 %v3968, %v4006
  %v4017 = vadd.f32 %v3969, %v4007
  %v4018 = vadd.f32 %v3970, %v4008
  %v4019 = vadd.f32 %v3971, %v4009
  %v4020 = vperm.slane %v3775, 5
  %v4021 = vperm.slane %v3776, 5
  %v4022 = vperm.slane %v3777, 5
  %v4023 = vperm.slane %v3778, 5
  %v4024 = vperm.slane %v3779, 5
  %4025 = vset.pattern.permute.xlu0 69
  %4026 = vperm.xlu0 %4025, %v714
  %v4027 = vpop.permute.xlu0 %4026
  %v4029 = vsub.f32 %v4020, %v4027
  %v4030 = vsub.f32 %v4021, %v4027
  %v4031 = vsub.f32 %v4022, %v4027
  %v4032 = vsub.f32 %v4023, %v4027
  %v4033 = vsub.f32 %v4024, %v4027
  %v4034 = vand.u32 2147483647, %v4029
  %v4035 = vand.u32 2147483647, %v4030
  %v4036 = vand.u32 2147483647, %v4031
  %v4037 = vand.u32 2147483647, %v4032
  %v4038 = vand.u32 2147483647, %v4033
  %4044 = vrot.lane.b32.xlu0 %v4034, 94
  %v4045 = vpop.permute.xlu0 %4044
  %4046 = vrot.lane.b32.xlu0 %v4035, 94
  %v4047 = vpop.permute.xlu0 %4046
  %4048 = vrot.lane.b32.xlu0 %v4036, 94
  %v4049 = vpop.permute.xlu0 %4048
  %4050 = vrot.lane.b32.xlu0 %v4037, 94
  %v4051 = vpop.permute.xlu0 %4050
  %4052 = vrot.lane.b32.xlu0 %v4038, 94
  %v4053 = vpop.permute.xlu0 %4052
  %v4054 = vsel %vm453, %v4045, %v4047
  %v4055 = vsel %vm453, %v4047, %v4049
  %v4056 = vsel %vm453, %v4049, %v4051
  %v4057 = vsel %vm453, %v4051, %v4053
  %v4063 = vadd.f32 %v4015, %v4045
  %v4064 = vadd.f32 %v4016, %v4054
  %v4065 = vadd.f32 %v4017, %v4055
  %v4066 = vadd.f32 %v4018, %v4056
  %v4067 = vadd.f32 %v4019, %v4057
  %v4068 = vperm.slane %v3775, 6
  %v4069 = vperm.slane %v3776, 6
  %v4070 = vperm.slane %v3777, 6
  %v4071 = vperm.slane %v3778, 6
  %v4072 = vperm.slane %v3779, 6
  %4073 = vset.pattern.permute.xlu0 70
  %4074 = vperm.xlu0 %4073, %v714
  %v4075 = vpop.permute.xlu0 %4074
  %v4077 = vsub.f32 %v4068, %v4075
  %v4078 = vsub.f32 %v4069, %v4075
  %v4079 = vsub.f32 %v4070, %v4075
  %v4080 = vsub.f32 %v4071, %v4075
  %v4081 = vsub.f32 %v4072, %v4075
  %v4082 = vand.u32 2147483647, %v4077
  %v4083 = vand.u32 2147483647, %v4078
  %v4084 = vand.u32 2147483647, %v4079
  %v4085 = vand.u32 2147483647, %v4080
  %v4086 = vand.u32 2147483647, %v4081
  %4092 = vrot.lane.b32.xlu0 %v4082, 94
  %v4093 = vpop.permute.xlu0 %4092
  %4094 = vrot.lane.b32.xlu0 %v4083, 94
  %v4095 = vpop.permute.xlu0 %4094
  %4096 = vrot.lane.b32.xlu0 %v4084, 94
  %v4097 = vpop.permute.xlu0 %4096
  %4098 = vrot.lane.b32.xlu0 %v4085, 94
  %v4099 = vpop.permute.xlu0 %4098
  %4100 = vrot.lane.b32.xlu0 %v4086, 94
  %v4101 = vpop.permute.xlu0 %4100
  %v4102 = vsel %vm453, %v4093, %v4095
  %v4103 = vsel %vm453, %v4095, %v4097
  %v4104 = vsel %vm453, %v4097, %v4099
  %v4105 = vsel %vm453, %v4099, %v4101
  %v4111 = vadd.f32 %v4063, %v4093
  %v4112 = vadd.f32 %v4064, %v4102
  %v4113 = vadd.f32 %v4065, %v4103
  %v4114 = vadd.f32 %v4066, %v4104
  %v4115 = vadd.f32 %v4067, %v4105
  %v4116 = vperm.slane %v3775, 7
  %v4117 = vperm.slane %v3776, 7
  %v4118 = vperm.slane %v3777, 7
  %v4119 = vperm.slane %v3778, 7
  %v4120 = vperm.slane %v3779, 7
  %4121 = vset.pattern.permute.xlu0 71
  %4122 = vperm.xlu0 %4121, %v714
  %v4123 = vpop.permute.xlu0 %4122
  %v4125 = vsub.f32 %v4116, %v4123
  %v4126 = vsub.f32 %v4117, %v4123
  %v4127 = vsub.f32 %v4118, %v4123
  %v4128 = vsub.f32 %v4119, %v4123
  %v4129 = vsub.f32 %v4120, %v4123
  %v4130 = vand.u32 2147483647, %v4125
  %v4131 = vand.u32 2147483647, %v4126
  %v4132 = vand.u32 2147483647, %v4127
  %v4133 = vand.u32 2147483647, %v4128
  %v4134 = vand.u32 2147483647, %v4129
  %4140 = vrot.lane.b32.xlu0 %v4130, 94
  %v4141 = vpop.permute.xlu0 %4140
  %4142 = vrot.lane.b32.xlu0 %v4131, 94
  %v4143 = vpop.permute.xlu0 %4142
  %4144 = vrot.lane.b32.xlu0 %v4132, 94
  %v4145 = vpop.permute.xlu0 %4144
  %4146 = vrot.lane.b32.xlu0 %v4133, 94
  %v4147 = vpop.permute.xlu0 %4146
  %4148 = vrot.lane.b32.xlu0 %v4134, 94
  %v4149 = vpop.permute.xlu0 %4148
  %v4150 = vsel %vm453, %v4141, %v4143
  %v4151 = vsel %vm453, %v4143, %v4145
  %v4152 = vsel %vm453, %v4145, %v4147
  %v4153 = vsel %vm453, %v4147, %v4149
  %v4159 = vadd.f32 %v4111, %v4141
  %v4160 = vadd.f32 %v4112, %v4150
  %v4161 = vadd.f32 %v4113, %v4151
  %v4162 = vadd.f32 %v4114, %v4152
  %v4163 = vadd.f32 %v4115, %v4153
  %v4164 = vsub.f32 0.0, %v4159
  %v4165 = vsub.f32 0.0, %v4160
  %v4166 = vsub.f32 0.0, %v4161
  %v4167 = vsub.f32 0.0, %v4162
  %v4168 = vsub.f32 0.0, %v4163
  %4174 = vrot.lane.b32.xlu0 %v4164, 17
  %v4175 = vpop.permute.xlu0 %4174
  %4176 = vrot.lane.b32.xlu0 %v4165, 17
  %v4177 = vpop.permute.xlu0 %4176
  %4178 = vrot.lane.b32.xlu0 %v4166, 17
  %v4179 = vpop.permute.xlu0 %4178
  %4180 = vrot.lane.b32.xlu0 %v4167, 17
  %v4181 = vpop.permute.xlu0 %4180
  %4182 = vrot.lane.b32.xlu0 %v4168, 17
  %v4183 = vpop.permute.xlu0 %4182
  %v4184 = vsel %vm291, %v4175, %v4177
  %v4185 = vsel %vm291, %v4177, %v4179
  %v4186 = vsel %vm291, %v4179, %v4181
  %v4187 = vsel %vm291, %v4181, %v4183
  %v4192 = vadd.f32 %v4184, %v4185
  %v4193 = vadd.f32 %v4192, %v4186
  %v4194 = vadd.f32 %v4193, %v4187
  %4195 = vadd.xlane.f32.xlu0 %v4194
  %v4196 = vpop.xlane.xlu0 %4195
  %v4197 = vrcp.pop 512.0
  %v4198 = vmul.f32 512.0, %v4197
  %v4199 = vsub.f32 1.0, %v4198
  %v4200 = vmul.f32 %v4197, %v4199
  %v4201 = vadd.f32 %v4197, %v4200
  %vm4202 = vweird.f32 %v4197
  %v4203 = vsel %vm4202, %v4197, %v4201
  %v4204 = vmul.f32 %v4196, %v4203
  %v4205 = vsub.f32 %v4164, %v4204
  %v4206 = vsub.f32 %v4165, %v4204
  %v4207 = vsub.f32 %v4166, %v4204
  %v4208 = vsub.f32 %v4167, %v4204
  %v4209 = vsub.f32 %v4168, %v4204
  %v4210 = vmul.f32 %v4205, %v4205
  %v4211 = vmul.f32 %v4206, %v4206
  %v4212 = vmul.f32 %v4207, %v4207
  %v4213 = vmul.f32 %v4208, %v4208
  %v4214 = vmul.f32 %v4209, %v4209
  %4220 = vrot.lane.b32.xlu0 %v4210, 17
  %v4221 = vpop.permute.xlu0 %4220
  %4222 = vrot.lane.b32.xlu0 %v4211, 17
  %v4223 = vpop.permute.xlu0 %4222
  %4224 = vrot.lane.b32.xlu0 %v4212, 17
  %v4225 = vpop.permute.xlu0 %4224
  %4226 = vrot.lane.b32.xlu0 %v4213, 17
  %v4227 = vpop.permute.xlu0 %4226
  %4228 = vrot.lane.b32.xlu0 %v4214, 17
  %v4229 = vpop.permute.xlu0 %4228
  %v4230 = vsel %vm291, %v4221, %v4223
  %v4231 = vsel %vm291, %v4223, %v4225
  %v4232 = vsel %vm291, %v4225, %v4227
  %v4233 = vsel %vm291, %v4227, %v4229
  %v4238 = vadd.f32 %v4230, %v4231
  %v4239 = vadd.f32 %v4238, %v4232
  %v4240 = vadd.f32 %v4239, %v4233
  %4241 = vadd.xlane.f32.xlu0 %v4240
  %v4242 = vpop.xlane.xlu0 %4241
  %v4243 = vmul.f32 %v4242, %v4203
  %v4244 = vadd.f32 %v4243, 1e-05
  %v4245 = vrsqrt.pop %v4244
  %v4246 = vmul.f32 %v4245, %v4244
  %v4247 = vmul.f32 %v4246, %v4245
  %v4248 = vmul.f32 0.5, %v4247
  %v4249 = vsub.f32 1.5, %v4248
  %v4250 = vmul.f32 %v4245, %v4249
  %vm4251 = vweird.f32 %v4244
  %vm4252 = vweird.f32 %v4245
  %vm4253 = vmor %vm4251, %vm4252
  %v4254 = vsel %vm4253, %v4245, %v4250
  %v4255 = vmul.f32 %v4205, %v4254
  %v4256 = vmul.f32 %v4206, %v4254
  %v4257 = vmul.f32 %v4207, %v4254
  %v4258 = vmul.f32 %v4208, %v4254
  %v4259 = vmul.f32 %v4209, %v4254
  %v4260 = vld [vmem:[%s3] sm:$0xff]
  %4262 = vset.pattern.permute.xlu0 0
  %4263 = vperm.xlu0 %4262, %v4260
  %v4264 = vpop.permute.xlu0 %4263
  %v4266 = vmul.f32 %v4255, %v4264
  %v4267 = vmul.f32 %v4256, %v4264
  %v4268 = vmul.f32 %v4257, %v4264
  %v4269 = vmul.f32 %v4258, %v4264
  %v4270 = vmul.f32 %v4259, %v4264
  %v4271 = vld [vmem:[%s4] sm:$0xff]
  %4273 = vset.pattern.permute.xlu0 0
  %4274 = vperm.xlu0 %4273, %v4271
  %v4275 = vpop.permute.xlu0 %4274
  %v4277 = vadd.f32 %v4266, %v4275
  %v4278 = vadd.f32 %v4267, %v4275
  %v4279 = vadd.f32 %v4268, %v4275
  %v4280 = vadd.f32 %v4269, %v4275
  %v4281 = vadd.f32 %v4270, %v4275
  %v4282 = vmax.f32 %v4277, 0.0
  %v4283 = vmax.f32 %v4278, 0.0
  %v4284 = vmax.f32 %v4279, 0.0
  %v4285 = vmax.f32 %v4280, 0.0
  %v4286 = vmax.f32 %v4281, 0.0
  %v4287 = vld [vmem:[%s0] sm:$0xff]
  %v4288 = vld [vmem:[%s0 + $0x8] sm:$0xff]
  %v4289 = vld [vmem:[%s0 + $0x10] sm:$0xff]
  %v4290 = vld [vmem:[%s0 + $0x18] sm:$0xff]
  %4296 = vrot.lane.b32.xlu0 %v4282, 17
  %v4297 = vpop.permute.xlu0 %4296
  %4298 = vrot.lane.b32.xlu0 %v4283, 17
  %v4299 = vpop.permute.xlu0 %4298
  %4300 = vrot.lane.b32.xlu0 %v4284, 17
  %v4301 = vpop.permute.xlu0 %4300
  %4302 = vrot.lane.b32.xlu0 %v4285, 17
  %v4303 = vpop.permute.xlu0 %4302
  %4304 = vrot.lane.b32.xlu0 %v4286, 17
  %v4305 = vpop.permute.xlu0 %4304
  %v4306 = vsel %vm291, %v4297, %v4299
  %v4307 = vsel %vm291, %v4299, %v4301
  %v4308 = vsel %vm291, %v4301, %v4303
  %v4309 = vsel %vm291, %v4303, %v4305
  %4314 = vst [vmem:[#allocation2 + $0x8] sm:$0xff] %v4306
  %4315 = vst [vmem:[#allocation2 + $0x10] sm:$0xff] %v4307
  %4316 = vst [vmem:[#allocation2 + $0x18] sm:$0xff] %v4308
  %4317 = vst [vmem:[#allocation2 + $0x20] sm:$0xff] %v4309
  %v4318 = vld [vmem:[#allocation2] sm:$0xff]
  %v4319 = vld [vmem:[#allocation2 + $0x8] sm:$0xff]
  %v4320 = vld [vmem:[#allocation2 + $0x10] sm:$0xff]
  %v4321 = vld [vmem:[#allocation2 + $0x18] sm:$0xff]
  %v4322 = vld [vmem:[#allocation2 + $0x20] sm:$0xff]
  %v4323 = vld [vmem:[%s9] ss:$8 sm:$0xf]
  %v4325 = vperm.slane %v4323, 0
  %v4326 = vperm.slane %v4323, 1
  %v4327 = vperm.slane %v4323, 2
  %v4328 = vperm.slane %v4323, 3
  %4329 = vrot.lane.b32.xlu0 %v4325, 111
  %v4330 = vpop.permute.xlu0 %4329
  %4331 = vrot.lane.b32.xlu0 %v4326, 111
  %v4332 = vpop.permute.xlu0 %4331
  %4333 = vrot.lane.b32.xlu0 %v4327, 111
  %v4334 = vpop.permute.xlu0 %4333
  %4335 = vrot.lane.b32.xlu0 %v4328, 111
  %v4336 = vpop.permute.xlu0 %4335
  %v4337 = vsel %vm68, %v4330, %v4332
  %v4338 = vsel %vm68, %v4332, %v4334
  %v4339 = vsel %vm68, %v4334, %v4336
  %v4345 = vmul.f32 %v4318, %v4330
  %v4346 = vmul.f32 %v4319, %v4337
  %v4347 = vmul.f32 %v4320, %v4338
  %v4348 = vmul.f32 %v4321, %v4339
  %v4349 = vmul.f32 %v4322, %v4336
  %v4350 = vld [vmem:[%s82] ss:$8 sm:$0xf]
  %v4352 = vperm.slane %v4350, 0
  %v4353 = vperm.slane %v4350, 1
  %v4354 = vperm.slane %v4350, 2
  %v4355 = vperm.slane %v4350, 3
  %4356 = vrot.lane.b32.xlu0 %v4352, 112
  %v4357 = vpop.permute.xlu0 %4356
  %4358 = vrot.lane.b32.xlu0 %v4353, 112
  %v4359 = vpop.permute.xlu0 %4358
  %4360 = vrot.lane.b32.xlu0 %v4354, 112
  %v4361 = vpop.permute.xlu0 %4360
  %4362 = vrot.lane.b32.xlu0 %v4355, 112
  %v4363 = vpop.permute.xlu0 %4362
  %v4364 = vsel %vm97, %v4357, %v4359
  %v4365 = vsel %vm97, %v4359, %v4361
  %v4366 = vsel %vm97, %v4361, %v4363
  %v4372 = vmul.f32 %v4318, %v4357
  %v4373 = vmul.f32 %v4319, %v4364
  %v4374 = vmul.f32 %v4320, %v4365
  %v4375 = vmul.f32 %v4321, %v4366
  %v4376 = vmul.f32 %v4322, %v4363
  %v4377 = vld [vmem:[%s111] ss:$8 sm:$0xf]
  %v4379 = vperm.slane %v4377, 0
  %v4380 = vperm.slane %v4377, 1
  %v4381 = vperm.slane %v4377, 2
  %v4382 = vperm.slane %v4377, 3
  %4383 = vrot.lane.b32.xlu0 %v4379, 113
  %v4384 = vpop.permute.xlu0 %4383
  %4385 = vrot.lane.b32.xlu0 %v4380, 113
  %v4386 = vpop.permute.xlu0 %4385
  %4387 = vrot.lane.b32.xlu0 %v4381, 113
  %v4388 = vpop.permute.xlu0 %4387
  %4389 = vrot.lane.b32.xlu0 %v4382, 113
  %v4390 = vpop.permute.xlu0 %4389
  %v4391 = vsel %vm126, %v4384, %v4386
  %v4392 = vsel %vm126, %v4386, %v4388
  %v4393 = vsel %vm126, %v4388, %v4390
  %v4399 = vmul.f32 %v4318, %v4384
  %v4400 = vmul.f32 %v4319, %v4391
  %v4401 = vmul.f32 %v4320, %v4392
  %v4402 = vmul.f32 %v4321, %v4393
  %v4403 = vmul.f32 %v4322, %v4390
  %v4404 = vld [vmem:[%s140] ss:$8 sm:$0xf]
  %v4406 = vperm.slane %v4404, 0
  %v4407 = vperm.slane %v4404, 1
  %v4408 = vperm.slane %v4404, 2
  %v4409 = vperm.slane %v4404, 3
  %4410 = vrot.lane.b32.xlu0 %v4406, 127
  %v4411 = vpop.permute.xlu0 %4410
  %4412 = vrot.lane.b32.xlu0 %v4407, 127
  %v4413 = vpop.permute.xlu0 %4412
  %4414 = vrot.lane.b32.xlu0 %v4408, 127
  %v4415 = vpop.permute.xlu0 %4414
  %4416 = vrot.lane.b32.xlu0 %v4409, 127
  %v4417 = vpop.permute.xlu0 %4416
  %v4418 = vsel %vm155, %v4411, %v4413
  %v4419 = vsel %vm155, %v4413, %v4415
  %v4420 = vsel %vm155, %v4415, %v4417
  %v4426 = vmul.f32 %v4318, %v4411
  %v4427 = vmul.f32 %v4319, %v4418
  %v4428 = vmul.f32 %v4320, %v4419
  %v4429 = vmul.f32 %v4321, %v4420
  %v4430 = vmul.f32 %v4322, %v4417
  %v4431 = vld [vmem:[%s169] ss:$8 sm:$0xf]
  %v4433 = vperm.slane %v4431, 0
  %v4434 = vperm.slane %v4431, 1
  %v4435 = vperm.slane %v4431, 2
  %v4436 = vperm.slane %v4431, 3
  %v4441 = vmul.f32 %v4319, %v4433
  %v4442 = vmul.f32 %v4320, %v4434
  %v4443 = vmul.f32 %v4321, %v4435
  %v4444 = vmul.f32 %v4322, %v4436
  %v4445 = vld [vmem:[#allocation2 + $0x8] sm:$0xff]
  %v4446 = vld [vmem:[#allocation2 + $0x10] sm:$0xff]
  %v4447 = vld [vmem:[#allocation2 + $0x18] sm:$0xff]
  %v4448 = vld [vmem:[#allocation2 + $0x20] sm:$0xff]
  %v4449 = vld [vmem:[#allocation2 + $0x28] sm:$0xff]
  %v4450 = vld [vmem:[%s189] ss:$8 sm:$0xf]
  %v4452 = vperm.slane %v4450, 0
  %v4453 = vperm.slane %v4450, 1
  %v4454 = vperm.slane %v4450, 2
  %v4455 = vperm.slane %v4450, 3
  %4456 = vrot.lane.b32.xlu0 %v4452, 1
  %v4457 = vpop.permute.xlu0 %4456
  %4458 = vrot.lane.b32.xlu0 %v4453, 1
  %v4459 = vpop.permute.xlu0 %4458
  %4460 = vrot.lane.b32.xlu0 %v4454, 1
  %v4461 = vpop.permute.xlu0 %4460
  %4462 = vrot.lane.b32.xlu0 %v4455, 1
  %v4463 = vpop.permute.xlu0 %4462
  %v4464 = vsel %vm204, %v4457, %v4459
  %v4465 = vsel %vm204, %v4459, %v4461
  %v4466 = vsel %vm204, %v4461, %v4463
  %v4472 = vmul.f32 %v4445, %v4457
  %v4473 = vmul.f32 %v4446, %v4464
  %v4474 = vmul.f32 %v4447, %v4465
  %v4475 = vmul.f32 %v4448, %v4466
  %v4476 = vmul.f32 %v4449, %v4463
  %v4477 = vld [vmem:[%s218] ss:$8 sm:$0xf]
  %v4479 = vperm.slane %v4477, 0
  %v4480 = vperm.slane %v4477, 1
  %v4481 = vperm.slane %v4477, 2
  %v4482 = vperm.slane %v4477, 3
  %4483 = vrot.lane.b32.xlu0 %v4479, 15
  %v4484 = vpop.permute.xlu0 %4483
  %4485 = vrot.lane.b32.xlu0 %v4480, 15
  %v4486 = vpop.permute.xlu0 %4485
  %4487 = vrot.lane.b32.xlu0 %v4481, 15
  %v4488 = vpop.permute.xlu0 %4487
  %4489 = vrot.lane.b32.xlu0 %v4482, 15
  %v4490 = vpop.permute.xlu0 %4489
  %v4491 = vsel %vm233, %v4484, %v4486
  %v4492 = vsel %vm233, %v4486, %v4488
  %v4493 = vsel %vm233, %v4488, %v4490
  %v4499 = vmul.f32 %v4445, %v4484
  %v4500 = vmul.f32 %v4446, %v4491
  %v4501 = vmul.f32 %v4447, %v4492
  %v4502 = vmul.f32 %v4448, %v4493
  %v4503 = vmul.f32 %v4449, %v4490
  %v4504 = vld [vmem:[%s247] ss:$8 sm:$0xf]
  %v4506 = vperm.slane %v4504, 0
  %v4507 = vperm.slane %v4504, 1
  %v4508 = vperm.slane %v4504, 2
  %v4509 = vperm.slane %v4504, 3
  %4510 = vrot.lane.b32.xlu0 %v4506, 16
  %v4511 = vpop.permute.xlu0 %4510
  %4512 = vrot.lane.b32.xlu0 %v4507, 16
  %v4513 = vpop.permute.xlu0 %4512
  %4514 = vrot.lane.b32.xlu0 %v4508, 16
  %v4515 = vpop.permute.xlu0 %4514
  %4516 = vrot.lane.b32.xlu0 %v4509, 16
  %v4517 = vpop.permute.xlu0 %4516
  %v4518 = vsel %vm262, %v4511, %v4513
  %v4519 = vsel %vm262, %v4513, %v4515
  %v4520 = vsel %vm262, %v4515, %v4517
  %v4526 = vmul.f32 %v4445, %v4511
  %v4527 = vmul.f32 %v4446, %v4518
  %v4528 = vmul.f32 %v4447, %v4519
  %v4529 = vmul.f32 %v4448, %v4520
  %v4530 = vmul.f32 %v4449, %v4517
  %v4531 = vld [vmem:[%s276] ss:$8 sm:$0xf]
  %v4533 = vperm.slane %v4531, 0
  %v4534 = vperm.slane %v4531, 1
  %v4535 = vperm.slane %v4531, 2
  %v4536 = vperm.slane %v4531, 3
  %4537 = vrot.lane.b32.xlu0 %v4533, 17
  %v4538 = vpop.permute.xlu0 %4537
  %4539 = vrot.lane.b32.xlu0 %v4534, 17
  %v4540 = vpop.permute.xlu0 %4539
  %4541 = vrot.lane.b32.xlu0 %v4535, 17
  %v4542 = vpop.permute.xlu0 %4541
  %4543 = vrot.lane.b32.xlu0 %v4536, 17
  %v4544 = vpop.permute.xlu0 %4543
  %v4545 = vsel %vm291, %v4538, %v4540
  %v4546 = vsel %vm291, %v4540, %v4542
  %v4547 = vsel %vm291, %v4542, %v4544
  %v4553 = vmul.f32 %v4445, %v4538
  %v4554 = vmul.f32 %v4446, %v4545
  %v4555 = vmul.f32 %v4447, %v4546
  %v4556 = vmul.f32 %v4448, %v4547
  %v4557 = vmul.f32 %v4449, %v4544
  %4563 = vrot.lane.b32.xlu0 %v4372, 127
  %v4564 = vpop.permute.xlu0 %4563
  %4565 = vrot.lane.b32.xlu0 %v4373, 127
  %v4566 = vpop.permute.xlu0 %4565
  %4567 = vrot.lane.b32.xlu0 %v4374, 127
  %v4568 = vpop.permute.xlu0 %4567
  %4569 = vrot.lane.b32.xlu0 %v4375, 127
  %v4570 = vpop.permute.xlu0 %4569
  %4571 = vrot.lane.b32.xlu0 %v4376, 127
  %v4572 = vpop.permute.xlu0 %4571
  %v4573 = vsel %vm155, %v4564, %v4566
  %v4574 = vsel %vm155, %v4566, %v4568
  %v4575 = vsel %vm155, %v4568, %v4570
  %v4576 = vsel %vm155, %v4570, %v4572
  %4582 = vrot.lane.b32.xlu0 %v4399, 126
  %v4583 = vpop.permute.xlu0 %4582
  %4584 = vrot.lane.b32.xlu0 %v4400, 126
  %v4585 = vpop.permute.xlu0 %4584
  %4586 = vrot.lane.b32.xlu0 %v4401, 126
  %v4587 = vpop.permute.xlu0 %4586
  %4588 = vrot.lane.b32.xlu0 %v4402, 126
  %v4589 = vpop.permute.xlu0 %4588
  %4590 = vrot.lane.b32.xlu0 %v4403, 126
  %v4591 = vpop.permute.xlu0 %4590
  %v4592 = vsel %vm339, %v4583, %v4585
  %v4593 = vsel %vm339, %v4585, %v4587
  %v4594 = vsel %vm339, %v4587, %v4589
  %v4595 = vsel %vm339, %v4589, %v4591
  %4601 = vrot.lane.b32.xlu0 %v4426, 112
  %v4602 = vpop.permute.xlu0 %4601
  %4603 = vrot.lane.b32.xlu0 %v4427, 112
  %v4604 = vpop.permute.xlu0 %4603
  %4605 = vrot.lane.b32.xlu0 %v4428, 112
  %v4606 = vpop.permute.xlu0 %4605
  %4607 = vrot.lane.b32.xlu0 %v4429, 112
  %v4608 = vpop.permute.xlu0 %4607
  %4609 = vrot.lane.b32.xlu0 %v4430, 112
  %v4610 = vpop.permute.xlu0 %4609
  %v4611 = vsel %vm97, %v4602, %v4604
  %v4612 = vsel %vm97, %v4604, %v4606
  %v4613 = vsel %vm97, %v4606, %v4608
  %v4614 = vsel %vm97, %v4608, %v4610
  %4619 = vrot.lane.b32.xlu0 %v4441, 111
  %v4620 = vpop.permute.xlu0 %4619
  %4621 = vrot.lane.b32.xlu0 %v4442, 111
  %v4622 = vpop.permute.xlu0 %4621
  %4623 = vrot.lane.b32.xlu0 %v4443, 111
  %v4624 = vpop.permute.xlu0 %4623
  %4625 = vrot.lane.b32.xlu0 %v4444, 111
  %v4626 = vpop.permute.xlu0 %4625
  %v4627 = vsel %vm68, %v4620, %v4622
  %v4628 = vsel %vm68, %v4622, %v4624
  %v4629 = vsel %vm68, %v4624, %v4626
  %4635 = vrot.lane.b32.xlu0 %v4472, 110
  %v4636 = vpop.permute.xlu0 %4635
  %4637 = vrot.lane.b32.xlu0 %v4473, 110
  %v4638 = vpop.permute.xlu0 %4637
  %4639 = vrot.lane.b32.xlu0 %v4474, 110
  %v4640 = vpop.permute.xlu0 %4639
  %4641 = vrot.lane.b32.xlu0 %v4475, 110
  %v4642 = vpop.permute.xlu0 %4641
  %4643 = vrot.lane.b32.xlu0 %v4476, 110
  %v4644 = vpop.permute.xlu0 %4643
  %v4645 = vsel %vm393, %v4636, %v4638
  %v4646 = vsel %vm393, %v4638, %v4640
  %v4647 = vsel %vm393, %v4640, %v4642
  %v4648 = vsel %vm393, %v4642, %v4644
  %4654 = vrot.lane.b32.xlu0 %v4499, 96
  %v4655 = vpop.permute.xlu0 %4654
  %4656 = vrot.lane.b32.xlu0 %v4500, 96
  %v4657 = vpop.permute.xlu0 %4656
  %4658 = vrot.lane.b32.xlu0 %v4501, 96
  %v4659 = vpop.permute.xlu0 %4658
  %4660 = vrot.lane.b32.xlu0 %v4502, 96
  %v4661 = vpop.permute.xlu0 %4660
  %4662 = vrot.lane.b32.xlu0 %v4503, 96
  %v4663 = vpop.permute.xlu0 %4662
  %v4664 = vsel %vm413, %v4655, %v4657
  %v4665 = vsel %vm413, %v4657, %v4659
  %v4666 = vsel %vm413, %v4659, %v4661
  %v4667 = vsel %vm413, %v4661, %v4663
  %4673 = vrot.lane.b32.xlu0 %v4526, 95
  %v4674 = vpop.permute.xlu0 %4673
  %4675 = vrot.lane.b32.xlu0 %v4527, 95
  %v4676 = vpop.permute.xlu0 %4675
  %4677 = vrot.lane.b32.xlu0 %v4528, 95
  %v4678 = vpop.permute.xlu0 %4677
  %4679 = vrot.lane.b32.xlu0 %v4529, 95
  %v4680 = vpop.permute.xlu0 %4679
  %4681 = vrot.lane.b32.xlu0 %v4530, 95
  %v4682 = vpop.permute.xlu0 %4681
  %v4683 = vsel %vm433, %v4674, %v4676
  %v4684 = vsel %vm433, %v4676, %v4678
  %v4685 = vsel %vm433, %v4678, %v4680
  %v4686 = vsel %vm433, %v4680, %v4682
  %4692 = vrot.lane.b32.xlu0 %v4553, 94
  %v4693 = vpop.permute.xlu0 %4692
  %4694 = vrot.lane.b32.xlu0 %v4554, 94
  %v4695 = vpop.permute.xlu0 %4694
  %4696 = vrot.lane.b32.xlu0 %v4555, 94
  %v4697 = vpop.permute.xlu0 %4696
  %4698 = vrot.lane.b32.xlu0 %v4556, 94
  %v4699 = vpop.permute.xlu0 %4698
  %4700 = vrot.lane.b32.xlu0 %v4557, 94
  %v4701 = vpop.permute.xlu0 %4700
  %v4702 = vsel %vm453, %v4693, %v4695
  %v4703 = vsel %vm453, %v4695, %v4697
  %v4704 = vsel %vm453, %v4697, %v4699
  %v4705 = vsel %vm453, %v4699, %v4701
  %v4706 = vld [vmem:[%s5] sm:$0xff]
  %4712 = vrot.lane.b32.xlu0 %v4345, 17
  %v4713 = vpop.permute.xlu0 %4712
  %4714 = vrot.lane.b32.xlu0 %v4346, 17
  %v4715 = vpop.permute.xlu0 %4714
  %4716 = vrot.lane.b32.xlu0 %v4347, 17
  %v4717 = vpop.permute.xlu0 %4716
  %4718 = vrot.lane.b32.xlu0 %v4348, 17
  %v4719 = vpop.permute.xlu0 %4718
  %4720 = vrot.lane.b32.xlu0 %v4349, 17
  %v4721 = vpop.permute.xlu0 %4720
  %4722 = vrot.lane.b32.xlu0 %v4573, 17
  %v4723 = vpop.permute.xlu0 %4722
  %4724 = vrot.lane.b32.xlu0 %v4574, 17
  %v4725 = vpop.permute.xlu0 %4724
  %4726 = vrot.lane.b32.xlu0 %v4575, 17
  %v4727 = vpop.permute.xlu0 %4726
  %4728 = vrot.lane.b32.xlu0 %v4576, 17
  %v4729 = vpop.permute.xlu0 %4728
  %4730 = vrot.lane.b32.xlu0 %v4572, 17
  %v4731 = vpop.permute.xlu0 %4730
  %4732 = vrot.lane.b32.xlu0 %v4592, 17
  %v4733 = vpop.permute.xlu0 %4732
  %4734 = vrot.lane.b32.xlu0 %v4593, 17
  %v4735 = vpop.permute.xlu0 %4734
  %4736 = vrot.lane.b32.xlu0 %v4594, 17
  %v4737 = vpop.permute.xlu0 %4736
  %4738 = vrot.lane.b32.xlu0 %v4595, 17
  %v4739 = vpop.permute.xlu0 %4738
  %4740 = vrot.lane.b32.xlu0 %v4591, 17
  %v4741 = vpop.permute.xlu0 %4740
  %4742 = vrot.lane.b32.xlu0 %v4611, 17
  %v4743 = vpop.permute.xlu0 %4742
  %4744 = vrot.lane.b32.xlu0 %v4612, 17
  %v4745 = vpop.permute.xlu0 %4744
  %4746 = vrot.lane.b32.xlu0 %v4613, 17
  %v4747 = vpop.permute.xlu0 %4746
  %4748 = vrot.lane.b32.xlu0 %v4614, 17
  %v4749 = vpop.permute.xlu0 %4748
  %4750 = vrot.lane.b32.xlu0 %v4610, 17
  %v4751 = vpop.permute.xlu0 %4750
  %4752 = vrot.lane.b32.xlu0 %v4620, 17
  %v4753 = vpop.permute.xlu0 %4752
  %4754 = vrot.lane.b32.xlu0 %v4627, 17
  %v4755 = vpop.permute.xlu0 %4754
  %4756 = vrot.lane.b32.xlu0 %v4628, 17
  %v4757 = vpop.permute.xlu0 %4756
  %4758 = vrot.lane.b32.xlu0 %v4629, 17
  %v4759 = vpop.permute.xlu0 %4758
  %4760 = vrot.lane.b32.xlu0 %v4626, 17
  %v4761 = vpop.permute.xlu0 %4760
  %4762 = vrot.lane.b32.xlu0 %v4636, 17
  %v4763 = vpop.permute.xlu0 %4762
  %4764 = vrot.lane.b32.xlu0 %v4645, 17
  %v4765 = vpop.permute.xlu0 %4764
  %4766 = vrot.lane.b32.xlu0 %v4646, 17
  %v4767 = vpop.permute.xlu0 %4766
  %4768 = vrot.lane.b32.xlu0 %v4647, 17
  %v4769 = vpop.permute.xlu0 %4768
  %4770 = vrot.lane.b32.xlu0 %v4648, 17
  %v4771 = vpop.permute.xlu0 %4770
  %4772 = vrot.lane.b32.xlu0 %v4655, 17
  %v4773 = vpop.permute.xlu0 %4772
  %4774 = vrot.lane.b32.xlu0 %v4664, 17
  %v4775 = vpop.permute.xlu0 %4774
  %4776 = vrot.lane.b32.xlu0 %v4665, 17
  %v4777 = vpop.permute.xlu0 %4776
  %4778 = vrot.lane.b32.xlu0 %v4666, 17
  %v4779 = vpop.permute.xlu0 %4778
  %4780 = vrot.lane.b32.xlu0 %v4667, 17
  %v4781 = vpop.permute.xlu0 %4780
  %4782 = vrot.lane.b32.xlu0 %v4674, 17
  %v4783 = vpop.permute.xlu0 %4782
  %4784 = vrot.lane.b32.xlu0 %v4683, 17
  %v4785 = vpop.permute.xlu0 %4784
  %4786 = vrot.lane.b32.xlu0 %v4684, 17
  %v4787 = vpop.permute.xlu0 %4786
  %4788 = vrot.lane.b32.xlu0 %v4685, 17
  %v4789 = vpop.permute.xlu0 %4788
  %4790 = vrot.lane.b32.xlu0 %v4686, 17
  %v4791 = vpop.permute.xlu0 %4790
  %4792 = vrot.lane.b32.xlu0 %v4693, 17
  %v4793 = vpop.permute.xlu0 %4792
  %4794 = vrot.lane.b32.xlu0 %v4702, 17
  %v4795 = vpop.permute.xlu0 %4794
  %4796 = vrot.lane.b32.xlu0 %v4703, 17
  %v4797 = vpop.permute.xlu0 %4796
  %4798 = vrot.lane.b32.xlu0 %v4704, 17
  %v4799 = vpop.permute.xlu0 %4798
  %4800 = vrot.lane.b32.xlu0 %v4705, 17
  %v4801 = vpop.permute.xlu0 %4800
  %v4802 = vsel %vm291, %v4713, %v4715
  %v4803 = vsel %vm291, %v4715, %v4717
  %v4804 = vsel %vm291, %v4717, %v4719
  %v4805 = vsel %vm291, %v4719, %v4721
  %v4806 = vsel %vm291, %v4723, %v4725
  %v4807 = vsel %vm291, %v4725, %v4727
  %v4808 = vsel %vm291, %v4727, %v4729
  %v4809 = vsel %vm291, %v4729, %v4731
  %v4810 = vsel %vm291, %v4733, %v4735
  %v4811 = vsel %vm291, %v4735, %v4737
  %v4812 = vsel %vm291, %v4737, %v4739
  %v4813 = vsel %vm291, %v4739, %v4741
  %v4814 = vsel %vm291, %v4743, %v4745
  %v4815 = vsel %vm291, %v4745, %v4747
  %v4816 = vsel %vm291, %v4747, %v4749
  %v4817 = vsel %vm291, %v4749, %v4751
  %v4818 = vsel %vm291, %v4753, %v4755
  %v4819 = vsel %vm291, %v4755, %v4757
  %v4820 = vsel %vm291, %v4757, %v4759
  %v4821 = vsel %vm291, %v4759, %v4761
  %v4822 = vsel %vm291, %v4763, %v4765
  %v4823 = vsel %vm291, %v4765, %v4767
  %v4824 = vsel %vm291, %v4767, %v4769
  %v4825 = vsel %vm291, %v4769, %v4771
  %v4826 = vsel %vm291, %v4773, %v4775
  %v4827 = vsel %vm291, %v4775, %v4777
  %v4828 = vsel %vm291, %v4777, %v4779
  %v4829 = vsel %vm291, %v4779, %v4781
  %v4830 = vsel %vm291, %v4783, %v4785
  %v4831 = vsel %vm291, %v4785, %v4787
  %v4832 = vsel %vm291, %v4787, %v4789
  %v4833 = vsel %vm291, %v4789, %v4791
  %v4834 = vsel %vm291, %v4793, %v4795
  %v4835 = vsel %vm291, %v4795, %v4797
  %v4836 = vsel %vm291, %v4797, %v4799
  %v4837 = vsel %vm291, %v4799, %v4801
  %v4875 = vsel %vm626, %v4706, 0
  %4877 = vmatpush.msra.mxu0 0.0
  %4878 = vmatpush.msra.mxu0 0.0
  %4879 = vmatpush.msra.mxu0 0.0
  %4880 = vmatpush.msra.mxu0 0.0
  %4881 = vmatpush.msra.mxu0 0.0
  %4882 = vmatpush.msra.mxu0 0.0
  %4883 = vmatpush.msra.mxu0 0.0
  %4884 = vmatpush.msra.mxu0 %v4834
  %4885 = vmatpush.msra.mxu0 %v4830
  %4886 = vmatpush.msra.mxu0 %v4826
  %4887 = vmatpush.msra.mxu0 %v4822
  %4888 = vmatpush.msra.mxu0 %v4818
  %4889 = vmatpush.msra.mxu0 %v4814
  %4890 = vmatpush.msra.mxu0 %v4810
  %4891 = vmatpush.msra.mxu0 %v4806
  %4892 = vmatpush.msra.mxu0 %v4802
  %4893 = vmatmul.f32.gmra.mxu0 %v4875
  %v4894 = vpop.f32.mrf.mxu0
  %v4895 = vadd.f32 0.0, %v4894
  %4896 = vdwg.mxu0
  %4897 = vmatpush.msra.mxu0 0.0
  %4898 = vmatpush.msra.mxu0 0.0
  %4899 = vmatpush.msra.mxu0 0.0
  %4900 = vmatpush.msra.mxu0 0.0
  %4901 = vmatpush.msra.mxu0 0.0
  %4902 = vmatpush.msra.mxu0 0.0
  %4903 = vmatpush.msra.mxu0 0.0
  %4904 = vmatpush.msra.mxu0 %v4835
  %4905 = vmatpush.msra.mxu0 %v4831
  %4906 = vmatpush.msra.mxu0 %v4827
  %4907 = vmatpush.msra.mxu0 %v4823
  %4908 = vmatpush.msra.mxu0 %v4819
  %4909 = vmatpush.msra.mxu0 %v4815
  %4910 = vmatpush.msra.mxu0 %v4811
  %4911 = vmatpush.msra.mxu0 %v4807
  %4912 = vmatpush.msra.mxu0 %v4803
  %4913 = vmatmul.f32.gmra.mxu0 %v4875
  %v4914 = vpop.f32.mrf.mxu0
  %v4915 = vadd.f32 0.0, %v4914
  %4916 = vdwg.mxu0
  %4917 = vmatpush.msra.mxu0 0.0
  %4918 = vmatpush.msra.mxu0 0.0
  %4919 = vmatpush.msra.mxu0 0.0
  %4920 = vmatpush.msra.mxu0 0.0
  %4921 = vmatpush.msra.mxu0 0.0
  %4922 = vmatpush.msra.mxu0 0.0
  %4923 = vmatpush.msra.mxu0 0.0
  %4924 = vmatpush.msra.mxu0 %v4836
  %4925 = vmatpush.msra.mxu0 %v4832
  %4926 = vmatpush.msra.mxu0 %v4828
  %4927 = vmatpush.msra.mxu0 %v4824
  %4928 = vmatpush.msra.mxu0 %v4820
  %4929 = vmatpush.msra.mxu0 %v4816
  %4930 = vmatpush.msra.mxu0 %v4812
  %4931 = vmatpush.msra.mxu0 %v4808
  %4932 = vmatpush.msra.mxu0 %v4804
  %4933 = vmatmul.f32.gmra.mxu0 %v4875
  %v4934 = vpop.f32.mrf.mxu0
  %v4935 = vadd.f32 0.0, %v4934
  %4936 = vdwg.mxu0
  %4937 = vmatpush.msra.mxu0 0.0
  %4938 = vmatpush.msra.mxu0 0.0
  %4939 = vmatpush.msra.mxu0 0.0
  %4940 = vmatpush.msra.mxu0 0.0
  %4941 = vmatpush.msra.mxu0 0.0
  %4942 = vmatpush.msra.mxu0 0.0
  %4943 = vmatpush.msra.mxu0 0.0
  %4944 = vmatpush.msra.mxu0 %v4837
  %4945 = vmatpush.msra.mxu0 %v4833
  %4946 = vmatpush.msra.mxu0 %v4829
  %4947 = vmatpush.msra.mxu0 %v4825
  %4948 = vmatpush.msra.mxu0 %v4821
  %4949 = vmatpush.msra.mxu0 %v4817
  %4950 = vmatpush.msra.mxu0 %v4813
  %4951 = vmatpush.msra.mxu0 %v4809
  %4952 = vmatpush.msra.mxu0 %v4805
  %4953 = vmatmul.f32.gmra.mxu0 %v4875
  %v4954 = vpop.f32.mrf.mxu0
  %v4955 = vadd.f32 0.0, %v4954
  %4956 = vdwg.mxu0
  %4957 = vst [vmem:[#allocation2 + $0x8] sm:$0xff] %v4895
  %4958 = vst [vmem:[#allocation2 + $0x10] sm:$0xff] %v4915
  %4959 = vst [vmem:[#allocation2 + $0x18] sm:$0xff] %v4935
  %4960 = vst [vmem:[#allocation2 + $0x20] sm:$0xff] %v4955
  %v4961 = vld [vmem:[%s6] sm:$0xff]
  %v4962 = vld [vmem:[#allocation2] sm:$0xff]
  %v4963 = vld [vmem:[#allocation2 + $0x8] sm:$0xff]
  %v4964 = vld [vmem:[#allocation2 + $0x10] sm:$0xff]
  %v4965 = vld [vmem:[#allocation2 + $0x18] sm:$0xff]
  %v4966 = vld [vmem:[#allocation2 + $0x20] sm:$0xff]
  %v4967 = vld [vmem:[%s9] ss:$8 sm:$0xf]
  %v4969 = vperm.slane %v4967, 0
  %v4970 = vperm.slane %v4967, 1
  %v4971 = vperm.slane %v4967, 2
  %v4972 = vperm.slane %v4967, 3
  %4973 = vrot.lane.b32.xlu0 %v4969, 111
  %v4974 = vpop.permute.xlu0 %4973
  %4975 = vrot.lane.b32.xlu0 %v4970, 111
  %v4976 = vpop.permute.xlu0 %4975
  %4977 = vrot.lane.b32.xlu0 %v4971, 111
  %v4978 = vpop.permute.xlu0 %4977
  %4979 = vrot.lane.b32.xlu0 %v4972, 111
  %v4980 = vpop.permute.xlu0 %4979
  %v4981 = vsel %vm68, %v4974, %v4976
  %v4982 = vsel %vm68, %v4976, %v4978
  %v4983 = vsel %vm68, %v4978, %v4980
  %v4989 = vmul.f32 %v4962, %v4974
  %v4990 = vmul.f32 %v4963, %v4981
  %v4991 = vmul.f32 %v4964, %v4982
  %v4992 = vmul.f32 %v4965, %v4983
  %v4993 = vmul.f32 %v4966, %v4980
  %v4994 = vperm.slane %v4989, 0
  %v4995 = vperm.slane %v4990, 0
  %v4996 = vperm.slane %v4991, 0
  %v4997 = vperm.slane %v4992, 0
  %v4998 = vperm.slane %v4993, 0
  %5000 = vset.pattern.permute.xlu0 0
  %5001 = vperm.xlu0 %5000, %v4961
  %v5002 = vpop.permute.xlu0 %5001
  %v5004 = vsub.f32 %v4994, %v5002
  %v5005 = vsub.f32 %v4995, %v5002
  %v5006 = vsub.f32 %v4996, %v5002
  %v5007 = vsub.f32 %v4997, %v5002
  %v5008 = vsub.f32 %v4998, %v5002
  %v5009 = vand.u32 2147483647, %v5004
  %v5010 = vand.u32 2147483647, %v5005
  %v5011 = vand.u32 2147483647, %v5006
  %v5012 = vand.u32 2147483647, %v5007
  %v5013 = vand.u32 2147483647, %v5008
  %v5014 = vadd.f32 %v5009, 0.0
  %v5015 = vadd.f32 %v5010, 0.0
  %v5016 = vadd.f32 %v5011, 0.0
  %v5017 = vadd.f32 %v5012, 0.0
  %v5018 = vadd.f32 %v5013, 0.0
  %v5019 = vperm.slane %v4989, 1
  %v5020 = vperm.slane %v4990, 1
  %v5021 = vperm.slane %v4991, 1
  %v5022 = vperm.slane %v4992, 1
  %v5023 = vperm.slane %v4993, 1
  %5024 = vset.pattern.permute.xlu0 1
  %5025 = vperm.xlu0 %5024, %v4961
  %v5026 = vpop.permute.xlu0 %5025
  %v5028 = vsub.f32 %v5019, %v5026
  %v5029 = vsub.f32 %v5020, %v5026
  %v5030 = vsub.f32 %v5021, %v5026
  %v5031 = vsub.f32 %v5022, %v5026
  %v5032 = vsub.f32 %v5023, %v5026
  %v5033 = vand.u32 2147483647, %v5028
  %v5034 = vand.u32 2147483647, %v5029
  %v5035 = vand.u32 2147483647, %v5030
  %v5036 = vand.u32 2147483647, %v5031
  %v5037 = vand.u32 2147483647, %v5032
  %v5038 = vadd.f32 %v5014, %v5033
  %v5039 = vadd.f32 %v5015, %v5034
  %v5040 = vadd.f32 %v5016, %v5035
  %v5041 = vadd.f32 %v5017, %v5036
  %v5042 = vadd.f32 %v5018, %v5037
  %v5043 = vperm.slane %v4989, 2
  %v5044 = vperm.slane %v4990, 2
  %v5045 = vperm.slane %v4991, 2
  %v5046 = vperm.slane %v4992, 2
  %v5047 = vperm.slane %v4993, 2
  %5048 = vset.pattern.permute.xlu0 2
  %5049 = vperm.xlu0 %5048, %v4961
  %v5050 = vpop.permute.xlu0 %5049
  %v5052 = vsub.f32 %v5043, %v5050
  %v5053 = vsub.f32 %v5044, %v5050
  %v5054 = vsub.f32 %v5045, %v5050
  %v5055 = vsub.f32 %v5046, %v5050
  %v5056 = vsub.f32 %v5047, %v5050
  %v5057 = vand.u32 2147483647, %v5052
  %v5058 = vand.u32 2147483647, %v5053
  %v5059 = vand.u32 2147483647, %v5054
  %v5060 = vand.u32 2147483647, %v5055
  %v5061 = vand.u32 2147483647, %v5056
  %v5062 = vadd.f32 %v5038, %v5057
  %v5063 = vadd.f32 %v5039, %v5058
  %v5064 = vadd.f32 %v5040, %v5059
  %v5065 = vadd.f32 %v5041, %v5060
  %v5066 = vadd.f32 %v5042, %v5061
  %v5067 = vperm.slane %v4989, 3
  %v5068 = vperm.slane %v4990, 3
  %v5069 = vperm.slane %v4991, 3
  %v5070 = vperm.slane %v4992, 3
  %v5071 = vperm.slane %v4993, 3
  %5072 = vset.pattern.permute.xlu0 3
  %5073 = vperm.xlu0 %5072, %v4961
  %v5074 = vpop.permute.xlu0 %5073
  %v5076 = vsub.f32 %v5067, %v5074
  %v5077 = vsub.f32 %v5068, %v5074
  %v5078 = vsub.f32 %v5069, %v5074
  %v5079 = vsub.f32 %v5070, %v5074
  %v5080 = vsub.f32 %v5071, %v5074
  %v5081 = vand.u32 2147483647, %v5076
  %v5082 = vand.u32 2147483647, %v5077
  %v5083 = vand.u32 2147483647, %v5078
  %v5084 = vand.u32 2147483647, %v5079
  %v5085 = vand.u32 2147483647, %v5080
  %v5086 = vadd.f32 %v5062, %v5081
  %v5087 = vadd.f32 %v5063, %v5082
  %v5088 = vadd.f32 %v5064, %v5083
  %v5089 = vadd.f32 %v5065, %v5084
  %v5090 = vadd.f32 %v5066, %v5085
  %v5091 = vperm.slane %v4989, 4
  %v5092 = vperm.slane %v4990, 4
  %v5093 = vperm.slane %v4991, 4
  %v5094 = vperm.slane %v4992, 4
  %v5095 = vperm.slane %v4993, 4
  %5096 = vset.pattern.permute.xlu0 4
  %5097 = vperm.xlu0 %5096, %v4961
  %v5098 = vpop.permute.xlu0 %5097
  %v5100 = vsub.f32 %v5091, %v5098
  %v5101 = vsub.f32 %v5092, %v5098
  %v5102 = vsub.f32 %v5093, %v5098
  %v5103 = vsub.f32 %v5094, %v5098
  %v5104 = vsub.f32 %v5095, %v5098
  %v5105 = vand.u32 2147483647, %v5100
  %v5106 = vand.u32 2147483647, %v5101
  %v5107 = vand.u32 2147483647, %v5102
  %v5108 = vand.u32 2147483647, %v5103
  %v5109 = vand.u32 2147483647, %v5104
  %v5110 = vadd.f32 %v5086, %v5105
  %v5111 = vadd.f32 %v5087, %v5106
  %v5112 = vadd.f32 %v5088, %v5107
  %v5113 = vadd.f32 %v5089, %v5108
  %v5114 = vadd.f32 %v5090, %v5109
  %v5115 = vperm.slane %v4989, 5
  %v5116 = vperm.slane %v4990, 5
  %v5117 = vperm.slane %v4991, 5
  %v5118 = vperm.slane %v4992, 5
  %v5119 = vperm.slane %v4993, 5
  %5120 = vset.pattern.permute.xlu0 5
  %5121 = vperm.xlu0 %5120, %v4961
  %v5122 = vpop.permute.xlu0 %5121
  %v5124 = vsub.f32 %v5115, %v5122
  %v5125 = vsub.f32 %v5116, %v5122
  %v5126 = vsub.f32 %v5117, %v5122
  %v5127 = vsub.f32 %v5118, %v5122
  %v5128 = vsub.f32 %v5119, %v5122
  %v5129 = vand.u32 2147483647, %v5124
  %v5130 = vand.u32 2147483647, %v5125
  %v5131 = vand.u32 2147483647, %v5126
  %v5132 = vand.u32 2147483647, %v5127
  %v5133 = vand.u32 2147483647, %v5128
  %v5134 = vadd.f32 %v5110, %v5129
  %v5135 = vadd.f32 %v5111, %v5130
  %v5136 = vadd.f32 %v5112, %v5131
  %v5137 = vadd.f32 %v5113, %v5132
  %v5138 = vadd.f32 %v5114, %v5133
  %v5139 = vperm.slane %v4989, 6
  %v5140 = vperm.slane %v4990, 6
  %v5141 = vperm.slane %v4991, 6
  %v5142 = vperm.slane %v4992, 6
  %v5143 = vperm.slane %v4993, 6
  %5144 = vset.pattern.permute.xlu0 6
  %5145 = vperm.xlu0 %5144, %v4961
  %v5146 = vpop.permute.xlu0 %5145
  %v5148 = vsub.f32 %v5139, %v5146
  %v5149 = vsub.f32 %v5140, %v5146
  %v5150 = vsub.f32 %v5141, %v5146
  %v5151 = vsub.f32 %v5142, %v5146
  %v5152 = vsub.f32 %v5143, %v5146
  %v5153 = vand.u32 2147483647, %v5148
  %v5154 = vand.u32 2147483647, %v5149
  %v5155 = vand.u32 2147483647, %v5150
  %v5156 = vand.u32 2147483647, %v5151
  %v5157 = vand.u32 2147483647, %v5152
  %v5158 = vadd.f32 %v5134, %v5153
  %v5159 = vadd.f32 %v5135, %v5154
  %v5160 = vadd.f32 %v5136, %v5155
  %v5161 = vadd.f32 %v5137, %v5156
  %v5162 = vadd.f32 %v5138, %v5157
  %v5163 = vperm.slane %v4989, 7
  %v5164 = vperm.slane %v4990, 7
  %v5165 = vperm.slane %v4991, 7
  %v5166 = vperm.slane %v4992, 7
  %v5167 = vperm.slane %v4993, 7
  %5168 = vset.pattern.permute.xlu0 7
  %5169 = vperm.xlu0 %5168, %v4961
  %v5170 = vpop.permute.xlu0 %5169
  %v5172 = vsub.f32 %v5163, %v5170
  %v5173 = vsub.f32 %v5164, %v5170
  %v5174 = vsub.f32 %v5165, %v5170
  %v5175 = vsub.f32 %v5166, %v5170
  %v5176 = vsub.f32 %v5167, %v5170
  %v5177 = vand.u32 2147483647, %v5172
  %v5178 = vand.u32 2147483647, %v5173
  %v5179 = vand.u32 2147483647, %v5174
  %v5180 = vand.u32 2147483647, %v5175
  %v5181 = vand.u32 2147483647, %v5176
  %v5182 = vadd.f32 %v5158, %v5177
  %v5183 = vadd.f32 %v5159, %v5178
  %v5184 = vadd.f32 %v5160, %v5179
  %v5185 = vadd.f32 %v5161, %v5180
  %v5186 = vadd.f32 %v5162, %v5181
  %v5187 = vld [vmem:[%s82] ss:$8 sm:$0xf]
  %v5189 = vperm.slane %v5187, 0
  %v5190 = vperm.slane %v5187, 1
  %v5191 = vperm.slane %v5187, 2
  %v5192 = vperm.slane %v5187, 3
  %5193 = vrot.lane.b32.xlu0 %v5189, 112
  %v5194 = vpop.permute.xlu0 %5193
  %5195 = vrot.lane.b32.xlu0 %v5190, 112
  %v5196 = vpop.permute.xlu0 %5195
  %5197 = vrot.lane.b32.xlu0 %v5191, 112
  %v5198 = vpop.permute.xlu0 %5197
  %5199 = vrot.lane.b32.xlu0 %v5192, 112
  %v5200 = vpop.permute.xlu0 %5199
  %v5201 = vsel %vm97, %v5194, %v5196
  %v5202 = vsel %vm97, %v5196, %v5198
  %v5203 = vsel %vm97, %v5198, %v5200
  %v5209 = vmul.f32 %v4962, %v5194
  %v5210 = vmul.f32 %v4963, %v5201
  %v5211 = vmul.f32 %v4964, %v5202
  %v5212 = vmul.f32 %v4965, %v5203
  %v5213 = vmul.f32 %v4966, %v5200
  %v5214 = vperm.slane %v5209, 0
  %v5215 = vperm.slane %v5210, 0
  %v5216 = vperm.slane %v5211, 0
  %v5217 = vperm.slane %v5212, 0
  %v5218 = vperm.slane %v5213, 0
  %5219 = vset.pattern.permute.xlu0 8
  %5220 = vperm.xlu0 %5219, %v4961
  %v5221 = vpop.permute.xlu0 %5220
  %v5223 = vsub.f32 %v5214, %v5221
  %v5224 = vsub.f32 %v5215, %v5221
  %v5225 = vsub.f32 %v5216, %v5221
  %v5226 = vsub.f32 %v5217, %v5221
  %v5227 = vsub.f32 %v5218, %v5221
  %v5228 = vand.u32 2147483647, %v5223
  %v5229 = vand.u32 2147483647, %v5224
  %v5230 = vand.u32 2147483647, %v5225
  %v5231 = vand.u32 2147483647, %v5226
  %v5232 = vand.u32 2147483647, %v5227
  %5238 = vrot.lane.b32.xlu0 %v5228, 127
  %v5239 = vpop.permute.xlu0 %5238
  %5240 = vrot.lane.b32.xlu0 %v5229, 127
  %v5241 = vpop.permute.xlu0 %5240
  %5242 = vrot.lane.b32.xlu0 %v5230, 127
  %v5243 = vpop.permute.xlu0 %5242
  %5244 = vrot.lane.b32.xlu0 %v5231, 127
  %v5245 = vpop.permute.xlu0 %5244
  %5246 = vrot.lane.b32.xlu0 %v5232, 127
  %v5247 = vpop.permute.xlu0 %5246
  %v5248 = vsel %vm155, %v5239, %v5241
  %v5249 = vsel %vm155, %v5241, %v5243
  %v5250 = vsel %vm155, %v5243, %v5245
  %v5251 = vsel %vm155, %v5245, %v5247
  %v5257 = vadd.f32 %v5182, %v5248
  %v5258 = vadd.f32 %v5183, %v5249
  %v5259 = vadd.f32 %v5184, %v5250
  %v5260 = vadd.f32 %v5185, %v5251
  %v5261 = vadd.f32 %v5186, %v5247
  %v5262 = vperm.slane %v5209, 1
  %v5263 = vperm.slane %v5210, 1
  %v5264 = vperm.slane %v5211, 1
  %v5265 = vperm.slane %v5212, 1
  %v5266 = vperm.slane %v5213, 1
  %5267 = vset.pattern.permute.xlu0 9
  %5268 = vperm.xlu0 %5267, %v4961
  %v5269 = vpop.permute.xlu0 %5268
  %v5271 = vsub.f32 %v5262, %v5269
  %v5272 = vsub.f32 %v5263, %v5269
  %v5273 = vsub.f32 %v5264, %v5269
  %v5274 = vsub.f32 %v5265, %v5269
  %v5275 = vsub.f32 %v5266, %v5269
  %v5276 = vand.u32 2147483647, %v5271
  %v5277 = vand.u32 2147483647, %v5272
  %v5278 = vand.u32 2147483647, %v5273
  %v5279 = vand.u32 2147483647, %v5274
  %v5280 = vand.u32 2147483647, %v5275
  %5286 = vrot.lane.b32.xlu0 %v5276, 127
  %v5287 = vpop.permute.xlu0 %5286
  %5288 = vrot.lane.b32.xlu0 %v5277, 127
  %v5289 = vpop.permute.xlu0 %5288
  %5290 = vrot.lane.b32.xlu0 %v5278, 127
  %v5291 = vpop.permute.xlu0 %5290
  %5292 = vrot.lane.b32.xlu0 %v5279, 127
  %v5293 = vpop.permute.xlu0 %5292
  %5294 = vrot.lane.b32.xlu0 %v5280, 127
  %v5295 = vpop.permute.xlu0 %5294
  %v5296 = vsel %vm155, %v5287, %v5289
  %v5297 = vsel %vm155, %v5289, %v5291
  %v5298 = vsel %vm155, %v5291, %v5293
  %v5299 = vsel %vm155, %v5293, %v5295
  %v5305 = vadd.f32 %v5257, %v5296
  %v5306 = vadd.f32 %v5258, %v5297
  %v5307 = vadd.f32 %v5259, %v5298
  %v5308 = vadd.f32 %v5260, %v5299
  %v5309 = vadd.f32 %v5261, %v5295
  %v5310 = vperm.slane %v5209, 2
  %v5311 = vperm.slane %v5210, 2
  %v5312 = vperm.slane %v5211, 2
  %v5313 = vperm.slane %v5212, 2
  %v5314 = vperm.slane %v5213, 2
  %5315 = vset.pattern.permute.xlu0 10
  %5316 = vperm.xlu0 %5315, %v4961
  %v5317 = vpop.permute.xlu0 %5316
  %v5319 = vsub.f32 %v5310, %v5317
  %v5320 = vsub.f32 %v5311, %v5317
  %v5321 = vsub.f32 %v5312, %v5317
  %v5322 = vsub.f32 %v5313, %v5317
  %v5323 = vsub.f32 %v5314, %v5317
  %v5324 = vand.u32 2147483647, %v5319
  %v5325 = vand.u32 2147483647, %v5320
  %v5326 = vand.u32 2147483647, %v5321
  %v5327 = vand.u32 2147483647, %v5322
  %v5328 = vand.u32 2147483647, %v5323
  %5334 = vrot.lane.b32.xlu0 %v5324, 127
  %v5335 = vpop.permute.xlu0 %5334
  %5336 = vrot.lane.b32.xlu0 %v5325, 127
  %v5337 = vpop.permute.xlu0 %5336
  %5338 = vrot.lane.b32.xlu0 %v5326, 127
  %v5339 = vpop.permute.xlu0 %5338
  %5340 = vrot.lane.b32.xlu0 %v5327, 127
  %v5341 = vpop.permute.xlu0 %5340
  %5342 = vrot.lane.b32.xlu0 %v5328, 127
  %v5343 = vpop.permute.xlu0 %5342
  %v5344 = vsel %vm155, %v5335, %v5337
  %v5345 = vsel %vm155, %v5337, %v5339
  %v5346 = vsel %vm155, %v5339, %v5341
  %v5347 = vsel %vm155, %v5341, %v5343
  %v5353 = vadd.f32 %v5305, %v5344
  %v5354 = vadd.f32 %v5306, %v5345
  %v5355 = vadd.f32 %v5307, %v5346
  %v5356 = vadd.f32 %v5308, %v5347
  %v5357 = vadd.f32 %v5309, %v5343
  %v5358 = vperm.slane %v5209, 3
  %v5359 = vperm.slane %v5210, 3
  %v5360 = vperm.slane %v5211, 3
  %v5361 = vperm.slane %v5212, 3
  %v5362 = vperm.slane %v5213, 3
  %5363 = vset.pattern.permute.xlu0 11
  %5364 = vperm.xlu0 %5363, %v4961
  %v5365 = vpop.permute.xlu0 %5364
  %v5367 = vsub.f32 %v5358, %v5365
  %v5368 = vsub.f32 %v5359, %v5365
  %v5369 = vsub.f32 %v5360, %v5365
  %v5370 = vsub.f32 %v5361, %v5365
  %v5371 = vsub.f32 %v5362, %v5365
  %v5372 = vand.u32 2147483647, %v5367
  %v5373 = vand.u32 2147483647, %v5368
  %v5374 = vand.u32 2147483647, %v5369
  %v5375 = vand.u32 2147483647, %v5370
  %v5376 = vand.u32 2147483647, %v5371
  %5382 = vrot.lane.b32.xlu0 %v5372, 127
  %v5383 = vpop.permute.xlu0 %5382
  %5384 = vrot.lane.b32.xlu0 %v5373, 127
  %v5385 = vpop.permute.xlu0 %5384
  %5386 = vrot.lane.b32.xlu0 %v5374, 127
  %v5387 = vpop.permute.xlu0 %5386
  %5388 = vrot.lane.b32.xlu0 %v5375, 127
  %v5389 = vpop.permute.xlu0 %5388
  %5390 = vrot.lane.b32.xlu0 %v5376, 127
  %v5391 = vpop.permute.xlu0 %5390
  %v5392 = vsel %vm155, %v5383, %v5385
  %v5393 = vsel %vm155, %v5385, %v5387
  %v5394 = vsel %vm155, %v5387, %v5389
  %v5395 = vsel %vm155, %v5389, %v5391
  %v5401 = vadd.f32 %v5353, %v5392
  %v5402 = vadd.f32 %v5354, %v5393
  %v5403 = vadd.f32 %v5355, %v5394
  %v5404 = vadd.f32 %v5356, %v5395
  %v5405 = vadd.f32 %v5357, %v5391
  %v5406 = vperm.slane %v5209, 4
  %v5407 = vperm.slane %v5210, 4
  %v5408 = vperm.slane %v5211, 4
  %v5409 = vperm.slane %v5212, 4
  %v5410 = vperm.slane %v5213, 4
  %5411 = vset.pattern.permute.xlu0 12
  %5412 = vperm.xlu0 %5411, %v4961
  %v5413 = vpop.permute.xlu0 %5412
  %v5415 = vsub.f32 %v5406, %v5413
  %v5416 = vsub.f32 %v5407, %v5413
  %v5417 = vsub.f32 %v5408, %v5413
  %v5418 = vsub.f32 %v5409, %v5413
  %v5419 = vsub.f32 %v5410, %v5413
  %v5420 = vand.u32 2147483647, %v5415
  %v5421 = vand.u32 2147483647, %v5416
  %v5422 = vand.u32 2147483647, %v5417
  %v5423 = vand.u32 2147483647, %v5418
  %v5424 = vand.u32 2147483647, %v5419
  %5430 = vrot.lane.b32.xlu0 %v5420, 127
  %v5431 = vpop.permute.xlu0 %5430
  %5432 = vrot.lane.b32.xlu0 %v5421, 127
  %v5433 = vpop.permute.xlu0 %5432
  %5434 = vrot.lane.b32.xlu0 %v5422, 127
  %v5435 = vpop.permute.xlu0 %5434
  %5436 = vrot.lane.b32.xlu0 %v5423, 127
  %v5437 = vpop.permute.xlu0 %5436
  %5438 = vrot.lane.b32.xlu0 %v5424, 127
  %v5439 = vpop.permute.xlu0 %5438
  %v5440 = vsel %vm155, %v5431, %v5433
  %v5441 = vsel %vm155, %v5433, %v5435
  %v5442 = vsel %vm155, %v5435, %v5437
  %v5443 = vsel %vm155, %v5437, %v5439
  %v5449 = vadd.f32 %v5401, %v5440
  %v5450 = vadd.f32 %v5402, %v5441
  %v5451 = vadd.f32 %v5403, %v5442
  %v5452 = vadd.f32 %v5404, %v5443
  %v5453 = vadd.f32 %v5405, %v5439
  %v5454 = vperm.slane %v5209, 5
  %v5455 = vperm.slane %v5210, 5
  %v5456 = vperm.slane %v5211, 5
  %v5457 = vperm.slane %v5212, 5
  %v5458 = vperm.slane %v5213, 5
  %5459 = vset.pattern.permute.xlu0 13
  %5460 = vperm.xlu0 %5459, %v4961
  %v5461 = vpop.permute.xlu0 %5460
  %v5463 = vsub.f32 %v5454, %v5461
  %v5464 = vsub.f32 %v5455, %v5461
  %v5465 = vsub.f32 %v5456, %v5461
  %v5466 = vsub.f32 %v5457, %v5461
  %v5467 = vsub.f32 %v5458, %v5461
  %v5468 = vand.u32 2147483647, %v5463
  %v5469 = vand.u32 2147483647, %v5464
  %v5470 = vand.u32 2147483647, %v5465
  %v5471 = vand.u32 2147483647, %v5466
  %v5472 = vand.u32 2147483647, %v5467
  %5478 = vrot.lane.b32.xlu0 %v5468, 127
  %v5479 = vpop.permute.xlu0 %5478
  %5480 = vrot.lane.b32.xlu0 %v5469, 127
  %v5481 = vpop.permute.xlu0 %5480
  %5482 = vrot.lane.b32.xlu0 %v5470, 127
  %v5483 = vpop.permute.xlu0 %5482
  %5484 = vrot.lane.b32.xlu0 %v5471, 127
  %v5485 = vpop.permute.xlu0 %5484
  %5486 = vrot.lane.b32.xlu0 %v5472, 127
  %v5487 = vpop.permute.xlu0 %5486
  %v5488 = vsel %vm155, %v5479, %v5481
  %v5489 = vsel %vm155, %v5481, %v5483
  %v5490 = vsel %vm155, %v5483, %v5485
  %v5491 = vsel %vm155, %v5485, %v5487
  %v5497 = vadd.f32 %v5449, %v5488
  %v5498 = vadd.f32 %v5450, %v5489
  %v5499 = vadd.f32 %v5451, %v5490
  %v5500 = vadd.f32 %v5452, %v5491
  %v5501 = vadd.f32 %v5453, %v5487
  %v5502 = vperm.slane %v5209, 6
  %v5503 = vperm.slane %v5210, 6
  %v5504 = vperm.slane %v5211, 6
  %v5505 = vperm.slane %v5212, 6
  %v5506 = vperm.slane %v5213, 6
  %5507 = vset.pattern.permute.xlu0 14
  %5508 = vperm.xlu0 %5507, %v4961
  %v5509 = vpop.permute.xlu0 %5508
  %v5511 = vsub.f32 %v5502, %v5509
  %v5512 = vsub.f32 %v5503, %v5509
  %v5513 = vsub.f32 %v5504, %v5509
  %v5514 = vsub.f32 %v5505, %v5509
  %v5515 = vsub.f32 %v5506, %v5509
  %v5516 = vand.u32 2147483647, %v5511
  %v5517 = vand.u32 2147483647, %v5512
  %v5518 = vand.u32 2147483647, %v5513
  %v5519 = vand.u32 2147483647, %v5514
  %v5520 = vand.u32 2147483647, %v5515
  %5526 = vrot.lane.b32.xlu0 %v5516, 127
  %v5527 = vpop.permute.xlu0 %5526
  %5528 = vrot.lane.b32.xlu0 %v5517, 127
  %v5529 = vpop.permute.xlu0 %5528
  %5530 = vrot.lane.b32.xlu0 %v5518, 127
  %v5531 = vpop.permute.xlu0 %5530
  %5532 = vrot.lane.b32.xlu0 %v5519, 127
  %v5533 = vpop.permute.xlu0 %5532
  %5534 = vrot.lane.b32.xlu0 %v5520, 127
  %v5535 = vpop.permute.xlu0 %5534
  %v5536 = vsel %vm155, %v5527, %v5529
  %v5537 = vsel %vm155, %v5529, %v5531
  %v5538 = vsel %vm155, %v5531, %v5533
  %v5539 = vsel %vm155, %v5533, %v5535
  %v5545 = vadd.f32 %v5497, %v5536
  %v5546 = vadd.f32 %v5498, %v5537
  %v5547 = vadd.f32 %v5499, %v5538
  %v5548 = vadd.f32 %v5500, %v5539
  %v5549 = vadd.f32 %v5501, %v5535
  %v5550 = vperm.slane %v5209, 7
  %v5551 = vperm.slane %v5210, 7
  %v5552 = vperm.slane %v5211, 7
  %v5553 = vperm.slane %v5212, 7
  %v5554 = vperm.slane %v5213, 7
  %5555 = vset.pattern.permute.xlu0 15
  %5556 = vperm.xlu0 %5555, %v4961
  %v5557 = vpop.permute.xlu0 %5556
  %v5559 = vsub.f32 %v5550, %v5557
  %v5560 = vsub.f32 %v5551, %v5557
  %v5561 = vsub.f32 %v5552, %v5557
  %v5562 = vsub.f32 %v5553, %v5557
  %v5563 = vsub.f32 %v5554, %v5557
  %v5564 = vand.u32 2147483647, %v5559
  %v5565 = vand.u32 2147483647, %v5560
  %v5566 = vand.u32 2147483647, %v5561
  %v5567 = vand.u32 2147483647, %v5562
  %v5568 = vand.u32 2147483647, %v5563
  %5574 = vrot.lane.b32.xlu0 %v5564, 127
  %v5575 = vpop.permute.xlu0 %5574
  %5576 = vrot.lane.b32.xlu0 %v5565, 127
  %v5577 = vpop.permute.xlu0 %5576
  %5578 = vrot.lane.b32.xlu0 %v5566, 127
  %v5579 = vpop.permute.xlu0 %5578
  %5580 = vrot.lane.b32.xlu0 %v5567, 127
  %v5581 = vpop.permute.xlu0 %5580
  %5582 = vrot.lane.b32.xlu0 %v5568, 127
  %v5583 = vpop.permute.xlu0 %5582
  %v5584 = vsel %vm155, %v5575, %v5577
  %v5585 = vsel %vm155, %v5577, %v5579
  %v5586 = vsel %vm155, %v5579, %v5581
  %v5587 = vsel %vm155, %v5581, %v5583
  %v5593 = vadd.f32 %v5545, %v5584
  %v5594 = vadd.f32 %v5546, %v5585
  %v5595 = vadd.f32 %v5547, %v5586
  %v5596 = vadd.f32 %v5548, %v5587
  %v5597 = vadd.f32 %v5549, %v5583
  %v5598 = vld [vmem:[%s111] ss:$8 sm:$0xf]
  %v5600 = vperm.slane %v5598, 0
  %v5601 = vperm.slane %v5598, 1
  %v5602 = vperm.slane %v5598, 2
  %v5603 = vperm.slane %v5598, 3
  %5604 = vrot.lane.b32.xlu0 %v5600, 113
  %v5605 = vpop.permute.xlu0 %5604
  %5606 = vrot.lane.b32.xlu0 %v5601, 113
  %v5607 = vpop.permute.xlu0 %5606
  %5608 = vrot.lane.b32.xlu0 %v5602, 113
  %v5609 = vpop.permute.xlu0 %5608
  %5610 = vrot.lane.b32.xlu0 %v5603, 113
  %v5611 = vpop.permute.xlu0 %5610
  %v5612 = vsel %vm126, %v5605, %v5607
  %v5613 = vsel %vm126, %v5607, %v5609
  %v5614 = vsel %vm126, %v5609, %v5611
  %v5620 = vmul.f32 %v4962, %v5605
  %v5621 = vmul.f32 %v4963, %v5612
  %v5622 = vmul.f32 %v4964, %v5613
  %v5623 = vmul.f32 %v4965, %v5614
  %v5624 = vmul.f32 %v4966, %v5611
  %v5625 = vperm.slane %v5620, 0
  %v5626 = vperm.slane %v5621, 0
  %v5627 = vperm.slane %v5622, 0
  %v5628 = vperm.slane %v5623, 0
  %v5629 = vperm.slane %v5624, 0
  %5630 = vset.pattern.permute.xlu0 16
  %5631 = vperm.xlu0 %5630, %v4961
  %v5632 = vpop.permute.xlu0 %5631
  %v5634 = vsub.f32 %v5625, %v5632
  %v5635 = vsub.f32 %v5626, %v5632
  %v5636 = vsub.f32 %v5627, %v5632
  %v5637 = vsub.f32 %v5628, %v5632
  %v5638 = vsub.f32 %v5629, %v5632
  %v5639 = vand.u32 2147483647, %v5634
  %v5640 = vand.u32 2147483647, %v5635
  %v5641 = vand.u32 2147483647, %v5636
  %v5642 = vand.u32 2147483647, %v5637
  %v5643 = vand.u32 2147483647, %v5638
  %5649 = vrot.lane.b32.xlu0 %v5639, 126
  %v5650 = vpop.permute.xlu0 %5649
  %5651 = vrot.lane.b32.xlu0 %v5640, 126
  %v5652 = vpop.permute.xlu0 %5651
  %5653 = vrot.lane.b32.xlu0 %v5641, 126
  %v5654 = vpop.permute.xlu0 %5653
  %5655 = vrot.lane.b32.xlu0 %v5642, 126
  %v5656 = vpop.permute.xlu0 %5655
  %5657 = vrot.lane.b32.xlu0 %v5643, 126
  %v5658 = vpop.permute.xlu0 %5657
  %v5659 = vsel %vm339, %v5650, %v5652
  %v5660 = vsel %vm339, %v5652, %v5654
  %v5661 = vsel %vm339, %v5654, %v5656
  %v5662 = vsel %vm339, %v5656, %v5658
  %v5668 = vadd.f32 %v5593, %v5659
  %v5669 = vadd.f32 %v5594, %v5660
  %v5670 = vadd.f32 %v5595, %v5661
  %v5671 = vadd.f32 %v5596, %v5662
  %v5672 = vadd.f32 %v5597, %v5658
  %v5673 = vperm.slane %v5620, 1
  %v5674 = vperm.slane %v5621, 1
  %v5675 = vperm.slane %v5622, 1
  %v5676 = vperm.slane %v5623, 1
  %v5677 = vperm.slane %v5624, 1
  %5678 = vset.pattern.permute.xlu0 17
  %5679 = vperm.xlu0 %5678, %v4961
  %v5680 = vpop.permute.xlu0 %5679
  %v5682 = vsub.f32 %v5673, %v5680
  %v5683 = vsub.f32 %v5674, %v5680
  %v5684 = vsub.f32 %v5675, %v5680
  %v5685 = vsub.f32 %v5676, %v5680
  %v5686 = vsub.f32 %v5677, %v5680
  %v5687 = vand.u32 2147483647, %v5682
  %v5688 = vand.u32 2147483647, %v5683
  %v5689 = vand.u32 2147483647, %v5684
  %v5690 = vand.u32 2147483647, %v5685
  %v5691 = vand.u32 2147483647, %v5686
  %5697 = vrot.lane.b32.xlu0 %v5687, 126
  %v5698 = vpop.permute.xlu0 %5697
  %5699 = vrot.lane.b32.xlu0 %v5688, 126
  %v5700 = vpop.permute.xlu0 %5699
  %5701 = vrot.lane.b32.xlu0 %v5689, 126
  %v5702 = vpop.permute.xlu0 %5701
  %5703 = vrot.lane.b32.xlu0 %v5690, 126
  %v5704 = vpop.permute.xlu0 %5703
  %5705 = vrot.lane.b32.xlu0 %v5691, 126
  %v5706 = vpop.permute.xlu0 %5705
  %v5707 = vsel %vm339, %v5698, %v5700
  %v5708 = vsel %vm339, %v5700, %v5702
  %v5709 = vsel %vm339, %v5702, %v5704
  %v5710 = vsel %vm339, %v5704, %v5706
  %v5716 = vadd.f32 %v5668, %v5707
  %v5717 = vadd.f32 %v5669, %v5708
  %v5718 = vadd.f32 %v5670, %v5709
  %v5719 = vadd.f32 %v5671, %v5710
  %v5720 = vadd.f32 %v5672, %v5706
  %v5721 = vperm.slane %v5620, 2
  %v5722 = vperm.slane %v5621, 2
  %v5723 = vperm.slane %v5622, 2
  %v5724 = vperm.slane %v5623, 2
  %v5725 = vperm.slane %v5624, 2
  %5726 = vset.pattern.permute.xlu0 18
  %5727 = vperm.xlu0 %5726, %v4961
  %v5728 = vpop.permute.xlu0 %5727
  %v5730 = vsub.f32 %v5721, %v5728
  %v5731 = vsub.f32 %v5722, %v5728
  %v5732 = vsub.f32 %v5723, %v5728
  %v5733 = vsub.f32 %v5724, %v5728
  %v5734 = vsub.f32 %v5725, %v5728
  %v5735 = vand.u32 2147483647, %v5730
  %v5736 = vand.u32 2147483647, %v5731
  %v5737 = vand.u32 2147483647, %v5732
  %v5738 = vand.u32 2147483647, %v5733
  %v5739 = vand.u32 2147483647, %v5734
  %5745 = vrot.lane.b32.xlu0 %v5735, 126
  %v5746 = vpop.permute.xlu0 %5745
  %5747 = vrot.lane.b32.xlu0 %v5736, 126
  %v5748 = vpop.permute.xlu0 %5747
  %5749 = vrot.lane.b32.xlu0 %v5737, 126
  %v5750 = vpop.permute.xlu0 %5749
  %5751 = vrot.lane.b32.xlu0 %v5738, 126
  %v5752 = vpop.permute.xlu0 %5751
  %5753 = vrot.lane.b32.xlu0 %v5739, 126
  %v5754 = vpop.permute.xlu0 %5753
  %v5755 = vsel %vm339, %v5746, %v5748
  %v5756 = vsel %vm339, %v5748, %v5750
  %v5757 = vsel %vm339, %v5750, %v5752
  %v5758 = vsel %vm339, %v5752, %v5754
  %v5764 = vadd.f32 %v5716, %v5755
  %v5765 = vadd.f32 %v5717, %v5756
  %v5766 = vadd.f32 %v5718, %v5757
  %v5767 = vadd.f32 %v5719, %v5758
  %v5768 = vadd.f32 %v5720, %v5754
  %v5769 = vperm.slane %v5620, 3
  %v5770 = vperm.slane %v5621, 3
  %v5771 = vperm.slane %v5622, 3
  %v5772 = vperm.slane %v5623, 3
  %v5773 = vperm.slane %v5624, 3
  %5774 = vset.pattern.permute.xlu0 19
  %5775 = vperm.xlu0 %5774, %v4961
  %v5776 = vpop.permute.xlu0 %5775
  %v5778 = vsub.f32 %v5769, %v5776
  %v5779 = vsub.f32 %v5770, %v5776
  %v5780 = vsub.f32 %v5771, %v5776
  %v5781 = vsub.f32 %v5772, %v5776
  %v5782 = vsub.f32 %v5773, %v5776
  %v5783 = vand.u32 2147483647, %v5778
  %v5784 = vand.u32 2147483647, %v5779
  %v5785 = vand.u32 2147483647, %v5780
  %v5786 = vand.u32 2147483647, %v5781
  %v5787 = vand.u32 2147483647, %v5782
  %5793 = vrot.lane.b32.xlu0 %v5783, 126
  %v5794 = vpop.permute.xlu0 %5793
  %5795 = vrot.lane.b32.xlu0 %v5784, 126
  %v5796 = vpop.permute.xlu0 %5795
  %5797 = vrot.lane.b32.xlu0 %v5785, 126
  %v5798 = vpop.permute.xlu0 %5797
  %5799 = vrot.lane.b32.xlu0 %v5786, 126
  %v5800 = vpop.permute.xlu0 %5799
  %5801 = vrot.lane.b32.xlu0 %v5787, 126
  %v5802 = vpop.permute.xlu0 %5801
  %v5803 = vsel %vm339, %v5794, %v5796
  %v5804 = vsel %vm339, %v5796, %v5798
  %v5805 = vsel %vm339, %v5798, %v5800
  %v5806 = vsel %vm339, %v5800, %v5802
  %v5812 = vadd.f32 %v5764, %v5803
  %v5813 = vadd.f32 %v5765, %v5804
  %v5814 = vadd.f32 %v5766, %v5805
  %v5815 = vadd.f32 %v5767, %v5806
  %v5816 = vadd.f32 %v5768, %v5802
  %v5817 = vperm.slane %v5620, 4
  %v5818 = vperm.slane %v5621, 4
  %v5819 = vperm.slane %v5622, 4
  %v5820 = vperm.slane %v5623, 4
  %v5821 = vperm.slane %v5624, 4
  %5822 = vset.pattern.permute.xlu0 20
  %5823 = vperm.xlu0 %5822, %v4961
  %v5824 = vpop.permute.xlu0 %5823
  %v5826 = vsub.f32 %v5817, %v5824
  %v5827 = vsub.f32 %v5818, %v5824
  %v5828 = vsub.f32 %v5819, %v5824
  %v5829 = vsub.f32 %v5820, %v5824
  %v5830 = vsub.f32 %v5821, %v5824
  %v5831 = vand.u32 2147483647, %v5826
  %v5832 = vand.u32 2147483647, %v5827
  %v5833 = vand.u32 2147483647, %v5828
  %v5834 = vand.u32 2147483647, %v5829
  %v5835 = vand.u32 2147483647, %v5830
  %5841 = vrot.lane.b32.xlu0 %v5831, 126
  %v5842 = vpop.permute.xlu0 %5841
  %5843 = vrot.lane.b32.xlu0 %v5832, 126
  %v5844 = vpop.permute.xlu0 %5843
  %5845 = vrot.lane.b32.xlu0 %v5833, 126
  %v5846 = vpop.permute.xlu0 %5845
  %5847 = vrot.lane.b32.xlu0 %v5834, 126
  %v5848 = vpop.permute.xlu0 %5847
  %5849 = vrot.lane.b32.xlu0 %v5835, 126
  %v5850 = vpop.permute.xlu0 %5849
  %v5851 = vsel %vm339, %v5842, %v5844
  %v5852 = vsel %vm339, %v5844, %v5846
  %v5853 = vsel %vm339, %v5846, %v5848
  %v5854 = vsel %vm339, %v5848, %v5850
  %v5860 = vadd.f32 %v5812, %v5851
  %v5861 = vadd.f32 %v5813, %v5852
  %v5862 = vadd.f32 %v5814, %v5853
  %v5863 = vadd.f32 %v5815, %v5854
  %v5864 = vadd.f32 %v5816, %v5850
  %v5865 = vperm.slane %v5620, 5
  %v5866 = vperm.slane %v5621, 5
  %v5867 = vperm.slane %v5622, 5
  %v5868 = vperm.slane %v5623, 5
  %v5869 = vperm.slane %v5624, 5
  %5870 = vset.pattern.permute.xlu0 21
  %5871 = vperm.xlu0 %5870, %v4961
  %v5872 = vpop.permute.xlu0 %5871
  %v5874 = vsub.f32 %v5865, %v5872
  %v5875 = vsub.f32 %v5866, %v5872
  %v5876 = vsub.f32 %v5867, %v5872
  %v5877 = vsub.f32 %v5868, %v5872
  %v5878 = vsub.f32 %v5869, %v5872
  %v5879 = vand.u32 2147483647, %v5874
  %v5880 = vand.u32 2147483647, %v5875
  %v5881 = vand.u32 2147483647, %v5876
  %v5882 = vand.u32 2147483647, %v5877
  %v5883 = vand.u32 2147483647, %v5878
  %5889 = vrot.lane.b32.xlu0 %v5879, 126
  %v5890 = vpop.permute.xlu0 %5889
  %5891 = vrot.lane.b32.xlu0 %v5880, 126
  %v5892 = vpop.permute.xlu0 %5891
  %5893 = vrot.lane.b32.xlu0 %v5881, 126
  %v5894 = vpop.permute.xlu0 %5893
  %5895 = vrot.lane.b32.xlu0 %v5882, 126
  %v5896 = vpop.permute.xlu0 %5895
  %5897 = vrot.lane.b32.xlu0 %v5883, 126
  %v5898 = vpop.permute.xlu0 %5897
  %v5899 = vsel %vm339, %v5890, %v5892
  %v5900 = vsel %vm339, %v5892, %v5894
  %v5901 = vsel %vm339, %v5894, %v5896
  %v5902 = vsel %vm339, %v5896, %v5898
  %v5908 = vadd.f32 %v5860, %v5899
  %v5909 = vadd.f32 %v5861, %v5900
  %v5910 = vadd.f32 %v5862, %v5901
  %v5911 = vadd.f32 %v5863, %v5902
  %v5912 = vadd.f32 %v5864, %v5898
  %v5913 = vperm.slane %v5620, 6
  %v5914 = vperm.slane %v5621, 6
  %v5915 = vperm.slane %v5622, 6
  %v5916 = vperm.slane %v5623, 6
  %v5917 = vperm.slane %v5624, 6
  %5918 = vset.pattern.permute.xlu0 22
  %5919 = vperm.xlu0 %5918, %v4961
  %v5920 = vpop.permute.xlu0 %5919
  %v5922 = vsub.f32 %v5913, %v5920
  %v5923 = vsub.f32 %v5914, %v5920
  %v5924 = vsub.f32 %v5915, %v5920
  %v5925 = vsub.f32 %v5916, %v5920
  %v5926 = vsub.f32 %v5917, %v5920
  %v5927 = vand.u32 2147483647, %v5922
  %v5928 = vand.u32 2147483647, %v5923
  %v5929 = vand.u32 2147483647, %v5924
  %v5930 = vand.u32 2147483647, %v5925
  %v5931 = vand.u32 2147483647, %v5926
  %5937 = vrot.lane.b32.xlu0 %v5927, 126
  %v5938 = vpop.permute.xlu0 %5937
  %5939 = vrot.lane.b32.xlu0 %v5928, 126
  %v5940 = vpop.permute.xlu0 %5939
  %5941 = vrot.lane.b32.xlu0 %v5929, 126
  %v5942 = vpop.permute.xlu0 %5941
  %5943 = vrot.lane.b32.xlu0 %v5930, 126
  %v5944 = vpop.permute.xlu0 %5943
  %5945 = vrot.lane.b32.xlu0 %v5931, 126
  %v5946 = vpop.permute.xlu0 %5945
  %v5947 = vsel %vm339, %v5938, %v5940
  %v5948 = vsel %vm339, %v5940, %v5942
  %v5949 = vsel %vm339, %v5942, %v5944
  %v5950 = vsel %vm339, %v5944, %v5946
  %v5956 = vadd.f32 %v5908, %v5947
  %v5957 = vadd.f32 %v5909, %v5948
  %v5958 = vadd.f32 %v5910, %v5949
  %v5959 = vadd.f32 %v5911, %v5950
  %v5960 = vadd.f32 %v5912, %v5946
  %v5961 = vperm.slane %v5620, 7
  %v5962 = vperm.slane %v5621, 7
  %v5963 = vperm.slane %v5622, 7
  %v5964 = vperm.slane %v5623, 7
  %v5965 = vperm.slane %v5624, 7
  %5966 = vset.pattern.permute.xlu0 23
  %5967 = vperm.xlu0 %5966, %v4961
  %v5968 = vpop.permute.xlu0 %5967
  %v5970 = vsub.f32 %v5961, %v5968
  %v5971 = vsub.f32 %v5962, %v5968
  %v5972 = vsub.f32 %v5963, %v5968
  %v5973 = vsub.f32 %v5964, %v5968
  %v5974 = vsub.f32 %v5965, %v5968
  %v5975 = vand.u32 2147483647, %v5970
  %v5976 = vand.u32 2147483647, %v5971
  %v5977 = vand.u32 2147483647, %v5972
  %v5978 = vand.u32 2147483647, %v5973
  %v5979 = vand.u32 2147483647, %v5974
  %5985 = vrot.lane.b32.xlu0 %v5975, 126
  %v5986 = vpop.permute.xlu0 %5985
  %5987 = vrot.lane.b32.xlu0 %v5976, 126
  %v5988 = vpop.permute.xlu0 %5987
  %5989 = vrot.lane.b32.xlu0 %v5977, 126
  %v5990 = vpop.permute.xlu0 %5989
  %5991 = vrot.lane.b32.xlu0 %v5978, 126
  %v5992 = vpop.permute.xlu0 %5991
  %5993 = vrot.lane.b32.xlu0 %v5979, 126
  %v5994 = vpop.permute.xlu0 %5993
  %v5995 = vsel %vm339, %v5986, %v5988
  %v5996 = vsel %vm339, %v5988, %v5990
  %v5997 = vsel %vm339, %v5990, %v5992
  %v5998 = vsel %vm339, %v5992, %v5994
  %v6004 = vadd.f32 %v5956, %v5995
  %v6005 = vadd.f32 %v5957, %v5996
  %v6006 = vadd.f32 %v5958, %v5997
  %v6007 = vadd.f32 %v5959, %v5998
  %v6008 = vadd.f32 %v5960, %v5994
  %v6009 = vld [vmem:[%s140] ss:$8 sm:$0xf]
  %v6011 = vperm.slane %v6009, 0
  %v6012 = vperm.slane %v6009, 1
  %v6013 = vperm.slane %v6009, 2
  %v6014 = vperm.slane %v6009, 3
  %6015 = vrot.lane.b32.xlu0 %v6011, 127
  %v6016 = vpop.permute.xlu0 %6015
  %6017 = vrot.lane.b32.xlu0 %v6012, 127
  %v6018 = vpop.permute.xlu0 %6017
  %6019 = vrot.lane.b32.xlu0 %v6013, 127
  %v6020 = vpop.permute.xlu0 %6019
  %6021 = vrot.lane.b32.xlu0 %v6014, 127
  %v6022 = vpop.permute.xlu0 %6021
  %v6023 = vsel %vm155, %v6016, %v6018
  %v6024 = vsel %vm155, %v6018, %v6020
  %v6025 = vsel %vm155, %v6020, %v6022
  %v6031 = vmul.f32 %v4962, %v6016
  %v6032 = vmul.f32 %v4963, %v6023
  %v6033 = vmul.f32 %v4964, %v6024
  %v6034 = vmul.f32 %v4965, %v6025
  %v6035 = vmul.f32 %v4966, %v6022
  %v6036 = vperm.slane %v6031, 0
  %v6037 = vperm.slane %v6032, 0
  %v6038 = vperm.slane %v6033, 0
  %v6039 = vperm.slane %v6034, 0
  %v6040 = vperm.slane %v6035, 0
  %6041 = vset.pattern.permute.xlu0 24
  %6042 = vperm.xlu0 %6041, %v4961
  %v6043 = vpop.permute.xlu0 %6042
  %v6045 = vsub.f32 %v6036, %v6043
  %v6046 = vsub.f32 %v6037, %v6043
  %v6047 = vsub.f32 %v6038, %v6043
  %v6048 = vsub.f32 %v6039, %v6043
  %v6049 = vsub.f32 %v6040, %v6043
  %v6050 = vand.u32 2147483647, %v6045
  %v6051 = vand.u32 2147483647, %v6046
  %v6052 = vand.u32 2147483647, %v6047
  %v6053 = vand.u32 2147483647, %v6048
  %v6054 = vand.u32 2147483647, %v6049
  %6060 = vrot.lane.b32.xlu0 %v6050, 112
  %v6061 = vpop.permute.xlu0 %6060
  %6062 = vrot.lane.b32.xlu0 %v6051, 112
  %v6063 = vpop.permute.xlu0 %6062
  %6064 = vrot.lane.b32.xlu0 %v6052, 112
  %v6065 = vpop.permute.xlu0 %6064
  %6066 = vrot.lane.b32.xlu0 %v6053, 112
  %v6067 = vpop.permute.xlu0 %6066
  %6068 = vrot.lane.b32.xlu0 %v6054, 112
  %v6069 = vpop.permute.xlu0 %6068
  %v6070 = vsel %vm97, %v6061, %v6063
  %v6071 = vsel %vm97, %v6063, %v6065
  %v6072 = vsel %vm97, %v6065, %v6067
  %v6073 = vsel %vm97, %v6067, %v6069
  %v6079 = vadd.f32 %v6004, %v6070
  %v6080 = vadd.f32 %v6005, %v6071
  %v6081 = vadd.f32 %v6006, %v6072
  %v6082 = vadd.f32 %v6007, %v6073
  %v6083 = vadd.f32 %v6008, %v6069
  %v6084 = vperm.slane %v6031, 1
  %v6085 = vperm.slane %v6032, 1
  %v6086 = vperm.slane %v6033, 1
  %v6087 = vperm.slane %v6034, 1
  %v6088 = vperm.slane %v6035, 1
  %6089 = vset.pattern.permute.xlu0 25
  %6090 = vperm.xlu0 %6089, %v4961
  %v6091 = vpop.permute.xlu0 %6090
  %v6093 = vsub.f32 %v6084, %v6091
  %v6094 = vsub.f32 %v6085, %v6091
  %v6095 = vsub.f32 %v6086, %v6091
  %v6096 = vsub.f32 %v6087, %v6091
  %v6097 = vsub.f32 %v6088, %v6091
  %v6098 = vand.u32 2147483647, %v6093
  %v6099 = vand.u32 2147483647, %v6094
  %v6100 = vand.u32 2147483647, %v6095
  %v6101 = vand.u32 2147483647, %v6096
  %v6102 = vand.u32 2147483647, %v6097
  %6108 = vrot.lane.b32.xlu0 %v6098, 112
  %v6109 = vpop.permute.xlu0 %6108
  %6110 = vrot.lane.b32.xlu0 %v6099, 112
  %v6111 = vpop.permute.xlu0 %6110
  %6112 = vrot.lane.b32.xlu0 %v6100, 112
  %v6113 = vpop.permute.xlu0 %6112
  %6114 = vrot.lane.b32.xlu0 %v6101, 112
  %v6115 = vpop.permute.xlu0 %6114
  %6116 = vrot.lane.b32.xlu0 %v6102, 112
  %v6117 = vpop.permute.xlu0 %6116
  %v6118 = vsel %vm97, %v6109, %v6111
  %v6119 = vsel %vm97, %v6111, %v6113
  %v6120 = vsel %vm97, %v6113, %v6115
  %v6121 = vsel %vm97, %v6115, %v6117
  %v6127 = vadd.f32 %v6079, %v6118
  %v6128 = vadd.f32 %v6080, %v6119
  %v6129 = vadd.f32 %v6081, %v6120
  %v6130 = vadd.f32 %v6082, %v6121
  %v6131 = vadd.f32 %v6083, %v6117
  %v6132 = vperm.slane %v6031, 2
  %v6133 = vperm.slane %v6032, 2
  %v6134 = vperm.slane %v6033, 2
  %v6135 = vperm.slane %v6034, 2
  %v6136 = vperm.slane %v6035, 2
  %6137 = vset.pattern.permute.xlu0 26
  %6138 = vperm.xlu0 %6137, %v4961
  %v6139 = vpop.permute.xlu0 %6138
  %v6141 = vsub.f32 %v6132, %v6139
  %v6142 = vsub.f32 %v6133, %v6139
  %v6143 = vsub.f32 %v6134, %v6139
  %v6144 = vsub.f32 %v6135, %v6139
  %v6145 = vsub.f32 %v6136, %v6139
  %v6146 = vand.u32 2147483647, %v6141
  %v6147 = vand.u32 2147483647, %v6142
  %v6148 = vand.u32 2147483647, %v6143
  %v6149 = vand.u32 2147483647, %v6144
  %v6150 = vand.u32 2147483647, %v6145
  %6156 = vrot.lane.b32.xlu0 %v6146, 112
  %v6157 = vpop.permute.xlu0 %6156
  %6158 = vrot.lane.b32.xlu0 %v6147, 112
  %v6159 = vpop.permute.xlu0 %6158
  %6160 = vrot.lane.b32.xlu0 %v6148, 112
  %v6161 = vpop.permute.xlu0 %6160
  %6162 = vrot.lane.b32.xlu0 %v6149, 112
  %v6163 = vpop.permute.xlu0 %6162
  %6164 = vrot.lane.b32.xlu0 %v6150, 112
  %v6165 = vpop.permute.xlu0 %6164
  %v6166 = vsel %vm97, %v6157, %v6159
  %v6167 = vsel %vm97, %v6159, %v6161
  %v6168 = vsel %vm97, %v6161, %v6163
  %v6169 = vsel %vm97, %v6163, %v6165
  %v6175 = vadd.f32 %v6127, %v6166
  %v6176 = vadd.f32 %v6128, %v6167
  %v6177 = vadd.f32 %v6129, %v6168
  %v6178 = vadd.f32 %v6130, %v6169
  %v6179 = vadd.f32 %v6131, %v6165
  %v6180 = vperm.slane %v6031, 3
  %v6181 = vperm.slane %v6032, 3
  %v6182 = vperm.slane %v6033, 3
  %v6183 = vperm.slane %v6034, 3
  %v6184 = vperm.slane %v6035, 3
  %6185 = vset.pattern.permute.xlu0 27
  %6186 = vperm.xlu0 %6185, %v4961
  %v6187 = vpop.permute.xlu0 %6186
  %v6189 = vsub.f32 %v6180, %v6187
  %v6190 = vsub.f32 %v6181, %v6187
  %v6191 = vsub.f32 %v6182, %v6187
  %v6192 = vsub.f32 %v6183, %v6187
  %v6193 = vsub.f32 %v6184, %v6187
  %v6194 = vand.u32 2147483647, %v6189
  %v6195 = vand.u32 2147483647, %v6190
  %v6196 = vand.u32 2147483647, %v6191
  %v6197 = vand.u32 2147483647, %v6192
  %v6198 = vand.u32 2147483647, %v6193
  %6204 = vrot.lane.b32.xlu0 %v6194, 112
  %v6205 = vpop.permute.xlu0 %6204
  %6206 = vrot.lane.b32.xlu0 %v6195, 112
  %v6207 = vpop.permute.xlu0 %6206
  %6208 = vrot.lane.b32.xlu0 %v6196, 112
  %v6209 = vpop.permute.xlu0 %6208
  %6210 = vrot.lane.b32.xlu0 %v6197, 112
  %v6211 = vpop.permute.xlu0 %6210
  %6212 = vrot.lane.b32.xlu0 %v6198, 112
  %v6213 = vpop.permute.xlu0 %6212
  %v6214 = vsel %vm97, %v6205, %v6207
  %v6215 = vsel %vm97, %v6207, %v6209
  %v6216 = vsel %vm97, %v6209, %v6211
  %v6217 = vsel %vm97, %v6211, %v6213
  %v6223 = vadd.f32 %v6175, %v6214
  %v6224 = vadd.f32 %v6176, %v6215
  %v6225 = vadd.f32 %v6177, %v6216
  %v6226 = vadd.f32 %v6178, %v6217
  %v6227 = vadd.f32 %v6179, %v6213
  %v6228 = vperm.slane %v6031, 4
  %v6229 = vperm.slane %v6032, 4
  %v6230 = vperm.slane %v6033, 4
  %v6231 = vperm.slane %v6034, 4
  %v6232 = vperm.slane %v6035, 4
  %6233 = vset.pattern.permute.xlu0 28
  %6234 = vperm.xlu0 %6233, %v4961
  %v6235 = vpop.permute.xlu0 %6234
  %v6237 = vsub.f32 %v6228, %v6235
  %v6238 = vsub.f32 %v6229, %v6235
  %v6239 = vsub.f32 %v6230, %v6235
  %v6240 = vsub.f32 %v6231, %v6235
  %v6241 = vsub.f32 %v6232, %v6235
  %v6242 = vand.u32 2147483647, %v6237
  %v6243 = vand.u32 2147483647, %v6238
  %v6244 = vand.u32 2147483647, %v6239
  %v6245 = vand.u32 2147483647, %v6240
  %v6246 = vand.u32 2147483647, %v6241
  %6252 = vrot.lane.b32.xlu0 %v6242, 112
  %v6253 = vpop.permute.xlu0 %6252
  %6254 = vrot.lane.b32.xlu0 %v6243, 112
  %v6255 = vpop.permute.xlu0 %6254
  %6256 = vrot.lane.b32.xlu0 %v6244, 112
  %v6257 = vpop.permute.xlu0 %6256
  %6258 = vrot.lane.b32.xlu0 %v6245, 112
  %v6259 = vpop.permute.xlu0 %6258
  %6260 = vrot.lane.b32.xlu0 %v6246, 112
  %v6261 = vpop.permute.xlu0 %6260
  %v6262 = vsel %vm97, %v6253, %v6255
  %v6263 = vsel %vm97, %v6255, %v6257
  %v6264 = vsel %vm97, %v6257, %v6259
  %v6265 = vsel %vm97, %v6259, %v6261
  %v6271 = vadd.f32 %v6223, %v6262
  %v6272 = vadd.f32 %v6224, %v6263
  %v6273 = vadd.f32 %v6225, %v6264
  %v6274 = vadd.f32 %v6226, %v6265
  %v6275 = vadd.f32 %v6227, %v6261
  %v6276 = vperm.slane %v6031, 5
  %v6277 = vperm.slane %v6032, 5
  %v6278 = vperm.slane %v6033, 5
  %v6279 = vperm.slane %v6034, 5
  %v6280 = vperm.slane %v6035, 5
  %6281 = vset.pattern.permute.xlu0 29
  %6282 = vperm.xlu0 %6281, %v4961
  %v6283 = vpop.permute.xlu0 %6282
  %v6285 = vsub.f32 %v6276, %v6283
  %v6286 = vsub.f32 %v6277, %v6283
  %v6287 = vsub.f32 %v6278, %v6283
  %v6288 = vsub.f32 %v6279, %v6283
  %v6289 = vsub.f32 %v6280, %v6283
  %v6290 = vand.u32 2147483647, %v6285
  %v6291 = vand.u32 2147483647, %v6286
  %v6292 = vand.u32 2147483647, %v6287
  %v6293 = vand.u32 2147483647, %v6288
  %v6294 = vand.u32 2147483647, %v6289
  %6300 = vrot.lane.b32.xlu0 %v6290, 112
  %v6301 = vpop.permute.xlu0 %6300
  %6302 = vrot.lane.b32.xlu0 %v6291, 112
  %v6303 = vpop.permute.xlu0 %6302
  %6304 = vrot.lane.b32.xlu0 %v6292, 112
  %v6305 = vpop.permute.xlu0 %6304
  %6306 = vrot.lane.b32.xlu0 %v6293, 112
  %v6307 = vpop.permute.xlu0 %6306
  %6308 = vrot.lane.b32.xlu0 %v6294, 112
  %v6309 = vpop.permute.xlu0 %6308
  %v6310 = vsel %vm97, %v6301, %v6303
  %v6311 = vsel %vm97, %v6303, %v6305
  %v6312 = vsel %vm97, %v6305, %v6307
  %v6313 = vsel %vm97, %v6307, %v6309
  %v6319 = vadd.f32 %v6271, %v6310
  %v6320 = vadd.f32 %v6272, %v6311
  %v6321 = vadd.f32 %v6273, %v6312
  %v6322 = vadd.f32 %v6274, %v6313
  %v6323 = vadd.f32 %v6275, %v6309
  %v6324 = vperm.slane %v6031, 6
  %v6325 = vperm.slane %v6032, 6
  %v6326 = vperm.slane %v6033, 6
  %v6327 = vperm.slane %v6034, 6
  %v6328 = vperm.slane %v6035, 6
  %6329 = vset.pattern.permute.xlu0 30
  %6330 = vperm.xlu0 %6329, %v4961
  %v6331 = vpop.permute.xlu0 %6330
  %v6333 = vsub.f32 %v6324, %v6331
  %v6334 = vsub.f32 %v6325, %v6331
  %v6335 = vsub.f32 %v6326, %v6331
  %v6336 = vsub.f32 %v6327, %v6331
  %v6337 = vsub.f32 %v6328, %v6331
  %v6338 = vand.u32 2147483647, %v6333
  %v6339 = vand.u32 2147483647, %v6334
  %v6340 = vand.u32 2147483647, %v6335
  %v6341 = vand.u32 2147483647, %v6336
  %v6342 = vand.u32 2147483647, %v6337
  %6348 = vrot.lane.b32.xlu0 %v6338, 112
  %v6349 = vpop.permute.xlu0 %6348
  %6350 = vrot.lane.b32.xlu0 %v6339, 112
  %v6351 = vpop.permute.xlu0 %6350
  %6352 = vrot.lane.b32.xlu0 %v6340, 112
  %v6353 = vpop.permute.xlu0 %6352
  %6354 = vrot.lane.b32.xlu0 %v6341, 112
  %v6355 = vpop.permute.xlu0 %6354
  %6356 = vrot.lane.b32.xlu0 %v6342, 112
  %v6357 = vpop.permute.xlu0 %6356
  %v6358 = vsel %vm97, %v6349, %v6351
  %v6359 = vsel %vm97, %v6351, %v6353
  %v6360 = vsel %vm97, %v6353, %v6355
  %v6361 = vsel %vm97, %v6355, %v6357
  %v6367 = vadd.f32 %v6319, %v6358
  %v6368 = vadd.f32 %v6320, %v6359
  %v6369 = vadd.f32 %v6321, %v6360
  %v6370 = vadd.f32 %v6322, %v6361
  %v6371 = vadd.f32 %v6323, %v6357
  %v6372 = vperm.slane %v6031, 7
  %v6373 = vperm.slane %v6032, 7
  %v6374 = vperm.slane %v6033, 7
  %v6375 = vperm.slane %v6034, 7
  %v6376 = vperm.slane %v6035, 7
  %6377 = vset.pattern.permute.xlu0 31
  %6378 = vperm.xlu0 %6377, %v4961
  %v6379 = vpop.permute.xlu0 %6378
  %v6381 = vsub.f32 %v6372, %v6379
  %v6382 = vsub.f32 %v6373, %v6379
  %v6383 = vsub.f32 %v6374, %v6379
  %v6384 = vsub.f32 %v6375, %v6379
  %v6385 = vsub.f32 %v6376, %v6379
  %v6386 = vand.u32 2147483647, %v6381
  %v6387 = vand.u32 2147483647, %v6382
  %v6388 = vand.u32 2147483647, %v6383
  %v6389 = vand.u32 2147483647, %v6384
  %v6390 = vand.u32 2147483647, %v6385
  %6396 = vrot.lane.b32.xlu0 %v6386, 112
  %v6397 = vpop.permute.xlu0 %6396
  %6398 = vrot.lane.b32.xlu0 %v6387, 112
  %v6399 = vpop.permute.xlu0 %6398
  %6400 = vrot.lane.b32.xlu0 %v6388, 112
  %v6401 = vpop.permute.xlu0 %6400
  %6402 = vrot.lane.b32.xlu0 %v6389, 112
  %v6403 = vpop.permute.xlu0 %6402
  %6404 = vrot.lane.b32.xlu0 %v6390, 112
  %v6405 = vpop.permute.xlu0 %6404
  %v6406 = vsel %vm97, %v6397, %v6399
  %v6407 = vsel %vm97, %v6399, %v6401
  %v6408 = vsel %vm97, %v6401, %v6403
  %v6409 = vsel %vm97, %v6403, %v6405
  %v6415 = vadd.f32 %v6367, %v6406
  %v6416 = vadd.f32 %v6368, %v6407
  %v6417 = vadd.f32 %v6369, %v6408
  %v6418 = vadd.f32 %v6370, %v6409
  %v6419 = vadd.f32 %v6371, %v6405
  %v6420 = vld [vmem:[%s169] ss:$8 sm:$0xf]
  %v6422 = vperm.slane %v6420, 0
  %v6423 = vperm.slane %v6420, 1
  %v6424 = vperm.slane %v6420, 2
  %v6425 = vperm.slane %v6420, 3
  %v6430 = vmul.f32 %v4963, %v6422
  %v6431 = vmul.f32 %v4964, %v6423
  %v6432 = vmul.f32 %v4965, %v6424
  %v6433 = vmul.f32 %v4966, %v6425
  %v6434 = vperm.slane %v6430, 0
  %v6435 = vperm.slane %v6431, 0
  %v6436 = vperm.slane %v6432, 0
  %v6437 = vperm.slane %v6433, 0
  %6438 = vset.pattern.permute.xlu0 32
  %6439 = vperm.xlu0 %6438, %v4961
  %v6440 = vpop.permute.xlu0 %6439
  %v6442 = vsub.f32 %v6434, %v6440
  %v6443 = vsub.f32 %v6435, %v6440
  %v6444 = vsub.f32 %v6436, %v6440
  %v6445 = vsub.f32 %v6437, %v6440
  %v6446 = vand.u32 2147483647, %v6442
  %v6447 = vand.u32 2147483647, %v6443
  %v6448 = vand.u32 2147483647, %v6444
  %v6449 = vand.u32 2147483647, %v6445
  %6454 = vrot.lane.b32.xlu0 %v6446, 111
  %v6455 = vpop.permute.xlu0 %6454
  %6456 = vrot.lane.b32.xlu0 %v6447, 111
  %v6457 = vpop.permute.xlu0 %6456
  %6458 = vrot.lane.b32.xlu0 %v6448, 111
  %v6459 = vpop.permute.xlu0 %6458
  %6460 = vrot.lane.b32.xlu0 %v6449, 111
  %v6461 = vpop.permute.xlu0 %6460
  %v6462 = vsel %vm68, %v6455, %v6457
  %v6463 = vsel %vm68, %v6457, %v6459
  %v6464 = vsel %vm68, %v6459, %v6461
  %v6470 = vadd.f32 %v6415, %v6455
  %v6471 = vadd.f32 %v6416, %v6462
  %v6472 = vadd.f32 %v6417, %v6463
  %v6473 = vadd.f32 %v6418, %v6464
  %v6474 = vadd.f32 %v6419, %v6461
  %v6475 = vperm.slane %v6430, 1
  %v6476 = vperm.slane %v6431, 1
  %v6477 = vperm.slane %v6432, 1
  %v6478 = vperm.slane %v6433, 1
  %6479 = vset.pattern.permute.xlu0 33
  %6480 = vperm.xlu0 %6479, %v4961
  %v6481 = vpop.permute.xlu0 %6480
  %v6483 = vsub.f32 %v6475, %v6481
  %v6484 = vsub.f32 %v6476, %v6481
  %v6485 = vsub.f32 %v6477, %v6481
  %v6486 = vsub.f32 %v6478, %v6481
  %v6487 = vand.u32 2147483647, %v6483
  %v6488 = vand.u32 2147483647, %v6484
  %v6489 = vand.u32 2147483647, %v6485
  %v6490 = vand.u32 2147483647, %v6486
  %6495 = vrot.lane.b32.xlu0 %v6487, 111
  %v6496 = vpop.permute.xlu0 %6495
  %6497 = vrot.lane.b32.xlu0 %v6488, 111
  %v6498 = vpop.permute.xlu0 %6497
  %6499 = vrot.lane.b32.xlu0 %v6489, 111
  %v6500 = vpop.permute.xlu0 %6499
  %6501 = vrot.lane.b32.xlu0 %v6490, 111
  %v6502 = vpop.permute.xlu0 %6501
  %v6503 = vsel %vm68, %v6496, %v6498
  %v6504 = vsel %vm68, %v6498, %v6500
  %v6505 = vsel %vm68, %v6500, %v6502
  %v6511 = vadd.f32 %v6470, %v6496
  %v6512 = vadd.f32 %v6471, %v6503
  %v6513 = vadd.f32 %v6472, %v6504
  %v6514 = vadd.f32 %v6473, %v6505
  %v6515 = vadd.f32 %v6474, %v6502
  %v6516 = vperm.slane %v6430, 2
  %v6517 = vperm.slane %v6431, 2
  %v6518 = vperm.slane %v6432, 2
  %v6519 = vperm.slane %v6433, 2
  %6520 = vset.pattern.permute.xlu0 34
  %6521 = vperm.xlu0 %6520, %v4961
  %v6522 = vpop.permute.xlu0 %6521
  %v6524 = vsub.f32 %v6516, %v6522
  %v6525 = vsub.f32 %v6517, %v6522
  %v6526 = vsub.f32 %v6518, %v6522
  %v6527 = vsub.f32 %v6519, %v6522
  %v6528 = vand.u32 2147483647, %v6524
  %v6529 = vand.u32 2147483647, %v6525
  %v6530 = vand.u32 2147483647, %v6526
  %v6531 = vand.u32 2147483647, %v6527
  %6536 = vrot.lane.b32.xlu0 %v6528, 111
  %v6537 = vpop.permute.xlu0 %6536
  %6538 = vrot.lane.b32.xlu0 %v6529, 111
  %v6539 = vpop.permute.xlu0 %6538
  %6540 = vrot.lane.b32.xlu0 %v6530, 111
  %v6541 = vpop.permute.xlu0 %6540
  %6542 = vrot.lane.b32.xlu0 %v6531, 111
  %v6543 = vpop.permute.xlu0 %6542
  %v6544 = vsel %vm68, %v6537, %v6539
  %v6545 = vsel %vm68, %v6539, %v6541
  %v6546 = vsel %vm68, %v6541, %v6543
  %v6552 = vadd.f32 %v6511, %v6537
  %v6553 = vadd.f32 %v6512, %v6544
  %v6554 = vadd.f32 %v6513, %v6545
  %v6555 = vadd.f32 %v6514, %v6546
  %v6556 = vadd.f32 %v6515, %v6543
  %v6557 = vperm.slane %v6430, 3
  %v6558 = vperm.slane %v6431, 3
  %v6559 = vperm.slane %v6432, 3
  %v6560 = vperm.slane %v6433, 3
  %6561 = vset.pattern.permute.xlu0 35
  %6562 = vperm.xlu0 %6561, %v4961
  %v6563 = vpop.permute.xlu0 %6562
  %v6565 = vsub.f32 %v6557, %v6563
  %v6566 = vsub.f32 %v6558, %v6563
  %v6567 = vsub.f32 %v6559, %v6563
  %v6568 = vsub.f32 %v6560, %v6563
  %v6569 = vand.u32 2147483647, %v6565
  %v6570 = vand.u32 2147483647, %v6566
  %v6571 = vand.u32 2147483647, %v6567
  %v6572 = vand.u32 2147483647, %v6568
  %6577 = vrot.lane.b32.xlu0 %v6569, 111
  %v6578 = vpop.permute.xlu0 %6577
  %6579 = vrot.lane.b32.xlu0 %v6570, 111
  %v6580 = vpop.permute.xlu0 %6579
  %6581 = vrot.lane.b32.xlu0 %v6571, 111
  %v6582 = vpop.permute.xlu0 %6581
  %6583 = vrot.lane.b32.xlu0 %v6572, 111
  %v6584 = vpop.permute.xlu0 %6583
  %v6585 = vsel %vm68, %v6578, %v6580
  %v6586 = vsel %vm68, %v6580, %v6582
  %v6587 = vsel %vm68, %v6582, %v6584
  %v6593 = vadd.f32 %v6552, %v6578
  %v6594 = vadd.f32 %v6553, %v6585
  %v6595 = vadd.f32 %v6554, %v6586
  %v6596 = vadd.f32 %v6555, %v6587
  %v6597 = vadd.f32 %v6556, %v6584
  %v6598 = vperm.slane %v6430, 4
  %v6599 = vperm.slane %v6431, 4
  %v6600 = vperm.slane %v6432, 4
  %v6601 = vperm.slane %v6433, 4
  %6602 = vset.pattern.permute.xlu0 36
  %6603 = vperm.xlu0 %6602, %v4961
  %v6604 = vpop.permute.xlu0 %6603
  %v6606 = vsub.f32 %v6598, %v6604
  %v6607 = vsub.f32 %v6599, %v6604
  %v6608 = vsub.f32 %v6600, %v6604
  %v6609 = vsub.f32 %v6601, %v6604
  %v6610 = vand.u32 2147483647, %v6606
  %v6611 = vand.u32 2147483647, %v6607
  %v6612 = vand.u32 2147483647, %v6608
  %v6613 = vand.u32 2147483647, %v6609
  %6618 = vrot.lane.b32.xlu0 %v6610, 111
  %v6619 = vpop.permute.xlu0 %6618
  %6620 = vrot.lane.b32.xlu0 %v6611, 111
  %v6621 = vpop.permute.xlu0 %6620
  %6622 = vrot.lane.b32.xlu0 %v6612, 111
  %v6623 = vpop.permute.xlu0 %6622
  %6624 = vrot.lane.b32.xlu0 %v6613, 111
  %v6625 = vpop.permute.xlu0 %6624
  %v6626 = vsel %vm68, %v6619, %v6621
  %v6627 = vsel %vm68, %v6621, %v6623
  %v6628 = vsel %vm68, %v6623, %v6625
  %v6634 = vadd.f32 %v6593, %v6619
  %v6635 = vadd.f32 %v6594, %v6626
  %v6636 = vadd.f32 %v6595, %v6627
  %v6637 = vadd.f32 %v6596, %v6628
  %v6638 = vadd.f32 %v6597, %v6625
  %v6639 = vperm.slane %v6430, 5
  %v6640 = vperm.slane %v6431, 5
  %v6641 = vperm.slane %v6432, 5
  %v6642 = vperm.slane %v6433, 5
  %6643 = vset.pattern.permute.xlu0 37
  %6644 = vperm.xlu0 %6643, %v4961
  %v6645 = vpop.permute.xlu0 %6644
  %v6647 = vsub.f32 %v6639, %v6645
  %v6648 = vsub.f32 %v6640, %v6645
  %v6649 = vsub.f32 %v6641, %v6645
  %v6650 = vsub.f32 %v6642, %v6645
  %v6651 = vand.u32 2147483647, %v6647
  %v6652 = vand.u32 2147483647, %v6648
  %v6653 = vand.u32 2147483647, %v6649
  %v6654 = vand.u32 2147483647, %v6650
  %6659 = vrot.lane.b32.xlu0 %v6651, 111
  %v6660 = vpop.permute.xlu0 %6659
  %6661 = vrot.lane.b32.xlu0 %v6652, 111
  %v6662 = vpop.permute.xlu0 %6661
  %6663 = vrot.lane.b32.xlu0 %v6653, 111
  %v6664 = vpop.permute.xlu0 %6663
  %6665 = vrot.lane.b32.xlu0 %v6654, 111
  %v6666 = vpop.permute.xlu0 %6665
  %v6667 = vsel %vm68, %v6660, %v6662
  %v6668 = vsel %vm68, %v6662, %v6664
  %v6669 = vsel %vm68, %v6664, %v6666
  %v6675 = vadd.f32 %v6634, %v6660
  %v6676 = vadd.f32 %v6635, %v6667
  %v6677 = vadd.f32 %v6636, %v6668
  %v6678 = vadd.f32 %v6637, %v6669
  %v6679 = vadd.f32 %v6638, %v6666
  %v6680 = vperm.slane %v6430, 6
  %v6681 = vperm.slane %v6431, 6
  %v6682 = vperm.slane %v6432, 6
  %v6683 = vperm.slane %v6433, 6
  %6684 = vset.pattern.permute.xlu0 38
  %6685 = vperm.xlu0 %6684, %v4961
  %v6686 = vpop.permute.xlu0 %6685
  %v6688 = vsub.f32 %v6680, %v6686
  %v6689 = vsub.f32 %v6681, %v6686
  %v6690 = vsub.f32 %v6682, %v6686
  %v6691 = vsub.f32 %v6683, %v6686
  %v6692 = vand.u32 2147483647, %v6688
  %v6693 = vand.u32 2147483647, %v6689
  %v6694 = vand.u32 2147483647, %v6690
  %v6695 = vand.u32 2147483647, %v6691
  %6700 = vrot.lane.b32.xlu0 %v6692, 111
  %v6701 = vpop.permute.xlu0 %6700
  %6702 = vrot.lane.b32.xlu0 %v6693, 111
  %v6703 = vpop.permute.xlu0 %6702
  %6704 = vrot.lane.b32.xlu0 %v6694, 111
  %v6705 = vpop.permute.xlu0 %6704
  %6706 = vrot.lane.b32.xlu0 %v6695, 111
  %v6707 = vpop.permute.xlu0 %6706
  %v6708 = vsel %vm68, %v6701, %v6703
  %v6709 = vsel %vm68, %v6703, %v6705
  %v6710 = vsel %vm68, %v6705, %v6707
  %v6716 = vadd.f32 %v6675, %v6701
  %v6717 = vadd.f32 %v6676, %v6708
  %v6718 = vadd.f32 %v6677, %v6709
  %v6719 = vadd.f32 %v6678, %v6710
  %v6720 = vadd.f32 %v6679, %v6707
  %v6721 = vperm.slane %v6430, 7
  %v6722 = vperm.slane %v6431, 7
  %v6723 = vperm.slane %v6432, 7
  %v6724 = vperm.slane %v6433, 7
  %6725 = vset.pattern.permute.xlu0 39
  %6726 = vperm.xlu0 %6725, %v4961
  %v6727 = vpop.permute.xlu0 %6726
  %v6729 = vsub.f32 %v6721, %v6727
  %v6730 = vsub.f32 %v6722, %v6727
  %v6731 = vsub.f32 %v6723, %v6727
  %v6732 = vsub.f32 %v6724, %v6727
  %v6733 = vand.u32 2147483647, %v6729
  %v6734 = vand.u32 2147483647, %v6730
  %v6735 = vand.u32 2147483647, %v6731
  %v6736 = vand.u32 2147483647, %v6732
  %6741 = vrot.lane.b32.xlu0 %v6733, 111
  %v6742 = vpop.permute.xlu0 %6741
  %6743 = vrot.lane.b32.xlu0 %v6734, 111
  %v6744 = vpop.permute.xlu0 %6743
  %6745 = vrot.lane.b32.xlu0 %v6735, 111
  %v6746 = vpop.permute.xlu0 %6745
  %6747 = vrot.lane.b32.xlu0 %v6736, 111
  %v6748 = vpop.permute.xlu0 %6747
  %v6749 = vsel %vm68, %v6742, %v6744
  %v6750 = vsel %vm68, %v6744, %v6746
  %v6751 = vsel %vm68, %v6746, %v6748
  %v6757 = vadd.f32 %v6716, %v6742
  %v6758 = vadd.f32 %v6717, %v6749
  %v6759 = vadd.f32 %v6718, %v6750
  %v6760 = vadd.f32 %v6719, %v6751
  %v6761 = vadd.f32 %v6720, %v6748
  %v6762 = vld [vmem:[#allocation2 + $0x8] sm:$0xff]
  %v6763 = vld [vmem:[#allocation2 + $0x10] sm:$0xff]
  %v6764 = vld [vmem:[#allocation2 + $0x18] sm:$0xff]
  %v6765 = vld [vmem:[#allocation2 + $0x20] sm:$0xff]
  %v6766 = vld [vmem:[#allocation2 + $0x28] sm:$0xff]
  %v6767 = vld [vmem:[%s189] ss:$8 sm:$0xf]
  %v6769 = vperm.slane %v6767, 0
  %v6770 = vperm.slane %v6767, 1
  %v6771 = vperm.slane %v6767, 2
  %v6772 = vperm.slane %v6767, 3
  %6773 = vrot.lane.b32.xlu0 %v6769, 1
  %v6774 = vpop.permute.xlu0 %6773
  %6775 = vrot.lane.b32.xlu0 %v6770, 1
  %v6776 = vpop.permute.xlu0 %6775
  %6777 = vrot.lane.b32.xlu0 %v6771, 1
  %v6778 = vpop.permute.xlu0 %6777
  %6779 = vrot.lane.b32.xlu0 %v6772, 1
  %v6780 = vpop.permute.xlu0 %6779
  %v6781 = vsel %vm204, %v6774, %v6776
  %v6782 = vsel %vm204, %v6776, %v6778
  %v6783 = vsel %vm204, %v6778, %v6780
  %v6789 = vmul.f32 %v6762, %v6774
  %v6790 = vmul.f32 %v6763, %v6781
  %v6791 = vmul.f32 %v6764, %v6782
  %v6792 = vmul.f32 %v6765, %v6783
  %v6793 = vmul.f32 %v6766, %v6780
  %v6794 = vperm.slane %v6789, 0
  %v6795 = vperm.slane %v6790, 0
  %v6796 = vperm.slane %v6791, 0
  %v6797 = vperm.slane %v6792, 0
  %v6798 = vperm.slane %v6793, 0
  %6799 = vset.pattern.permute.xlu0 40
  %6800 = vperm.xlu0 %6799, %v4961
  %v6801 = vpop.permute.xlu0 %6800
  %v6803 = vsub.f32 %v6794, %v6801
  %v6804 = vsub.f32 %v6795, %v6801
  %v6805 = vsub.f32 %v6796, %v6801
  %v6806 = vsub.f32 %v6797, %v6801
  %v6807 = vsub.f32 %v6798, %v6801
  %v6808 = vand.u32 2147483647, %v6803
  %v6809 = vand.u32 2147483647, %v6804
  %v6810 = vand.u32 2147483647, %v6805
  %v6811 = vand.u32 2147483647, %v6806
  %v6812 = vand.u32 2147483647, %v6807
  %6818 = vrot.lane.b32.xlu0 %v6808, 110
  %v6819 = vpop.permute.xlu0 %6818
  %6820 = vrot.lane.b32.xlu0 %v6809, 110
  %v6821 = vpop.permute.xlu0 %6820
  %6822 = vrot.lane.b32.xlu0 %v6810, 110
  %v6823 = vpop.permute.xlu0 %6822
  %6824 = vrot.lane.b32.xlu0 %v6811, 110
  %v6825 = vpop.permute.xlu0 %6824
  %6826 = vrot.lane.b32.xlu0 %v6812, 110
  %v6827 = vpop.permute.xlu0 %6826
  %v6828 = vsel %vm393, %v6819, %v6821
  %v6829 = vsel %vm393, %v6821, %v6823
  %v6830 = vsel %vm393, %v6823, %v6825
  %v6831 = vsel %vm393, %v6825, %v6827
  %v6837 = vadd.f32 %v6757, %v6819
  %v6838 = vadd.f32 %v6758, %v6828
  %v6839 = vadd.f32 %v6759, %v6829
  %v6840 = vadd.f32 %v6760, %v6830
  %v6841 = vadd.f32 %v6761, %v6831
  %v6842 = vperm.slane %v6789, 1
  %v6843 = vperm.slane %v6790, 1
  %v6844 = vperm.slane %v6791, 1
  %v6845 = vperm.slane %v6792, 1
  %v6846 = vperm.slane %v6793, 1
  %6847 = vset.pattern.permute.xlu0 41
  %6848 = vperm.xlu0 %6847, %v4961
  %v6849 = vpop.permute.xlu0 %6848
  %v6851 = vsub.f32 %v6842, %v6849
  %v6852 = vsub.f32 %v6843, %v6849
  %v6853 = vsub.f32 %v6844, %v6849
  %v6854 = vsub.f32 %v6845, %v6849
  %v6855 = vsub.f32 %v6846, %v6849
  %v6856 = vand.u32 2147483647, %v6851
  %v6857 = vand.u32 2147483647, %v6852
  %v6858 = vand.u32 2147483647, %v6853
  %v6859 = vand.u32 2147483647, %v6854
  %v6860 = vand.u32 2147483647, %v6855
  %6866 = vrot.lane.b32.xlu0 %v6856, 110
  %v6867 = vpop.permute.xlu0 %6866
  %6868 = vrot.lane.b32.xlu0 %v6857, 110
  %v6869 = vpop.permute.xlu0 %6868
  %6870 = vrot.lane.b32.xlu0 %v6858, 110
  %v6871 = vpop.permute.xlu0 %6870
  %6872 = vrot.lane.b32.xlu0 %v6859, 110
  %v6873 = vpop.permute.xlu0 %6872
  %6874 = vrot.lane.b32.xlu0 %v6860, 110
  %v6875 = vpop.permute.xlu0 %6874
  %v6876 = vsel %vm393, %v6867, %v6869
  %v6877 = vsel %vm393, %v6869, %v6871
  %v6878 = vsel %vm393, %v6871, %v6873
  %v6879 = vsel %vm393, %v6873, %v6875
  %v6885 = vadd.f32 %v6837, %v6867
  %v6886 = vadd.f32 %v6838, %v6876
  %v6887 = vadd.f32 %v6839, %v6877
  %v6888 = vadd.f32 %v6840, %v6878
  %v6889 = vadd.f32 %v6841, %v6879
  %v6890 = vperm.slane %v6789, 2
  %v6891 = vperm.slane %v6790, 2
  %v6892 = vperm.slane %v6791, 2
  %v6893 = vperm.slane %v6792, 2
  %v6894 = vperm.slane %v6793, 2
  %6895 = vset.pattern.permute.xlu0 42
  %6896 = vperm.xlu0 %6895, %v4961
  %v6897 = vpop.permute.xlu0 %6896
  %v6899 = vsub.f32 %v6890, %v6897
  %v6900 = vsub.f32 %v6891, %v6897
  %v6901 = vsub.f32 %v6892, %v6897
  %v6902 = vsub.f32 %v6893, %v6897
  %v6903 = vsub.f32 %v6894, %v6897
  %v6904 = vand.u32 2147483647, %v6899
  %v6905 = vand.u32 2147483647, %v6900
  %v6906 = vand.u32 2147483647, %v6901
  %v6907 = vand.u32 2147483647, %v6902
  %v6908 = vand.u32 2147483647, %v6903
  %6914 = vrot.lane.b32.xlu0 %v6904, 110
  %v6915 = vpop.permute.xlu0 %6914
  %6916 = vrot.lane.b32.xlu0 %v6905, 110
  %v6917 = vpop.permute.xlu0 %6916
  %6918 = vrot.lane.b32.xlu0 %v6906, 110
  %v6919 = vpop.permute.xlu0 %6918
  %6920 = vrot.lane.b32.xlu0 %v6907, 110
  %v6921 = vpop.permute.xlu0 %6920
  %6922 = vrot.lane.b32.xlu0 %v6908, 110
  %v6923 = vpop.permute.xlu0 %6922
  %v6924 = vsel %vm393, %v6915, %v6917
  %v6925 = vsel %vm393, %v6917, %v6919
  %v6926 = vsel %vm393, %v6919, %v6921
  %v6927 = vsel %vm393, %v6921, %v6923
  %v6933 = vadd.f32 %v6885, %v6915
  %v6934 = vadd.f32 %v6886, %v6924
  %v6935 = vadd.f32 %v6887, %v6925
  %v6936 = vadd.f32 %v6888, %v6926
  %v6937 = vadd.f32 %v6889, %v6927
  %v6938 = vperm.slane %v6789, 3
  %v6939 = vperm.slane %v6790, 3
  %v6940 = vperm.slane %v6791, 3
  %v6941 = vperm.slane %v6792, 3
  %v6942 = vperm.slane %v6793, 3
  %6943 = vset.pattern.permute.xlu0 43
  %6944 = vperm.xlu0 %6943, %v4961
  %v6945 = vpop.permute.xlu0 %6944
  %v6947 = vsub.f32 %v6938, %v6945
  %v6948 = vsub.f32 %v6939, %v6945
  %v6949 = vsub.f32 %v6940, %v6945
  %v6950 = vsub.f32 %v6941, %v6945
  %v6951 = vsub.f32 %v6942, %v6945
  %v6952 = vand.u32 2147483647, %v6947
  %v6953 = vand.u32 2147483647, %v6948
  %v6954 = vand.u32 2147483647, %v6949
  %v6955 = vand.u32 2147483647, %v6950
  %v6956 = vand.u32 2147483647, %v6951
  %6962 = vrot.lane.b32.xlu0 %v6952, 110
  %v6963 = vpop.permute.xlu0 %6962
  %6964 = vrot.lane.b32.xlu0 %v6953, 110
  %v6965 = vpop.permute.xlu0 %6964
  %6966 = vrot.lane.b32.xlu0 %v6954, 110
  %v6967 = vpop.permute.xlu0 %6966
  %6968 = vrot.lane.b32.xlu0 %v6955, 110
  %v6969 = vpop.permute.xlu0 %6968
  %6970 = vrot.lane.b32.xlu0 %v6956, 110
  %v6971 = vpop.permute.xlu0 %6970
  %v6972 = vsel %vm393, %v6963, %v6965
  %v6973 = vsel %vm393, %v6965, %v6967
  %v6974 = vsel %vm393, %v6967, %v6969
  %v6975 = vsel %vm393, %v6969, %v6971
  %v6981 = vadd.f32 %v6933, %v6963
  %v6982 = vadd.f32 %v6934, %v6972
  %v6983 = vadd.f32 %v6935, %v6973
  %v6984 = vadd.f32 %v6936, %v6974
  %v6985 = vadd.f32 %v6937, %v6975
  %v6986 = vperm.slane %v6789, 4
  %v6987 = vperm.slane %v6790, 4
  %v6988 = vperm.slane %v6791, 4
  %v6989 = vperm.slane %v6792, 4
  %v6990 = vperm.slane %v6793, 4
  %6991 = vset.pattern.permute.xlu0 44
  %6992 = vperm.xlu0 %6991, %v4961
  %v6993 = vpop.permute.xlu0 %6992
  %v6995 = vsub.f32 %v6986, %v6993
  %v6996 = vsub.f32 %v6987, %v6993
  %v6997 = vsub.f32 %v6988, %v6993
  %v6998 = vsub.f32 %v6989, %v6993
  %v6999 = vsub.f32 %v6990, %v6993
  %v7000 = vand.u32 2147483647, %v6995
  %v7001 = vand.u32 2147483647, %v6996
  %v7002 = vand.u32 2147483647, %v6997
  %v7003 = vand.u32 2147483647, %v6998
  %v7004 = vand.u32 2147483647, %v6999
  %7010 = vrot.lane.b32.xlu0 %v7000, 110
  %v7011 = vpop.permute.xlu0 %7010
  %7012 = vrot.lane.b32.xlu0 %v7001, 110
  %v7013 = vpop.permute.xlu0 %7012
  %7014 = vrot.lane.b32.xlu0 %v7002, 110
  %v7015 = vpop.permute.xlu0 %7014
  %7016 = vrot.lane.b32.xlu0 %v7003, 110
  %v7017 = vpop.permute.xlu0 %7016
  %7018 = vrot.lane.b32.xlu0 %v7004, 110
  %v7019 = vpop.permute.xlu0 %7018
  %v7020 = vsel %vm393, %v7011, %v7013
  %v7021 = vsel %vm393, %v7013, %v7015
  %v7022 = vsel %vm393, %v7015, %v7017
  %v7023 = vsel %vm393, %v7017, %v7019
  %v7029 = vadd.f32 %v6981, %v7011
  %v7030 = vadd.f32 %v6982, %v7020
  %v7031 = vadd.f32 %v6983, %v7021
  %v7032 = vadd.f32 %v6984, %v7022
  %v7033 = vadd.f32 %v6985, %v7023
  %v7034 = vperm.slane %v6789, 5
  %v7035 = vperm.slane %v6790, 5
  %v7036 = vperm.slane %v6791, 5
  %v7037 = vperm.slane %v6792, 5
  %v7038 = vperm.slane %v6793, 5
  %7039 = vset.pattern.permute.xlu0 45
  %7040 = vperm.xlu0 %7039, %v4961
  %v7041 = vpop.permute.xlu0 %7040
  %v7043 = vsub.f32 %v7034, %v7041
  %v7044 = vsub.f32 %v7035, %v7041
  %v7045 = vsub.f32 %v7036, %v7041
  %v7046 = vsub.f32 %v7037, %v7041
  %v7047 = vsub.f32 %v7038, %v7041
  %v7048 = vand.u32 2147483647, %v7043
  %v7049 = vand.u32 2147483647, %v7044
  %v7050 = vand.u32 2147483647, %v7045
  %v7051 = vand.u32 2147483647, %v7046
  %v7052 = vand.u32 2147483647, %v7047
  %7058 = vrot.lane.b32.xlu0 %v7048, 110
  %v7059 = vpop.permute.xlu0 %7058
  %7060 = vrot.lane.b32.xlu0 %v7049, 110
  %v7061 = vpop.permute.xlu0 %7060
  %7062 = vrot.lane.b32.xlu0 %v7050, 110
  %v7063 = vpop.permute.xlu0 %7062
  %7064 = vrot.lane.b32.xlu0 %v7051, 110
  %v7065 = vpop.permute.xlu0 %7064
  %7066 = vrot.lane.b32.xlu0 %v7052, 110
  %v7067 = vpop.permute.xlu0 %7066
  %v7068 = vsel %vm393, %v7059, %v7061
  %v7069 = vsel %vm393, %v7061, %v7063
  %v7070 = vsel %vm393, %v7063, %v7065
  %v7071 = vsel %vm393, %v7065, %v7067
  %v7077 = vadd.f32 %v7029, %v7059
  %v7078 = vadd.f32 %v7030, %v7068
  %v7079 = vadd.f32 %v7031, %v7069
  %v7080 = vadd.f32 %v7032, %v7070
  %v7081 = vadd.f32 %v7033, %v7071
  %v7082 = vperm.slane %v6789, 6
  %v7083 = vperm.slane %v6790, 6
  %v7084 = vperm.slane %v6791, 6
  %v7085 = vperm.slane %v6792, 6
  %v7086 = vperm.slane %v6793, 6
  %7087 = vset.pattern.permute.xlu0 46
  %7088 = vperm.xlu0 %7087, %v4961
  %v7089 = vpop.permute.xlu0 %7088
  %v7091 = vsub.f32 %v7082, %v7089
  %v7092 = vsub.f32 %v7083, %v7089
  %v7093 = vsub.f32 %v7084, %v7089
  %v7094 = vsub.f32 %v7085, %v7089
  %v7095 = vsub.f32 %v7086, %v7089
  %v7096 = vand.u32 2147483647, %v7091
  %v7097 = vand.u32 2147483647, %v7092
  %v7098 = vand.u32 2147483647, %v7093
  %v7099 = vand.u32 2147483647, %v7094
  %v7100 = vand.u32 2147483647, %v7095
  %7106 = vrot.lane.b32.xlu0 %v7096, 110
  %v7107 = vpop.permute.xlu0 %7106
  %7108 = vrot.lane.b32.xlu0 %v7097, 110
  %v7109 = vpop.permute.xlu0 %7108
  %7110 = vrot.lane.b32.xlu0 %v7098, 110
  %v7111 = vpop.permute.xlu0 %7110
  %7112 = vrot.lane.b32.xlu0 %v7099, 110
  %v7113 = vpop.permute.xlu0 %7112
  %7114 = vrot.lane.b32.xlu0 %v7100, 110
  %v7115 = vpop.permute.xlu0 %7114
  %v7116 = vsel %vm393, %v7107, %v7109
  %v7117 = vsel %vm393, %v7109, %v7111
  %v7118 = vsel %vm393, %v7111, %v7113
  %v7119 = vsel %vm393, %v7113, %v7115
  %v7125 = vadd.f32 %v7077, %v7107
  %v7126 = vadd.f32 %v7078, %v7116
  %v7127 = vadd.f32 %v7079, %v7117
  %v7128 = vadd.f32 %v7080, %v7118
  %v7129 = vadd.f32 %v7081, %v7119
  %v7130 = vperm.slane %v6789, 7
  %v7131 = vperm.slane %v6790, 7
  %v7132 = vperm.slane %v6791, 7
  %v7133 = vperm.slane %v6792, 7
  %v7134 = vperm.slane %v6793, 7
  %7135 = vset.pattern.permute.xlu0 47
  %7136 = vperm.xlu0 %7135, %v4961
  %v7137 = vpop.permute.xlu0 %7136
  %v7139 = vsub.f32 %v7130, %v7137
  %v7140 = vsub.f32 %v7131, %v7137
  %v7141 = vsub.f32 %v7132, %v7137
  %v7142 = vsub.f32 %v7133, %v7137
  %v7143 = vsub.f32 %v7134, %v7137
  %v7144 = vand.u32 2147483647, %v7139
  %v7145 = vand.u32 2147483647, %v7140
  %v7146 = vand.u32 2147483647, %v7141
  %v7147 = vand.u32 2147483647, %v7142
  %v7148 = vand.u32 2147483647, %v7143
  %7154 = vrot.lane.b32.xlu0 %v7144, 110
  %v7155 = vpop.permute.xlu0 %7154
  %7156 = vrot.lane.b32.xlu0 %v7145, 110
  %v7157 = vpop.permute.xlu0 %7156
  %7158 = vrot.lane.b32.xlu0 %v7146, 110
  %v7159 = vpop.permute.xlu0 %7158
  %7160 = vrot.lane.b32.xlu0 %v7147, 110
  %v7161 = vpop.permute.xlu0 %7160
  %7162 = vrot.lane.b32.xlu0 %v7148, 110
  %v7163 = vpop.permute.xlu0 %7162
  %v7164 = vsel %vm393, %v7155, %v7157
  %v7165 = vsel %vm393, %v7157, %v7159
  %v7166 = vsel %vm393, %v7159, %v7161
  %v7167 = vsel %vm393, %v7161, %v7163
  %v7173 = vadd.f32 %v7125, %v7155
  %v7174 = vadd.f32 %v7126, %v7164
  %v7175 = vadd.f32 %v7127, %v7165
  %v7176 = vadd.f32 %v7128, %v7166
  %v7177 = vadd.f32 %v7129, %v7167
  %v7178 = vld [vmem:[%s218] ss:$8 sm:$0xf]
  %v7180 = vperm.slane %v7178, 0
  %v7181 = vperm.slane %v7178, 1
  %v7182 = vperm.slane %v7178, 2
  %v7183 = vperm.slane %v7178, 3
  %7184 = vrot.lane.b32.xlu0 %v7180, 15
  %v7185 = vpop.permute.xlu0 %7184
  %7186 = vrot.lane.b32.xlu0 %v7181, 15
  %v7187 = vpop.permute.xlu0 %7186
  %7188 = vrot.lane.b32.xlu0 %v7182, 15
  %v7189 = vpop.permute.xlu0 %7188
  %7190 = vrot.lane.b32.xlu0 %v7183, 15
  %v7191 = vpop.permute.xlu0 %7190
  %v7192 = vsel %vm233, %v7185, %v7187
  %v7193 = vsel %vm233, %v7187, %v7189
  %v7194 = vsel %vm233, %v7189, %v7191
  %v7200 = vmul.f32 %v6762, %v7185
  %v7201 = vmul.f32 %v6763, %v7192
  %v7202 = vmul.f32 %v6764, %v7193
  %v7203 = vmul.f32 %v6765, %v7194
  %v7204 = vmul.f32 %v6766, %v7191
  %v7205 = vperm.slane %v7200, 0
  %v7206 = vperm.slane %v7201, 0
  %v7207 = vperm.slane %v7202, 0
  %v7208 = vperm.slane %v7203, 0
  %v7209 = vperm.slane %v7204, 0
  %7210 = vset.pattern.permute.xlu0 48
  %7211 = vperm.xlu0 %7210, %v4961
  %v7212 = vpop.permute.xlu0 %7211
  %v7214 = vsub.f32 %v7205, %v7212
  %v7215 = vsub.f32 %v7206, %v7212
  %v7216 = vsub.f32 %v7207, %v7212
  %v7217 = vsub.f32 %v7208, %v7212
  %v7218 = vsub.f32 %v7209, %v7212
  %v7219 = vand.u32 2147483647, %v7214
  %v7220 = vand.u32 2147483647, %v7215
  %v7221 = vand.u32 2147483647, %v7216
  %v7222 = vand.u32 2147483647, %v7217
  %v7223 = vand.u32 2147483647, %v7218
  %7229 = vrot.lane.b32.xlu0 %v7219, 96
  %v7230 = vpop.permute.xlu0 %7229
  %7231 = vrot.lane.b32.xlu0 %v7220, 96
  %v7232 = vpop.permute.xlu0 %7231
  %7233 = vrot.lane.b32.xlu0 %v7221, 96
  %v7234 = vpop.permute.xlu0 %7233
  %7235 = vrot.lane.b32.xlu0 %v7222, 96
  %v7236 = vpop.permute.xlu0 %7235
  %7237 = vrot.lane.b32.xlu0 %v7223, 96
  %v7238 = vpop.permute.xlu0 %7237
  %v7239 = vsel %vm413, %v7230, %v7232
  %v7240 = vsel %vm413, %v7232, %v7234
  %v7241 = vsel %vm413, %v7234, %v7236
  %v7242 = vsel %vm413, %v7236, %v7238
  %v7248 = vadd.f32 %v7173, %v7230
  %v7249 = vadd.f32 %v7174, %v7239
  %v7250 = vadd.f32 %v7175, %v7240
  %v7251 = vadd.f32 %v7176, %v7241
  %v7252 = vadd.f32 %v7177, %v7242
  %v7253 = vperm.slane %v7200, 1
  %v7254 = vperm.slane %v7201, 1
  %v7255 = vperm.slane %v7202, 1
  %v7256 = vperm.slane %v7203, 1
  %v7257 = vperm.slane %v7204, 1
  %7258 = vset.pattern.permute.xlu0 49
  %7259 = vperm.xlu0 %7258, %v4961
  %v7260 = vpop.permute.xlu0 %7259
  %v7262 = vsub.f32 %v7253, %v7260
  %v7263 = vsub.f32 %v7254, %v7260
  %v7264 = vsub.f32 %v7255, %v7260
  %v7265 = vsub.f32 %v7256, %v7260
  %v7266 = vsub.f32 %v7257, %v7260
  %v7267 = vand.u32 2147483647, %v7262
  %v7268 = vand.u32 2147483647, %v7263
  %v7269 = vand.u32 2147483647, %v7264
  %v7270 = vand.u32 2147483647, %v7265
  %v7271 = vand.u32 2147483647, %v7266
  %7277 = vrot.lane.b32.xlu0 %v7267, 96
  %v7278 = vpop.permute.xlu0 %7277
  %7279 = vrot.lane.b32.xlu0 %v7268, 96
  %v7280 = vpop.permute.xlu0 %7279
  %7281 = vrot.lane.b32.xlu0 %v7269, 96
  %v7282 = vpop.permute.xlu0 %7281
  %7283 = vrot.lane.b32.xlu0 %v7270, 96
  %v7284 = vpop.permute.xlu0 %7283
  %7285 = vrot.lane.b32.xlu0 %v7271, 96
  %v7286 = vpop.permute.xlu0 %7285
  %v7287 = vsel %vm413, %v7278, %v7280
  %v7288 = vsel %vm413, %v7280, %v7282
  %v7289 = vsel %vm413, %v7282, %v7284
  %v7290 = vsel %vm413, %v7284, %v7286
  %v7296 = vadd.f32 %v7248, %v7278
  %v7297 = vadd.f32 %v7249, %v7287
  %v7298 = vadd.f32 %v7250, %v7288
  %v7299 = vadd.f32 %v7251, %v7289
  %v7300 = vadd.f32 %v7252, %v7290
  %v7301 = vperm.slane %v7200, 2
  %v7302 = vperm.slane %v7201, 2
  %v7303 = vperm.slane %v7202, 2
  %v7304 = vperm.slane %v7203, 2
  %v7305 = vperm.slane %v7204, 2
  %7306 = vset.pattern.permute.xlu0 50
  %7307 = vperm.xlu0 %7306, %v4961
  %v7308 = vpop.permute.xlu0 %7307
  %v7310 = vsub.f32 %v7301, %v7308
  %v7311 = vsub.f32 %v7302, %v7308
  %v7312 = vsub.f32 %v7303, %v7308
  %v7313 = vsub.f32 %v7304, %v7308
  %v7314 = vsub.f32 %v7305, %v7308
  %v7315 = vand.u32 2147483647, %v7310
  %v7316 = vand.u32 2147483647, %v7311
  %v7317 = vand.u32 2147483647, %v7312
  %v7318 = vand.u32 2147483647, %v7313
  %v7319 = vand.u32 2147483647, %v7314
  %7325 = vrot.lane.b32.xlu0 %v7315, 96
  %v7326 = vpop.permute.xlu0 %7325
  %7327 = vrot.lane.b32.xlu0 %v7316, 96
  %v7328 = vpop.permute.xlu0 %7327
  %7329 = vrot.lane.b32.xlu0 %v7317, 96
  %v7330 = vpop.permute.xlu0 %7329
  %7331 = vrot.lane.b32.xlu0 %v7318, 96
  %v7332 = vpop.permute.xlu0 %7331
  %7333 = vrot.lane.b32.xlu0 %v7319, 96
  %v7334 = vpop.permute.xlu0 %7333
  %v7335 = vsel %vm413, %v7326, %v7328
  %v7336 = vsel %vm413, %v7328, %v7330
  %v7337 = vsel %vm413, %v7330, %v7332
  %v7338 = vsel %vm413, %v7332, %v7334
  %v7344 = vadd.f32 %v7296, %v7326
  %v7345 = vadd.f32 %v7297, %v7335
  %v7346 = vadd.f32 %v7298, %v7336
  %v7347 = vadd.f32 %v7299, %v7337
  %v7348 = vadd.f32 %v7300, %v7338
  %v7349 = vperm.slane %v7200, 3
  %v7350 = vperm.slane %v7201, 3
  %v7351 = vperm.slane %v7202, 3
  %v7352 = vperm.slane %v7203, 3
  %v7353 = vperm.slane %v7204, 3
  %7354 = vset.pattern.permute.xlu0 51
  %7355 = vperm.xlu0 %7354, %v4961
  %v7356 = vpop.permute.xlu0 %7355
  %v7358 = vsub.f32 %v7349, %v7356
  %v7359 = vsub.f32 %v7350, %v7356
  %v7360 = vsub.f32 %v7351, %v7356
  %v7361 = vsub.f32 %v7352, %v7356
  %v7362 = vsub.f32 %v7353, %v7356
  %v7363 = vand.u32 2147483647, %v7358
  %v7364 = vand.u32 2147483647, %v7359
  %v7365 = vand.u32 2147483647, %v7360
  %v7366 = vand.u32 2147483647, %v7361
  %v7367 = vand.u32 2147483647, %v7362
  %7373 = vrot.lane.b32.xlu0 %v7363, 96
  %v7374 = vpop.permute.xlu0 %7373
  %7375 = vrot.lane.b32.xlu0 %v7364, 96
  %v7376 = vpop.permute.xlu0 %7375
  %7377 = vrot.lane.b32.xlu0 %v7365, 96
  %v7378 = vpop.permute.xlu0 %7377
  %7379 = vrot.lane.b32.xlu0 %v7366, 96
  %v7380 = vpop.permute.xlu0 %7379
  %7381 = vrot.lane.b32.xlu0 %v7367, 96
  %v7382 = vpop.permute.xlu0 %7381
  %v7383 = vsel %vm413, %v7374, %v7376
  %v7384 = vsel %vm413, %v7376, %v7378
  %v7385 = vsel %vm413, %v7378, %v7380
  %v7386 = vsel %vm413, %v7380, %v7382
  %v7392 = vadd.f32 %v7344, %v7374
  %v7393 = vadd.f32 %v7345, %v7383
  %v7394 = vadd.f32 %v7346, %v7384
  %v7395 = vadd.f32 %v7347, %v7385
  %v7396 = vadd.f32 %v7348, %v7386
  %v7397 = vperm.slane %v7200, 4
  %v7398 = vperm.slane %v7201, 4
  %v7399 = vperm.slane %v7202, 4
  %v7400 = vperm.slane %v7203, 4
  %v7401 = vperm.slane %v7204, 4
  %7402 = vset.pattern.permute.xlu0 52
  %7403 = vperm.xlu0 %7402, %v4961
  %v7404 = vpop.permute.xlu0 %7403
  %v7406 = vsub.f32 %v7397, %v7404
  %v7407 = vsub.f32 %v7398, %v7404
  %v7408 = vsub.f32 %v7399, %v7404
  %v7409 = vsub.f32 %v7400, %v7404
  %v7410 = vsub.f32 %v7401, %v7404
  %v7411 = vand.u32 2147483647, %v7406
  %v7412 = vand.u32 2147483647, %v7407
  %v7413 = vand.u32 2147483647, %v7408
  %v7414 = vand.u32 2147483647, %v7409
  %v7415 = vand.u32 2147483647, %v7410
  %7421 = vrot.lane.b32.xlu0 %v7411, 96
  %v7422 = vpop.permute.xlu0 %7421
  %7423 = vrot.lane.b32.xlu0 %v7412, 96
  %v7424 = vpop.permute.xlu0 %7423
  %7425 = vrot.lane.b32.xlu0 %v7413, 96
  %v7426 = vpop.permute.xlu0 %7425
  %7427 = vrot.lane.b32.xlu0 %v7414, 96
  %v7428 = vpop.permute.xlu0 %7427
  %7429 = vrot.lane.b32.xlu0 %v7415, 96
  %v7430 = vpop.permute.xlu0 %7429
  %v7431 = vsel %vm413, %v7422, %v7424
  %v7432 = vsel %vm413, %v7424, %v7426
  %v7433 = vsel %vm413, %v7426, %v7428
  %v7434 = vsel %vm413, %v7428, %v7430
  %v7440 = vadd.f32 %v7392, %v7422
  %v7441 = vadd.f32 %v7393, %v7431
  %v7442 = vadd.f32 %v7394, %v7432
  %v7443 = vadd.f32 %v7395, %v7433
  %v7444 = vadd.f32 %v7396, %v7434
  %v7445 = vperm.slane %v7200, 5
  %v7446 = vperm.slane %v7201, 5
  %v7447 = vperm.slane %v7202, 5
  %v7448 = vperm.slane %v7203, 5
  %v7449 = vperm.slane %v7204, 5
  %7450 = vset.pattern.permute.xlu0 53
  %7451 = vperm.xlu0 %7450, %v4961
  %v7452 = vpop.permute.xlu0 %7451
  %v7454 = vsub.f32 %v7445, %v7452
  %v7455 = vsub.f32 %v7446, %v7452
  %v7456 = vsub.f32 %v7447, %v7452
  %v7457 = vsub.f32 %v7448, %v7452
  %v7458 = vsub.f32 %v7449, %v7452
  %v7459 = vand.u32 2147483647, %v7454
  %v7460 = vand.u32 2147483647, %v7455
  %v7461 = vand.u32 2147483647, %v7456
  %v7462 = vand.u32 2147483647, %v7457
  %v7463 = vand.u32 2147483647, %v7458
  %7469 = vrot.lane.b32.xlu0 %v7459, 96
  %v7470 = vpop.permute.xlu0 %7469
  %7471 = vrot.lane.b32.xlu0 %v7460, 96
  %v7472 = vpop.permute.xlu0 %7471
  %7473 = vrot.lane.b32.xlu0 %v7461, 96
  %v7474 = vpop.permute.xlu0 %7473
  %7475 = vrot.lane.b32.xlu0 %v7462, 96
  %v7476 = vpop.permute.xlu0 %7475
  %7477 = vrot.lane.b32.xlu0 %v7463, 96
  %v7478 = vpop.permute.xlu0 %7477
  %v7479 = vsel %vm413, %v7470, %v7472
  %v7480 = vsel %vm413, %v7472, %v7474
  %v7481 = vsel %vm413, %v7474, %v7476
  %v7482 = vsel %vm413, %v7476, %v7478
  %v7488 = vadd.f32 %v7440, %v7470
  %v7489 = vadd.f32 %v7441, %v7479
  %v7490 = vadd.f32 %v7442, %v7480
  %v7491 = vadd.f32 %v7443, %v7481
  %v7492 = vadd.f32 %v7444, %v7482
  %v7493 = vperm.slane %v7200, 6
  %v7494 = vperm.slane %v7201, 6
  %v7495 = vperm.slane %v7202, 6
  %v7496 = vperm.slane %v7203, 6
  %v7497 = vperm.slane %v7204, 6
  %7498 = vset.pattern.permute.xlu0 54
  %7499 = vperm.xlu0 %7498, %v4961
  %v7500 = vpop.permute.xlu0 %7499
  %v7502 = vsub.f32 %v7493, %v7500
  %v7503 = vsub.f32 %v7494, %v7500
  %v7504 = vsub.f32 %v7495, %v7500
  %v7505 = vsub.f32 %v7496, %v7500
  %v7506 = vsub.f32 %v7497, %v7500
  %v7507 = vand.u32 2147483647, %v7502
  %v7508 = vand.u32 2147483647, %v7503
  %v7509 = vand.u32 2147483647, %v7504
  %v7510 = vand.u32 2147483647, %v7505
  %v7511 = vand.u32 2147483647, %v7506
  %7517 = vrot.lane.b32.xlu0 %v7507, 96
  %v7518 = vpop.permute.xlu0 %7517
  %7519 = vrot.lane.b32.xlu0 %v7508, 96
  %v7520 = vpop.permute.xlu0 %7519
  %7521 = vrot.lane.b32.xlu0 %v7509, 96
  %v7522 = vpop.permute.xlu0 %7521
  %7523 = vrot.lane.b32.xlu0 %v7510, 96
  %v7524 = vpop.permute.xlu0 %7523
  %7525 = vrot.lane.b32.xlu0 %v7511, 96
  %v7526 = vpop.permute.xlu0 %7525
  %v7527 = vsel %vm413, %v7518, %v7520
  %v7528 = vsel %vm413, %v7520, %v7522
  %v7529 = vsel %vm413, %v7522, %v7524
  %v7530 = vsel %vm413, %v7524, %v7526
  %v7536 = vadd.f32 %v7488, %v7518
  %v7537 = vadd.f32 %v7489, %v7527
  %v7538 = vadd.f32 %v7490, %v7528
  %v7539 = vadd.f32 %v7491, %v7529
  %v7540 = vadd.f32 %v7492, %v7530
  %v7541 = vperm.slane %v7200, 7
  %v7542 = vperm.slane %v7201, 7
  %v7543 = vperm.slane %v7202, 7
  %v7544 = vperm.slane %v7203, 7
  %v7545 = vperm.slane %v7204, 7
  %7546 = vset.pattern.permute.xlu0 55
  %7547 = vperm.xlu0 %7546, %v4961
  %v7548 = vpop.permute.xlu0 %7547
  %v7550 = vsub.f32 %v7541, %v7548
  %v7551 = vsub.f32 %v7542, %v7548
  %v7552 = vsub.f32 %v7543, %v7548
  %v7553 = vsub.f32 %v7544, %v7548
  %v7554 = vsub.f32 %v7545, %v7548
  %v7555 = vand.u32 2147483647, %v7550
  %v7556 = vand.u32 2147483647, %v7551
  %v7557 = vand.u32 2147483647, %v7552
  %v7558 = vand.u32 2147483647, %v7553
  %v7559 = vand.u32 2147483647, %v7554
  %7565 = vrot.lane.b32.xlu0 %v7555, 96
  %v7566 = vpop.permute.xlu0 %7565
  %7567 = vrot.lane.b32.xlu0 %v7556, 96
  %v7568 = vpop.permute.xlu0 %7567
  %7569 = vrot.lane.b32.xlu0 %v7557, 96
  %v7570 = vpop.permute.xlu0 %7569
  %7571 = vrot.lane.b32.xlu0 %v7558, 96
  %v7572 = vpop.permute.xlu0 %7571
  %7573 = vrot.lane.b32.xlu0 %v7559, 96
  %v7574 = vpop.permute.xlu0 %7573
  %v7575 = vsel %vm413, %v7566, %v7568
  %v7576 = vsel %vm413, %v7568, %v7570
  %v7577 = vsel %vm413, %v7570, %v7572
  %v7578 = vsel %vm413, %v7572, %v7574
  %v7584 = vadd.f32 %v7536, %v7566
  %v7585 = vadd.f32 %v7537, %v7575
  %v7586 = vadd.f32 %v7538, %v7576
  %v7587 = vadd.f32 %v7539, %v7577
  %v7588 = vadd.f32 %v7540, %v7578
  %v7589 = vld [vmem:[%s247] ss:$8 sm:$0xf]
  %v7591 = vperm.slane %v7589, 0
  %v7592 = vperm.slane %v7589, 1
  %v7593 = vperm.slane %v7589, 2
  %v7594 = vperm.slane %v7589, 3
  %7595 = vrot.lane.b32.xlu0 %v7591, 16
  %v7596 = vpop.permute.xlu0 %7595
  %7597 = vrot.lane.b32.xlu0 %v7592, 16
  %v7598 = vpop.permute.xlu0 %7597
  %7599 = vrot.lane.b32.xlu0 %v7593, 16
  %v7600 = vpop.permute.xlu0 %7599
  %7601 = vrot.lane.b32.xlu0 %v7594, 16
  %v7602 = vpop.permute.xlu0 %7601
  %v7603 = vsel %vm262, %v7596, %v7598
  %v7604 = vsel %vm262, %v7598, %v7600
  %v7605 = vsel %vm262, %v7600, %v7602
  %v7611 = vmul.f32 %v6762, %v7596
  %v7612 = vmul.f32 %v6763, %v7603
  %v7613 = vmul.f32 %v6764, %v7604
  %v7614 = vmul.f32 %v6765, %v7605
  %v7615 = vmul.f32 %v6766, %v7602
  %v7616 = vperm.slane %v7611, 0
  %v7617 = vperm.slane %v7612, 0
  %v7618 = vperm.slane %v7613, 0
  %v7619 = vperm.slane %v7614, 0
  %v7620 = vperm.slane %v7615, 0
  %7621 = vset.pattern.permute.xlu0 56
  %7622 = vperm.xlu0 %7621, %v4961
  %v7623 = vpop.permute.xlu0 %7622
  %v7625 = vsub.f32 %v7616, %v7623
  %v7626 = vsub.f32 %v7617, %v7623
  %v7627 = vsub.f32 %v7618, %v7623
  %v7628 = vsub.f32 %v7619, %v7623
  %v7629 = vsub.f32 %v7620, %v7623
  %v7630 = vand.u32 2147483647, %v7625
  %v7631 = vand.u32 2147483647, %v7626
  %v7632 = vand.u32 2147483647, %v7627
  %v7633 = vand.u32 2147483647, %v7628
  %v7634 = vand.u32 2147483647, %v7629
  %7640 = vrot.lane.b32.xlu0 %v7630, 95
  %v7641 = vpop.permute.xlu0 %7640
  %7642 = vrot.lane.b32.xlu0 %v7631, 95
  %v7643 = vpop.permute.xlu0 %7642
  %7644 = vrot.lane.b32.xlu0 %v7632, 95
  %v7645 = vpop.permute.xlu0 %7644
  %7646 = vrot.lane.b32.xlu0 %v7633, 95
  %v7647 = vpop.permute.xlu0 %7646
  %7648 = vrot.lane.b32.xlu0 %v7634, 95
  %v7649 = vpop.permute.xlu0 %7648
  %v7650 = vsel %vm433, %v7641, %v7643
  %v7651 = vsel %vm433, %v7643, %v7645
  %v7652 = vsel %vm433, %v7645, %v7647
  %v7653 = vsel %vm433, %v7647, %v7649
  %v7659 = vadd.f32 %v7584, %v7641
  %v7660 = vadd.f32 %v7585, %v7650
  %v7661 = vadd.f32 %v7586, %v7651
  %v7662 = vadd.f32 %v7587, %v7652
  %v7663 = vadd.f32 %v7588, %v7653
  %v7664 = vperm.slane %v7611, 1
  %v7665 = vperm.slane %v7612, 1
  %v7666 = vperm.slane %v7613, 1
  %v7667 = vperm.slane %v7614, 1
  %v7668 = vperm.slane %v7615, 1
  %7669 = vset.pattern.permute.xlu0 57
  %7670 = vperm.xlu0 %7669, %v4961
  %v7671 = vpop.permute.xlu0 %7670
  %v7673 = vsub.f32 %v7664, %v7671
  %v7674 = vsub.f32 %v7665, %v7671
  %v7675 = vsub.f32 %v7666, %v7671
  %v7676 = vsub.f32 %v7667, %v7671
  %v7677 = vsub.f32 %v7668, %v7671
  %v7678 = vand.u32 2147483647, %v7673
  %v7679 = vand.u32 2147483647, %v7674
  %v7680 = vand.u32 2147483647, %v7675
  %v7681 = vand.u32 2147483647, %v7676
  %v7682 = vand.u32 2147483647, %v7677
  %7688 = vrot.lane.b32.xlu0 %v7678, 95
  %v7689 = vpop.permute.xlu0 %7688
  %7690 = vrot.lane.b32.xlu0 %v7679, 95
  %v7691 = vpop.permute.xlu0 %7690
  %7692 = vrot.lane.b32.xlu0 %v7680, 95
  %v7693 = vpop.permute.xlu0 %7692
  %7694 = vrot.lane.b32.xlu0 %v7681, 95
  %v7695 = vpop.permute.xlu0 %7694
  %7696 = vrot.lane.b32.xlu0 %v7682, 95
  %v7697 = vpop.permute.xlu0 %7696
  %v7698 = vsel %vm433, %v7689, %v7691
  %v7699 = vsel %vm433, %v7691, %v7693
  %v7700 = vsel %vm433, %v7693, %v7695
  %v7701 = vsel %vm433, %v7695, %v7697
  %v7707 = vadd.f32 %v7659, %v7689
  %v7708 = vadd.f32 %v7660, %v7698
  %v7709 = vadd.f32 %v7661, %v7699
  %v7710 = vadd.f32 %v7662, %v7700
  %v7711 = vadd.f32 %v7663, %v7701
  %v7712 = vperm.slane %v7611, 2
  %v7713 = vperm.slane %v7612, 2
  %v7714 = vperm.slane %v7613, 2
  %v7715 = vperm.slane %v7614, 2
  %v7716 = vperm.slane %v7615, 2
  %7717 = vset.pattern.permute.xlu0 58
  %7718 = vperm.xlu0 %7717, %v4961
  %v7719 = vpop.permute.xlu0 %7718
  %v7721 = vsub.f32 %v7712, %v7719
  %v7722 = vsub.f32 %v7713, %v7719
  %v7723 = vsub.f32 %v7714, %v7719
  %v7724 = vsub.f32 %v7715, %v7719
  %v7725 = vsub.f32 %v7716, %v7719
  %v7726 = vand.u32 2147483647, %v7721
  %v7727 = vand.u32 2147483647, %v7722
  %v7728 = vand.u32 2147483647, %v7723
  %v7729 = vand.u32 2147483647, %v7724
  %v7730 = vand.u32 2147483647, %v7725
  %7736 = vrot.lane.b32.xlu0 %v7726, 95
  %v7737 = vpop.permute.xlu0 %7736
  %7738 = vrot.lane.b32.xlu0 %v7727, 95
  %v7739 = vpop.permute.xlu0 %7738
  %7740 = vrot.lane.b32.xlu0 %v7728, 95
  %v7741 = vpop.permute.xlu0 %7740
  %7742 = vrot.lane.b32.xlu0 %v7729, 95
  %v7743 = vpop.permute.xlu0 %7742
  %7744 = vrot.lane.b32.xlu0 %v7730, 95
  %v7745 = vpop.permute.xlu0 %7744
  %v7746 = vsel %vm433, %v7737, %v7739
  %v7747 = vsel %vm433, %v7739, %v7741
  %v7748 = vsel %vm433, %v7741, %v7743
  %v7749 = vsel %vm433, %v7743, %v7745
  %v7755 = vadd.f32 %v7707, %v7737
  %v7756 = vadd.f32 %v7708, %v7746
  %v7757 = vadd.f32 %v7709, %v7747
  %v7758 = vadd.f32 %v7710, %v7748
  %v7759 = vadd.f32 %v7711, %v7749
  %v7760 = vperm.slane %v7611, 3
  %v7761 = vperm.slane %v7612, 3
  %v7762 = vperm.slane %v7613, 3
  %v7763 = vperm.slane %v7614, 3
  %v7764 = vperm.slane %v7615, 3
  %7765 = vset.pattern.permute.xlu0 59
  %7766 = vperm.xlu0 %7765, %v4961
  %v7767 = vpop.permute.xlu0 %7766
  %v7769 = vsub.f32 %v7760, %v7767
  %v7770 = vsub.f32 %v7761, %v7767
  %v7771 = vsub.f32 %v7762, %v7767
  %v7772 = vsub.f32 %v7763, %v7767
  %v7773 = vsub.f32 %v7764, %v7767
  %v7774 = vand.u32 2147483647, %v7769
  %v7775 = vand.u32 2147483647, %v7770
  %v7776 = vand.u32 2147483647, %v7771
  %v7777 = vand.u32 2147483647, %v7772
  %v7778 = vand.u32 2147483647, %v7773
  %7784 = vrot.lane.b32.xlu0 %v7774, 95
  %v7785 = vpop.permute.xlu0 %7784
  %7786 = vrot.lane.b32.xlu0 %v7775, 95
  %v7787 = vpop.permute.xlu0 %7786
  %7788 = vrot.lane.b32.xlu0 %v7776, 95
  %v7789 = vpop.permute.xlu0 %7788
  %7790 = vrot.lane.b32.xlu0 %v7777, 95
  %v7791 = vpop.permute.xlu0 %7790
  %7792 = vrot.lane.b32.xlu0 %v7778, 95
  %v7793 = vpop.permute.xlu0 %7792
  %v7794 = vsel %vm433, %v7785, %v7787
  %v7795 = vsel %vm433, %v7787, %v7789
  %v7796 = vsel %vm433, %v7789, %v7791
  %v7797 = vsel %vm433, %v7791, %v7793
  %v7803 = vadd.f32 %v7755, %v7785
  %v7804 = vadd.f32 %v7756, %v7794
  %v7805 = vadd.f32 %v7757, %v7795
  %v7806 = vadd.f32 %v7758, %v7796
  %v7807 = vadd.f32 %v7759, %v7797
  %v7808 = vperm.slane %v7611, 4
  %v7809 = vperm.slane %v7612, 4
  %v7810 = vperm.slane %v7613, 4
  %v7811 = vperm.slane %v7614, 4
  %v7812 = vperm.slane %v7615, 4
  %7813 = vset.pattern.permute.xlu0 60
  %7814 = vperm.xlu0 %7813, %v4961
  %v7815 = vpop.permute.xlu0 %7814
  %v7817 = vsub.f32 %v7808, %v7815
  %v7818 = vsub.f32 %v7809, %v7815
  %v7819 = vsub.f32 %v7810, %v7815
  %v7820 = vsub.f32 %v7811, %v7815
  %v7821 = vsub.f32 %v7812, %v7815
  %v7822 = vand.u32 2147483647, %v7817
  %v7823 = vand.u32 2147483647, %v7818
  %v7824 = vand.u32 2147483647, %v7819
  %v7825 = vand.u32 2147483647, %v7820
  %v7826 = vand.u32 2147483647, %v7821
  %7832 = vrot.lane.b32.xlu0 %v7822, 95
  %v7833 = vpop.permute.xlu0 %7832
  %7834 = vrot.lane.b32.xlu0 %v7823, 95
  %v7835 = vpop.permute.xlu0 %7834
  %7836 = vrot.lane.b32.xlu0 %v7824, 95
  %v7837 = vpop.permute.xlu0 %7836
  %7838 = vrot.lane.b32.xlu0 %v7825, 95
  %v7839 = vpop.permute.xlu0 %7838
  %7840 = vrot.lane.b32.xlu0 %v7826, 95
  %v7841 = vpop.permute.xlu0 %7840
  %v7842 = vsel %vm433, %v7833, %v7835
  %v7843 = vsel %vm433, %v7835, %v7837
  %v7844 = vsel %vm433, %v7837, %v7839
  %v7845 = vsel %vm433, %v7839, %v7841
  %v7851 = vadd.f32 %v7803, %v7833
  %v7852 = vadd.f32 %v7804, %v7842
  %v7853 = vadd.f32 %v7805, %v7843
  %v7854 = vadd.f32 %v7806, %v7844
  %v7855 = vadd.f32 %v7807, %v7845
  %v7856 = vperm.slane %v7611, 5
  %v7857 = vperm.slane %v7612, 5
  %v7858 = vperm.slane %v7613, 5
  %v7859 = vperm.slane %v7614, 5
  %v7860 = vperm.slane %v7615, 5
  %7861 = vset.pattern.permute.xlu0 61
  %7862 = vperm.xlu0 %7861, %v4961
  %v7863 = vpop.permute.xlu0 %7862
  %v7865 = vsub.f32 %v7856, %v7863
  %v7866 = vsub.f32 %v7857, %v7863
  %v7867 = vsub.f32 %v7858, %v7863
  %v7868 = vsub.f32 %v7859, %v7863
  %v7869 = vsub.f32 %v7860, %v7863
  %v7870 = vand.u32 2147483647, %v7865
  %v7871 = vand.u32 2147483647, %v7866
  %v7872 = vand.u32 2147483647, %v7867
  %v7873 = vand.u32 2147483647, %v7868
  %v7874 = vand.u32 2147483647, %v7869
  %7880 = vrot.lane.b32.xlu0 %v7870, 95
  %v7881 = vpop.permute.xlu0 %7880
  %7882 = vrot.lane.b32.xlu0 %v7871, 95
  %v7883 = vpop.permute.xlu0 %7882
  %7884 = vrot.lane.b32.xlu0 %v7872, 95
  %v7885 = vpop.permute.xlu0 %7884
  %7886 = vrot.lane.b32.xlu0 %v7873, 95
  %v7887 = vpop.permute.xlu0 %7886
  %7888 = vrot.lane.b32.xlu0 %v7874, 95
  %v7889 = vpop.permute.xlu0 %7888
  %v7890 = vsel %vm433, %v7881, %v7883
  %v7891 = vsel %vm433, %v7883, %v7885
  %v7892 = vsel %vm433, %v7885, %v7887
  %v7893 = vsel %vm433, %v7887, %v7889
  %v7899 = vadd.f32 %v7851, %v7881
  %v7900 = vadd.f32 %v7852, %v7890
  %v7901 = vadd.f32 %v7853, %v7891
  %v7902 = vadd.f32 %v7854, %v7892
  %v7903 = vadd.f32 %v7855, %v7893
  %v7904 = vperm.slane %v7611, 6
  %v7905 = vperm.slane %v7612, 6
  %v7906 = vperm.slane %v7613, 6
  %v7907 = vperm.slane %v7614, 6
  %v7908 = vperm.slane %v7615, 6
  %7909 = vset.pattern.permute.xlu0 62
  %7910 = vperm.xlu0 %7909, %v4961
  %v7911 = vpop.permute.xlu0 %7910
  %v7913 = vsub.f32 %v7904, %v7911
  %v7914 = vsub.f32 %v7905, %v7911
  %v7915 = vsub.f32 %v7906, %v7911
  %v7916 = vsub.f32 %v7907, %v7911
  %v7917 = vsub.f32 %v7908, %v7911
  %v7918 = vand.u32 2147483647, %v7913
  %v7919 = vand.u32 2147483647, %v7914
  %v7920 = vand.u32 2147483647, %v7915
  %v7921 = vand.u32 2147483647, %v7916
  %v7922 = vand.u32 2147483647, %v7917
  %7928 = vrot.lane.b32.xlu0 %v7918, 95
  %v7929 = vpop.permute.xlu0 %7928
  %7930 = vrot.lane.b32.xlu0 %v7919, 95
  %v7931 = vpop.permute.xlu0 %7930
  %7932 = vrot.lane.b32.xlu0 %v7920, 95
  %v7933 = vpop.permute.xlu0 %7932
  %7934 = vrot.lane.b32.xlu0 %v7921, 95
  %v7935 = vpop.permute.xlu0 %7934
  %7936 = vrot.lane.b32.xlu0 %v7922, 95
  %v7937 = vpop.permute.xlu0 %7936
  %v7938 = vsel %vm433, %v7929, %v7931
  %v7939 = vsel %vm433, %v7931, %v7933
  %v7940 = vsel %vm433, %v7933, %v7935
  %v7941 = vsel %vm433, %v7935, %v7937
  %v7947 = vadd.f32 %v7899, %v7929
  %v7948 = vadd.f32 %v7900, %v7938
  %v7949 = vadd.f32 %v7901, %v7939
  %v7950 = vadd.f32 %v7902, %v7940
  %v7951 = vadd.f32 %v7903, %v7941
  %v7952 = vperm.slane %v7611, 7
  %v7953 = vperm.slane %v7612, 7
  %v7954 = vperm.slane %v7613, 7
  %v7955 = vperm.slane %v7614, 7
  %v7956 = vperm.slane %v7615, 7
  %7957 = vset.pattern.permute.xlu0 63
  %7958 = vperm.xlu0 %7957, %v4961
  %v7959 = vpop.permute.xlu0 %7958
  %v7961 = vsub.f32 %v7952, %v7959
  %v7962 = vsub.f32 %v7953, %v7959
  %v7963 = vsub.f32 %v7954, %v7959
  %v7964 = vsub.f32 %v7955, %v7959
  %v7965 = vsub.f32 %v7956, %v7959
  %v7966 = vand.u32 2147483647, %v7961
  %v7967 = vand.u32 2147483647, %v7962
  %v7968 = vand.u32 2147483647, %v7963
  %v7969 = vand.u32 2147483647, %v7964
  %v7970 = vand.u32 2147483647, %v7965
  %7976 = vrot.lane.b32.xlu0 %v7966, 95
  %v7977 = vpop.permute.xlu0 %7976
  %7978 = vrot.lane.b32.xlu0 %v7967, 95
  %v7979 = vpop.permute.xlu0 %7978
  %7980 = vrot.lane.b32.xlu0 %v7968, 95
  %v7981 = vpop.permute.xlu0 %7980
  %7982 = vrot.lane.b32.xlu0 %v7969, 95
  %v7983 = vpop.permute.xlu0 %7982
  %7984 = vrot.lane.b32.xlu0 %v7970, 95
  %v7985 = vpop.permute.xlu0 %7984
  %v7986 = vsel %vm433, %v7977, %v7979
  %v7987 = vsel %vm433, %v7979, %v7981
  %v7988 = vsel %vm433, %v7981, %v7983
  %v7989 = vsel %vm433, %v7983, %v7985
  %v7995 = vadd.f32 %v7947, %v7977
  %v7996 = vadd.f32 %v7948, %v7986
  %v7997 = vadd.f32 %v7949, %v7987
  %v7998 = vadd.f32 %v7950, %v7988
  %v7999 = vadd.f32 %v7951, %v7989
  %v8000 = vld [vmem:[%s276] ss:$8 sm:$0xf]
  %v8002 = vperm.slane %v8000, 0
  %v8003 = vperm.slane %v8000, 1
  %v8004 = vperm.slane %v8000, 2
  %v8005 = vperm.slane %v8000, 3
  %8006 = vrot.lane.b32.xlu0 %v8002, 17
  %v8007 = vpop.permute.xlu0 %8006
  %8008 = vrot.lane.b32.xlu0 %v8003, 17
  %v8009 = vpop.permute.xlu0 %8008
  %8010 = vrot.lane.b32.xlu0 %v8004, 17
  %v8011 = vpop.permute.xlu0 %8010
  %8012 = vrot.lane.b32.xlu0 %v8005, 17
  %v8013 = vpop.permute.xlu0 %8012
  %v8014 = vsel %vm291, %v8007, %v8009
  %v8015 = vsel %vm291, %v8009, %v8011
  %v8016 = vsel %vm291, %v8011, %v8013
  %v8022 = vmul.f32 %v6762, %v8007
  %v8023 = vmul.f32 %v6763, %v8014
  %v8024 = vmul.f32 %v6764, %v8015
  %v8025 = vmul.f32 %v6765, %v8016
  %v8026 = vmul.f32 %v6766, %v8013
  %v8027 = vperm.slane %v8022, 0
  %v8028 = vperm.slane %v8023, 0
  %v8029 = vperm.slane %v8024, 0
  %v8030 = vperm.slane %v8025, 0
  %v8031 = vperm.slane %v8026, 0
  %8032 = vset.pattern.permute.xlu0 64
  %8033 = vperm.xlu0 %8032, %v4961
  %v8034 = vpop.permute.xlu0 %8033
  %v8036 = vsub.f32 %v8027, %v8034
  %v8037 = vsub.f32 %v8028, %v8034
  %v8038 = vsub.f32 %v8029, %v8034
  %v8039 = vsub.f32 %v8030, %v8034
  %v8040 = vsub.f32 %v8031, %v8034
  %v8041 = vand.u32 2147483647, %v8036
  %v8042 = vand.u32 2147483647, %v8037
  %v8043 = vand.u32 2147483647, %v8038
  %v8044 = vand.u32 2147483647, %v8039
  %v8045 = vand.u32 2147483647, %v8040
  %8051 = vrot.lane.b32.xlu0 %v8041, 94
  %v8052 = vpop.permute.xlu0 %8051
  %8053 = vrot.lane.b32.xlu0 %v8042, 94
  %v8054 = vpop.permute.xlu0 %8053
  %8055 = vrot.lane.b32.xlu0 %v8043, 94
  %v8056 = vpop.permute.xlu0 %8055
  %8057 = vrot.lane.b32.xlu0 %v8044, 94
  %v8058 = vpop.permute.xlu0 %8057
  %8059 = vrot.lane.b32.xlu0 %v8045, 94
  %v8060 = vpop.permute.xlu0 %8059
  %v8061 = vsel %vm453, %v8052, %v8054
  %v8062 = vsel %vm453, %v8054, %v8056
  %v8063 = vsel %vm453, %v8056, %v8058
  %v8064 = vsel %vm453, %v8058, %v8060
  %v8070 = vadd.f32 %v7995, %v8052
  %v8071 = vadd.f32 %v7996, %v8061
  %v8072 = vadd.f32 %v7997, %v8062
  %v8073 = vadd.f32 %v7998, %v8063
  %v8074 = vadd.f32 %v7999, %v8064
  %v8075 = vperm.slane %v8022, 1
  %v8076 = vperm.slane %v8023, 1
  %v8077 = vperm.slane %v8024, 1
  %v8078 = vperm.slane %v8025, 1
  %v8079 = vperm.slane %v8026, 1
  %8080 = vset.pattern.permute.xlu0 65
  %8081 = vperm.xlu0 %8080, %v4961
  %v8082 = vpop.permute.xlu0 %8081
  %v8084 = vsub.f32 %v8075, %v8082
  %v8085 = vsub.f32 %v8076, %v8082
  %v8086 = vsub.f32 %v8077, %v8082
  %v8087 = vsub.f32 %v8078, %v8082
  %v8088 = vsub.f32 %v8079, %v8082
  %v8089 = vand.u32 2147483647, %v8084
  %v8090 = vand.u32 2147483647, %v8085
  %v8091 = vand.u32 2147483647, %v8086
  %v8092 = vand.u32 2147483647, %v8087
  %v8093 = vand.u32 2147483647, %v8088
  %8099 = vrot.lane.b32.xlu0 %v8089, 94
  %v8100 = vpop.permute.xlu0 %8099
  %8101 = vrot.lane.b32.xlu0 %v8090, 94
  %v8102 = vpop.permute.xlu0 %8101
  %8103 = vrot.lane.b32.xlu0 %v8091, 94
  %v8104 = vpop.permute.xlu0 %8103
  %8105 = vrot.lane.b32.xlu0 %v8092, 94
  %v8106 = vpop.permute.xlu0 %8105
  %8107 = vrot.lane.b32.xlu0 %v8093, 94
  %v8108 = vpop.permute.xlu0 %8107
  %v8109 = vsel %vm453, %v8100, %v8102
  %v8110 = vsel %vm453, %v8102, %v8104
  %v8111 = vsel %vm453, %v8104, %v8106
  %v8112 = vsel %vm453, %v8106, %v8108
  %v8118 = vadd.f32 %v8070, %v8100
  %v8119 = vadd.f32 %v8071, %v8109
  %v8120 = vadd.f32 %v8072, %v8110
  %v8121 = vadd.f32 %v8073, %v8111
  %v8122 = vadd.f32 %v8074, %v8112
  %v8123 = vperm.slane %v8022, 2
  %v8124 = vperm.slane %v8023, 2
  %v8125 = vperm.slane %v8024, 2
  %v8126 = vperm.slane %v8025, 2
  %v8127 = vperm.slane %v8026, 2
  %8128 = vset.pattern.permute.xlu0 66
  %8129 = vperm.xlu0 %8128, %v4961
  %v8130 = vpop.permute.xlu0 %8129
  %v8132 = vsub.f32 %v8123, %v8130
  %v8133 = vsub.f32 %v8124, %v8130
  %v8134 = vsub.f32 %v8125, %v8130
  %v8135 = vsub.f32 %v8126, %v8130
  %v8136 = vsub.f32 %v8127, %v8130
  %v8137 = vand.u32 2147483647, %v8132
  %v8138 = vand.u32 2147483647, %v8133
  %v8139 = vand.u32 2147483647, %v8134
  %v8140 = vand.u32 2147483647, %v8135
  %v8141 = vand.u32 2147483647, %v8136
  %8147 = vrot.lane.b32.xlu0 %v8137, 94
  %v8148 = vpop.permute.xlu0 %8147
  %8149 = vrot.lane.b32.xlu0 %v8138, 94
  %v8150 = vpop.permute.xlu0 %8149
  %8151 = vrot.lane.b32.xlu0 %v8139, 94
  %v8152 = vpop.permute.xlu0 %8151
  %8153 = vrot.lane.b32.xlu0 %v8140, 94
  %v8154 = vpop.permute.xlu0 %8153
  %8155 = vrot.lane.b32.xlu0 %v8141, 94
  %v8156 = vpop.permute.xlu0 %8155
  %v8157 = vsel %vm453, %v8148, %v8150
  %v8158 = vsel %vm453, %v8150, %v8152
  %v8159 = vsel %vm453, %v8152, %v8154
  %v8160 = vsel %vm453, %v8154, %v8156
  %v8166 = vadd.f32 %v8118, %v8148
  %v8167 = vadd.f32 %v8119, %v8157
  %v8168 = vadd.f32 %v8120, %v8158
  %v8169 = vadd.f32 %v8121, %v8159
  %v8170 = vadd.f32 %v8122, %v8160
  %v8171 = vperm.slane %v8022, 3
  %v8172 = vperm.slane %v8023, 3
  %v8173 = vperm.slane %v8024, 3
  %v8174 = vperm.slane %v8025, 3
  %v8175 = vperm.slane %v8026, 3
  %8176 = vset.pattern.permute.xlu0 67
  %8177 = vperm.xlu0 %8176, %v4961
  %v8178 = vpop.permute.xlu0 %8177
  %v8180 = vsub.f32 %v8171, %v8178
  %v8181 = vsub.f32 %v8172, %v8178
  %v8182 = vsub.f32 %v8173, %v8178
  %v8183 = vsub.f32 %v8174, %v8178
  %v8184 = vsub.f32 %v8175, %v8178
  %v8185 = vand.u32 2147483647, %v8180
  %v8186 = vand.u32 2147483647, %v8181
  %v8187 = vand.u32 2147483647, %v8182
  %v8188 = vand.u32 2147483647, %v8183
  %v8189 = vand.u32 2147483647, %v8184
  %8195 = vrot.lane.b32.xlu0 %v8185, 94
  %v8196 = vpop.permute.xlu0 %8195
  %8197 = vrot.lane.b32.xlu0 %v8186, 94
  %v8198 = vpop.permute.xlu0 %8197
  %8199 = vrot.lane.b32.xlu0 %v8187, 94
  %v8200 = vpop.permute.xlu0 %8199
  %8201 = vrot.lane.b32.xlu0 %v8188, 94
  %v8202 = vpop.permute.xlu0 %8201
  %8203 = vrot.lane.b32.xlu0 %v8189, 94
  %v8204 = vpop.permute.xlu0 %8203
  %v8205 = vsel %vm453, %v8196, %v8198
  %v8206 = vsel %vm453, %v8198, %v8200
  %v8207 = vsel %vm453, %v8200, %v8202
  %v8208 = vsel %vm453, %v8202, %v8204
  %v8214 = vadd.f32 %v8166, %v8196
  %v8215 = vadd.f32 %v8167, %v8205
  %v8216 = vadd.f32 %v8168, %v8206
  %v8217 = vadd.f32 %v8169, %v8207
  %v8218 = vadd.f32 %v8170, %v8208
  %v8219 = vperm.slane %v8022, 4
  %v8220 = vperm.slane %v8023, 4
  %v8221 = vperm.slane %v8024, 4
  %v8222 = vperm.slane %v8025, 4
  %v8223 = vperm.slane %v8026, 4
  %8224 = vset.pattern.permute.xlu0 68
  %8225 = vperm.xlu0 %8224, %v4961
  %v8226 = vpop.permute.xlu0 %8225
  %v8228 = vsub.f32 %v8219, %v8226
  %v8229 = vsub.f32 %v8220, %v8226
  %v8230 = vsub.f32 %v8221, %v8226
  %v8231 = vsub.f32 %v8222, %v8226
  %v8232 = vsub.f32 %v8223, %v8226
  %v8233 = vand.u32 2147483647, %v8228
  %v8234 = vand.u32 2147483647, %v8229
  %v8235 = vand.u32 2147483647, %v8230
  %v8236 = vand.u32 2147483647, %v8231
  %v8237 = vand.u32 2147483647, %v8232
  %8243 = vrot.lane.b32.xlu0 %v8233, 94
  %v8244 = vpop.permute.xlu0 %8243
  %8245 = vrot.lane.b32.xlu0 %v8234, 94
  %v8246 = vpop.permute.xlu0 %8245
  %8247 = vrot.lane.b32.xlu0 %v8235, 94
  %v8248 = vpop.permute.xlu0 %8247
  %8249 = vrot.lane.b32.xlu0 %v8236, 94
  %v8250 = vpop.permute.xlu0 %8249
  %8251 = vrot.lane.b32.xlu0 %v8237, 94
  %v8252 = vpop.permute.xlu0 %8251
  %v8253 = vsel %vm453, %v8244, %v8246
  %v8254 = vsel %vm453, %v8246, %v8248
  %v8255 = vsel %vm453, %v8248, %v8250
  %v8256 = vsel %vm453, %v8250, %v8252
  %v8262 = vadd.f32 %v8214, %v8244
  %v8263 = vadd.f32 %v8215, %v8253
  %v8264 = vadd.f32 %v8216, %v8254
  %v8265 = vadd.f32 %v8217, %v8255
  %v8266 = vadd.f32 %v8218, %v8256
  %v8267 = vperm.slane %v8022, 5
  %v8268 = vperm.slane %v8023, 5
  %v8269 = vperm.slane %v8024, 5
  %v8270 = vperm.slane %v8025, 5
  %v8271 = vperm.slane %v8026, 5
  %8272 = vset.pattern.permute.xlu0 69
  %8273 = vperm.xlu0 %8272, %v4961
  %v8274 = vpop.permute.xlu0 %8273
  %v8276 = vsub.f32 %v8267, %v8274
  %v8277 = vsub.f32 %v8268, %v8274
  %v8278 = vsub.f32 %v8269, %v8274
  %v8279 = vsub.f32 %v8270, %v8274
  %v8280 = vsub.f32 %v8271, %v8274
  %v8281 = vand.u32 2147483647, %v8276
  %v8282 = vand.u32 2147483647, %v8277
  %v8283 = vand.u32 2147483647, %v8278
  %v8284 = vand.u32 2147483647, %v8279
  %v8285 = vand.u32 2147483647, %v8280
  %8291 = vrot.lane.b32.xlu0 %v8281, 94
  %v8292 = vpop.permute.xlu0 %8291
  %8293 = vrot.lane.b32.xlu0 %v8282, 94
  %v8294 = vpop.permute.xlu0 %8293
  %8295 = vrot.lane.b32.xlu0 %v8283, 94
  %v8296 = vpop.permute.xlu0 %8295
  %8297 = vrot.lane.b32.xlu0 %v8284, 94
  %v8298 = vpop.permute.xlu0 %8297
  %8299 = vrot.lane.b32.xlu0 %v8285, 94
  %v8300 = vpop.permute.xlu0 %8299
  %v8301 = vsel %vm453, %v8292, %v8294
  %v8302 = vsel %vm453, %v8294, %v8296
  %v8303 = vsel %vm453, %v8296, %v8298
  %v8304 = vsel %vm453, %v8298, %v8300
  %v8310 = vadd.f32 %v8262, %v8292
  %v8311 = vadd.f32 %v8263, %v8301
  %v8312 = vadd.f32 %v8264, %v8302
  %v8313 = vadd.f32 %v8265, %v8303
  %v8314 = vadd.f32 %v8266, %v8304
  %v8315 = vperm.slane %v8022, 6
  %v8316 = vperm.slane %v8023, 6
  %v8317 = vperm.slane %v8024, 6
  %v8318 = vperm.slane %v8025, 6
  %v8319 = vperm.slane %v8026, 6
  %8320 = vset.pattern.permute.xlu0 70
  %8321 = vperm.xlu0 %8320, %v4961
  %v8322 = vpop.permute.xlu0 %8321
  %v8324 = vsub.f32 %v8315, %v8322
  %v8325 = vsub.f32 %v8316, %v8322
  %v8326 = vsub.f32 %v8317, %v8322
  %v8327 = vsub.f32 %v8318, %v8322
  %v8328 = vsub.f32 %v8319, %v8322
  %v8329 = vand.u32 2147483647, %v8324
  %v8330 = vand.u32 2147483647, %v8325
  %v8331 = vand.u32 2147483647, %v8326
  %v8332 = vand.u32 2147483647, %v8327
  %v8333 = vand.u32 2147483647, %v8328
  %8339 = vrot.lane.b32.xlu0 %v8329, 94
  %v8340 = vpop.permute.xlu0 %8339
  %8341 = vrot.lane.b32.xlu0 %v8330, 94
  %v8342 = vpop.permute.xlu0 %8341
  %8343 = vrot.lane.b32.xlu0 %v8331, 94
  %v8344 = vpop.permute.xlu0 %8343
  %8345 = vrot.lane.b32.xlu0 %v8332, 94
  %v8346 = vpop.permute.xlu0 %8345
  %8347 = vrot.lane.b32.xlu0 %v8333, 94
  %v8348 = vpop.permute.xlu0 %8347
  %v8349 = vsel %vm453, %v8340, %v8342
  %v8350 = vsel %vm453, %v8342, %v8344
  %v8351 = vsel %vm453, %v8344, %v8346
  %v8352 = vsel %vm453, %v8346, %v8348
  %v8358 = vadd.f32 %v8310, %v8340
  %v8359 = vadd.f32 %v8311, %v8349
  %v8360 = vadd.f32 %v8312, %v8350
  %v8361 = vadd.f32 %v8313, %v8351
  %v8362 = vadd.f32 %v8314, %v8352
  %v8363 = vperm.slane %v8022, 7
  %v8364 = vperm.slane %v8023, 7
  %v8365 = vperm.slane %v8024, 7
  %v8366 = vperm.slane %v8025, 7
  %v8367 = vperm.slane %v8026, 7
  %8368 = vset.pattern.permute.xlu0 71
  %8369 = vperm.xlu0 %8368, %v4961
  %v8370 = vpop.permute.xlu0 %8369
  %v8372 = vsub.f32 %v8363, %v8370
  %v8373 = vsub.f32 %v8364, %v8370
  %v8374 = vsub.f32 %v8365, %v8370
  %v8375 = vsub.f32 %v8366, %v8370
  %v8376 = vsub.f32 %v8367, %v8370
  %v8377 = vand.u32 2147483647, %v8372
  %v8378 = vand.u32 2147483647, %v8373
  %v8379 = vand.u32 2147483647, %v8374
  %v8380 = vand.u32 2147483647, %v8375
  %v8381 = vand.u32 2147483647, %v8376
  %8387 = vrot.lane.b32.xlu0 %v8377, 94
  %v8388 = vpop.permute.xlu0 %8387
  %8389 = vrot.lane.b32.xlu0 %v8378, 94
  %v8390 = vpop.permute.xlu0 %8389
  %8391 = vrot.lane.b32.xlu0 %v8379, 94
  %v8392 = vpop.permute.xlu0 %8391
  %8393 = vrot.lane.b32.xlu0 %v8380, 94
  %v8394 = vpop.permute.xlu0 %8393
  %8395 = vrot.lane.b32.xlu0 %v8381, 94
  %v8396 = vpop.permute.xlu0 %8395
  %v8397 = vsel %vm453, %v8388, %v8390
  %v8398 = vsel %vm453, %v8390, %v8392
  %v8399 = vsel %vm453, %v8392, %v8394
  %v8400 = vsel %vm453, %v8394, %v8396
  %v8406 = vadd.f32 %v8358, %v8388
  %v8407 = vadd.f32 %v8359, %v8397
  %v8408 = vadd.f32 %v8360, %v8398
  %v8409 = vadd.f32 %v8361, %v8399
  %v8410 = vadd.f32 %v8362, %v8400
  %v8411 = vsub.f32 0.0, %v8406
  %v8412 = vsub.f32 0.0, %v8407
  %v8413 = vsub.f32 0.0, %v8408
  %v8414 = vsub.f32 0.0, %v8409
  %v8415 = vsub.f32 0.0, %v8410
  %8421 = vrot.lane.b32.xlu0 %v8411, 17
  %v8422 = vpop.permute.xlu0 %8421
  %8423 = vrot.lane.b32.xlu0 %v8412, 17
  %v8424 = vpop.permute.xlu0 %8423
  %8425 = vrot.lane.b32.xlu0 %v8413, 17
  %v8426 = vpop.permute.xlu0 %8425
  %8427 = vrot.lane.b32.xlu0 %v8414, 17
  %v8428 = vpop.permute.xlu0 %8427
  %8429 = vrot.lane.b32.xlu0 %v8415, 17
  %v8430 = vpop.permute.xlu0 %8429
  %v8431 = vsel %vm291, %v8422, %v8424
  %v8432 = vsel %vm291, %v8424, %v8426
  %v8433 = vsel %vm291, %v8426, %v8428
  %v8434 = vsel %vm291, %v8428, %v8430
  %v8439 = vadd.f32 %v8431, %v8432
  %v8440 = vadd.f32 %v8439, %v8433
  %v8441 = vadd.f32 %v8440, %v8434
  %8442 = vadd.xlane.f32.xlu0 %v8441
  %v8443 = vpop.xlane.xlu0 %8442
  %v8444 = vmul.f32 %v8443, %v4203
  %v8445 = vsub.f32 %v8411, %v8444
  %v8446 = vsub.f32 %v8412, %v8444
  %v8447 = vsub.f32 %v8413, %v8444
  %v8448 = vsub.f32 %v8414, %v8444
  %v8449 = vsub.f32 %v8415, %v8444
  %v8450 = vmul.f32 %v8445, %v8445
  %v8451 = vmul.f32 %v8446, %v8446
  %v8452 = vmul.f32 %v8447, %v8447
  %v8453 = vmul.f32 %v8448, %v8448
  %v8454 = vmul.f32 %v8449, %v8449
  %8460 = vrot.lane.b32.xlu0 %v8450, 17
  %v8461 = vpop.permute.xlu0 %8460
  %8462 = vrot.lane.b32.xlu0 %v8451, 17
  %v8463 = vpop.permute.xlu0 %8462
  %8464 = vrot.lane.b32.xlu0 %v8452, 17
  %v8465 = vpop.permute.xlu0 %8464
  %8466 = vrot.lane.b32.xlu0 %v8453, 17
  %v8467 = vpop.permute.xlu0 %8466
  %8468 = vrot.lane.b32.xlu0 %v8454, 17
  %v8469 = vpop.permute.xlu0 %8468
  %v8470 = vsel %vm291, %v8461, %v8463
  %v8471 = vsel %vm291, %v8463, %v8465
  %v8472 = vsel %vm291, %v8465, %v8467
  %v8473 = vsel %vm291, %v8467, %v8469
  %v8478 = vadd.f32 %v8470, %v8471
  %v8479 = vadd.f32 %v8478, %v8472
  %v8480 = vadd.f32 %v8479, %v8473
  %8481 = vadd.xlane.f32.xlu0 %v8480
  %v8482 = vpop.xlane.xlu0 %8481
  %v8483 = vmul.f32 %v8482, %v4203
  %v8484 = vadd.f32 %v8483, 1e-05
  %v8485 = vrsqrt.pop %v8484
  %v8486 = vmul.f32 %v8485, %v8484
  %v8487 = vmul.f32 %v8486, %v8485
  %v8488 = vmul.f32 0.5, %v8487
  %v8489 = vsub.f32 1.5, %v8488
  %v8490 = vmul.f32 %v8485, %v8489
  %vm8491 = vweird.f32 %v8484
  %vm8492 = vweird.f32 %v8485
  %vm8493 = vmor %vm8491, %vm8492
  %v8494 = vsel %vm8493, %v8485, %v8490
  %v8495 = vmul.f32 %v8445, %v8494
  %v8496 = vmul.f32 %v8446, %v8494
  %v8497 = vmul.f32 %v8447, %v8494
  %v8498 = vmul.f32 %v8448, %v8494
  %v8499 = vmul.f32 %v8449, %v8494
  %v8500 = vld [vmem:[%s7] sm:$0xff]
  %8502 = vset.pattern.permute.xlu0 0
  %8503 = vperm.xlu0 %8502, %v8500
  %v8504 = vpop.permute.xlu0 %8503
  %v8506 = vmul.f32 %v8495, %v8504
  %v8507 = vmul.f32 %v8496, %v8504
  %v8508 = vmul.f32 %v8497, %v8504
  %v8509 = vmul.f32 %v8498, %v8504
  %v8510 = vmul.f32 %v8499, %v8504
  %v8511 = vld [vmem:[%s8] sm:$0xff]
  %8513 = vset.pattern.permute.xlu0 0
  %8514 = vperm.xlu0 %8513, %v8511
  %v8515 = vpop.permute.xlu0 %8514
  %v8517 = vadd.f32 %v8506, %v8515
  %v8518 = vadd.f32 %v8507, %v8515
  %v8519 = vadd.f32 %v8508, %v8515
  %v8520 = vadd.f32 %v8509, %v8515
  %v8521 = vadd.f32 %v8510, %v8515
  %8526 = vrot.lane.b32.xlu0 %v4287, 111
  %v8527 = vpop.permute.xlu0 %8526
  %8528 = vrot.lane.b32.xlu0 %v4288, 111
  %v8529 = vpop.permute.xlu0 %8528
  %8530 = vrot.lane.b32.xlu0 %v4289, 111
  %v8531 = vpop.permute.xlu0 %8530
  %8532 = vrot.lane.b32.xlu0 %v4290, 111
  %v8533 = vpop.permute.xlu0 %8532
  %v8534 = vsel %vm68, %v8527, %v8529
  %v8535 = vsel %vm68, %v8529, %v8531
  %v8536 = vsel %vm68, %v8531, %v8533
  %v8542 = vadd.f32 %v8517, %v8527
  %v8543 = vadd.f32 %v8518, %v8534
  %v8544 = vadd.f32 %v8519, %v8535
  %v8545 = vadd.f32 %v8520, %v8536
  %v8546 = vadd.f32 %v8521, %v8533
  %v8547 = vmax.f32 %v8542, 0.0
  %v8548 = vmax.f32 %v8543, 0.0
  %v8549 = vmax.f32 %v8544, 0.0
  %v8550 = vmax.f32 %v8545, 0.0
  %v8551 = vmax.f32 %v8546, 0.0
  %8557 = vrot.lane.b32.xlu0 %v8547, 17
  %v8558 = vpop.permute.xlu0 %8557
  %8559 = vrot.lane.b32.xlu0 %v8548, 17
  %v8560 = vpop.permute.xlu0 %8559
  %8561 = vrot.lane.b32.xlu0 %v8549, 17
  %v8562 = vpop.permute.xlu0 %8561
  %8563 = vrot.lane.b32.xlu0 %v8550, 17
  %v8564 = vpop.permute.xlu0 %8563
  %8565 = vrot.lane.b32.xlu0 %v8551, 17
  %v8566 = vpop.permute.xlu0 %8565
  %v8567 = vsel %vm291, %v8558, %v8560
  %v8568 = vsel %vm291, %v8560, %v8562
  %v8569 = vsel %vm291, %v8562, %v8564
  %v8570 = vsel %vm291, %v8564, %v8566
  %8575 = vst [vmem:[%s10] sm:$0xff] %v8567
  %8576 = vst [vmem:[%s10 + $0x8] sm:$0xff] %v8568
  %8577 = vst [vmem:[%s10 + $0x10] sm:$0xff] %v8569
  %8578 = vst [vmem:[%s10 + $0x18] sm:$0xff] %v8570
  // Predicated region
  $region42: #{basic_block_forward.1} parent=0 // pred_check
    _
  $region43: #{basic_block_forward.1} parent=0 // pred_check_branch
    %8580 = sbr.rel (0) target = $region45
  $region44: #{basic_block_forward.1} parent=0 // pred_region
    _
  $region45: #{basic_block_forward.1} parent=0 // pred_fallthru
    _
  // Predicated region
  $region46: #{basic_block_forward.1} parent=0 // pred_check
    _
  $region47: #{basic_block_forward.1} parent=0 // pred_check_branch
    %8582 = sbr.rel (0) target = $region49
  $region48: #{basic_block_forward.1} parent=0 // pred_region
    _
  $region49: #{basic_block_forward.1} parent=0 // pred_fallthru
    _

</llo_original>
